<compile_context>
chip_gen: v6e
topology: v6e:2x2x1
jax: 0.10.0
libtpu: 0.0.40
codegen_flags: <defaults>
</compile_context>

<pallas_src>
import functools

import jax
import jax.numpy as jnp
from jax.experimental import pallas as pl
from jax.experimental.pallas import tpu as pltpu


# ----------------------------------------------------------------------------
# Tiled matmul + bias kernel:  (M, K) @ (K, N) + (1, N)  ->  (M, N)
# Used for both the hoisted LSTM input projection and the decoder.
# ----------------------------------------------------------------------------
def _linear_kernel(x_ref, w_ref, b_ref, o_ref, acc_ref):
    k = pl.program_id(2)

    @pl.when(k == 0)
    def _():
        acc_ref[...] = jnp.zeros_like(acc_ref)

    acc_ref[...] += jnp.dot(x_ref[...], w_ref[...],
                            preferred_element_type=jnp.float32)

    @pl.when(k == pl.num_programs(2) - 1)
    def _():
        o_ref[...] = (acc_ref[...] + b_ref[...].astype(jnp.float32)
                      ).astype(o_ref.dtype)


def _pick_tile(dim, pref, align):
    """Largest tile <= pref that divides dim and is align-aligned (else full dim)."""
    if dim <= pref:
        return dim
    cand = (pref // align) * align
    while cand >= align:
        if dim % cand == 0:
            return cand
        cand -= align
    return dim


def linear_pallas(x, w_t, b, out_dtype):
    """x: (M, K); w_t: (K, N); b: (1, N) f32.  Returns (M, N) out_dtype."""
    M, K = x.shape
    Kw, N = w_t.shape
    assert K == Kw
    tm = _pick_tile(M, 256, 8)
    tn = _pick_tile(N, 256, 128)
    tk = _pick_tile(K, 512, 128)
    grid = (M // tm, N // tn, K // tk)
    return pl.pallas_call(
        _linear_kernel,
        out_shape=jax.ShapeDtypeStruct((M, N), out_dtype),
        grid=grid,
        in_specs=[
            pl.BlockSpec((tm, tk), lambda i, j, k: (i, k)),
            pl.BlockSpec((tk, tn), lambda i, j, k: (k, j)),
            pl.BlockSpec((1, tn), lambda i, j, k: (0, j)),
        ],
        out_specs=pl.BlockSpec((tm, tn), lambda i, j, k: (i, j)),
        scratch_shapes=[pltpu.VMEM((tm, tn), jnp.float32)],
        compiler_params=pltpu.CompilerParams(
            dimension_semantics=("parallel", "parallel", "arbitrary")),
    )(x, w_t, b)


# ----------------------------------------------------------------------------
# LSTM recurrence kernel.  Grid iterates over blocks of T timesteps
# (sequential); each grid step unrolls T steps of
#     gates = xproj[t] + h @ W_hh^T ;  i,f,g,o -> c,h
# h/c live in f32 VMEM scratch across the whole sequence; final h_n/c_n are
# emitted from the f32 scratch at the last grid step.
# ----------------------------------------------------------------------------
def _lstm_scan_kernel(xp_ref, whh_ref, h0_ref, c0_ref,
                      out_ref, hn_ref, cn_ref, h_scr, c_scr):
    blk = pl.program_id(0)
    T = xp_ref.shape[0]          # static: timesteps per grid step
    nh = h_scr.shape[1]          # static: nhid (128-multiple -> lane-aligned slices)

    @pl.when(blk == 0)
    def _():
        h_scr[...] = h0_ref[...].astype(jnp.float32)
        c_scr[...] = c0_ref[...].astype(jnp.float32)

    def step(t, carry):
        h = h_scr[...]                                   # (bsz, nhid) f32
        c = c_scr[...]
        pre = xp_ref[t].astype(jnp.float32)              # (bsz, 4*nhid) precomputed
        gates = pre + jnp.dot(h.astype(whh_ref.dtype), whh_ref[...],
                              preferred_element_type=jnp.float32)
        # PyTorch LSTM gate order: i, f, g, o  (gate math kept in f32)
        i_g = jax.nn.sigmoid(gates[:, 0 * nh:1 * nh])
        f_g = jax.nn.sigmoid(gates[:, 1 * nh:2 * nh])
        g_g = jnp.tanh(gates[:, 2 * nh:3 * nh])
        o_g = jax.nn.sigmoid(gates[:, 3 * nh:4 * nh])
        c_new = f_g * c + i_g * g_g
        h_new = o_g * jnp.tanh(c_new)
        c_scr[...] = c_new
        h_scr[...] = h_new
        out_ref[t] = h_new.astype(out_ref.dtype)
        return carry

    jax.lax.fori_loop(0, T, step, 0, unroll=True)

    @pl.when(blk == pl.num_programs(0) - 1)
    def _():
        hn_ref[...] = h_scr[...]
        cn_ref[...] = c_scr[...]


def lstm_layer_scan(xproj, w_hh_t, h0, c0, t_block):
    """xproj: (seq, bsz, 4*nhid) = x @ W_ih^T + b (precomputed, bf16);
    w_hh_t: (nhid, 4*nhid) bf16; h0/c0: (bsz, nhid) f32.
    Returns out (seq, bsz, nhid) bf16, h_n (bsz, nhid) f32, c_n (bsz, nhid) f32."""
    seq, bsz, g4 = xproj.shape
    nhid = h0.shape[1]
    assert seq % t_block == 0
    nblk = seq // t_block

    # NOTE: for very large nhid on v7x, drop W_hh to bf16 (done) and consider
    # pipeline_mode=pl.Buffered(1) or an explicit one-shot DMA to avoid
    # double-buffering the resident weight.
    return pl.pallas_call(
        _lstm_scan_kernel,
        out_shape=(
            jax.ShapeDtypeStruct((seq, bsz, nhid), xproj.dtype),
            jax.ShapeDtypeStruct((bsz, nhid), jnp.float32),
            jax.ShapeDtypeStruct((bsz, nhid), jnp.float32),
        ),
        grid=(nblk,),
        in_specs=[
            pl.BlockSpec((t_block, bsz, g4), lambda b: (b, 0, 0)),
            pl.BlockSpec((nhid, g4), lambda b: (0, 0)),
            pl.BlockSpec((bsz, nhid), lambda b: (0, 0)),
            pl.BlockSpec((bsz, nhid), lambda b: (0, 0)),
        ],
        out_specs=[
            pl.BlockSpec((t_block, bsz, nhid), lambda b: (b, 0, 0)),
            pl.BlockSpec((bsz, nhid), lambda b: (0, 0)),
            pl.BlockSpec((bsz, nhid), lambda b: (0, 0)),
        ],
        scratch_shapes=[
            pltpu.VMEM((bsz, nhid), jnp.float32),   # h carry
            pltpu.VMEM((bsz, nhid), jnp.float32),   # c carry
        ],
        compiler_params=pltpu.CompilerParams(
            dimension_semantics=("arbitrary",)),    # sequential recurrence
    )(xproj, w_hh_t, h0, c0)


# ----------------------------------------------------------------------------
# Parameters
# ----------------------------------------------------------------------------
def init_params(key, ntoken, ninp, nhid, nlayers):
    initrange = 0.1
    keys = jax.random.split(key, 2 + 4 * nlayers)
    params = {}
    params["encoder_w"] = jax.random.uniform(
        keys[0], (ntoken, ninp), jnp.float32, -initrange, initrange)
    params["decoder_w"] = jax.random.uniform(
        keys[1], (ntoken, nhid), jnp.float32, -initrange, initrange)
    params["decoder_b"] = jnp.zeros((ntoken,), jnp.float32)

    stdv = 1.0 / (nhid ** 0.5)  # PyTorch nn.LSTM default init range
    lstm = []
    for l in range(nlayers):
        in_dim = ninp if l == 0 else nhid
        k0, k1, k2, k3 = keys[2 + 4 * l: 6 + 4 * l]
        lstm.append({
            "w_ih": jax.random.uniform(k0, (4 * nhid, in_dim), jnp.float32, -stdv, stdv),
            "w_hh": jax.random.uniform(k1, (4 * nhid, nhid), jnp.float32, -stdv, stdv),
            "b_ih": jax.random.uniform(k2, (4 * nhid,), jnp.float32, -stdv, stdv),
            "b_hh": jax.random.uniform(k3, (4 * nhid,), jnp.float32, -stdv, stdv),
        })
    params["lstm"] = lstm
    return params


def prepare_params(params):
    """One-time pre-transpose / pre-cast / bias-fold (not paid per forward)."""
    kp = {
        "encoder_w": params["encoder_w"],                               # f32 gather table
        "decoder_w_t": params["decoder_w"].T.astype(jnp.bfloat16),       # (nhid, ntoken)
        "decoder_b": params["decoder_b"][None, :].astype(jnp.float32),   # (1, ntoken)
        "lstm": [],
    }
    for p in params["lstm"]:
        kp["lstm"].append({
            "w_ih_t": p["w_ih"].T.astype(jnp.bfloat16),                  # (in_dim, 4*nhid)
            "w_hh_t": p["w_hh"].T.astype(jnp.bfloat16),                  # (nhid, 4*nhid)
            "bias": (p["b_ih"] + p["b_hh"])[None, :].astype(jnp.float32),  # (1, 4*nhid)
        })
    return kp


def _pick_t_block(seq, pref=32):
    t = min(seq, pref)
    while seq % t != 0:
        t -= 1
    return t


# ----------------------------------------------------------------------------
# RNNModel forward
# ----------------------------------------------------------------------------
@functools.partial(jax.jit, static_argnames=("nlayers", "t_block"))
def rnn_model_forward(kparams, tokens, hidden_h, hidden_c, nlayers, t_block):
    """tokens: (seq, bsz) int32; hidden_h/c: (nlayers, bsz, nhid) f32.
    Returns decoded (seq, bsz, ntoken) f32 and (h_n, c_n)."""
    # Embedding lookup (plain-JAX glue), cast activations to bf16.
    emb = jnp.take(kparams["encoder_w"], tokens, axis=0).astype(jnp.bfloat16)
    # TODO(synk): nn.Dropout(0.5) is stochastic; implemented as identity (eval mode).

    seq, bsz, _ = emb.shape
    x = emb
    h_out, c_out = [], []
    for l in range(nlayers):
        lp = kparams["lstm"][l]
        in_dim = x.shape[-1]
        # Hoisted input projection over the whole sequence (one big MXU matmul).
        xproj = linear_pallas(x.reshape(seq * bsz, in_dim),
                              lp["w_ih_t"], lp["bias"], jnp.bfloat16)
        xproj = xproj.reshape(seq, bsz, -1)
        out, hn, cn = lstm_layer_scan(xproj, lp["w_hh_t"],
                                      hidden_h[l], hidden_c[l], t_block)
        h_out.append(hn)
        c_out.append(cn)
        x = out  # inter-layer dropout = identity (eval mode)

    nhid = x.shape[-1]
    decoded = linear_pallas(x.reshape(seq * bsz, nhid),
                            kparams["decoder_w_t"], kparams["decoder_b"],
                            jnp.float32)
    decoded = decoded.reshape(seq, bsz, -1)
    h_n = jnp.stack(h_out, axis=0)
    c_n = jnp.stack(c_out, axis=0)
    return decoded, (h_n, c_n)


if __name__ == "__main__":
    # Small but hardware-aligned shapes: nhid/ninp multiples of 128, bsz multiple of 8.
    ntoken, ninp, nhid, nlayers = 256, 128, 128, 2
    bsz, seq = 8, 16

    key = jax.random.PRNGKey(0)
    pkey, tkey = jax.random.split(key)
    params = init_params(pkey, ntoken, ninp, nhid, nlayers)
    kparams = prepare_params(params)

    tokens = jax.random.randint(tkey, (seq, bsz), 0, ntoken, dtype=jnp.int32)
    hidden_h = jnp.zeros((nlayers, bsz, nhid), jnp.float32)
    hidden_c = jnp.zeros((nlayers, bsz, nhid), jnp.float32)

    t_block = _pick_t_block(seq)
    decoded, (h_n, c_n) = rnn_model_forward(kparams, tokens, hidden_h, hidden_c,
                                            nlayers, t_block)
    jax.block_until_ready(decoded)

    assert decoded.shape == (seq, bsz, ntoken), decoded.shape
    assert h_n.shape == (nlayers, bsz, nhid), h_n.shape
    assert c_n.shape == (nlayers, bsz, nhid), c_n.shape
    assert bool(jnp.all(jnp.isfinite(decoded)))
    print("KERNEL_OK")
</pallas_src>

<mosaic_0001>
module attributes {stable_mosaic.version = 11 : i64} {
  func.func @_linear_kernel(%arg0: i32, %arg1: i32, %arg2: i32, %arg3: memref<128x128xbf16, #tpu.memory_space<vmem>>, %arg4: memref<128x256xbf16, #tpu.memory_space<vmem>>, %arg5: memref<1x256xf32, #tpu.memory_space<vmem>>, %arg6: memref<128x256xbf16, #tpu.memory_space<vmem>>, %arg7: memref<128x256xf32, #tpu.memory_space<vmem>>) attributes {dimension_semantics = [#tpu.dimension_semantics<parallel>, #tpu.dimension_semantics<parallel>, #tpu.dimension_semantics<arbitrary>], iteration_bounds = array<i64: 1, 2, 1>, scalar_prefetch = 0 : i64, scratch_operands = 1 : i64, tpu.core_type = #tpu.core_type<tc>, window_params = [{transform_indices = @transform_0, window_bounds = array<i64: 128, 128>}, {transform_indices = @transform_1, window_bounds = array<i64: 128, 256>}, {transform_indices = @transform_2, window_bounds = array<i64: 1, 256>}, {transform_indices = @transform_3, window_bounds = array<i64: 128, 256>}]} {
    %c0_i32 = arith.constant 0 : i32
    %0 = arith.cmpi eq, %arg2, %c0_i32 : i32
    %1 = arith.extui %0 : i1 to i32
    %c0_i32_0 = arith.constant 0 : i32
    %2 = arith.cmpi ne, %1, %c0_i32_0 : i32
    scf.if %2 {
      %cst_10 = arith.constant 0.000000e+00 : f32
      %12 = vector.broadcast %cst_10 : f32 to vector<128x256xf32>
      %c0_11 = arith.constant 0 : index
      %c0_12 = arith.constant 0 : index
      %13 = vector.load %arg7[%c0_11, %c0_12] : memref<128x256xf32, #tpu.memory_space<vmem>>, vector<128x256xf32>
      tpu.vector_store %arg7[%c0_11, %c0_12], %12 {strides = array<i32>} : memref<128x256xf32, #tpu.memory_space<vmem>>, vector<128x256xf32>,
    } else {
    }
    %c0 = arith.constant 0 : index
    %c0_1 = arith.constant 0 : index
    %3 = vector.load %arg7[%c0, %c0_1] : memref<128x256xf32, #tpu.memory_space<vmem>>, vector<128x256xf32>
    %c0_2 = arith.constant 0 : index
    %c0_3 = arith.constant 0 : index
    %4 = vector.load %arg3[%c0_2, %c0_3] : memref<128x128xbf16, #tpu.memory_space<vmem>>, vector<128x128xbf16>
    %c0_4 = arith.constant 0 : index
    %c0_5 = arith.constant 0 : index
    %5 = vector.load %arg4[%c0_4, %c0_5] : memref<128x256xbf16, #tpu.memory_space<vmem>>, vector<128x256xbf16>
    %cst = arith.constant dense<0.000000e+00> : vector<128x256xf32>
    %6 = tpu.matmul %4, %5, %cst {dimension_numbers = #tpu.dot_dimension_numbers<[1], [0], [0], [1], [0, 0, 1, 1], [], []>} : vector<128x128xbf16>, vector<128x256xbf16>, vector<128x256xf32> -> vector<128x256xf32>
    %7 = arith.addf %3, %6 : vector<128x256xf32>
    %c0_6 = arith.constant 0 : index
    %c0_7 = arith.constant 0 : index
    %8 = vector.load %arg7[%c0_6, %c0_7] : memref<128x256xf32, #tpu.memory_space<vmem>>, vector<128x256xf32>
    tpu.vector_store %arg7[%c0_6, %c0_7], %7 {strides = array<i32>} : memref<128x256xf32, #tpu.memory_space<vmem>>, vector<128x256xf32>,
    %c0_i32_8 = arith.constant 0 : i32
    %9 = arith.cmpi eq, %arg2, %c0_i32_8 : i32
    %10 = arith.extui %9 : i1 to i32
    %c0_i32_9 = arith.constant 0 : i32
    %11 = arith.cmpi ne, %10, %c0_i32_9 : i32
    scf.if %11 {
      %c0_10 = arith.constant 0 : index
      %c0_11 = arith.constant 0 : index
      %12 = vector.load %arg7[%c0_10, %c0_11] : memref<128x256xf32, #tpu.memory_space<vmem>>, vector<128x256xf32>
      %c0_12 = arith.constant 0 : index
      %c0_13 = arith.constant 0 : index
      %13 = vector.load %arg5[%c0_12, %c0_13] : memref<1x256xf32, #tpu.memory_space<vmem>>, vector<1x256xf32>
      %14 = vector.broadcast %13 : vector<1x256xf32> to vector<128x256xf32>
      %15 = arith.addf %12, %14 : vector<128x256xf32>
      %16 = arith.truncf %15 : vector<128x256xf32> to vector<128x256xbf16>
      %c0_14 = arith.constant 0 : index
      %c0_15 = arith.constant 0 : index
      %17 = vector.load %arg6[%c0_14, %c0_15] : memref<128x256xbf16, #tpu.memory_space<vmem>>, vector<128x256xbf16>
      tpu.vector_store %arg6[%c0_14, %c0_15], %16 {strides = array<i32>} : memref<128x256xbf16, #tpu.memory_space<vmem>>, vector<128x256xbf16>,
    } else {
    }
    return
  }
  func.func @transform_0(%arg0: i32, %arg1: i32, %arg2: i32) -> (i32, i32) {
    %c0_i32 = arith.constant 0 : i32
    return %arg0, %arg2 : i32, i32
  }
  func.func @transform_1(%arg0: i32, %arg1: i32, %arg2: i32) -> (i32, i32) {
    %c0_i32 = arith.constant 0 : i32
    return %arg2, %arg1 : i32, i32
  }
  func.func @transform_2(%arg0: i32, %arg1: i32, %arg2: i32) -> (i32, i32) {
    %c0_i32 = arith.constant 0 : i32
    %c0_i32_0 = arith.constant 0 : i32
    return %c0_i32, %arg1 : i32, i32
  }
  func.func @transform_3(%arg0: i32, %arg1: i32, %arg2: i32) -> (i32, i32) {
    %c0_i32 = arith.constant 0 : i32
    return %arg0, %arg1 : i32, i32
  }
}

module attributes {stable_mosaic.version = 11 : i64} {
  func.func @_linear_kernel(%arg0: i32, %arg1: i32, %arg2: i32, %arg3: memref<128x128xbf16, #tpu.memory_space<vmem>>, %arg4: memref<128x256xbf16, #tpu.memory_space<vmem>>, %arg5: memref<1x256xf32, #tpu.memory_space<vmem>>, %arg6: memref<128x256xf32, #tpu.memory_space<vmem>>, %arg7: memref<128x256xf32, #tpu.memory_space<vmem>>) attributes {dimension_semantics = [#tpu.dimension_semantics<parallel>, #tpu.dimension_semantics<parallel>, #tpu.dimension_semantics<arbitrary>], iteration_bounds = array<i64: 1, 1, 1>, scalar_prefetch = 0 : i64, scratch_operands = 1 : i64, tpu.core_type = #tpu.core_type<tc>, window_params = [{transform_indices = @transform_0, window_bounds = array<i64: 128, 128>}, {transform_indices = @transform_1, window_bounds = array<i64: 128, 256>}, {transform_indices = @transform_2, window_bounds = array<i64: 1, 256>}, {transform_indices = @transform_3, window_bounds = array<i64: 128, 256>}]} {
    %c0_i32 = arith.constant 0 : i32
    %0 = arith.cmpi eq, %arg2, %c0_i32 : i32
    %1 = arith.extui %0 : i1 to i32
    %c0_i32_0 = arith.constant 0 : i32
    %2 = arith.cmpi ne, %1, %c0_i32_0 : i32
    scf.if %2 {
      %cst_10 = arith.constant 0.000000e+00 : f32
      %12 = vector.broadcast %cst_10 : f32 to vector<128x256xf32>
      %c0_11 = arith.constant 0 : index
      %c0_12 = arith.constant 0 : index
      %13 = vector.load %arg7[%c0_11, %c0_12] : memref<128x256xf32, #tpu.memory_space<vmem>>, vector<128x256xf32>
      tpu.vector_store %arg7[%c0_11, %c0_12], %12 {strides = array<i32>} : memref<128x256xf32, #tpu.memory_space<vmem>>, vector<128x256xf32>,
    } else {
    }
    %c0 = arith.constant 0 : index
    %c0_1 = arith.constant 0 : index
    %3 = vector.load %arg7[%c0, %c0_1] : memref<128x256xf32, #tpu.memory_space<vmem>>, vector<128x256xf32>
    %c0_2 = arith.constant 0 : index
    %c0_3 = arith.constant 0 : index
    %4 = vector.load %arg3[%c0_2, %c0_3] : memref<128x128xbf16, #tpu.memory_space<vmem>>, vector<128x128xbf16>
    %c0_4 = arith.constant 0 : index
    %c0_5 = arith.constant 0 : index
    %5 = vector.load %arg4[%c0_4, %c0_5] : memref<128x256xbf16, #tpu.memory_space<vmem>>, vector<128x256xbf16>
    %cst = arith.constant dense<0.000000e+00> : vector<128x256xf32>
    %6 = tpu.matmul %4, %5, %cst {dimension_numbers = #tpu.dot_dimension_numbers<[1], [0], [0], [1], [0, 0, 1, 1], [], []>} : vector<128x128xbf16>, vector<128x256xbf16>, vector<128x256xf32> -> vector<128x256xf32>
    %7 = arith.addf %3, %6 : vector<128x256xf32>
    %c0_6 = arith.constant 0 : index
    %c0_7 = arith.constant 0 : index
    %8 = vector.load %arg7[%c0_6, %c0_7] : memref<128x256xf32, #tpu.memory_space<vmem>>, vector<128x256xf32>
    tpu.vector_store %arg7[%c0_6, %c0_7], %7 {strides = array<i32>} : memref<128x256xf32, #tpu.memory_space<vmem>>, vector<128x256xf32>,
    %c0_i32_8 = arith.constant 0 : i32
    %9 = arith.cmpi eq, %arg2, %c0_i32_8 : i32
    %10 = arith.extui %9 : i1 to i32
    %c0_i32_9 = arith.constant 0 : i32
    %11 = arith.cmpi ne, %10, %c0_i32_9 : i32
    scf.if %11 {
      %c0_10 = arith.constant 0 : index
      %c0_11 = arith.constant 0 : index
      %12 = vector.load %arg7[%c0_10, %c0_11] : memref<128x256xf32, #tpu.memory_space<vmem>>, vector<128x256xf32>
      %c0_12 = arith.constant 0 : index
      %c0_13 = arith.constant 0 : index
      %13 = vector.load %arg5[%c0_12, %c0_13] : memref<1x256xf32, #tpu.memory_space<vmem>>, vector<1x256xf32>
      %14 = vector.broadcast %13 : vector<1x256xf32> to vector<128x256xf32>
      %15 = arith.addf %12, %14 : vector<128x256xf32>
      %c0_14 = arith.constant 0 : index
      %c0_15 = arith.constant 0 : index
      %16 = vector.load %arg6[%c0_14, %c0_15] : memref<128x256xf32, #tpu.memory_space<vmem>>, vector<128x256xf32>
      tpu.vector_store %arg6[%c0_14, %c0_15], %15 {strides = array<i32>} : memref<128x256xf32, #tpu.memory_space<vmem>>, vector<128x256xf32>,
    } else {
    }
    return
  }
  func.func @transform_0(%arg0: i32, %arg1: i32, %arg2: i32) -> (i32, i32) {
    %c0_i32 = arith.constant 0 : i32
    return %arg0, %arg2 : i32, i32
  }
  func.func @transform_1(%arg0: i32, %arg1: i32, %arg2: i32) -> (i32, i32) {
    %c0_i32 = arith.constant 0 : i32
    return %arg2, %arg1 : i32, i32
  }
  func.func @transform_2(%arg0: i32, %arg1: i32, %arg2: i32) -> (i32, i32) {
    %c0_i32 = arith.constant 0 : i32
    %c0_i32_0 = arith.constant 0 : i32
    return %c0_i32, %arg1 : i32, i32
  }
  func.func @transform_3(%arg0: i32, %arg1: i32, %arg2: i32) -> (i32, i32) {
    %c0_i32 = arith.constant 0 : i32
    return %arg0, %arg1 : i32, i32
  }
}

module attributes {stable_mosaic.version = 11 : i64} {
  func.func @_lstm_scan_kernel(%arg0: i32, %arg1: memref<16x8x512xbf16, #tpu.memory_space<vmem>>, %arg2: memref<128x512xbf16, #tpu.memory_space<vmem>>, %arg3: memref<8x128xf32, #tpu.memory_space<vmem>>, %arg4: memref<8x128xf32, #tpu.memory_space<vmem>>, %arg5: memref<16x8x128xbf16, #tpu.memory_space<vmem>>, %arg6: memref<8x128xf32, #tpu.memory_space<vmem>>, %arg7: memref<8x128xf32, #tpu.memory_space<vmem>>, %arg8: memref<8x128xf32, #tpu.memory_space<vmem>>, %arg9: memref<8x128xf32, #tpu.memory_space<vmem>>) attributes {dimension_semantics = [#tpu.dimension_semantics<arbitrary>], iteration_bounds = array<i64: 1>, scalar_prefetch = 0 : i64, scratch_operands = 2 : i64, tpu.core_type = #tpu.core_type<tc>, window_params = [{transform_indices = @transform_0, window_bounds = array<i64: 16, 8, 512>}, {pipeline_mode = #tpu.pipeline_mode<synchronous>, transform_indices = @transform_1, window_bounds = array<i64: 128, 512>}, {pipeline_mode = #tpu.pipeline_mode<synchronous>, transform_indices = @transform_2, window_bounds = array<i64: 8, 128>}, {pipeline_mode = #tpu.pipeline_mode<synchronous>, transform_indices = @transform_3, window_bounds = array<i64: 8, 128>}, {transform_indices = @transform_4, window_bounds = array<i64: 16, 8, 128>}, {pipeline_mode = #tpu.pipeline_mode<synchronous>, transform_indices = @transform_5, window_bounds = array<i64: 8, 128>}, {pipeline_mode = #tpu.pipeline_mode<synchronous>, transform_indices = @transform_6, window_bounds = array<i64: 8, 128>}]} {
    %c0_i32 = arith.constant 0 : i32
    %0 = arith.cmpi eq, %arg0, %c0_i32 : i32
    %1 = arith.extui %0 : i1 to i32
    %c0_i32_0 = arith.constant 0 : i32
    %2 = arith.cmpi ne, %1, %c0_i32_0 : i32
    scf.if %2 {
      %c0_290 = arith.constant 0 : index
      %c0_291 = arith.constant 0 : index
      %678 = vector.load %arg3[%c0_290, %c0_291] : memref<8x128xf32, #tpu.memory_space<vmem>>, vector<8x128xf32>
      %c0_292 = arith.constant 0 : index
      %c0_293 = arith.constant 0 : index
      %679 = vector.load %arg8[%c0_292, %c0_293] : memref<8x128xf32, #tpu.memory_space<vmem>>, vector<8x128xf32>
      tpu.vector_store %arg8[%c0_292, %c0_293], %678 {strides = array<i32>} : memref<8x128xf32, #tpu.memory_space<vmem>>, vector<8x128xf32>,
      %c0_294 = arith.constant 0 : index
      %c0_295 = arith.constant 0 : index
      %680 = vector.load %arg4[%c0_294, %c0_295] : memref<8x128xf32, #tpu.memory_space<vmem>>, vector<8x128xf32>
      %c0_296 = arith.constant 0 : index
      %c0_297 = arith.constant 0 : index
      %681 = vector.load %arg9[%c0_296, %c0_297] : memref<8x128xf32, #tpu.memory_space<vmem>>, vector<8x128xf32>
      tpu.vector_store %arg9[%c0_296, %c0_297], %680 {strides = array<i32>} : memref<8x128xf32, #tpu.memory_space<vmem>>, vector<8x128xf32>,
    } else {
    }
    %c0_i32_1 = arith.constant 0 : i32
    %c0 = arith.constant 0 : index
    %c0_2 = arith.constant 0 : index
    %3 = vector.load %arg8[%c0, %c0_2] : memref<8x128xf32, #tpu.memory_space<vmem>>, vector<8x128xf32>
    %c0_3 = arith.constant 0 : index
    %c0_4 = arith.constant 0 : index
    %4 = vector.load %arg9[%c0_3, %c0_4] : memref<8x128xf32, #tpu.memory_space<vmem>>, vector<8x128xf32>
    %5 = arith.index_cast %c0_i32_1 : i32 to index
    %c0_5 = arith.constant 0 : index
    %c0_6 = arith.constant 0 : index
    %6 = vector.load %arg1[%5, %c0_5, %c0_6] : memref<16x8x512xbf16, #tpu.memory_space<vmem>>, vector<1x8x512xbf16>
    %7 = vector.shape_cast %6 : vector<1x8x512xbf16> to vector<8x512xbf16>
    %8 = arith.extf %7 : vector<8x512xbf16> to vector<8x512xf32>
    %9 = arith.truncf %3 : vector<8x128xf32> to vector<8x128xbf16>
    %c0_7 = arith.constant 0 : index
    %c0_8 = arith.constant 0 : index
    %10 = vector.load %arg2[%c0_7, %c0_8] : memref<128x512xbf16, #tpu.memory_space<vmem>>, vector<128x512xbf16>
    %cst = arith.constant dense<0.000000e+00> : vector<8x512xf32>
    %11 = tpu.matmul %9, %10, %cst {dimension_numbers = #tpu.dot_dimension_numbers<[1], [0], [0], [1], [0, 0, 1, 1], [], []>} : vector<8x128xbf16>, vector<128x512xbf16>, vector<8x512xf32> -> vector<8x512xf32>
    %12 = arith.addf %8, %11 : vector<8x512xf32>
    %13 = vector.extract_strided_slice %12 {offsets = [0, 0], sizes = [8, 128], strides = [1, 1]} : vector<8x512xf32> to vector<8x128xf32>
    %14 = arith.negf %13 : vector<8x128xf32>
    %15 = math.exp %14 : vector<8x128xf32>
    %cst_9 = arith.constant 1.000000e+00 : f32
    %16 = vector.broadcast %cst_9 : f32 to vector<8x128xf32>
    %17 = arith.addf %16, %15 : vector<8x128xf32>
    %18 = arith.divf %16, %17 : vector<8x128xf32>
    %19 = vector.extract_strided_slice %12 {offsets = [0, 128], sizes = [8, 128], strides = [1, 1]} : vector<8x512xf32> to vector<8x128xf32>
    %20 = arith.negf %19 : vector<8x128xf32>
    %21 = math.exp %20 : vector<8x128xf32>
    %cst_10 = arith.constant 1.000000e+00 : f32
    %22 = vector.broadcast %cst_10 : f32 to vector<8x128xf32>
    %23 = arith.addf %22, %21 : vector<8x128xf32>
    %24 = arith.divf %22, %23 : vector<8x128xf32>
    %25 = vector.extract_strided_slice %12 {offsets = [0, 256], sizes = [8, 128], strides = [1, 1]} : vector<8x512xf32> to vector<8x128xf32>
    %26 = math.tanh %25 : vector<8x128xf32>
    %27 = vector.extract_strided_slice %12 {offsets = [0, 384], sizes = [8, 128], strides = [1, 1]} : vector<8x512xf32> to vector<8x128xf32>
    %28 = arith.negf %27 : vector<8x128xf32>
    %29 = math.exp %28 : vector<8x128xf32>
    %cst_11 = arith.constant 1.000000e+00 : f32
    %30 = vector.broadcast %cst_11 : f32 to vector<8x128xf32>
    %31 = arith.addf %30, %29 : vector<8x128xf32>
    %32 = arith.divf %30, %31 : vector<8x128xf32>
    %33 = arith.mulf %24, %4 : vector<8x128xf32>
    %34 = arith.mulf %18, %26 : vector<8x128xf32>
    %35 = arith.addf %33, %34 : vector<8x128xf32>
    %36 = math.tanh %35 : vector<8x128xf32>
    %37 = arith.mulf %32, %36 : vector<8x128xf32>
    %c0_12 = arith.constant 0 : index
    %c0_13 = arith.constant 0 : index
    %38 = vector.load %arg9[%c0_12, %c0_13] : memref<8x128xf32, #tpu.memory_space<vmem>>, vector<8x128xf32>
    tpu.vector_store %arg9[%c0_12, %c0_13], %35 {strides = array<i32>} : memref<8x128xf32, #tpu.memory_space<vmem>>, vector<8x128xf32>,
    %c0_14 = arith.constant 0 : index
    %c0_15 = arith.constant 0 : index
    %39 = vector.load %arg8[%c0_14, %c0_15] : memref<8x128xf32, #tpu.memory_space<vmem>>, vector<8x128xf32>
    tpu.vector_store %arg8[%c0_14, %c0_15], %37 {strides = array<i32>} : memref<8x128xf32, #tpu.memory_space<vmem>>, vector<8x128xf32>,
    %40 = arith.truncf %37 : vector<8x128xf32> to vector<8x128xbf16>
    %41 = arith.index_cast %c0_i32_1 : i32 to index
    %c0_16 = arith.constant 0 : index
    %c0_17 = arith.constant 0 : index
    %42 = vector.load %arg5[%41, %c0_16, %c0_17] : memref<16x8x128xbf16, #tpu.memory_space<vmem>>, vector<1x8x128xbf16>
    %43 = vector.shape_cast %42 : vector<1x8x128xbf16> to vector<8x128xbf16>
    %44 = vector.shape_cast %40 : vector<8x128xbf16> to vector<1x8x128xbf16>
    tpu.vector_store %arg5[%41, %c0_16, %c0_17], %44 {strides = array<i32>} : memref<16x8x128xbf16, #tpu.memory_space<vmem>>, vector<1x8x128xbf16>,
    %c1_i32 = arith.constant 1 : i32
    %c0_18 = arith.constant 0 : index
    %c0_19 = arith.constant 0 : index
    %45 = vector.load %arg8[%c0_18, %c0_19] : memref<8x128xf32, #tpu.memory_space<vmem>>, vector<8x128xf32>
    %c0_20 = arith.constant 0 : index
    %c0_21 = arith.constant 0 : index
    %46 = vector.load %arg9[%c0_20, %c0_21] : memref<8x128xf32, #tpu.memory_space<vmem>>, vector<8x128xf32>
    %47 = arith.index_cast %c1_i32 : i32 to index
    %c0_22 = arith.constant 0 : index
    %c0_23 = arith.constant 0 : index
    %48 = vector.load %arg1[%47, %c0_22, %c0_23] : memref<16x8x512xbf16, #tpu.memory_space<vmem>>, vector<1x8x512xbf16>
    %49 = vector.shape_cast %48 : vector<1x8x512xbf16> to vector<8x512xbf16>
    %50 = arith.extf %49 : vector<8x512xbf16> to vector<8x512xf32>
    %51 = arith.truncf %45 : vector<8x128xf32> to vector<8x128xbf16>
    %c0_24 = arith.constant 0 : index
    %c0_25 = arith.constant 0 : index
    %52 = vector.load %arg2[%c0_24, %c0_25] : memref<128x512xbf16, #tpu.memory_space<vmem>>, vector<128x512xbf16>
    %cst_26 = arith.constant dense<0.000000e+00> : vector<8x512xf32>
    %53 = tpu.matmul %51, %52, %cst_26 {dimension_numbers = #tpu.dot_dimension_numbers<[1], [0], [0], [1], [0, 0, 1, 1], [], []>} : vector<8x128xbf16>, vector<128x512xbf16>, vector<8x512xf32> -> vector<8x512xf32>
    %54 = arith.addf %50, %53 : vector<8x512xf32>
    %55 = vector.extract_strided_slice %54 {offsets = [0, 0], sizes = [8, 128], strides = [1, 1]} : vector<8x512xf32> to vector<8x128xf32>
    %56 = arith.negf %55 : vector<8x128xf32>
    %57 = math.exp %56 : vector<8x128xf32>
    %cst_27 = arith.constant 1.000000e+00 : f32
    %58 = vector.broadcast %cst_27 : f32 to vector<8x128xf32>
    %59 = arith.addf %58, %57 : vector<8x128xf32>
    %60 = arith.divf %58, %59 : vector<8x128xf32>
    %61 = vector.extract_strided_slice %54 {offsets = [0, 128], sizes = [8, 128], strides = [1, 1]} : vector<8x512xf32> to vector<8x128xf32>
    %62 = arith.negf %61 : vector<8x128xf32>
    %63 = math.exp %62 : vector<8x128xf32>
    %cst_28 = arith.constant 1.000000e+00 : f32
    %64 = vector.broadcast %cst_28 : f32 to vector<8x128xf32>
    %65 = arith.addf %64, %63 : vector<8x128xf32>
    %66 = arith.divf %64, %65 : vector<8x128xf32>
    %67 = vector.extract_strided_slice %54 {offsets = [0, 256], sizes = [8, 128], strides = [1, 1]} : vector<8x512xf32> to vector<8x128xf32>
    %68 = math.tanh %67 : vector<8x128xf32>
    %69 = vector.extract_strided_slice %54 {offsets = [0, 384], sizes = [8, 128], strides = [1, 1]} : vector<8x512xf32> to vector<8x128xf32>
    %70 = arith.negf %69 : vector<8x128xf32>
    %71 = math.exp %70 : vector<8x128xf32>
    %cst_29 = arith.constant 1.000000e+00 : f32
    %72 = vector.broadcast %cst_29 : f32 to vector<8x128xf32>
    %73 = arith.addf %72, %71 : vector<8x128xf32>
    %74 = arith.divf %72, %73 : vector<8x128xf32>
    %75 = arith.mulf %66, %46 : vector<8x128xf32>
    %76 = arith.mulf %60, %68 : vector<8x128xf32>
    %77 = arith.addf %75, %76 : vector<8x128xf32>
    %78 = math.tanh %77 : vector<8x128xf32>
    %79 = arith.mulf %74, %78 : vector<8x128xf32>
    %c0_30 = arith.constant 0 : index
    %c0_31 = arith.constant 0 : index
    %80 = vector.load %arg9[%c0_30, %c0_31] : memref<8x128xf32, #tpu.memory_space<vmem>>, vector<8x128xf32>
    tpu.vector_store %arg9[%c0_30, %c0_31], %77 {strides = array<i32>} : memref<8x128xf32, #tpu.memory_space<vmem>>, vector<8x128xf32>,
    %c0_32 = arith.constant 0 : index
    %c0_33 = arith.constant 0 : index
    %81 = vector.load %arg8[%c0_32, %c0_33] : memref<8x128xf32, #tpu.memory_space<vmem>>, vector<8x128xf32>
    tpu.vector_store %arg8[%c0_32, %c0_33], %79 {strides = array<i32>} : memref<8x128xf32, #tpu.memory_space<vmem>>, vector<8x128xf32>,
    %82 = arith.truncf %79 : vector<8x128xf32> to vector<8x128xbf16>
    %83 = arith.index_cast %c1_i32 : i32 to index
    %c0_34 = arith.constant 0 : index
    %c0_35 = arith.constant 0 : index
    %84 = vector.load %arg5[%83, %c0_34, %c0_35] : memref<16x8x128xbf16, #tpu.memory_space<vmem>>, vector<1x8x128xbf16>
    %85 = vector.shape_cast %84 : vector<1x8x128xbf16> to vector<8x128xbf16>
    %86 = vector.shape_cast %82 : vector<8x128xbf16> to vector<1x8x128xbf16>
    tpu.vector_store %arg5[%83, %c0_34, %c0_35], %86 {strides = array<i32>} : memref<16x8x128xbf16, #tpu.memory_space<vmem>>, vector<1x8x128xbf16>,
    %c2_i32 = arith.constant 2 : i32
    %c0_36 = arith.constant 0 : index
    %c0_37 = arith.constant 0 : index
    %87 = vector.load %arg8[%c0_36, %c0_37] : memref<8x128xf32, #tpu.memory_space<vmem>>, vector<8x128xf32>
    %c0_38 = arith.constant 0 : index
    %c0_39 = arith.constant 0 : index
    %88 = vector.load %arg9[%c0_38, %c0_39] : memref<8x128xf32, #tpu.memory_space<vmem>>, vector<8x128xf32>
    %89 = arith.index_cast %c2_i32 : i32 to index
    %c0_40 = arith.constant 0 : index
    %c0_41 = arith.constant 0 : index
    %90 = vector.load %arg1[%89, %c0_40, %c0_41] : memref<16x8x512xbf16, #tpu.memory_space<vmem>>, vector<1x8x512xbf16>
    %91 = vector.shape_cast %90 : vector<1x8x512xbf16> to vector<8x512xbf16>
    %92 = arith.extf %91 : vector<8x512xbf16> to vector<8x512xf32>
    %93 = arith.truncf %87 : vector<8x128xf32> to vector<8x128xbf16>
    %c0_42 = arith.constant 0 : index
    %c0_43 = arith.constant 0 : index
    %94 = vector.load %arg2[%c0_42, %c0_43] : memref<128x512xbf16, #tpu.memory_space<vmem>>, vector<128x512xbf16>
    %cst_44 = arith.constant dense<0.000000e+00> : vector<8x512xf32>
    %95 = tpu.matmul %93, %94, %cst_44 {dimension_numbers = #tpu.dot_dimension_numbers<[1], [0], [0], [1], [0, 0, 1, 1], [], []>} : vector<8x128xbf16>, vector<128x512xbf16>, vector<8x512xf32> -> vector<8x512xf32>
    %96 = arith.addf %92, %95 : vector<8x512xf32>
    %97 = vector.extract_strided_slice %96 {offsets = [0, 0], sizes = [8, 128], strides = [1, 1]} : vector<8x512xf32> to vector<8x128xf32>
    %98 = arith.negf %97 : vector<8x128xf32>
    %99 = math.exp %98 : vector<8x128xf32>
    %cst_45 = arith.constant 1.000000e+00 : f32
    %100 = vector.broadcast %cst_45 : f32 to vector<8x128xf32>
    %101 = arith.addf %100, %99 : vector<8x128xf32>
    %102 = arith.divf %100, %101 : vector<8x128xf32>
    %103 = vector.extract_strided_slice %96 {offsets = [0, 128], sizes = [8, 128], strides = [1, 1]} : vector<8x512xf32> to vector<8x128xf32>
    %104 = arith.negf %103 : vector<8x128xf32>
    %105 = math.exp %104 : vector<8x128xf32>
    %cst_46 = arith.constant 1.000000e+00 : f32
    %106 = vector.broadcast %cst_46 : f32 to vector<8x128xf32>
    %107 = arith.addf %106, %105 : vector<8x128xf32>
    %108 = arith.divf %106, %107 : vector<8x128xf32>
    %109 = vector.extract_strided_slice %96 {offsets = [0, 256], sizes = [8, 128], strides = [1, 1]} : vector<8x512xf32> to vector<8x128xf32>
    %110 = math.tanh %109 : vector<8x128xf32>
    %111 = vector.extract_strided_slice %96 {offsets = [0, 384], sizes = [8, 128], strides = [1, 1]} : vector<8x512xf32> to vector<8x128xf32>
    %112 = arith.negf %111 : vector<8x128xf32>
    %113 = math.exp %112 : vector<8x128xf32>
    %cst_47 = arith.constant 1.000000e+00 : f32
    %114 = vector.broadcast %cst_47 : f32 to vector<8x128xf32>
    %115 = arith.addf %114, %113 : vector<8x128xf32>
    %116 = arith.divf %114, %115 : vector<8x128xf32>
    %117 = arith.mulf %108, %88 : vector<8x128xf32>
    %118 = arith.mulf %102, %110 : vector<8x128xf32>
    %119 = arith.addf %117, %118 : vector<8x128xf32>
    %120 = math.tanh %119 : vector<8x128xf32>
    %121 = arith.mulf %116, %120 : vector<8x128xf32>
    %c0_48 = arith.constant 0 : index
    %c0_49 = arith.constant 0 : index
    %122 = vector.load %arg9[%c0_48, %c0_49] : memref<8x128xf32, #tpu.memory_space<vmem>>, vector<8x128xf32>
    tpu.vector_store %arg9[%c0_48, %c0_49], %119 {strides = array<i32>} : memref<8x128xf32, #tpu.memory_space<vmem>>, vector<8x128xf32>,
    %c0_50 = arith.constant 0 : index
    %c0_51 = arith.constant 0 : index
    %123 = vector.load %arg8[%c0_50, %c0_51] : memref<8x128xf32, #tpu.memory_space<vmem>>, vector<8x128xf32>
    tpu.vector_store %arg8[%c0_50, %c0_51], %121 {strides = array<i32>} : memref<8x128xf32, #tpu.memory_space<vmem>>, vector<8x128xf32>,
    %124 = arith.truncf %121 : vector<8x128xf32> to vector<8x128xbf16>
    %125 = arith.index_cast %c2_i32 : i32 to index
    %c0_52 = arith.constant 0 : index
    %c0_53 = arith.constant 0 : index
    %126 = vector.load %arg5[%125, %c0_52, %c0_53] : memref<16x8x128xbf16, #tpu.memory_space<vmem>>, vector<1x8x128xbf16>
    %127 = vector.shape_cast %126 : vector<1x8x128xbf16> to vector<8x128xbf16>
    %128 = vector.shape_cast %124 : vector<8x128xbf16> to vector<1x8x128xbf16>
    tpu.vector_store %arg5[%125, %c0_52, %c0_53], %128 {strides = array<i32>} : memref<16x8x128xbf16, #tpu.memory_space<vmem>>, vector<1x8x128xbf16>,
    %c3_i32 = arith.constant 3 : i32
    %c0_54 = arith.constant 0 : index
    %c0_55 = arith.constant 0 : index
    %129 = vector.load %arg8[%c0_54, %c0_55] : memref<8x128xf32, #tpu.memory_space<vmem>>, vector<8x128xf32>
    %c0_56 = arith.constant 0 : index
    %c0_57 = arith.constant 0 : index
    %130 = vector.load %arg9[%c0_56, %c0_57] : memref<8x128xf32, #tpu.memory_space<vmem>>, vector<8x128xf32>
    %131 = arith.index_cast %c3_i32 : i32 to index
    %c0_58 = arith.constant 0 : index
    %c0_59 = arith.constant 0 : index
    %132 = vector.load %arg1[%131, %c0_58, %c0_59] : memref<16x8x512xbf16, #tpu.memory_space<vmem>>, vector<1x8x512xbf16>
    %133 = vector.shape_cast %132 : vector<1x8x512xbf16> to vector<8x512xbf16>
    %134 = arith.extf %133 : vector<8x512xbf16> to vector<8x512xf32>
    %135 = arith.truncf %129 : vector<8x128xf32> to vector<8x128xbf16>
    %c0_60 = arith.constant 0 : index
    %c0_61 = arith.constant 0 : index
    %136 = vector.load %arg2[%c0_60, %c0_61] : memref<128x512xbf16, #tpu.memory_space<vmem>>, vector<128x512xbf16>
    %cst_62 = arith.constant dense<0.000000e+00> : vector<8x512xf32>
    %137 = tpu.matmul %135, %136, %cst_62 {dimension_numbers = #tpu.dot_dimension_numbers<[1], [0], [0], [1], [0, 0, 1, 1], [], []>} : vector<8x128xbf16>, vector<128x512xbf16>, vector<8x512xf32> -> vector<8x512xf32>
    %138 = arith.addf %134, %137 : vector<8x512xf32>
    %139 = vector.extract_strided_slice %138 {offsets = [0, 0], sizes = [8, 128], strides = [1, 1]} : vector<8x512xf32> to vector<8x128xf32>
    %140 = arith.negf %139 : vector<8x128xf32>
    %141 = math.exp %140 : vector<8x128xf32>
    %cst_63 = arith.constant 1.000000e+00 : f32
    %142 = vector.broadcast %cst_63 : f32 to vector<8x128xf32>
    %143 = arith.addf %142, %141 : vector<8x128xf32>
    %144 = arith.divf %142, %143 : vector<8x128xf32>
    %145 = vector.extract_strided_slice %138 {offsets = [0, 128], sizes = [8, 128], strides = [1, 1]} : vector<8x512xf32> to vector<8x128xf32>
    %146 = arith.negf %145 : vector<8x128xf32>
    %147 = math.exp %146 : vector<8x128xf32>
    %cst_64 = arith.constant 1.000000e+00 : f32
    %148 = vector.broadcast %cst_64 : f32 to vector<8x128xf32>
    %149 = arith.addf %148, %147 : vector<8x128xf32>
    %150 = arith.divf %148, %149 : vector<8x128xf32>
    %151 = vector.extract_strided_slice %138 {offsets = [0, 256], sizes = [8, 128], strides = [1, 1]} : vector<8x512xf32> to vector<8x128xf32>
    %152 = math.tanh %151 : vector<8x128xf32>
    %153 = vector.extract_strided_slice %138 {offsets = [0, 384], sizes = [8, 128], strides = [1, 1]} : vector<8x512xf32> to vector<8x128xf32>
    %154 = arith.negf %153 : vector<8x128xf32>
    %155 = math.exp %154 : vector<8x128xf32>
    %cst_65 = arith.constant 1.000000e+00 : f32
    %156 = vector.broadcast %cst_65 : f32 to vector<8x128xf32>
    %157 = arith.addf %156, %155 : vector<8x128xf32>
    %158 = arith.divf %156, %157 : vector<8x128xf32>
    %159 = arith.mulf %150, %130 : vector<8x128xf32>
    %160 = arith.mulf %144, %152 : vector<8x128xf32>
    %161 = arith.addf %159, %160 : vector<8x128xf32>
    %162 = math.tanh %161 : vector<8x128xf32>
    %163 = arith.mulf %158, %162 : vector<8x128xf32>
    %c0_66 = arith.constant 0 : index
    %c0_67 = arith.constant 0 : index
    %164 = vector.load %arg9[%c0_66, %c0_67] : memref<8x128xf32, #tpu.memory_space<vmem>>, vector<8x128xf32>
    tpu.vector_store %arg9[%c0_66, %c0_67], %161 {strides = array<i32>} : memref<8x128xf32, #tpu.memory_space<vmem>>, vector<8x128xf32>,
    %c0_68 = arith.constant 0 : index
    %c0_69 = arith.constant 0 : index
    %165 = vector.load %arg8[%c0_68, %c0_69] : memref<8x128xf32, #tpu.memory_space<vmem>>, vector<8x128xf32>
    tpu.vector_store %arg8[%c0_68, %c0_69], %163 {strides = array<i32>} : memref<8x128xf32, #tpu.memory_space<vmem>>, vector<8x128xf32>,
    %166 = arith.truncf %163 : vector<8x128xf32> to vector<8x128xbf16>
    %167 = arith.index_cast %c3_i32 : i32 to index
    %c0_70 = arith.constant 0 : index
    %c0_71 = arith.constant 0 : index
    %168 = vector.load %arg5[%167, %c0_70, %c0_71] : memref<16x8x128xbf16, #tpu.memory_space<vmem>>, vector<1x8x128xbf16>
    %169 = vector.shape_cast %168 : vector<1x8x128xbf16> to vector<8x128xbf16>
    %170 = vector.shape_cast %166 : vector<8x128xbf16> to vector<1x8x128xbf16>
    tpu.vector_store %arg5[%167, %c0_70, %c0_71], %170 {strides = array<i32>} : memref<16x8x128xbf16, #tpu.memory_space<vmem>>, vector<1x8x128xbf16>,
    %c4_i32 = arith.constant 4 : i32
    %c0_72 = arith.constant 0 : index
    %c0_73 = arith.constant 0 : index
    %171 = vector.load %arg8[%c0_72, %c0_73] : memref<8x128xf32, #tpu.memory_space<vmem>>, vector<8x128xf32>
    %c0_74 = arith.constant 0 : index
    %c0_75 = arith.constant 0 : index
    %172 = vector.load %arg9[%c0_74, %c0_75] : memref<8x128xf32, #tpu.memory_space<vmem>>, vector<8x128xf32>
    %173 = arith.index_cast %c4_i32 : i32 to index
    %c0_76 = arith.constant 0 : index
    %c0_77 = arith.constant 0 : index
    %174 = vector.load %arg1[%173, %c0_76, %c0_77] : memref<16x8x512xbf16, #tpu.memory_space<vmem>>, vector<1x8x512xbf16>
    %175 = vector.shape_cast %174 : vector<1x8x512xbf16> to vector<8x512xbf16>
    %176 = arith.extf %175 : vector<8x512xbf16> to vector<8x512xf32>
    %177 = arith.truncf %171 : vector<8x128xf32> to vector<8x128xbf16>
    %c0_78 = arith.constant 0 : index
    %c0_79 = arith.constant 0 : index
    %178 = vector.load %arg2[%c0_78, %c0_79] : memref<128x512xbf16, #tpu.memory_space<vmem>>, vector<128x512xbf16>
    %cst_80 = arith.constant dense<0.000000e+00> : vector<8x512xf32>
    %179 = tpu.matmul %177, %178, %cst_80 {dimension_numbers = #tpu.dot_dimension_numbers<[1], [0], [0], [1], [0, 0, 1, 1], [], []>} : vector<8x128xbf16>, vector<128x512xbf16>, vector<8x512xf32> -> vector<8x512xf32>
    %180 = arith.addf %176, %179 : vector<8x512xf32>
    %181 = vector.extract_strided_slice %180 {offsets = [0, 0], sizes = [8, 128], strides = [1, 1]} : vector<8x512xf32> to vector<8x128xf32>
    %182 = arith.negf %181 : vector<8x128xf32>
    %183 = math.exp %182 : vector<8x128xf32>
    %cst_81 = arith.constant 1.000000e+00 : f32
    %184 = vector.broadcast %cst_81 : f32 to vector<8x128xf32>
    %185 = arith.addf %184, %183 : vector<8x128xf32>
    %186 = arith.divf %184, %185 : vector<8x128xf32>
    %187 = vector.extract_strided_slice %180 {offsets = [0, 128], sizes = [8, 128], strides = [1, 1]} : vector<8x512xf32> to vector<8x128xf32>
    %188 = arith.negf %187 : vector<8x128xf32>
    %189 = math.exp %188 : vector<8x128xf32>
    %cst_82 = arith.constant 1.000000e+00 : f32
    %190 = vector.broadcast %cst_82 : f32 to vector<8x128xf32>
    %191 = arith.addf %190, %189 : vector<8x128xf32>
    %192 = arith.divf %190, %191 : vector<8x128xf32>
    %193 = vector.extract_strided_slice %180 {offsets = [0, 256], sizes = [8, 128], strides = [1, 1]} : vector<8x512xf32> to vector<8x128xf32>
    %194 = math.tanh %193 : vector<8x128xf32>
    %195 = vector.extract_strided_slice %180 {offsets = [0, 384], sizes = [8, 128], strides = [1, 1]} : vector<8x512xf32> to vector<8x128xf32>
    %196 = arith.negf %195 : vector<8x128xf32>
    %197 = math.exp %196 : vector<8x128xf32>
    %cst_83 = arith.constant 1.000000e+00 : f32
    %198 = vector.broadcast %cst_83 : f32 to vector<8x128xf32>
    %199 = arith.addf %198, %197 : vector<8x128xf32>
    %200 = arith.divf %198, %199 : vector<8x128xf32>
    %201 = arith.mulf %192, %172 : vector<8x128xf32>
    %202 = arith.mulf %186, %194 : vector<8x128xf32>
    %203 = arith.addf %201, %202 : vector<8x128xf32>
    %204 = math.tanh %203 : vector<8x128xf32>
    %205 = arith.mulf %200, %204 : vector<8x128xf32>
    %c0_84 = arith.constant 0 : index
    %c0_85 = arith.constant 0 : index
    %206 = vector.load %arg9[%c0_84, %c0_85] : memref<8x128xf32, #tpu.memory_space<vmem>>, vector<8x128xf32>
    tpu.vector_store %arg9[%c0_84, %c0_85], %203 {strides = array<i32>} : memref<8x128xf32, #tpu.memory_space<vmem>>, vector<8x128xf32>,
    %c0_86 = arith.constant 0 : index
    %c0_87 = arith.constant 0 : index
    %207 = vector.load %arg8[%c0_86, %c0_87] : memref<8x128xf32, #tpu.memory_space<vmem>>, vector<8x128xf32>
    tpu.vector_store %arg8[%c0_86, %c0_87], %205 {strides = array<i32>} : memref<8x128xf32, #tpu.memory_space<vmem>>, vector<8x128xf32>,
    %208 = arith.truncf %205 : vector<8x128xf32> to vector<8x128xbf16>
    %209 = arith.index_cast %c4_i32 : i32 to index
    %c0_88 = arith.constant 0 : index
    %c0_89 = arith.constant 0 : index
    %210 = vector.load %arg5[%209, %c0_88, %c0_89] : memref<16x8x128xbf16, #tpu.memory_space<vmem>>, vector<1x8x128xbf16>
    %211 = vector.shape_cast %210 : vector<1x8x128xbf16> to vector<8x128xbf16>
    %212 = vector.shape_cast %208 : vector<8x128xbf16> to vector<1x8x128xbf16>
    tpu.vector_store %arg5[%209, %c0_88, %c0_89], %212 {strides = array<i32>} : memref<16x8x128xbf16, #tpu.memory_space<vmem>>, vector<1x8x128xbf16>,
    %c5_i32 = arith.constant 5 : i32
    %c0_90 = arith.constant 0 : index
    %c0_91 = arith.constant 0 : index
    %213 = vector.load %arg8[%c0_90, %c0_91] : memref<8x128xf32, #tpu.memory_space<vmem>>, vector<8x128xf32>
    %c0_92 = arith.constant 0 : index
    %c0_93 = arith.constant 0 : index
    %214 = vector.load %arg9[%c0_92, %c0_93] : memref<8x128xf32, #tpu.memory_space<vmem>>, vector<8x128xf32>
    %215 = arith.index_cast %c5_i32 : i32 to index
    %c0_94 = arith.constant 0 : index
    %c0_95 = arith.constant 0 : index
    %216 = vector.load %arg1[%215, %c0_94, %c0_95] : memref<16x8x512xbf16, #tpu.memory_space<vmem>>, vector<1x8x512xbf16>
    %217 = vector.shape_cast %216 : vector<1x8x512xbf16> to vector<8x512xbf16>
    %218 = arith.extf %217 : vector<8x512xbf16> to vector<8x512xf32>
    %219 = arith.truncf %213 : vector<8x128xf32> to vector<8x128xbf16>
    %c0_96 = arith.constant 0 : index
    %c0_97 = arith.constant 0 : index
    %220 = vector.load %arg2[%c0_96, %c0_97] : memref<128x512xbf16, #tpu.memory_space<vmem>>, vector<128x512xbf16>
    %cst_98 = arith.constant dense<0.000000e+00> : vector<8x512xf32>
    %221 = tpu.matmul %219, %220, %cst_98 {dimension_numbers = #tpu.dot_dimension_numbers<[1], [0], [0], [1], [0, 0, 1, 1], [], []>} : vector<8x128xbf16>, vector<128x512xbf16>, vector<8x512xf32> -> vector<8x512xf32>
    %222 = arith.addf %218, %221 : vector<8x512xf32>
    %223 = vector.extract_strided_slice %222 {offsets = [0, 0], sizes = [8, 128], strides = [1, 1]} : vector<8x512xf32> to vector<8x128xf32>
    %224 = arith.negf %223 : vector<8x128xf32>
    %225 = math.exp %224 : vector<8x128xf32>
    %cst_99 = arith.constant 1.000000e+00 : f32
    %226 = vector.broadcast %cst_99 : f32 to vector<8x128xf32>
    %227 = arith.addf %226, %225 : vector<8x128xf32>
    %228 = arith.divf %226, %227 : vector<8x128xf32>
    %229 = vector.extract_strided_slice %222 {offsets = [0, 128], sizes = [8, 128], strides = [1, 1]} : vector<8x512xf32> to vector<8x128xf32>
    %230 = arith.negf %229 : vector<8x128xf32>
    %231 = math.exp %230 : vector<8x128xf32>
    %cst_100 = arith.constant 1.000000e+00 : f32
    %232 = vector.broadcast %cst_100 : f32 to vector<8x128xf32>
    %233 = arith.addf %232, %231 : vector<8x128xf32>
    %234 = arith.divf %232, %233 : vector<8x128xf32>
    %235 = vector.extract_strided_slice %222 {offsets = [0, 256], sizes = [8, 128], strides = [1, 1]} : vector<8x512xf32> to vector<8x128xf32>
    %236 = math.tanh %235 : vector<8x128xf32>
    %237 = vector.extract_strided_slice %222 {offsets = [0, 384], sizes = [8, 128], strides = [1, 1]} : vector<8x512xf32> to vector<8x128xf32>
    %238 = arith.negf %237 : vector<8x128xf32>
    %239 = math.exp %238 : vector<8x128xf32>
    %cst_101 = arith.constant 1.000000e+00 : f32
    %240 = vector.broadcast %cst_101 : f32 to vector<8x128xf32>
    %241 = arith.addf %240, %239 : vector<8x128xf32>
    %242 = arith.divf %240, %241 : vector<8x128xf32>
    %243 = arith.mulf %234, %214 : vector<8x128xf32>
    %244 = arith.mulf %228, %236 : vector<8x128xf32>
    %245 = arith.addf %243, %244 : vector<8x128xf32>
    %246 = math.tanh %245 : vector<8x128xf32>
    %247 = arith.mulf %242, %246 : vector<8x128xf32>
    %c0_102 = arith.constant 0 : index
    %c0_103 = arith.constant 0 : index
    %248 = vector.load %arg9[%c0_102, %c0_103] : memref<8x128xf32, #tpu.memory_space<vmem>>, vector<8x128xf32>
    tpu.vector_store %arg9[%c0_102, %c0_103], %245 {strides = array<i32>} : memref<8x128xf32, #tpu.memory_space<vmem>>, vector<8x128xf32>,
    %c0_104 = arith.constant 0 : index
    %c0_105 = arith.constant 0 : index
    %249 = vector.load %arg8[%c0_104, %c0_105] : memref<8x128xf32, #tpu.memory_space<vmem>>, vector<8x128xf32>
    tpu.vector_store %arg8[%c0_104, %c0_105], %247 {strides = array<i32>} : memref<8x128xf32, #tpu.memory_space<vmem>>, vector<8x128xf32>,
    %250 = arith.truncf %247 : vector<8x128xf32> to vector<8x128xbf16>
    %251 = arith.index_cast %c5_i32 : i32 to index
    %c0_106 = arith.constant 0 : index
    %c0_107 = arith.constant 0 : index
    %252 = vector.load %arg5[%251, %c0_106, %c0_107] : memref<16x8x128xbf16, #tpu.memory_space<vmem>>, vector<1x8x128xbf16>
    %253 = vector.shape_cast %252 : vector<1x8x128xbf16> to vector<8x128xbf16>
    %254 = vector.shape_cast %250 : vector<8x128xbf16> to vector<1x8x128xbf16>
    tpu.vector_store %arg5[%251, %c0_106, %c0_107], %254 {strides = array<i32>} : memref<16x8x128xbf16, #tpu.memory_space<vmem>>, vector<1x8x128xbf16>,
    %c6_i32 = arith.constant 6 : i32
    %c0_108 = arith.constant 0 : index
    %c0_109 = arith.constant 0 : index
    %255 = vector.load %arg8[%c0_108, %c0_109] : memref<8x128xf32, #tpu.memory_space<vmem>>, vector<8x128xf32>
    %c0_110 = arith.constant 0 : index
    %c0_111 = arith.constant 0 : index
    %256 = vector.load %arg9[%c0_110, %c0_111] : memref<8x128xf32, #tpu.memory_space<vmem>>, vector<8x128xf32>
    %257 = arith.index_cast %c6_i32 : i32 to index
    %c0_112 = arith.constant 0 : index
    %c0_113 = arith.constant 0 : index
    %258 = vector.load %arg1[%257, %c0_112, %c0_113] : memref<16x8x512xbf16, #tpu.memory_space<vmem>>, vector<1x8x512xbf16>
    %259 = vector.shape_cast %258 : vector<1x8x512xbf16> to vector<8x512xbf16>
    %260 = arith.extf %259 : vector<8x512xbf16> to vector<8x512xf32>
    %261 = arith.truncf %255 : vector<8x128xf32> to vector<8x128xbf16>
    %c0_114 = arith.constant 0 : index
    %c0_115 = arith.constant 0 : index
    %262 = vector.load %arg2[%c0_114, %c0_115] : memref<128x512xbf16, #tpu.memory_space<vmem>>, vector<128x512xbf16>
    %cst_116 = arith.constant dense<0.000000e+00> : vector<8x512xf32>
    %263 = tpu.matmul %261, %262, %cst_116 {dimension_numbers = #tpu.dot_dimension_numbers<[1], [0], [0], [1], [0, 0, 1, 1], [], []>} : vector<8x128xbf16>, vector<128x512xbf16>, vector<8x512xf32> -> vector<8x512xf32>
    %264 = arith.addf %260, %263 : vector<8x512xf32>
    %265 = vector.extract_strided_slice %264 {offsets = [0, 0], sizes = [8, 128], strides = [1, 1]} : vector<8x512xf32> to vector<8x128xf32>
    %266 = arith.negf %265 : vector<8x128xf32>
    %267 = math.exp %266 : vector<8x128xf32>
    %cst_117 = arith.constant 1.000000e+00 : f32
    %268 = vector.broadcast %cst_117 : f32 to vector<8x128xf32>
    %269 = arith.addf %268, %267 : vector<8x128xf32>
    %270 = arith.divf %268, %269 : vector<8x128xf32>
    %271 = vector.extract_strided_slice %264 {offsets = [0, 128], sizes = [8, 128], strides = [1, 1]} : vector<8x512xf32> to vector<8x128xf32>
    %272 = arith.negf %271 : vector<8x128xf32>
    %273 = math.exp %272 : vector<8x128xf32>
    %cst_118 = arith.constant 1.000000e+00 : f32
    %274 = vector.broadcast %cst_118 : f32 to vector<8x128xf32>
    %275 = arith.addf %274, %273 : vector<8x128xf32>
    %276 = arith.divf %274, %275 : vector<8x128xf32>
    %277 = vector.extract_strided_slice %264 {offsets = [0, 256], sizes = [8, 128], strides = [1, 1]} : vector<8x512xf32> to vector<8x128xf32>
    %278 = math.tanh %277 : vector<8x128xf32>
    %279 = vector.extract_strided_slice %264 {offsets = [0, 384], sizes = [8, 128], strides = [1, 1]} : vector<8x512xf32> to vector<8x128xf32>
    %280 = arith.negf %279 : vector<8x128xf32>
    %281 = math.exp %280 : vector<8x128xf32>
    %cst_119 = arith.constant 1.000000e+00 : f32
    %282 = vector.broadcast %cst_119 : f32 to vector<8x128xf32>
    %283 = arith.addf %282, %281 : vector<8x128xf32>
    %284 = arith.divf %282, %283 : vector<8x128xf32>
    %285 = arith.mulf %276, %256 : vector<8x128xf32>
    %286 = arith.mulf %270, %278 : vector<8x128xf32>
    %287 = arith.addf %285, %286 : vector<8x128xf32>
    %288 = math.tanh %287 : vector<8x128xf32>
    %289 = arith.mulf %284, %288 : vector<8x128xf32>
    %c0_120 = arith.constant 0 : index
    %c0_121 = arith.constant 0 : index
    %290 = vector.load %arg9[%c0_120, %c0_121] : memref<8x128xf32, #tpu.memory_space<vmem>>, vector<8x128xf32>
    tpu.vector_store %arg9[%c0_120, %c0_121], %287 {strides = array<i32>} : memref<8x128xf32, #tpu.memory_space<vmem>>, vector<8x128xf32>,
    %c0_122 = arith.constant 0 : index
    %c0_123 = arith.constant 0 : index
    %291 = vector.load %arg8[%c0_122, %c0_123] : memref<8x128xf32, #tpu.memory_space<vmem>>, vector<8x128xf32>
    tpu.vector_store %arg8[%c0_122, %c0_123], %289 {strides = array<i32>} : memref<8x128xf32, #tpu.memory_space<vmem>>, vector<8x128xf32>,
    %292 = arith.truncf %289 : vector<8x128xf32> to vector<8x128xbf16>
    %293 = arith.index_cast %c6_i32 : i32 to index
    %c0_124 = arith.constant 0 : index
    %c0_125 = arith.constant 0 : index
    %294 = vector.load %arg5[%293, %c0_124, %c0_125] : memref<16x8x128xbf16, #tpu.memory_space<vmem>>, vector<1x8x128xbf16>
    %295 = vector.shape_cast %294 : vector<1x8x128xbf16> to vector<8x128xbf16>
    %296 = vector.shape_cast %292 : vector<8x128xbf16> to vector<1x8x128xbf16>
    tpu.vector_store %arg5[%293, %c0_124, %c0_125], %296 {strides = array<i32>} : memref<16x8x128xbf16, #tpu.memory_space<vmem>>, vector<1x8x128xbf16>,
    %c7_i32 = arith.constant 7 : i32
    %c0_126 = arith.constant 0 : index
    %c0_127 = arith.constant 0 : index
    %297 = vector.load %arg8[%c0_126, %c0_127] : memref<8x128xf32, #tpu.memory_space<vmem>>, vector<8x128xf32>
    %c0_128 = arith.constant 0 : index
    %c0_129 = arith.constant 0 : index
    %298 = vector.load %arg9[%c0_128, %c0_129] : memref<8x128xf32, #tpu.memory_space<vmem>>, vector<8x128xf32>
    %299 = arith.index_cast %c7_i32 : i32 to index
    %c0_130 = arith.constant 0 : index
    %c0_131 = arith.constant 0 : index
    %300 = vector.load %arg1[%299, %c0_130, %c0_131] : memref<16x8x512xbf16, #tpu.memory_space<vmem>>, vector<1x8x512xbf16>
    %301 = vector.shape_cast %300 : vector<1x8x512xbf16> to vector<8x512xbf16>
    %302 = arith.extf %301 : vector<8x512xbf16> to vector<8x512xf32>
    %303 = arith.truncf %297 : vector<8x128xf32> to vector<8x128xbf16>
    %c0_132 = arith.constant 0 : index
    %c0_133 = arith.constant 0 : index
    %304 = vector.load %arg2[%c0_132, %c0_133] : memref<128x512xbf16, #tpu.memory_space<vmem>>, vector<128x512xbf16>
    %cst_134 = arith.constant dense<0.000000e+00> : vector<8x512xf32>
    %305 = tpu.matmul %303, %304, %cst_134 {dimension_numbers = #tpu.dot_dimension_numbers<[1], [0], [0], [1], [0, 0, 1, 1], [], []>} : vector<8x128xbf16>, vector<128x512xbf16>, vector<8x512xf32> -> vector<8x512xf32>
    %306 = arith.addf %302, %305 : vector<8x512xf32>
    %307 = vector.extract_strided_slice %306 {offsets = [0, 0], sizes = [8, 128], strides = [1, 1]} : vector<8x512xf32> to vector<8x128xf32>
    %308 = arith.negf %307 : vector<8x128xf32>
    %309 = math.exp %308 : vector<8x128xf32>
    %cst_135 = arith.constant 1.000000e+00 : f32
    %310 = vector.broadcast %cst_135 : f32 to vector<8x128xf32>
    %311 = arith.addf %310, %309 : vector<8x128xf32>
    %312 = arith.divf %310, %311 : vector<8x128xf32>
    %313 = vector.extract_strided_slice %306 {offsets = [0, 128], sizes = [8, 128], strides = [1, 1]} : vector<8x512xf32> to vector<8x128xf32>
    %314 = arith.negf %313 : vector<8x128xf32>
    %315 = math.exp %314 : vector<8x128xf32>
    %cst_136 = arith.constant 1.000000e+00 : f32
    %316 = vector.broadcast %cst_136 : f32 to vector<8x128xf32>
    %317 = arith.addf %316, %315 : vector<8x128xf32>
    %318 = arith.divf %316, %317 : vector<8x128xf32>
    %319 = vector.extract_strided_slice %306 {offsets = [0, 256], sizes = [8, 128], strides = [1, 1]} : vector<8x512xf32> to vector<8x128xf32>
    %320 = math.tanh %319 : vector<8x128xf32>
    %321 = vector.extract_strided_slice %306 {offsets = [0, 384], sizes = [8, 128], strides = [1, 1]} : vector<8x512xf32> to vector<8x128xf32>
    %322 = arith.negf %321 : vector<8x128xf32>
    %323 = math.exp %322 : vector<8x128xf32>
    %cst_137 = arith.constant 1.000000e+00 : f32
    %324 = vector.broadcast %cst_137 : f32 to vector<8x128xf32>
    %325 = arith.addf %324, %323 : vector<8x128xf32>
    %326 = arith.divf %324, %325 : vector<8x128xf32>
    %327 = arith.mulf %318, %298 : vector<8x128xf32>
    %328 = arith.mulf %312, %320 : vector<8x128xf32>
    %329 = arith.addf %327, %328 : vector<8x128xf32>
    %330 = math.tanh %329 : vector<8x128xf32>
    %331 = arith.mulf %326, %330 : vector<8x128xf32>
    %c0_138 = arith.constant 0 : index
    %c0_139 = arith.constant 0 : index
    %332 = vector.load %arg9[%c0_138, %c0_139] : memref<8x128xf32, #tpu.memory_space<vmem>>, vector<8x128xf32>
    tpu.vector_store %arg9[%c0_138, %c0_139], %329 {strides = array<i32>} : memref<8x128xf32, #tpu.memory_space<vmem>>, vector<8x128xf32>,
    %c0_140 = arith.constant 0 : index
    %c0_141 = arith.constant 0 : index
    %333 = vector.load %arg8[%c0_140, %c0_141] : memref<8x128xf32, #tpu.memory_space<vmem>>, vector<8x128xf32>
    tpu.vector_store %arg8[%c0_140, %c0_141], %331 {strides = array<i32>} : memref<8x128xf32, #tpu.memory_space<vmem>>, vector<8x128xf32>,
    %334 = arith.truncf %331 : vector<8x128xf32> to vector<8x128xbf16>
    %335 = arith.index_cast %c7_i32 : i32 to index
    %c0_142 = arith.constant 0 : index
    %c0_143 = arith.constant 0 : index
    %336 = vector.load %arg5[%335, %c0_142, %c0_143] : memref<16x8x128xbf16, #tpu.memory_space<vmem>>, vector<1x8x128xbf16>
    %337 = vector.shape_cast %336 : vector<1x8x128xbf16> to vector<8x128xbf16>
    %338 = vector.shape_cast %334 : vector<8x128xbf16> to vector<1x8x128xbf16>
    tpu.vector_store %arg5[%335, %c0_142, %c0_143], %338 {strides = array<i32>} : memref<16x8x128xbf16, #tpu.memory_space<vmem>>, vector<1x8x128xbf16>,
    %c8_i32 = arith.constant 8 : i32
    %c0_144 = arith.constant 0 : index
    %c0_145 = arith.constant 0 : index
    %339 = vector.load %arg8[%c0_144, %c0_145] : memref<8x128xf32, #tpu.memory_space<vmem>>, vector<8x128xf32>
    %c0_146 = arith.constant 0 : index
    %c0_147 = arith.constant 0 : index
    %340 = vector.load %arg9[%c0_146, %c0_147] : memref<8x128xf32, #tpu.memory_space<vmem>>, vector<8x128xf32>
    %341 = arith.index_cast %c8_i32 : i32 to index
    %c0_148 = arith.constant 0 : index
    %c0_149 = arith.constant 0 : index
    %342 = vector.load %arg1[%341, %c0_148, %c0_149] : memref<16x8x512xbf16, #tpu.memory_space<vmem>>, vector<1x8x512xbf16>
    %343 = vector.shape_cast %342 : vector<1x8x512xbf16> to vector<8x512xbf16>
    %344 = arith.extf %343 : vector<8x512xbf16> to vector<8x512xf32>
    %345 = arith.truncf %339 : vector<8x128xf32> to vector<8x128xbf16>
    %c0_150 = arith.constant 0 : index
    %c0_151 = arith.constant 0 : index
    %346 = vector.load %arg2[%c0_150, %c0_151] : memref<128x512xbf16, #tpu.memory_space<vmem>>, vector<128x512xbf16>
    %cst_152 = arith.constant dense<0.000000e+00> : vector<8x512xf32>
    %347 = tpu.matmul %345, %346, %cst_152 {dimension_numbers = #tpu.dot_dimension_numbers<[1], [0], [0], [1], [0, 0, 1, 1], [], []>} : vector<8x128xbf16>, vector<128x512xbf16>, vector<8x512xf32> -> vector<8x512xf32>
    %348 = arith.addf %344, %347 : vector<8x512xf32>
    %349 = vector.extract_strided_slice %348 {offsets = [0, 0], sizes = [8, 128], strides = [1, 1]} : vector<8x512xf32> to vector<8x128xf32>
    %350 = arith.negf %349 : vector<8x128xf32>
    %351 = math.exp %350 : vector<8x128xf32>
    %cst_153 = arith.constant 1.000000e+00 : f32
    %352 = vector.broadcast %cst_153 : f32 to vector<8x128xf32>
    %353 = arith.addf %352, %351 : vector<8x128xf32>
    %354 = arith.divf %352, %353 : vector<8x128xf32>
    %355 = vector.extract_strided_slice %348 {offsets = [0, 128], sizes = [8, 128], strides = [1, 1]} : vector<8x512xf32> to vector<8x128xf32>
    %356 = arith.negf %355 : vector<8x128xf32>
    %357 = math.exp %356 : vector<8x128xf32>
    %cst_154 = arith.constant 1.000000e+00 : f32
    %358 = vector.broadcast %cst_154 : f32 to vector<8x128xf32>
    %359 = arith.addf %358, %357 : vector<8x128xf32>
    %360 = arith.divf %358, %359 : vector<8x128xf32>
    %361 = vector.extract_strided_slice %348 {offsets = [0, 256], sizes = [8, 128], strides = [1, 1]} : vector<8x512xf32> to vector<8x128xf32>
    %362 = math.tanh %361 : vector<8x128xf32>
    %363 = vector.extract_strided_slice %348 {offsets = [0, 384], sizes = [8, 128], strides = [1, 1]} : vector<8x512xf32> to vector<8x128xf32>
    %364 = arith.negf %363 : vector<8x128xf32>
    %365 = math.exp %364 : vector<8x128xf32>
    %cst_155 = arith.constant 1.000000e+00 : f32
    %366 = vector.broadcast %cst_155 : f32 to vector<8x128xf32>
    %367 = arith.addf %366, %365 : vector<8x128xf32>
    %368 = arith.divf %366, %367 : vector<8x128xf32>
    %369 = arith.mulf %360, %340 : vector<8x128xf32>
    %370 = arith.mulf %354, %362 : vector<8x128xf32>
    %371 = arith.addf %369, %370 : vector<8x128xf32>
    %372 = math.tanh %371 : vector<8x128xf32>
    %373 = arith.mulf %368, %372 : vector<8x128xf32>
    %c0_156 = arith.constant 0 : index
    %c0_157 = arith.constant 0 : index
    %374 = vector.load %arg9[%c0_156, %c0_157] : memref<8x128xf32, #tpu.memory_space<vmem>>, vector<8x128xf32>
    tpu.vector_store %arg9[%c0_156, %c0_157], %371 {strides = array<i32>} : memref<8x128xf32, #tpu.memory_space<vmem>>, vector<8x128xf32>,
    %c0_158 = arith.constant 0 : index
    %c0_159 = arith.constant 0 : index
    %375 = vector.load %arg8[%c0_158, %c0_159] : memref<8x128xf32, #tpu.memory_space<vmem>>, vector<8x128xf32>
    tpu.vector_store %arg8[%c0_158, %c0_159], %373 {strides = array<i32>} : memref<8x128xf32, #tpu.memory_space<vmem>>, vector<8x128xf32>,
    %376 = arith.truncf %373 : vector<8x128xf32> to vector<8x128xbf16>
    %377 = arith.index_cast %c8_i32 : i32 to index
    %c0_160 = arith.constant 0 : index
    %c0_161 = arith.constant 0 : index
    %378 = vector.load %arg5[%377, %c0_160, %c0_161] : memref<16x8x128xbf16, #tpu.memory_space<vmem>>, vector<1x8x128xbf16>
    %379 = vector.shape_cast %378 : vector<1x8x128xbf16> to vector<8x128xbf16>
    %380 = vector.shape_cast %376 : vector<8x128xbf16> to vector<1x8x128xbf16>
    tpu.vector_store %arg5[%377, %c0_160, %c0_161], %380 {strides = array<i32>} : memref<16x8x128xbf16, #tpu.memory_space<vmem>>, vector<1x8x128xbf16>,
    %c9_i32 = arith.constant 9 : i32
    %c0_162 = arith.constant 0 : index
    %c0_163 = arith.constant 0 : index
    %381 = vector.load %arg8[%c0_162, %c0_163] : memref<8x128xf32, #tpu.memory_space<vmem>>, vector<8x128xf32>
    %c0_164 = arith.constant 0 : index
    %c0_165 = arith.constant 0 : index
    %382 = vector.load %arg9[%c0_164, %c0_165] : memref<8x128xf32, #tpu.memory_space<vmem>>, vector<8x128xf32>
    %383 = arith.index_cast %c9_i32 : i32 to index
    %c0_166 = arith.constant 0 : index
    %c0_167 = arith.constant 0 : index
    %384 = vector.load %arg1[%383, %c0_166, %c0_167] : memref<16x8x512xbf16, #tpu.memory_space<vmem>>, vector<1x8x512xbf16>
    %385 = vector.shape_cast %384 : vector<1x8x512xbf16> to vector<8x512xbf16>
    %386 = arith.extf %385 : vector<8x512xbf16> to vector<8x512xf32>
    %387 = arith.truncf %381 : vector<8x128xf32> to vector<8x128xbf16>
    %c0_168 = arith.constant 0 : index
    %c0_169 = arith.constant 0 : index
    %388 = vector.load %arg2[%c0_168, %c0_169] : memref<128x512xbf16, #tpu.memory_space<vmem>>, vector<128x512xbf16>
    %cst_170 = arith.constant dense<0.000000e+00> : vector<8x512xf32>
    %389 = tpu.matmul %387, %388, %cst_170 {dimension_numbers = #tpu.dot_dimension_numbers<[1], [0], [0], [1], [0, 0, 1, 1], [], []>} : vector<8x128xbf16>, vector<128x512xbf16>, vector<8x512xf32> -> vector<8x512xf32>
    %390 = arith.addf %386, %389 : vector<8x512xf32>
    %391 = vector.extract_strided_slice %390 {offsets = [0, 0], sizes = [8, 128], strides = [1, 1]} : vector<8x512xf32> to vector<8x128xf32>
    %392 = arith.negf %391 : vector<8x128xf32>
    %393 = math.exp %392 : vector<8x128xf32>
    %cst_171 = arith.constant 1.000000e+00 : f32
    %394 = vector.broadcast %cst_171 : f32 to vector<8x128xf32>
    %395 = arith.addf %394, %393 : vector<8x128xf32>
    %396 = arith.divf %394, %395 : vector<8x128xf32>
    %397 = vector.extract_strided_slice %390 {offsets = [0, 128], sizes = [8, 128], strides = [1, 1]} : vector<8x512xf32> to vector<8x128xf32>
    %398 = arith.negf %397 : vector<8x128xf32>
    %399 = math.exp %398 : vector<8x128xf32>
    %cst_172 = arith.constant 1.000000e+00 : f32
    %400 = vector.broadcast %cst_172 : f32 to vector<8x128xf32>
    %401 = arith.addf %400, %399 : vector<8x128xf32>
    %402 = arith.divf %400, %401 : vector<8x128xf32>
    %403 = vector.extract_strided_slice %390 {offsets = [0, 256], sizes = [8, 128], strides = [1, 1]} : vector<8x512xf32> to vector<8x128xf32>
    %404 = math.tanh %403 : vector<8x128xf32>
    %405 = vector.extract_strided_slice %390 {offsets = [0, 384], sizes = [8, 128], strides = [1, 1]} : vector<8x512xf32> to vector<8x128xf32>
    %406 = arith.negf %405 : vector<8x128xf32>
    %407 = math.exp %406 : vector<8x128xf32>
    %cst_173 = arith.constant 1.000000e+00 : f32
    %408 = vector.broadcast %cst_173 : f32 to vector<8x128xf32>
    %409 = arith.addf %408, %407 : vector<8x128xf32>
    %410 = arith.divf %408, %409 : vector<8x128xf32>
    %411 = arith.mulf %402, %382 : vector<8x128xf32>
    %412 = arith.mulf %396, %404 : vector<8x128xf32>
    %413 = arith.addf %411, %412 : vector<8x128xf32>
    %414 = math.tanh %413 : vector<8x128xf32>
    %415 = arith.mulf %410, %414 : vector<8x128xf32>
    %c0_174 = arith.constant 0 : index
    %c0_175 = arith.constant 0 : index
    %416 = vector.load %arg9[%c0_174, %c0_175] : memref<8x128xf32, #tpu.memory_space<vmem>>, vector<8x128xf32>
    tpu.vector_store %arg9[%c0_174, %c0_175], %413 {strides = array<i32>} : memref<8x128xf32, #tpu.memory_space<vmem>>, vector<8x128xf32>,
    %c0_176 = arith.constant 0 : index
    %c0_177 = arith.constant 0 : index
    %417 = vector.load %arg8[%c0_176, %c0_177] : memref<8x128xf32, #tpu.memory_space<vmem>>, vector<8x128xf32>
    tpu.vector_store %arg8[%c0_176, %c0_177], %415 {strides = array<i32>} : memref<8x128xf32, #tpu.memory_space<vmem>>, vector<8x128xf32>,
    %418 = arith.truncf %415 : vector<8x128xf32> to vector<8x128xbf16>
    %419 = arith.index_cast %c9_i32 : i32 to index
    %c0_178 = arith.constant 0 : index
    %c0_179 = arith.constant 0 : index
    %420 = vector.load %arg5[%419, %c0_178, %c0_179] : memref<16x8x128xbf16, #tpu.memory_space<vmem>>, vector<1x8x128xbf16>
    %421 = vector.shape_cast %420 : vector<1x8x128xbf16> to vector<8x128xbf16>
    %422 = vector.shape_cast %418 : vector<8x128xbf16> to vector<1x8x128xbf16>
    tpu.vector_store %arg5[%419, %c0_178, %c0_179], %422 {strides = array<i32>} : memref<16x8x128xbf16, #tpu.memory_space<vmem>>, vector<1x8x128xbf16>,
    %c10_i32 = arith.constant 10 : i32
    %c0_180 = arith.constant 0 : index
    %c0_181 = arith.constant 0 : index
    %423 = vector.load %arg8[%c0_180, %c0_181] : memref<8x128xf32, #tpu.memory_space<vmem>>, vector<8x128xf32>
    %c0_182 = arith.constant 0 : index
    %c0_183 = arith.constant 0 : index
    %424 = vector.load %arg9[%c0_182, %c0_183] : memref<8x128xf32, #tpu.memory_space<vmem>>, vector<8x128xf32>
    %425 = arith.index_cast %c10_i32 : i32 to index
    %c0_184 = arith.constant 0 : index
    %c0_185 = arith.constant 0 : index
    %426 = vector.load %arg1[%425, %c0_184, %c0_185] : memref<16x8x512xbf16, #tpu.memory_space<vmem>>, vector<1x8x512xbf16>
    %427 = vector.shape_cast %426 : vector<1x8x512xbf16> to vector<8x512xbf16>
    %428 = arith.extf %427 : vector<8x512xbf16> to vector<8x512xf32>
    %429 = arith.truncf %423 : vector<8x128xf32> to vector<8x128xbf16>
    %c0_186 = arith.constant 0 : index
    %c0_187 = arith.constant 0 : index
    %430 = vector.load %arg2[%c0_186, %c0_187] : memref<128x512xbf16, #tpu.memory_space<vmem>>, vector<128x512xbf16>
    %cst_188 = arith.constant dense<0.000000e+00> : vector<8x512xf32>
    %431 = tpu.matmul %429, %430, %cst_188 {dimension_numbers = #tpu.dot_dimension_numbers<[1], [0], [0], [1], [0, 0, 1, 1], [], []>} : vector<8x128xbf16>, vector<128x512xbf16>, vector<8x512xf32> -> vector<8x512xf32>
    %432 = arith.addf %428, %431 : vector<8x512xf32>
    %433 = vector.extract_strided_slice %432 {offsets = [0, 0], sizes = [8, 128], strides = [1, 1]} : vector<8x512xf32> to vector<8x128xf32>
    %434 = arith.negf %433 : vector<8x128xf32>
    %435 = math.exp %434 : vector<8x128xf32>
    %cst_189 = arith.constant 1.000000e+00 : f32
    %436 = vector.broadcast %cst_189 : f32 to vector<8x128xf32>
    %437 = arith.addf %436, %435 : vector<8x128xf32>
    %438 = arith.divf %436, %437 : vector<8x128xf32>
    %439 = vector.extract_strided_slice %432 {offsets = [0, 128], sizes = [8, 128], strides = [1, 1]} : vector<8x512xf32> to vector<8x128xf32>
    %440 = arith.negf %439 : vector<8x128xf32>
    %441 = math.exp %440 : vector<8x128xf32>
    %cst_190 = arith.constant 1.000000e+00 : f32
    %442 = vector.broadcast %cst_190 : f32 to vector<8x128xf32>
    %443 = arith.addf %442, %441 : vector<8x128xf32>
    %444 = arith.divf %442, %443 : vector<8x128xf32>
    %445 = vector.extract_strided_slice %432 {offsets = [0, 256], sizes = [8, 128], strides = [1, 1]} : vector<8x512xf32> to vector<8x128xf32>
    %446 = math.tanh %445 : vector<8x128xf32>
    %447 = vector.extract_strided_slice %432 {offsets = [0, 384], sizes = [8, 128], strides = [1, 1]} : vector<8x512xf32> to vector<8x128xf32>
    %448 = arith.negf %447 : vector<8x128xf32>
    %449 = math.exp %448 : vector<8x128xf32>
    %cst_191 = arith.constant 1.000000e+00 : f32
    %450 = vector.broadcast %cst_191 : f32 to vector<8x128xf32>
    %451 = arith.addf %450, %449 : vector<8x128xf32>
    %452 = arith.divf %450, %451 : vector<8x128xf32>
    %453 = arith.mulf %444, %424 : vector<8x128xf32>
    %454 = arith.mulf %438, %446 : vector<8x128xf32>
    %455 = arith.addf %453, %454 : vector<8x128xf32>
    %456 = math.tanh %455 : vector<8x128xf32>
    %457 = arith.mulf %452, %456 : vector<8x128xf32>
    %c0_192 = arith.constant 0 : index
    %c0_193 = arith.constant 0 : index
    %458 = vector.load %arg9[%c0_192, %c0_193] : memref<8x128xf32, #tpu.memory_space<vmem>>, vector<8x128xf32>
    tpu.vector_store %arg9[%c0_192, %c0_193], %455 {strides = array<i32>} : memref<8x128xf32, #tpu.memory_space<vmem>>, vector<8x128xf32>,
    %c0_194 = arith.constant 0 : index
    %c0_195 = arith.constant 0 : index
    %459 = vector.load %arg8[%c0_194, %c0_195] : memref<8x128xf32, #tpu.memory_space<vmem>>, vector<8x128xf32>
    tpu.vector_store %arg8[%c0_194, %c0_195], %457 {strides = array<i32>} : memref<8x128xf32, #tpu.memory_space<vmem>>, vector<8x128xf32>,
    %460 = arith.truncf %457 : vector<8x128xf32> to vector<8x128xbf16>
    %461 = arith.index_cast %c10_i32 : i32 to index
    %c0_196 = arith.constant 0 : index
    %c0_197 = arith.constant 0 : index
    %462 = vector.load %arg5[%461, %c0_196, %c0_197] : memref<16x8x128xbf16, #tpu.memory_space<vmem>>, vector<1x8x128xbf16>
    %463 = vector.shape_cast %462 : vector<1x8x128xbf16> to vector<8x128xbf16>
    %464 = vector.shape_cast %460 : vector<8x128xbf16> to vector<1x8x128xbf16>
    tpu.vector_store %arg5[%461, %c0_196, %c0_197], %464 {strides = array<i32>} : memref<16x8x128xbf16, #tpu.memory_space<vmem>>, vector<1x8x128xbf16>,
    %c11_i32 = arith.constant 11 : i32
    %c0_198 = arith.constant 0 : index
    %c0_199 = arith.constant 0 : index
    %465 = vector.load %arg8[%c0_198, %c0_199] : memref<8x128xf32, #tpu.memory_space<vmem>>, vector<8x128xf32>
    %c0_200 = arith.constant 0 : index
    %c0_201 = arith.constant 0 : index
    %466 = vector.load %arg9[%c0_200, %c0_201] : memref<8x128xf32, #tpu.memory_space<vmem>>, vector<8x128xf32>
    %467 = arith.index_cast %c11_i32 : i32 to index
    %c0_202 = arith.constant 0 : index
    %c0_203 = arith.constant 0 : index
    %468 = vector.load %arg1[%467, %c0_202, %c0_203] : memref<16x8x512xbf16, #tpu.memory_space<vmem>>, vector<1x8x512xbf16>
    %469 = vector.shape_cast %468 : vector<1x8x512xbf16> to vector<8x512xbf16>
    %470 = arith.extf %469 : vector<8x512xbf16> to vector<8x512xf32>
    %471 = arith.truncf %465 : vector<8x128xf32> to vector<8x128xbf16>
    %c0_204 = arith.constant 0 : index
    %c0_205 = arith.constant 0 : index
    %472 = vector.load %arg2[%c0_204, %c0_205] : memref<128x512xbf16, #tpu.memory_space<vmem>>, vector<128x512xbf16>
    %cst_206 = arith.constant dense<0.000000e+00> : vector<8x512xf32>
    %473 = tpu.matmul %471, %472, %cst_206 {dimension_numbers = #tpu.dot_dimension_numbers<[1], [0], [0], [1], [0, 0, 1, 1], [], []>} : vector<8x128xbf16>, vector<128x512xbf16>, vector<8x512xf32> -> vector<8x512xf32>
    %474 = arith.addf %470, %473 : vector<8x512xf32>
    %475 = vector.extract_strided_slice %474 {offsets = [0, 0], sizes = [8, 128], strides = [1, 1]} : vector<8x512xf32> to vector<8x128xf32>
    %476 = arith.negf %475 : vector<8x128xf32>
    %477 = math.exp %476 : vector<8x128xf32>
    %cst_207 = arith.constant 1.000000e+00 : f32
    %478 = vector.broadcast %cst_207 : f32 to vector<8x128xf32>
    %479 = arith.addf %478, %477 : vector<8x128xf32>
    %480 = arith.divf %478, %479 : vector<8x128xf32>
    %481 = vector.extract_strided_slice %474 {offsets = [0, 128], sizes = [8, 128], strides = [1, 1]} : vector<8x512xf32> to vector<8x128xf32>
    %482 = arith.negf %481 : vector<8x128xf32>
    %483 = math.exp %482 : vector<8x128xf32>
    %cst_208 = arith.constant 1.000000e+00 : f32
    %484 = vector.broadcast %cst_208 : f32 to vector<8x128xf32>
    %485 = arith.addf %484, %483 : vector<8x128xf32>
    %486 = arith.divf %484, %485 : vector<8x128xf32>
    %487 = vector.extract_strided_slice %474 {offsets = [0, 256], sizes = [8, 128], strides = [1, 1]} : vector<8x512xf32> to vector<8x128xf32>
    %488 = math.tanh %487 : vector<8x128xf32>
    %489 = vector.extract_strided_slice %474 {offsets = [0, 384], sizes = [8, 128], strides = [1, 1]} : vector<8x512xf32> to vector<8x128xf32>
    %490 = arith.negf %489 : vector<8x128xf32>
    %491 = math.exp %490 : vector<8x128xf32>
    %cst_209 = arith.constant 1.000000e+00 : f32
    %492 = vector.broadcast %cst_209 : f32 to vector<8x128xf32>
    %493 = arith.addf %492, %491 : vector<8x128xf32>
    %494 = arith.divf %492, %493 : vector<8x128xf32>
    %495 = arith.mulf %486, %466 : vector<8x128xf32>
    %496 = arith.mulf %480, %488 : vector<8x128xf32>
    %497 = arith.addf %495, %496 : vector<8x128xf32>
    %498 = math.tanh %497 : vector<8x128xf32>
    %499 = arith.mulf %494, %498 : vector<8x128xf32>
    %c0_210 = arith.constant 0 : index
    %c0_211 = arith.constant 0 : index
    %500 = vector.load %arg9[%c0_210, %c0_211] : memref<8x128xf32, #tpu.memory_space<vmem>>, vector<8x128xf32>
    tpu.vector_store %arg9[%c0_210, %c0_211], %497 {strides = array<i32>} : memref<8x128xf32, #tpu.memory_space<vmem>>, vector<8x128xf32>,
    %c0_212 = arith.constant 0 : index
    %c0_213 = arith.constant 0 : index
    %501 = vector.load %arg8[%c0_212, %c0_213] : memref<8x128xf32, #tpu.memory_space<vmem>>, vector<8x128xf32>
    tpu.vector_store %arg8[%c0_212, %c0_213], %499 {strides = array<i32>} : memref<8x128xf32, #tpu.memory_space<vmem>>, vector<8x128xf32>,
    %502 = arith.truncf %499 : vector<8x128xf32> to vector<8x128xbf16>
    %503 = arith.index_cast %c11_i32 : i32 to index
    %c0_214 = arith.constant 0 : index
    %c0_215 = arith.constant 0 : index
    %504 = vector.load %arg5[%503, %c0_214, %c0_215] : memref<16x8x128xbf16, #tpu.memory_space<vmem>>, vector<1x8x128xbf16>
    %505 = vector.shape_cast %504 : vector<1x8x128xbf16> to vector<8x128xbf16>
    %506 = vector.shape_cast %502 : vector<8x128xbf16> to vector<1x8x128xbf16>
    tpu.vector_store %arg5[%503, %c0_214, %c0_215], %506 {strides = array<i32>} : memref<16x8x128xbf16, #tpu.memory_space<vmem>>, vector<1x8x128xbf16>,
    %c12_i32 = arith.constant 12 : i32
    %c0_216 = arith.constant 0 : index
    %c0_217 = arith.constant 0 : index
    %507 = vector.load %arg8[%c0_216, %c0_217] : memref<8x128xf32, #tpu.memory_space<vmem>>, vector<8x128xf32>
    %c0_218 = arith.constant 0 : index
    %c0_219 = arith.constant 0 : index
    %508 = vector.load %arg9[%c0_218, %c0_219] : memref<8x128xf32, #tpu.memory_space<vmem>>, vector<8x128xf32>
    %509 = arith.index_cast %c12_i32 : i32 to index
    %c0_220 = arith.constant 0 : index
    %c0_221 = arith.constant 0 : index
    %510 = vector.load %arg1[%509, %c0_220, %c0_221] : memref<16x8x512xbf16, #tpu.memory_space<vmem>>, vector<1x8x512xbf16>
    %511 = vector.shape_cast %510 : vector<1x8x512xbf16> to vector<8x512xbf16>
    %512 = arith.extf %511 : vector<8x512xbf16> to vector<8x512xf32>
    %513 = arith.truncf %507 : vector<8x128xf32> to vector<8x128xbf16>
    %c0_222 = arith.constant 0 : index
    %c0_223 = arith.constant 0 : index
    %514 = vector.load %arg2[%c0_222, %c0_223] : memref<128x512xbf16, #tpu.memory_space<vmem>>, vector<128x512xbf16>
    %cst_224 = arith.constant dense<0.000000e+00> : vector<8x512xf32>
    %515 = tpu.matmul %513, %514, %cst_224 {dimension_numbers = #tpu.dot_dimension_numbers<[1], [0], [0], [1], [0, 0, 1, 1], [], []>} : vector<8x128xbf16>, vector<128x512xbf16>, vector<8x512xf32> -> vector<8x512xf32>
    %516 = arith.addf %512, %515 : vector<8x512xf32>
    %517 = vector.extract_strided_slice %516 {offsets = [0, 0], sizes = [8, 128], strides = [1, 1]} : vector<8x512xf32> to vector<8x128xf32>
    %518 = arith.negf %517 : vector<8x128xf32>
    %519 = math.exp %518 : vector<8x128xf32>
    %cst_225 = arith.constant 1.000000e+00 : f32
    %520 = vector.broadcast %cst_225 : f32 to vector<8x128xf32>
    %521 = arith.addf %520, %519 : vector<8x128xf32>
    %522 = arith.divf %520, %521 : vector<8x128xf32>
    %523 = vector.extract_strided_slice %516 {offsets = [0, 128], sizes = [8, 128], strides = [1, 1]} : vector<8x512xf32> to vector<8x128xf32>
    %524 = arith.negf %523 : vector<8x128xf32>
    %525 = math.exp %524 : vector<8x128xf32>
    %cst_226 = arith.constant 1.000000e+00 : f32
    %526 = vector.broadcast %cst_226 : f32 to vector<8x128xf32>
    %527 = arith.addf %526, %525 : vector<8x128xf32>
    %528 = arith.divf %526, %527 : vector<8x128xf32>
    %529 = vector.extract_strided_slice %516 {offsets = [0, 256], sizes = [8, 128], strides = [1, 1]} : vector<8x512xf32> to vector<8x128xf32>
    %530 = math.tanh %529 : vector<8x128xf32>
    %531 = vector.extract_strided_slice %516 {offsets = [0, 384], sizes = [8, 128], strides = [1, 1]} : vector<8x512xf32> to vector<8x128xf32>
    %532 = arith.negf %531 : vector<8x128xf32>
    %533 = math.exp %532 : vector<8x128xf32>
    %cst_227 = arith.constant 1.000000e+00 : f32
    %534 = vector.broadcast %cst_227 : f32 to vector<8x128xf32>
    %535 = arith.addf %534, %533 : vector<8x128xf32>
    %536 = arith.divf %534, %535 : vector<8x128xf32>
    %537 = arith.mulf %528, %508 : vector<8x128xf32>
    %538 = arith.mulf %522, %530 : vector<8x128xf32>
    %539 = arith.addf %537, %538 : vector<8x128xf32>
    %540 = math.tanh %539 : vector<8x128xf32>
    %541 = arith.mulf %536, %540 : vector<8x128xf32>
    %c0_228 = arith.constant 0 : index
    %c0_229 = arith.constant 0 : index
    %542 = vector.load %arg9[%c0_228, %c0_229] : memref<8x128xf32, #tpu.memory_space<vmem>>, vector<8x128xf32>
    tpu.vector_store %arg9[%c0_228, %c0_229], %539 {strides = array<i32>} : memref<8x128xf32, #tpu.memory_space<vmem>>, vector<8x128xf32>,
    %c0_230 = arith.constant 0 : index
    %c0_231 = arith.constant 0 : index
    %543 = vector.load %arg8[%c0_230, %c0_231] : memref<8x128xf32, #tpu.memory_space<vmem>>, vector<8x128xf32>
    tpu.vector_store %arg8[%c0_230, %c0_231], %541 {strides = array<i32>} : memref<8x128xf32, #tpu.memory_space<vmem>>, vector<8x128xf32>,
    %544 = arith.truncf %541 : vector<8x128xf32> to vector<8x128xbf16>
    %545 = arith.index_cast %c12_i32 : i32 to index
    %c0_232 = arith.constant 0 : index
    %c0_233 = arith.constant 0 : index
    %546 = vector.load %arg5[%545, %c0_232, %c0_233] : memref<16x8x128xbf16, #tpu.memory_space<vmem>>, vector<1x8x128xbf16>
    %547 = vector.shape_cast %546 : vector<1x8x128xbf16> to vector<8x128xbf16>
    %548 = vector.shape_cast %544 : vector<8x128xbf16> to vector<1x8x128xbf16>
    tpu.vector_store %arg5[%545, %c0_232, %c0_233], %548 {strides = array<i32>} : memref<16x8x128xbf16, #tpu.memory_space<vmem>>, vector<1x8x128xbf16>,
    %c13_i32 = arith.constant 13 : i32
    %c0_234 = arith.constant 0 : index
    %c0_235 = arith.constant 0 : index
    %549 = vector.load %arg8[%c0_234, %c0_235] : memref<8x128xf32, #tpu.memory_space<vmem>>, vector<8x128xf32>
    %c0_236 = arith.constant 0 : index
    %c0_237 = arith.constant 0 : index
    %550 = vector.load %arg9[%c0_236, %c0_237] : memref<8x128xf32, #tpu.memory_space<vmem>>, vector<8x128xf32>
    %551 = arith.index_cast %c13_i32 : i32 to index
    %c0_238 = arith.constant 0 : index
    %c0_239 = arith.constant 0 : index
    %552 = vector.load %arg1[%551, %c0_238, %c0_239] : memref<16x8x512xbf16, #tpu.memory_space<vmem>>, vector<1x8x512xbf16>
    %553 = vector.shape_cast %552 : vector<1x8x512xbf16> to vector<8x512xbf16>
    %554 = arith.extf %553 : vector<8x512xbf16> to vector<8x512xf32>
    %555 = arith.truncf %549 : vector<8x128xf32> to vector<8x128xbf16>
    %c0_240 = arith.constant 0 : index
    %c0_241 = arith.constant 0 : index
    %556 = vector.load %arg2[%c0_240, %c0_241] : memref<128x512xbf16, #tpu.memory_space<vmem>>, vector<128x512xbf16>
    %cst_242 = arith.constant dense<0.000000e+00> : vector<8x512xf32>
    %557 = tpu.matmul %555, %556, %cst_242 {dimension_numbers = #tpu.dot_dimension_numbers<[1], [0], [0], [1], [0, 0, 1, 1], [], []>} : vector<8x128xbf16>, vector<128x512xbf16>, vector<8x512xf32> -> vector<8x512xf32>
    %558 = arith.addf %554, %557 : vector<8x512xf32>
    %559 = vector.extract_strided_slice %558 {offsets = [0, 0], sizes = [8, 128], strides = [1, 1]} : vector<8x512xf32> to vector<8x128xf32>
    %560 = arith.negf %559 : vector<8x128xf32>
    %561 = math.exp %560 : vector<8x128xf32>
    %cst_243 = arith.constant 1.000000e+00 : f32
    %562 = vector.broadcast %cst_243 : f32 to vector<8x128xf32>
    %563 = arith.addf %562, %561 : vector<8x128xf32>
    %564 = arith.divf %562, %563 : vector<8x128xf32>
    %565 = vector.extract_strided_slice %558 {offsets = [0, 128], sizes = [8, 128], strides = [1, 1]} : vector<8x512xf32> to vector<8x128xf32>
    %566 = arith.negf %565 : vector<8x128xf32>
    %567 = math.exp %566 : vector<8x128xf32>
    %cst_244 = arith.constant 1.000000e+00 : f32
    %568 = vector.broadcast %cst_244 : f32 to vector<8x128xf32>
    %569 = arith.addf %568, %567 : vector<8x128xf32>
    %570 = arith.divf %568, %569 : vector<8x128xf32>
    %571 = vector.extract_strided_slice %558 {offsets = [0, 256], sizes = [8, 128], strides = [1, 1]} : vector<8x512xf32> to vector<8x128xf32>
    %572 = math.tanh %571 : vector<8x128xf32>
    %573 = vector.extract_strided_slice %558 {offsets = [0, 384], sizes = [8, 128], strides = [1, 1]} : vector<8x512xf32> to vector<8x128xf32>
    %574 = arith.negf %573 : vector<8x128xf32>
    %575 = math.exp %574 : vector<8x128xf32>
    %cst_245 = arith.constant 1.000000e+00 : f32
    %576 = vector.broadcast %cst_245 : f32 to vector<8x128xf32>
    %577 = arith.addf %576, %575 : vector<8x128xf32>
    %578 = arith.divf %576, %577 : vector<8x128xf32>
    %579 = arith.mulf %570, %550 : vector<8x128xf32>
    %580 = arith.mulf %564, %572 : vector<8x128xf32>
    %581 = arith.addf %579, %580 : vector<8x128xf32>
    %582 = math.tanh %581 : vector<8x128xf32>
    %583 = arith.mulf %578, %582 : vector<8x128xf32>
    %c0_246 = arith.constant 0 : index
    %c0_247 = arith.constant 0 : index
    %584 = vector.load %arg9[%c0_246, %c0_247] : memref<8x128xf32, #tpu.memory_space<vmem>>, vector<8x128xf32>
    tpu.vector_store %arg9[%c0_246, %c0_247], %581 {strides = array<i32>} : memref<8x128xf32, #tpu.memory_space<vmem>>, vector<8x128xf32>,
    %c0_248 = arith.constant 0 : index
    %c0_249 = arith.constant 0 : index
    %585 = vector.load %arg8[%c0_248, %c0_249] : memref<8x128xf32, #tpu.memory_space<vmem>>, vector<8x128xf32>
    tpu.vector_store %arg8[%c0_248, %c0_249], %583 {strides = array<i32>} : memref<8x128xf32, #tpu.memory_space<vmem>>, vector<8x128xf32>,
    %586 = arith.truncf %583 : vector<8x128xf32> to vector<8x128xbf16>
    %587 = arith.index_cast %c13_i32 : i32 to index
    %c0_250 = arith.constant 0 : index
    %c0_251 = arith.constant 0 : index
    %588 = vector.load %arg5[%587, %c0_250, %c0_251] : memref<16x8x128xbf16, #tpu.memory_space<vmem>>, vector<1x8x128xbf16>
    %589 = vector.shape_cast %588 : vector<1x8x128xbf16> to vector<8x128xbf16>
    %590 = vector.shape_cast %586 : vector<8x128xbf16> to vector<1x8x128xbf16>
    tpu.vector_store %arg5[%587, %c0_250, %c0_251], %590 {strides = array<i32>} : memref<16x8x128xbf16, #tpu.memory_space<vmem>>, vector<1x8x128xbf16>,
    %c14_i32 = arith.constant 14 : i32
    %c0_252 = arith.constant 0 : index
    %c0_253 = arith.constant 0 : index
    %591 = vector.load %arg8[%c0_252, %c0_253] : memref<8x128xf32, #tpu.memory_space<vmem>>, vector<8x128xf32>
    %c0_254 = arith.constant 0 : index
    %c0_255 = arith.constant 0 : index
    %592 = vector.load %arg9[%c0_254, %c0_255] : memref<8x128xf32, #tpu.memory_space<vmem>>, vector<8x128xf32>
    %593 = arith.index_cast %c14_i32 : i32 to index
    %c0_256 = arith.constant 0 : index
    %c0_257 = arith.constant 0 : index
    %594 = vector.load %arg1[%593, %c0_256, %c0_257] : memref<16x8x512xbf16, #tpu.memory_space<vmem>>, vector<1x8x512xbf16>
    %595 = vector.shape_cast %594 : vector<1x8x512xbf16> to vector<8x512xbf16>
    %596 = arith.extf %595 : vector<8x512xbf16> to vector<8x512xf32>
    %597 = arith.truncf %591 : vector<8x128xf32> to vector<8x128xbf16>
    %c0_258 = arith.constant 0 : index
    %c0_259 = arith.constant 0 : index
    %598 = vector.load %arg2[%c0_258, %c0_259] : memref<128x512xbf16, #tpu.memory_space<vmem>>, vector<128x512xbf16>
    %cst_260 = arith.constant dense<0.000000e+00> : vector<8x512xf32>
    %599 = tpu.matmul %597, %598, %cst_260 {dimension_numbers = #tpu.dot_dimension_numbers<[1], [0], [0], [1], [0, 0, 1, 1], [], []>} : vector<8x128xbf16>, vector<128x512xbf16>, vector<8x512xf32> -> vector<8x512xf32>
    %600 = arith.addf %596, %599 : vector<8x512xf32>
    %601 = vector.extract_strided_slice %600 {offsets = [0, 0], sizes = [8, 128], strides = [1, 1]} : vector<8x512xf32> to vector<8x128xf32>
    %602 = arith.negf %601 : vector<8x128xf32>
    %603 = math.exp %602 : vector<8x128xf32>
    %cst_261 = arith.constant 1.000000e+00 : f32
    %604 = vector.broadcast %cst_261 : f32 to vector<8x128xf32>
    %605 = arith.addf %604, %603 : vector<8x128xf32>
    %606 = arith.divf %604, %605 : vector<8x128xf32>
    %607 = vector.extract_strided_slice %600 {offsets = [0, 128], sizes = [8, 128], strides = [1, 1]} : vector<8x512xf32> to vector<8x128xf32>
    %608 = arith.negf %607 : vector<8x128xf32>
    %609 = math.exp %608 : vector<8x128xf32>
    %cst_262 = arith.constant 1.000000e+00 : f32
    %610 = vector.broadcast %cst_262 : f32 to vector<8x128xf32>
    %611 = arith.addf %610, %609 : vector<8x128xf32>
    %612 = arith.divf %610, %611 : vector<8x128xf32>
    %613 = vector.extract_strided_slice %600 {offsets = [0, 256], sizes = [8, 128], strides = [1, 1]} : vector<8x512xf32> to vector<8x128xf32>
    %614 = math.tanh %613 : vector<8x128xf32>
    %615 = vector.extract_strided_slice %600 {offsets = [0, 384], sizes = [8, 128], strides = [1, 1]} : vector<8x512xf32> to vector<8x128xf32>
    %616 = arith.negf %615 : vector<8x128xf32>
    %617 = math.exp %616 : vector<8x128xf32>
    %cst_263 = arith.constant 1.000000e+00 : f32
    %618 = vector.broadcast %cst_263 : f32 to vector<8x128xf32>
    %619 = arith.addf %618, %617 : vector<8x128xf32>
    %620 = arith.divf %618, %619 : vector<8x128xf32>
    %621 = arith.mulf %612, %592 : vector<8x128xf32>
    %622 = arith.mulf %606, %614 : vector<8x128xf32>
    %623 = arith.addf %621, %622 : vector<8x128xf32>
    %624 = math.tanh %623 : vector<8x128xf32>
    %625 = arith.mulf %620, %624 : vector<8x128xf32>
    %c0_264 = arith.constant 0 : index
    %c0_265 = arith.constant 0 : index
    %626 = vector.load %arg9[%c0_264, %c0_265] : memref<8x128xf32, #tpu.memory_space<vmem>>, vector<8x128xf32>
    tpu.vector_store %arg9[%c0_264, %c0_265], %623 {strides = array<i32>} : memref<8x128xf32, #tpu.memory_space<vmem>>, vector<8x128xf32>,
    %c0_266 = arith.constant 0 : index
    %c0_267 = arith.constant 0 : index
    %627 = vector.load %arg8[%c0_266, %c0_267] : memref<8x128xf32, #tpu.memory_space<vmem>>, vector<8x128xf32>
    tpu.vector_store %arg8[%c0_266, %c0_267], %625 {strides = array<i32>} : memref<8x128xf32, #tpu.memory_space<vmem>>, vector<8x128xf32>,
    %628 = arith.truncf %625 : vector<8x128xf32> to vector<8x128xbf16>
    %629 = arith.index_cast %c14_i32 : i32 to index
    %c0_268 = arith.constant 0 : index
    %c0_269 = arith.constant 0 : index
    %630 = vector.load %arg5[%629, %c0_268, %c0_269] : memref<16x8x128xbf16, #tpu.memory_space<vmem>>, vector<1x8x128xbf16>
    %631 = vector.shape_cast %630 : vector<1x8x128xbf16> to vector<8x128xbf16>
    %632 = vector.shape_cast %628 : vector<8x128xbf16> to vector<1x8x128xbf16>
    tpu.vector_store %arg5[%629, %c0_268, %c0_269], %632 {strides = array<i32>} : memref<16x8x128xbf16, #tpu.memory_space<vmem>>, vector<1x8x128xbf16>,
    %c15_i32 = arith.constant 15 : i32
    %c0_270 = arith.constant 0 : index
    %c0_271 = arith.constant 0 : index
    %633 = vector.load %arg8[%c0_270, %c0_271] : memref<8x128xf32, #tpu.memory_space<vmem>>, vector<8x128xf32>
    %c0_272 = arith.constant 0 : index
    %c0_273 = arith.constant 0 : index
    %634 = vector.load %arg9[%c0_272, %c0_273] : memref<8x128xf32, #tpu.memory_space<vmem>>, vector<8x128xf32>
    %635 = arith.index_cast %c15_i32 : i32 to index
    %c0_274 = arith.constant 0 : index
    %c0_275 = arith.constant 0 : index
    %636 = vector.load %arg1[%635, %c0_274, %c0_275] : memref<16x8x512xbf16, #tpu.memory_space<vmem>>, vector<1x8x512xbf16>
    %637 = vector.shape_cast %636 : vector<1x8x512xbf16> to vector<8x512xbf16>
    %638 = arith.extf %637 : vector<8x512xbf16> to vector<8x512xf32>
    %639 = arith.truncf %633 : vector<8x128xf32> to vector<8x128xbf16>
    %c0_276 = arith.constant 0 : index
    %c0_277 = arith.constant 0 : index
    %640 = vector.load %arg2[%c0_276, %c0_277] : memref<128x512xbf16, #tpu.memory_space<vmem>>, vector<128x512xbf16>
    %cst_278 = arith.constant dense<0.000000e+00> : vector<8x512xf32>
    %641 = tpu.matmul %639, %640, %cst_278 {dimension_numbers = #tpu.dot_dimension_numbers<[1], [0], [0], [1], [0, 0, 1, 1], [], []>} : vector<8x128xbf16>, vector<128x512xbf16>, vector<8x512xf32> -> vector<8x512xf32>
    %642 = arith.addf %638, %641 : vector<8x512xf32>
    %643 = vector.extract_strided_slice %642 {offsets = [0, 0], sizes = [8, 128], strides = [1, 1]} : vector<8x512xf32> to vector<8x128xf32>
    %644 = arith.negf %643 : vector<8x128xf32>
    %645 = math.exp %644 : vector<8x128xf32>
    %cst_279 = arith.constant 1.000000e+00 : f32
    %646 = vector.broadcast %cst_279 : f32 to vector<8x128xf32>
    %647 = arith.addf %646, %645 : vector<8x128xf32>
    %648 = arith.divf %646, %647 : vector<8x128xf32>
    %649 = vector.extract_strided_slice %642 {offsets = [0, 128], sizes = [8, 128], strides = [1, 1]} : vector<8x512xf32> to vector<8x128xf32>
    %650 = arith.negf %649 : vector<8x128xf32>
    %651 = math.exp %650 : vector<8x128xf32>
    %cst_280 = arith.constant 1.000000e+00 : f32
    %652 = vector.broadcast %cst_280 : f32 to vector<8x128xf32>
    %653 = arith.addf %652, %651 : vector<8x128xf32>
    %654 = arith.divf %652, %653 : vector<8x128xf32>
    %655 = vector.extract_strided_slice %642 {offsets = [0, 256], sizes = [8, 128], strides = [1, 1]} : vector<8x512xf32> to vector<8x128xf32>
    %656 = math.tanh %655 : vector<8x128xf32>
    %657 = vector.extract_strided_slice %642 {offsets = [0, 384], sizes = [8, 128], strides = [1, 1]} : vector<8x512xf32> to vector<8x128xf32>
    %658 = arith.negf %657 : vector<8x128xf32>
    %659 = math.exp %658 : vector<8x128xf32>
    %cst_281 = arith.constant 1.000000e+00 : f32
    %660 = vector.broadcast %cst_281 : f32 to vector<8x128xf32>
    %661 = arith.addf %660, %659 : vector<8x128xf32>
    %662 = arith.divf %660, %661 : vector<8x128xf32>
    %663 = arith.mulf %654, %634 : vector<8x128xf32>
    %664 = arith.mulf %648, %656 : vector<8x128xf32>
    %665 = arith.addf %663, %664 : vector<8x128xf32>
    %666 = math.tanh %665 : vector<8x128xf32>
    %667 = arith.mulf %662, %666 : vector<8x128xf32>
    %c0_282 = arith.constant 0 : index
    %c0_283 = arith.constant 0 : index
    %668 = vector.load %arg9[%c0_282, %c0_283] : memref<8x128xf32, #tpu.memory_space<vmem>>, vector<8x128xf32>
    tpu.vector_store %arg9[%c0_282, %c0_283], %665 {strides = array<i32>} : memref<8x128xf32, #tpu.memory_space<vmem>>, vector<8x128xf32>,
    %c0_284 = arith.constant 0 : index
    %c0_285 = arith.constant 0 : index
    %669 = vector.load %arg8[%c0_284, %c0_285] : memref<8x128xf32, #tpu.memory_space<vmem>>, vector<8x128xf32>
    tpu.vector_store %arg8[%c0_284, %c0_285], %667 {strides = array<i32>} : memref<8x128xf32, #tpu.memory_space<vmem>>, vector<8x128xf32>,
    %670 = arith.truncf %667 : vector<8x128xf32> to vector<8x128xbf16>
    %671 = arith.index_cast %c15_i32 : i32 to index
    %c0_286 = arith.constant 0 : index
    %c0_287 = arith.constant 0 : index
    %672 = vector.load %arg5[%671, %c0_286, %c0_287] : memref<16x8x128xbf16, #tpu.memory_space<vmem>>, vector<1x8x128xbf16>
    %673 = vector.shape_cast %672 : vector<1x8x128xbf16> to vector<8x128xbf16>
    %674 = vector.shape_cast %670 : vector<8x128xbf16> to vector<1x8x128xbf16>
    tpu.vector_store %arg5[%671, %c0_286, %c0_287], %674 {strides = array<i32>} : memref<16x8x128xbf16, #tpu.memory_space<vmem>>, vector<1x8x128xbf16>,
    %c16_i32 = arith.constant 16 : i32
    %c0_i32_288 = arith.constant 0 : i32
    %675 = arith.cmpi eq, %arg0, %c0_i32_288 : i32
    %676 = arith.extui %675 : i1 to i32
    %c0_i32_289 = arith.constant 0 : i32
    %677 = arith.cmpi ne, %676, %c0_i32_289 : i32
    scf.if %677 {
      %c0_290 = arith.constant 0 : index
      %c0_291 = arith.constant 0 : index
      %678 = vector.load %arg8[%c0_290, %c0_291] : memref<8x128xf32, #tpu.memory_space<vmem>>, vector<8x128xf32>
      %c0_292 = arith.constant 0 : index
      %c0_293 = arith.constant 0 : index
      %679 = vector.load %arg6[%c0_292, %c0_293] : memref<8x128xf32, #tpu.memory_space<vmem>>, vector<8x128xf32>
      tpu.vector_store %arg6[%c0_292, %c0_293], %678 {strides = array<i32>} : memref<8x128xf32, #tpu.memory_space<vmem>>, vector<8x128xf32>,
      %c0_294 = arith.constant 0 : index
      %c0_295 = arith.constant 0 : index
      %680 = vector.load %arg9[%c0_294, %c0_295] : memref<8x128xf32, #tpu.memory_space<vmem>>, vector<8x128xf32>
      %c0_296 = arith.constant 0 : index
      %c0_297 = arith.constant 0 : index
      %681 = vector.load %arg7[%c0_296, %c0_297] : memref<8x128xf32, #tpu.memory_space<vmem>>, vector<8x128xf32>
      tpu.vector_store %arg7[%c0_296, %c0_297], %680 {strides = array<i32>} : memref<8x128xf32, #tpu.memory_space<vmem>>, vector<8x128xf32>,
    } else {
    }
    return
  }
  func.func @transform_0(%arg0: i32) -> (i32, i32, i32) {
    %c0_i32 = arith.constant 0 : i32
    %c0_i32_0 = arith.constant 0 : i32
    %c0_i32_1 = arith.constant 0 : i32
    return %arg0, %c0_i32, %c0_i32_0 : i32, i32, i32
  }
  func.func @transform_1(%arg0: i32) -> (i32, i32) {
    %c0_i32 = arith.constant 0 : i32
    %c0_i32_0 = arith.constant 0 : i32
    %c0_i32_1 = arith.constant 0 : i32
    return %c0_i32, %c0_i32_0 : i32, i32
  }
  func.func @transform_2(%arg0: i32) -> (i32, i32) {
    %c0_i32 = arith.constant 0 : i32
    %c0_i32_0 = arith.constant 0 : i32
    %c0_i32_1 = arith.constant 0 : i32
    return %c0_i32, %c0_i32_0 : i32, i32
  }
  func.func @transform_3(%arg0: i32) -> (i32, i32) {
    %c0_i32 = arith.constant 0 : i32
    %c0_i32_0 = arith.constant 0 : i32
    %c0_i32_1 = arith.constant 0 : i32
    return %c0_i32, %c0_i32_0 : i32, i32
  }
  func.func @transform_4(%arg0: i32) -> (i32, i32, i32) {
    %c0_i32 = arith.constant 0 : i32
    %c0_i32_0 = arith.constant 0 : i32
    %c0_i32_1 = arith.constant 0 : i32
    return %arg0, %c0_i32, %c0_i32_0 : i32, i32, i32
  }
  func.func @transform_5(%arg0: i32) -> (i32, i32) {
    %c0_i32 = arith.constant 0 : i32
    %c0_i32_0 = arith.constant 0 : i32
    %c0_i32_1 = arith.constant 0 : i32
    return %c0_i32, %c0_i32_0 : i32, i32
  }
  func.func @transform_6(%arg0: i32) -> (i32, i32) {
    %c0_i32 = arith.constant 0 : i32
    %c0_i32_0 = arith.constant 0 : i32
    %c0_i32_1 = arith.constant 0 : i32
    return %c0_i32, %c0_i32_0 : i32, i32
  }
}

</mosaic_0001>

<llo_original>
// kernel: rnn_model_forward.5
$region0: #{rnn_model_forward.5}
  #allocation0 [shape = 'u32[]', space=smem, size = 0x4, offset = 0x4, fixed_abs, tag = 'smem constant byte address 0x4 - core index']
  #allocation1 [shape = 'u32[144,128]{1,0:T(1,128)}', space=vmem, size = 0x12000, scoped, tag = 'internal scratch']
  #allocation2 [shape = 'f32[128,256]{1,0:T(8,128)}', space=vmem, size = 0x20000, scoped, tag = 'scratch operand']
  %s0 = inlined_call_operand.vmem [shape: bf16[128,128], index: 0, kind: input, shape index: {}]
  %s1 = inlined_call_operand.vmem [shape: bf16[128,512], index: 1, kind: input, shape index: {}]
  %s2 = inlined_call_operand.vmem [shape: f32[1,512], index: 2, kind: input, shape index: {}]
  %s3 = inlined_call_operand.vmem [shape: bf16[128,512], index: 3, kind: output, shape index: {}]
  %s4 = sld [smem:[#allocation0]]
  $region125: #{rnn_model_forward.5} parent=0
    _
  %s6 = ssub.s32 1, %s4
  %s7 = scalar_select 0, %s6, %s4
  $region1: #{rnn_model_forward.5} parent=0
    #allocation3 [shape = 'u8[131072]{0}', space=vmem, size = 0x20000, scoped, tag = 'input window, operand 1']
    #allocation4 [shape = 'u8[131072]{0}', space=vmem, size = 0x20000, scoped, tag = 'output window, operand 0']
    loop: start=0, step=1, limit=4
    $region2: #{rnn_model_forward.5} parent=1 // loop_pre_header
      _
    $region3: #{rnn_model_forward.5} parent=1 // loop_header
      %s9 = sphi 0, %s13
      %p10 = scmp.ge.s32.totalorder %s9, 4
      %s16 = sphi 0, %s35
      %s17 = sphi 0, %s31
      %s18 = sphi 0, %s27
      %s19 = sphi 0, %s16
      %s20 = sphi 0, %s17
      %s21 = sphi 0, %s18
      %s22 = sphi 0, %s19
      %s23 = sphi 0, %s20
      %s24 = sphi 0, %s21
      %s40 = sphi 0, %s42
      %s43 = sphi 0, %s40
      %s44 = sphi 0, %s43
      %s60 = sphi 0, %s44
      %s68 = sphi 0, %s70
      %s71 = sphi 0, %s68
      %s72 = sphi 0, %s71
      %s88 = sphi 0, %s72
      %s94 = sphi 0, %s96
      %s97 = sphi 0, %s94
      %s98 = sphi 0, %s97
      %s114 = sphi 0, %s98
      %s122 = sphi 0, %s124
      %s125 = sphi 0, %s122
      %s126 = sphi 0, %s125
      %s142 = sphi 0, %s126
    $region4: #{rnn_model_forward.5} parent=1 // loop_header_branch
      %12 = sbr.rel (%p10) target = $region8
    $region5: #{rnn_model_forward.5} parent=1 // loop_body
      %s14 = ssub.s32 %s9, 1
      %s15 = ssub.s32 %s9, 2
      %s25 = sadd.s32 1, %s18
      %p26 = scmp.ge.s32.totalorder %s25, 1
      %s27 = scalar_select %p26, 0, %s25
      %s28 = sadd.s32 1, %s17
      %s29 = scalar_select %p26, %s28, %s17
      %p30 = scmp.ge.s32.totalorder %s29, 2
      %s31 = scalar_select %p30, 0, %s29
      %s32 = sadd.s32 1, %s16
      %s33 = scalar_select %p30, %s32, %s16
      %p34 = scmp.ge.s32.totalorder %s33, 1
      %s35 = scalar_select %p34, 0, %s33
      %s36 = ssub.s32 %s16, %s35
      %s37 = ssub.s32 %s18, %s27
      %s38 = sor.u32 %s36, %s37
      %p39 = scmp.eq.s32.totalorder %s38, 0
      %s41 = sadd.s32 %s40, 1
      %s42 = scalar_select %p39, %s40, %s41
      %p45 = pneg %p39
      %p46 = scmp.eq.s32.totalorder %s9, 1
      %p47 = por %p45, %p46
      %p48 = scmp.ne.s32.totalorder %s40, %s43
      %p49 = scmp.eq.s32.totalorder %s9, 0
      %p50 = por %p48, %p49
      %p51 = scmp.ne.s32.totalorder %s40, %s43
      %p52 = scmp.eq.s32.totalorder %s14, 1
      %p53 = por %p51, %p52
      %p54 = scmp.ne.s32.totalorder %s43, %s44
      %p55 = scmp.eq.s32.totalorder %s14, 0
      %p56 = por %p54, %p55
      %p57 = scmp.ne.s32.totalorder %s43, %s44
      %p58 = scmp.eq.s32.totalorder %s15, 1
      %p59 = por %p57, %p58
      %p61 = scmp.ne.s32.totalorder %s44, %s60
      %p62 = scmp.eq.s32.totalorder %s15, 0
      %p63 = por %p61, %p62
      %s64 = ssub.s32 %s18, %s27
      %s65 = ssub.s32 %s17, %s31
      %s66 = sor.u32 %s64, %s65
      %p67 = scmp.eq.s32.totalorder %s66, 0
      %s69 = sadd.s32 %s68, 1
      %s70 = scalar_select %p67, %s68, %s69
      %p73 = pneg %p67
      %p74 = scmp.eq.s32.totalorder %s9, 1
      %p75 = por %p73, %p74
      %p76 = scmp.ne.s32.totalorder %s68, %s71
      %p77 = scmp.eq.s32.totalorder %s9, 0
      %p78 = por %p76, %p77
      %p79 = scmp.ne.s32.totalorder %s68, %s71
      %p80 = scmp.eq.s32.totalorder %s14, 1
      %p81 = por %p79, %p80
      %p82 = scmp.ne.s32.totalorder %s71, %s72
      %p83 = scmp.eq.s32.totalorder %s14, 0
      %p84 = por %p82, %p83
      %p85 = scmp.ne.s32.totalorder %s71, %s72
      %p86 = scmp.eq.s32.totalorder %s15, 1
      %p87 = por %p85, %p86
      %p89 = scmp.ne.s32.totalorder %s72, %s88
      %p90 = scmp.eq.s32.totalorder %s15, 0
      %p91 = por %p89, %p90
      %s92 = ssub.s32 %s17, %s31
      %p93 = scmp.eq.s32.totalorder %s92, 0
      %s95 = sadd.s32 %s94, 1
      %s96 = scalar_select %p93, %s94, %s95
      %p99 = pneg %p93
      %p100 = scmp.eq.s32.totalorder %s9, 1
      %p101 = por %p99, %p100
      %p102 = scmp.ne.s32.totalorder %s94, %s97
      %p103 = scmp.eq.s32.totalorder %s9, 0
      %p104 = por %p102, %p103
      %p105 = scmp.ne.s32.totalorder %s94, %s97
      %p106 = scmp.eq.s32.totalorder %s14, 1
      %p107 = por %p105, %p106
      %p108 = scmp.ne.s32.totalorder %s97, %s98
      %p109 = scmp.eq.s32.totalorder %s14, 0
      %p110 = por %p108, %p109
      %p111 = scmp.ne.s32.totalorder %s97, %s98
      %p112 = scmp.eq.s32.totalorder %s15, 1
      %p113 = por %p111, %p112
      %p115 = scmp.ne.s32.totalorder %s98, %s114
      %p116 = scmp.eq.s32.totalorder %s15, 0
      %p117 = por %p115, %p116
      %s118 = ssub.s32 %s16, %s35
      %s119 = ssub.s32 %s17, %s31
      %s120 = sor.u32 %s118, %s119
      %p121 = scmp.eq.s32.totalorder %s120, 0
      %s123 = sadd.s32 %s122, 1
      %s124 = scalar_select %p121, %s122, %s123
      %p127 = pneg %p121
      %p128 = scmp.eq.s32.totalorder %s9, 1
      %p129 = por %p127, %p128
      %p130 = scmp.ne.s32.totalorder %s122, %s125
      %p131 = scmp.eq.s32.totalorder %s9, 0
      %p132 = por %p130, %p131
      %p133 = scmp.ne.s32.totalorder %s122, %s125
      %p134 = scmp.eq.s32.totalorder %s14, 1
      %p135 = por %p133, %p134
      %p136 = scmp.ne.s32.totalorder %s125, %s126
      %p137 = scmp.eq.s32.totalorder %s14, 0
      %p138 = por %p136, %p137
      %p139 = scmp.ne.s32.totalorder %s125, %s126
      %p140 = scmp.eq.s32.totalorder %s15, 1
      %p141 = por %p139, %p140
      %p143 = scmp.ne.s32.totalorder %s126, %s142
      %p144 = scmp.eq.s32.totalorder %s15, 0
      %p145 = por %p143, %p144
      %p146 = scmp.le.s32.totalorder 1, %s9
      %p147 = scmp.lt.s32.totalorder %s9, 3
      %p148 = pnand %p146, %p147
      %p149 = pneg %p148
      // Predicated region
      $region9: #{rnn_model_forward.5} parent=5 // pred_check
        _
      $region10: #{rnn_model_forward.5} parent=5 // pred_check_branch
        %151 = sbr.rel (%p148) target = $region12
      $region11: #{rnn_model_forward.5} parent=5 // pred_region
        %s152 = ssub.s32 %s9, 1
        // Predicated region
        $region13: #{rnn_model_forward.5} parent=11 // pred_check
          %p153 = pneg %p56
        $region14: #{rnn_model_forward.5} parent=11 // pred_check_branch
          %155 = sbr.rel (%p153) target = $region16
        $region15: #{rnn_model_forward.5} parent=11 // pred_region
          %s156 = smul.u32 16, %s19
          %p157 = scmp.lt.s32.totalorder %s156, 15
          %s158 = scalar_select %p157, %s156, 15
          %p159 = scmp.lt.s32.totalorder %s21, 0
          %s160 = scalar_select %p159, %s21, 0
          %s161 = sadd.s32 %s160, %s158
          %s162 = smul.addr %s161, 4
          %s163 = scalar_lea.vmem %s0, %s162
          %s164 = smul.u32 16, %s19
        $region16: #{rnn_model_forward.5} parent=11 // pred_fallthru
          _
      $region12: #{rnn_model_forward.5} parent=5 // pred_fallthru
        _
      %p165 = scmp.lt.s32.totalorder %s9, 2
      // Predicated region
      $region17: #{rnn_model_forward.5} parent=5 // pred_check
        %p166 = pneg %p165
      $region18: #{rnn_model_forward.5} parent=5 // pred_check_branch
        %168 = sbr.rel (%p166) target = $region20
      $region19: #{rnn_model_forward.5} parent=5 // pred_region
        // Predicated region
        $region21: #{rnn_model_forward.5} parent=19 // pred_check
          %p169 = pneg %p78
        $region22: #{rnn_model_forward.5} parent=19 // pred_check_branch
          %171 = sbr.rel (%p169) target = $region24
        $region23: #{rnn_model_forward.5} parent=19 // pred_region
          %s172 = sand.u32 %s68, 1
          %s173 = sand.u32 %s68, 1
          %s174 = smul.addr %s173, 128
          %s175 = scalar_lea.vmem [#allocation3], %s174
          %s176 = smul.u32 16, %s18
          %s177 = smul.u32 2, %s17
          %s178 = smul.addr %s176, 4
          %s179 = sadd.s32 %s177, %s178
          %s180 = smul.addr %s179, 4
          %s181 = scalar_lea.vmem %s1, %s180
          // Predicated region
          $region25: #{rnn_model_forward.5} parent=23 // pred_check
            _
          $region26: #{rnn_model_forward.5} parent=23 // pred_check_branch
            %183 = sbr.rel (0) target = $region28
          $region27: #{rnn_model_forward.5} parent=23 // pred_region
            // Predicated region
            $region29: #{rnn_model_forward.5} parent=27 // pred_check
              _
            $region30: #{rnn_model_forward.5} parent=27 // pred_check_branch
              %185 = sbr.rel (0) target = $region32
            $region31: #{rnn_model_forward.5} parent=27 // pred_region
              // Predicated region
              $region44: #{rnn_model_forward.5} parent=31 // pred_check
                _
              $region45: #{rnn_model_forward.5} parent=31 // pred_check_branch
                %231 = sbr.rel (0) target = $region47
              $region46: #{rnn_model_forward.5} parent=31 // pred_region
                loop: start=0, step=1, limit=1
                $region48: #{rnn_model_forward.5} parent=46 // loop_pre_header
                  _
                $region49: #{rnn_model_forward.5} parent=46 // loop_header
                  %s233 = sphi 0, %s237
                  %p234 = scmp.ge.s32.totalorder %s233, 1
                  %s238 = sphi %s181, %s181
                  %s239 = sphi %s175, %s175
                $region50: #{rnn_model_forward.5} parent=46 // loop_header_branch
                  %236 = sbr.rel (%p234) target = $region54
                $region51: #{rnn_model_forward.5} parent=46 // loop_body
                  %v240 = vld [vmem:[%s238] sm:$0xff]
                  %241 = vst [vmem:[%s239] sm:$0xff] %v240
                  %v242 = vld [vmem:[%s238 + $0x10] sm:$0xff]
                  %243 = vst [vmem:[%s239 + $0x8] sm:$0xff] %v242
                  %v244 = vld [vmem:[%s238 + $0x20] sm:$0xff]
                  %245 = vst [vmem:[%s239 + $0x10] sm:$0xff] %v244
                  %v246 = vld [vmem:[%s238 + $0x30] sm:$0xff]
                  %247 = vst [vmem:[%s239 + $0x18] sm:$0xff] %v246
                  %v248 = vld [vmem:[%s238 + $0x40] sm:$0xff]
                  %249 = vst [vmem:[%s239 + $0x20] sm:$0xff] %v248
                  %v250 = vld [vmem:[%s238 + $0x50] sm:$0xff]
                  %251 = vst [vmem:[%s239 + $0x28] sm:$0xff] %v250
                  %v252 = vld [vmem:[%s238 + $0x60] sm:$0xff]
                  %253 = vst [vmem:[%s239 + $0x30] sm:$0xff] %v252
                  %v254 = vld [vmem:[%s238 + $0x70] sm:$0xff]
                  %255 = vst [vmem:[%s239 + $0x38] sm:$0xff] %v254
                  %v256 = vld [vmem:[%s238 + $0x80] sm:$0xff]
                  %257 = vst [vmem:[%s239 + $0x40] sm:$0xff] %v256
                  %v258 = vld [vmem:[%s238 + $0x90] sm:$0xff]
                  %259 = vst [vmem:[%s239 + $0x48] sm:$0xff] %v258
                  %v260 = vld [vmem:[%s238 + $0xa0] sm:$0xff]
                  %261 = vst [vmem:[%s239 + $0x50] sm:$0xff] %v260
                  %v262 = vld [vmem:[%s238 + $0xb0] sm:$0xff]
                  %263 = vst [vmem:[%s239 + $0x58] sm:$0xff] %v262
                  %v264 = vld [vmem:[%s238 + $0xc0] sm:$0xff]
                  %265 = vst [vmem:[%s239 + $0x60] sm:$0xff] %v264
                  %v266 = vld [vmem:[%s238 + $0xd0] sm:$0xff]
                  %267 = vst [vmem:[%s239 + $0x68] sm:$0xff] %v266
                  %v268 = vld [vmem:[%s238 + $0xe0] sm:$0xff]
                  %269 = vst [vmem:[%s239 + $0x70] sm:$0xff] %v268
                  %v270 = vld [vmem:[%s238 + $0xf0] sm:$0xff]
                  %271 = vst [vmem:[%s239 + $0x78] sm:$0xff] %v270
                $region52: #{rnn_model_forward.5} parent=46 // loop_footer
                  %s237 = sadd.s32 1, %s233
                $region53: #{rnn_model_forward.5} parent=46 // loop_footer_branch
                  %232 = sbr.rel target = $region49
                $region54: #{rnn_model_forward.5} parent=46 // loop_exit
                  _
              $region47: #{rnn_model_forward.5} parent=31 // pred_fallthru
                _
              // Predicated region
              $region55: #{rnn_model_forward.5} parent=31 // pred_check
                _
              $region56: #{rnn_model_forward.5} parent=31 // pred_check_branch
                %273 = sbr.rel target = $region58
              $region57: #{rnn_model_forward.5} parent=31 // pred_region
                _
              $region58: #{rnn_model_forward.5} parent=31 // pred_fallthru
                _
            $region32: #{rnn_model_forward.5} parent=27 // pred_fallthru
              _
            // Predicated region
            $region33: #{rnn_model_forward.5} parent=27 // pred_check
              _
            $region34: #{rnn_model_forward.5} parent=27 // pred_check_branch
              %187 = sbr.rel target = $region36
            $region35: #{rnn_model_forward.5} parent=27 // pred_region
              %s189 = ssub.s32 256, 1
              loop: start=0, step=1, limit=1
              $region37: #{rnn_model_forward.5} parent=35 // loop_pre_header
                _
              $region38: #{rnn_model_forward.5} parent=35 // loop_header
                %s191 = sphi 0, %s195
                %p192 = scmp.ge.s32.totalorder %s191, 1
                %s196 = sphi %s181, %s181
                %s197 = sphi %s175, %s175
              $region39: #{rnn_model_forward.5} parent=35 // loop_header_branch
                %194 = sbr.rel (%p192) target = $region43
              $region40: #{rnn_model_forward.5} parent=35 // loop_body
                %v198 = vld [vmem:[%s196] sm:%s189]
                %199 = vst [vmem:[%s197] sm:%s189] %v198
                %v200 = vld [vmem:[%s196 + $0x10] sm:%s189]
                %201 = vst [vmem:[%s197 + $0x8] sm:%s189] %v200
                %v202 = vld [vmem:[%s196 + $0x20] sm:%s189]
                %203 = vst [vmem:[%s197 + $0x10] sm:%s189] %v202
                %v204 = vld [vmem:[%s196 + $0x30] sm:%s189]
                %205 = vst [vmem:[%s197 + $0x18] sm:%s189] %v204
                %v206 = vld [vmem:[%s196 + $0x40] sm:%s189]
                %207 = vst [vmem:[%s197 + $0x20] sm:%s189] %v206
                %v208 = vld [vmem:[%s196 + $0x50] sm:%s189]
                %209 = vst [vmem:[%s197 + $0x28] sm:%s189] %v208
                %v210 = vld [vmem:[%s196 + $0x60] sm:%s189]
                %211 = vst [vmem:[%s197 + $0x30] sm:%s189] %v210
                %v212 = vld [vmem:[%s196 + $0x70] sm:%s189]
                %213 = vst [vmem:[%s197 + $0x38] sm:%s189] %v212
                %v214 = vld [vmem:[%s196 + $0x80] sm:%s189]
                %215 = vst [vmem:[%s197 + $0x40] sm:%s189] %v214
                %v216 = vld [vmem:[%s196 + $0x90] sm:%s189]
                %217 = vst [vmem:[%s197 + $0x48] sm:%s189] %v216
                %v218 = vld [vmem:[%s196 + $0xa0] sm:%s189]
                %219 = vst [vmem:[%s197 + $0x50] sm:%s189] %v218
                %v220 = vld [vmem:[%s196 + $0xb0] sm:%s189]
                %221 = vst [vmem:[%s197 + $0x58] sm:%s189] %v220
                %v222 = vld [vmem:[%s196 + $0xc0] sm:%s189]
                %223 = vst [vmem:[%s197 + $0x60] sm:%s189] %v222
                %v224 = vld [vmem:[%s196 + $0xd0] sm:%s189]
                %225 = vst [vmem:[%s197 + $0x68] sm:%s189] %v224
                %v226 = vld [vmem:[%s196 + $0xe0] sm:%s189]
                %227 = vst [vmem:[%s197 + $0x70] sm:%s189] %v226
                %v228 = vld [vmem:[%s196 + $0xf0] sm:%s189]
                %229 = vst [vmem:[%s197 + $0x78] sm:%s189] %v228
              $region41: #{rnn_model_forward.5} parent=35 // loop_footer
                %s195 = sadd.s32 1, %s191
              $region42: #{rnn_model_forward.5} parent=35 // loop_footer_branch
                %190 = sbr.rel target = $region38
              $region43: #{rnn_model_forward.5} parent=35 // loop_exit
                _
            $region36: #{rnn_model_forward.5} parent=27 // pred_fallthru
              _
          $region28: #{rnn_model_forward.5} parent=23 // pred_fallthru
            _
          %274 = vnop
        $region24: #{rnn_model_forward.5} parent=19 // pred_fallthru
          _
        // Predicated region
        $region59: #{rnn_model_forward.5} parent=19 // pred_check
          %p275 = pneg %p104
        $region60: #{rnn_model_forward.5} parent=19 // pred_check_branch
          %277 = sbr.rel (%p275) target = $region62
        $region61: #{rnn_model_forward.5} parent=19 // pred_region
          %s278 = smul.u32 2, %s17
          %p279 = scmp.lt.s32.totalorder %s278, 3
          %s280 = scalar_select %p279, %s278, 3
          %s281 = scalar_lea.vmem %s2, %s280
          %s282 = smul.u32 2, %s17
        $region62: #{rnn_model_forward.5} parent=19 // pred_fallthru
          _
      $region20: #{rnn_model_forward.5} parent=5 // pred_fallthru
        _
      %p283 = scmp.le.s32.totalorder 1, %s9
      %p284 = scmp.lt.s32.totalorder %s9, 3
      %p285 = pnand %p283, %p284
      %p286 = pneg %p285
      // Predicated region
      $region63: #{rnn_model_forward.5} parent=5 // pred_check
        _
      $region64: #{rnn_model_forward.5} parent=5 // pred_check_branch
        %288 = sbr.rel (%p285) target = $region66
      $region65: #{rnn_model_forward.5} parent=5 // pred_region
        %s289 = ssub.s32 %s9, 1
        %s290 = sand.u32 %s71, 1
        %s291 = sand.u32 %s71, 1
        %s292 = smul.addr %s291, 128
        %s293 = scalar_lea.vmem [#allocation3], %s292
        // Predicated region
        $region67: #{rnn_model_forward.5} parent=65 // pred_check
          %p294 = pneg %p84
        $region68: #{rnn_model_forward.5} parent=65 // pred_check_branch
          %296 = sbr.rel (%p294) target = $region70
        $region69: #{rnn_model_forward.5} parent=65 // pred_region
          _
        $region70: #{rnn_model_forward.5} parent=65 // pred_fallthru
          _
        %s297 = smul.u32 16, %s19
        %p298 = scmp.lt.s32.totalorder %s297, 15
        %s299 = scalar_select %p298, %s297, 15
        %p300 = scmp.lt.s32.totalorder %s21, 0
        %s301 = scalar_select %p300, %s21, 0
        %s302 = sadd.s32 %s301, %s299
        %s303 = smul.addr %s302, 4
        %s304 = scalar_lea.vmem %s0, %s303
        %p305 = pneg %p56
        %p306 = pneg %p53
        %s307 = sand.u32 %s71, 1
        %s308 = sand.u32 %s71, 1
        %s309 = smul.addr %s308, 128
        %s310 = scalar_lea.vmem [#allocation3], %s309
        %p311 = pneg %p84
        %p312 = pneg %p81
        %s313 = smul.u32 2, %s20
        %p314 = scmp.lt.s32.totalorder %s313, 3
        %s315 = scalar_select %p314, %s313, 3
        %s316 = scalar_lea.vmem %s2, %s315
        %p317 = pneg %p110
        %p318 = pneg %p107
        %p319 = pneg %p138
        %p320 = pneg %p135
        %s321 = sand.u32 %s125, 1
        %s322 = sand.u32 %s125, 1
        %s323 = smul.addr %s322, 128
        %s324 = scalar_lea.vmem [#allocation4], %s323
        %s325 = smul.u32 16, %s19
        %p326 = scmp.lt.s32.totalorder %s325, 15
        %s327 = scalar_select %p326, %s325, 15
        %p328 = scmp.lt.s32.totalorder %s21, 0
        %s329 = scalar_select %p328, %s21, 0
        %s330 = sadd.s32 %s329, %s327
        %s331 = smul.addr %s330, 4
        %s332 = scalar_lea.vmem %s0, %s331
        %s333 = smul.u32 16, %s19
        %s334 = smul.u32 16, %s21
        %s335 = smul.u32 2, %s20
        %s336 = smul.u32 2, %s20
        %p337 = scmp.lt.s32.totalorder %s336, 3
        %s338 = scalar_select %p337, %s336, 3
        %s339 = scalar_lea.vmem %s2, %s338
        %s340 = smul.u32 2, %s20
        %s341 = smul.u32 16, %s19
        %s342 = smul.u32 2, %s20
        %p344 = scmp.eq.s32.totalorder %s21, 0
        // Predicated region
        $region71: #{rnn_model_forward.5} parent=65 // pred_check
          %p345 = pneg %p344
        $region72: #{rnn_model_forward.5} parent=65 // pred_check_branch
          %347 = sbr.rel (%p345) target = $region74
        $region73: #{rnn_model_forward.5} parent=65 // pred_region
          %348 = vst [vmem:[#allocation2] sm:$0xff] 0.0
          %349 = vst [vmem:[#allocation2 + $0x8] sm:$0xff] 0.0
          %350 = vst [vmem:[#allocation2 + $0x10] sm:$0xff] 0.0
          %351 = vst [vmem:[#allocation2 + $0x18] sm:$0xff] 0.0
          %352 = vst [vmem:[#allocation2 + $0x20] sm:$0xff] 0.0
          %353 = vst [vmem:[#allocation2 + $0x28] sm:$0xff] 0.0
          %354 = vst [vmem:[#allocation2 + $0x30] sm:$0xff] 0.0
          %355 = vst [vmem:[#allocation2 + $0x38] sm:$0xff] 0.0
          %356 = vst [vmem:[#allocation2 + $0x40] sm:$0xff] 0.0
          %357 = vst [vmem:[#allocation2 + $0x48] sm:$0xff] 0.0
          %358 = vst [vmem:[#allocation2 + $0x50] sm:$0xff] 0.0
          %359 = vst [vmem:[#allocation2 + $0x58] sm:$0xff] 0.0
          %360 = vst [vmem:[#allocation2 + $0x60] sm:$0xff] 0.0
          %361 = vst [vmem:[#allocation2 + $0x68] sm:$0xff] 0.0
          %362 = vst [vmem:[#allocation2 + $0x70] sm:$0xff] 0.0
          %363 = vst [vmem:[#allocation2 + $0x78] sm:$0xff] 0.0
          %364 = vst [vmem:[#allocation2 + $0x80] sm:$0xff] 0.0
          %365 = vst [vmem:[#allocation2 + $0x88] sm:$0xff] 0.0
          %366 = vst [vmem:[#allocation2 + $0x90] sm:$0xff] 0.0
          %367 = vst [vmem:[#allocation2 + $0x98] sm:$0xff] 0.0
          %368 = vst [vmem:[#allocation2 + $0xa0] sm:$0xff] 0.0
          %369 = vst [vmem:[#allocation2 + $0xa8] sm:$0xff] 0.0
          %370 = vst [vmem:[#allocation2 + $0xb0] sm:$0xff] 0.0
          %371 = vst [vmem:[#allocation2 + $0xb8] sm:$0xff] 0.0
          %372 = vst [vmem:[#allocation2 + $0xc0] sm:$0xff] 0.0
          %373 = vst [vmem:[#allocation2 + $0xc8] sm:$0xff] 0.0
          %374 = vst [vmem:[#allocation2 + $0xd0] sm:$0xff] 0.0
          %375 = vst [vmem:[#allocation2 + $0xd8] sm:$0xff] 0.0
          %376 = vst [vmem:[#allocation2 + $0xe0] sm:$0xff] 0.0
          %377 = vst [vmem:[#allocation2 + $0xe8] sm:$0xff] 0.0
          %378 = vst [vmem:[#allocation2 + $0xf0] sm:$0xff] 0.0
          %379 = vst [vmem:[#allocation2 + $0xf8] sm:$0xff] 0.0
        $region74: #{rnn_model_forward.5} parent=65 // pred_fallthru
          _
        %v380 = vld [vmem:[#allocation2] sm:$0xff]
        %v381 = vld [vmem:[#allocation2 + $0x8] sm:$0xff]
        %v382 = vld [vmem:[#allocation2 + $0x10] sm:$0xff]
        %v383 = vld [vmem:[#allocation2 + $0x18] sm:$0xff]
        %v384 = vld [vmem:[#allocation2 + $0x20] sm:$0xff]
        %v385 = vld [vmem:[#allocation2 + $0x28] sm:$0xff]
        %v386 = vld [vmem:[#allocation2 + $0x30] sm:$0xff]
        %v387 = vld [vmem:[#allocation2 + $0x38] sm:$0xff]
        %v388 = vld [vmem:[#allocation2 + $0x40] sm:$0xff]
        %v389 = vld [vmem:[#allocation2 + $0x48] sm:$0xff]
        %v390 = vld [vmem:[#allocation2 + $0x50] sm:$0xff]
        %v391 = vld [vmem:[#allocation2 + $0x58] sm:$0xff]
        %v392 = vld [vmem:[#allocation2 + $0x60] sm:$0xff]
        %v393 = vld [vmem:[#allocation2 + $0x68] sm:$0xff]
        %v394 = vld [vmem:[#allocation2 + $0x70] sm:$0xff]
        %v395 = vld [vmem:[#allocation2 + $0x78] sm:$0xff]
        %v396 = vld [vmem:[#allocation2 + $0x80] sm:$0xff]
        %v397 = vld [vmem:[#allocation2 + $0x88] sm:$0xff]
        %v398 = vld [vmem:[#allocation2 + $0x90] sm:$0xff]
        %v399 = vld [vmem:[#allocation2 + $0x98] sm:$0xff]
        %v400 = vld [vmem:[#allocation2 + $0xa0] sm:$0xff]
        %v401 = vld [vmem:[#allocation2 + $0xa8] sm:$0xff]
        %v402 = vld [vmem:[#allocation2 + $0xb0] sm:$0xff]
        %v403 = vld [vmem:[#allocation2 + $0xb8] sm:$0xff]
        %v404 = vld [vmem:[#allocation2 + $0xc0] sm:$0xff]
        %v405 = vld [vmem:[#allocation2 + $0xc8] sm:$0xff]
        %v406 = vld [vmem:[#allocation2 + $0xd0] sm:$0xff]
        %v407 = vld [vmem:[#allocation2 + $0xd8] sm:$0xff]
        %v408 = vld [vmem:[#allocation2 + $0xe0] sm:$0xff]
        %v409 = vld [vmem:[#allocation2 + $0xe8] sm:$0xff]
        %v410 = vld [vmem:[#allocation2 + $0xf0] sm:$0xff]
        %v411 = vld [vmem:[#allocation2 + $0xf8] sm:$0xff]
        %v412 = vld [vmem:[%s332] sm:$0xf]
        %v413 = vld [vmem:[%s332 + $0x4] sm:$0xf]
        %v414 = vld [vmem:[%s332 + $0x8] sm:$0xf]
        %v415 = vld [vmem:[%s332 + $0xc] sm:$0xf]
        %v416 = vld [vmem:[%s332 + $0x10] sm:$0xf]
        %v417 = vld [vmem:[%s332 + $0x14] sm:$0xf]
        %v418 = vld [vmem:[%s332 + $0x18] sm:$0xf]
        %v419 = vld [vmem:[%s332 + $0x1c] sm:$0xf]
        %v420 = vld [vmem:[%s332 + $0x20] sm:$0xf]
        %v421 = vld [vmem:[%s332 + $0x24] sm:$0xf]
        %v422 = vld [vmem:[%s332 + $0x28] sm:$0xf]
        %v423 = vld [vmem:[%s332 + $0x2c] sm:$0xf]
        %v424 = vld [vmem:[%s332 + $0x30] sm:$0xf]
        %v425 = vld [vmem:[%s332 + $0x34] sm:$0xf]
        %v426 = vld [vmem:[%s332 + $0x38] sm:$0xf]
        %v427 = vld [vmem:[%s332 + $0x3c] sm:$0xf]
        %v428 = vld [vmem:[%s293] sm:$0xff]
        %v429 = vld [vmem:[%s293 + $0x8] sm:$0xff]
        %v430 = vld [vmem:[%s293 + $0x10] sm:$0xff]
        %v431 = vld [vmem:[%s293 + $0x18] sm:$0xff]
        %v432 = vld [vmem:[%s293 + $0x20] sm:$0xff]
        %v433 = vld [vmem:[%s293 + $0x28] sm:$0xff]
        %v434 = vld [vmem:[%s293 + $0x30] sm:$0xff]
        %v435 = vld [vmem:[%s293 + $0x38] sm:$0xff]
        %v436 = vld [vmem:[%s293 + $0x40] sm:$0xff]
        %v437 = vld [vmem:[%s293 + $0x48] sm:$0xff]
        %v438 = vld [vmem:[%s293 + $0x50] sm:$0xff]
        %v439 = vld [vmem:[%s293 + $0x58] sm:$0xff]
        %v440 = vld [vmem:[%s293 + $0x60] sm:$0xff]
        %v441 = vld [vmem:[%s293 + $0x68] sm:$0xff]
        %v442 = vld [vmem:[%s293 + $0x70] sm:$0xff]
        %v443 = vld [vmem:[%s293 + $0x78] sm:$0xff]
        %v460 = vunpack.c.l.b16 %v412
        %v461 = vunpack.c.l.b16 %v413
        %v462 = vunpack.c.l.b16 %v414
        %v463 = vunpack.c.l.b16 %v415
        %v464 = vunpack.c.l.b16 %v416
        %v465 = vunpack.c.l.b16 %v417
        %v466 = vunpack.c.l.b16 %v418
        %v467 = vunpack.c.l.b16 %v419
        %v468 = vunpack.c.l.b16 %v420
        %v469 = vunpack.c.l.b16 %v421
        %v470 = vunpack.c.l.b16 %v422
        %v471 = vunpack.c.l.b16 %v423
        %v472 = vunpack.c.l.b16 %v424
        %v473 = vunpack.c.l.b16 %v425
        %v474 = vunpack.c.l.b16 %v426
        %v475 = vunpack.c.l.b16 %v427
        %v476 = vpack.c.b16 %v461, %v460
        %v477 = vpack.c.b16 %v463, %v462
        %v478 = vpack.c.b16 %v465, %v464
        %v479 = vpack.c.b16 %v467, %v466
        %v480 = vpack.c.b16 %v469, %v468
        %v481 = vpack.c.b16 %v471, %v470
        %v482 = vpack.c.b16 %v473, %v472
        %v483 = vpack.c.b16 %v475, %v474
        %v508 = vunpack.c.l.b16 %v428
        %v509 = vunpack.c.h.b16 %v428
        %v510 = vunpack.c.l.b16 %v429
        %v511 = vunpack.c.h.b16 %v429
        %v512 = vunpack.c.l.b16 %v430
        %v513 = vunpack.c.h.b16 %v430
        %v514 = vunpack.c.l.b16 %v431
        %v515 = vunpack.c.h.b16 %v431
        %v516 = vunpack.c.l.b16 %v432
        %v517 = vunpack.c.h.b16 %v432
        %v518 = vunpack.c.l.b16 %v433
        %v519 = vunpack.c.h.b16 %v433
        %v520 = vunpack.c.l.b16 %v434
        %v521 = vunpack.c.h.b16 %v434
        %v522 = vunpack.c.l.b16 %v435
        %v523 = vunpack.c.h.b16 %v435
        %v524 = vunpack.c.l.b16 %v436
        %v525 = vunpack.c.h.b16 %v436
        %v526 = vunpack.c.l.b16 %v437
        %v527 = vunpack.c.h.b16 %v437
        %v528 = vunpack.c.l.b16 %v438
        %v529 = vunpack.c.h.b16 %v438
        %v530 = vunpack.c.l.b16 %v439
        %v531 = vunpack.c.h.b16 %v439
        %v532 = vunpack.c.l.b16 %v440
        %v533 = vunpack.c.h.b16 %v440
        %v534 = vunpack.c.l.b16 %v441
        %v535 = vunpack.c.h.b16 %v441
        %v536 = vunpack.c.l.b16 %v442
        %v537 = vunpack.c.h.b16 %v442
        %v538 = vunpack.c.l.b16 %v443
        %v539 = vunpack.c.h.b16 %v443
        %v540 = vpack.c.b16 %v510, %v508
        %v541 = vpack.c.b16 %v511, %v509
        %v542 = vpack.c.b16 %v514, %v512
        %v543 = vpack.c.b16 %v515, %v513
        %v544 = vpack.c.b16 %v518, %v516
        %v545 = vpack.c.b16 %v519, %v517
        %v546 = vpack.c.b16 %v522, %v520
        %v547 = vpack.c.b16 %v523, %v521
        %v548 = vpack.c.b16 %v526, %v524
        %v549 = vpack.c.b16 %v527, %v525
        %v550 = vpack.c.b16 %v530, %v528
        %v551 = vpack.c.b16 %v531, %v529
        %v552 = vpack.c.b16 %v534, %v532
        %v553 = vpack.c.b16 %v535, %v533
        %v554 = vpack.c.b16 %v538, %v536
        %v555 = vpack.c.b16 %v539, %v537
        %572 = vmatprep.subr.bf16.mxu0 %v555
        %573 = vmatpush1.bf16.msra.mxu0 %v554
        %574 = vmatprep.subr.bf16.mxu0 %v553
        %575 = vmatpush1.bf16.msra.mxu0 %v552
        %576 = vmatprep.subr.bf16.mxu0 %v551
        %577 = vmatpush1.bf16.msra.mxu0 %v550
        %578 = vmatprep.subr.bf16.mxu0 %v549
        %579 = vmatpush1.bf16.msra.mxu0 %v548
        %580 = vmatprep.subr.bf16.mxu0 %v547
        %581 = vmatpush1.bf16.msra.mxu0 %v546
        %582 = vmatprep.subr.bf16.mxu0 %v545
        %583 = vmatpush1.bf16.msra.mxu0 %v544
        %584 = vmatprep.subr.bf16.mxu0 %v543
        %585 = vmatpush1.bf16.msra.mxu0 %v542
        %586 = vmatprep.subr.bf16.mxu0 %v541
        %587 = vmatpush1.bf16.msra.mxu0 %v540
        %588 = vmatprep.subr.bf16.mxu0 0
        %589 = vmatpush2.bf16.msra.mxu0 0
        %590 = vmatprep.subr.bf16.mxu0 0
        %591 = vmatpush2.bf16.msra.mxu0 0
        %592 = vmatprep.subr.bf16.mxu0 0
        %593 = vmatpush2.bf16.msra.mxu0 0
        %594 = vmatprep.subr.bf16.mxu0 0
        %595 = vmatpush2.bf16.msra.mxu0 0
        %596 = vmatprep.subr.bf16.mxu0 0
        %597 = vmatpush2.bf16.msra.mxu0 0
        %598 = vmatprep.subr.bf16.mxu0 0
        %599 = vmatpush2.bf16.msra.mxu0 0
        %600 = vmatprep.subr.bf16.mxu0 0
        %601 = vmatpush2.bf16.msra.mxu0 0
        %602 = vmatprep.subr.bf16.mxu0 0
        %603 = vmatpush2.bf16.msra.mxu0 0
        %604 = vmatprep.mubr.bf16.mxu0 0
        %605 = vmatmul.mubr.bf16.gmra.mxu0 %v476
        %v606 = vpop.f32.mrf.mxu0
        %v607 = vadd.f32 0.0, %v606
        %v608 = vpop.f32.mrf.mxu0
        %v609 = vadd.f32 0.0, %v608
        %v610 = vpop.f32.mrf.mxu0
        %v611 = vadd.f32 0.0, %v610
        %v612 = vpop.f32.mrf.mxu0
        %v613 = vadd.f32 0.0, %v612
        %614 = vmatprep.mubr.bf16.mxu0 0
        %615 = vmatmul.mubr.bf16.gmra.mxu0 %v477
        %v616 = vpop.f32.mrf.mxu0
        %v617 = vadd.f32 0.0, %v616
        %v618 = vpop.f32.mrf.mxu0
        %v619 = vadd.f32 0.0, %v618
        %v620 = vpop.f32.mrf.mxu0
        %v621 = vadd.f32 0.0, %v620
        %v622 = vpop.f32.mrf.mxu0
        %v623 = vadd.f32 0.0, %v622
        %624 = vmatprep.mubr.bf16.mxu0 0
        %625 = vmatmul.mubr.bf16.gmra.mxu0 %v478
        %v626 = vpop.f32.mrf.mxu0
        %v627 = vadd.f32 0.0, %v626
        %v628 = vpop.f32.mrf.mxu0
        %v629 = vadd.f32 0.0, %v628
        %v630 = vpop.f32.mrf.mxu0
        %v631 = vadd.f32 0.0, %v630
        %v632 = vpop.f32.mrf.mxu0
        %v633 = vadd.f32 0.0, %v632
        %634 = vmatprep.mubr.bf16.mxu0 0
        %635 = vmatmul.mubr.bf16.gmra.mxu0 %v479
        %v636 = vpop.f32.mrf.mxu0
        %v637 = vadd.f32 0.0, %v636
        %v638 = vpop.f32.mrf.mxu0
        %v639 = vadd.f32 0.0, %v638
        %v640 = vpop.f32.mrf.mxu0
        %v641 = vadd.f32 0.0, %v640
        %v642 = vpop.f32.mrf.mxu0
        %v643 = vadd.f32 0.0, %v642
        %644 = vmatprep.mubr.bf16.mxu0 0
        %645 = vmatmul.mubr.bf16.gmra.mxu0 %v480
        %v646 = vpop.f32.mrf.mxu0
        %v647 = vadd.f32 0.0, %v646
        %v648 = vpop.f32.mrf.mxu0
        %v649 = vadd.f32 0.0, %v648
        %v650 = vpop.f32.mrf.mxu0
        %v651 = vadd.f32 0.0, %v650
        %v652 = vpop.f32.mrf.mxu0
        %v653 = vadd.f32 0.0, %v652
        %654 = vmatprep.mubr.bf16.mxu0 0
        %655 = vmatmul.mubr.bf16.gmra.mxu0 %v481
        %v656 = vpop.f32.mrf.mxu0
        %v657 = vadd.f32 0.0, %v656
        %v658 = vpop.f32.mrf.mxu0
        %v659 = vadd.f32 0.0, %v658
        %v660 = vpop.f32.mrf.mxu0
        %v661 = vadd.f32 0.0, %v660
        %v662 = vpop.f32.mrf.mxu0
        %v663 = vadd.f32 0.0, %v662
        %664 = vmatprep.mubr.bf16.mxu0 0
        %665 = vmatmul.mubr.bf16.gmra.mxu0 %v482
        %v666 = vpop.f32.mrf.mxu0
        %v667 = vadd.f32 0.0, %v666
        %v668 = vpop.f32.mrf.mxu0
        %v669 = vadd.f32 0.0, %v668
        %v670 = vpop.f32.mrf.mxu0
        %v671 = vadd.f32 0.0, %v670
        %v672 = vpop.f32.mrf.mxu0
        %v673 = vadd.f32 0.0, %v672
        %674 = vmatprep.mubr.bf16.mxu0 0
        %675 = vmatmul.mubr.bf16.gmra.mxu0 %v483
        %v676 = vpop.f32.mrf.mxu0
        %v677 = vadd.f32 0.0, %v676
        %v678 = vpop.f32.mrf.mxu0
        %v679 = vadd.f32 0.0, %v678
        %v680 = vpop.f32.mrf.mxu0
        %v681 = vadd.f32 0.0, %v680
        %v682 = vpop.f32.mrf.mxu0
        %v683 = vadd.f32 0.0, %v682
        %684 = vdwg.mxu0
        %v685 = vadd.f32 %v380, %v607
        %v686 = vadd.f32 %v381, %v609
        %v687 = vadd.f32 %v382, %v611
        %v688 = vadd.f32 %v383, %v613
        %v689 = vadd.f32 %v384, %v617
        %v690 = vadd.f32 %v385, %v619
        %v691 = vadd.f32 %v386, %v621
        %v692 = vadd.f32 %v387, %v623
        %v693 = vadd.f32 %v388, %v627
        %v694 = vadd.f32 %v389, %v629
        %v695 = vadd.f32 %v390, %v631
        %v696 = vadd.f32 %v391, %v633
        %v697 = vadd.f32 %v392, %v637
        %v698 = vadd.f32 %v393, %v639
        %v699 = vadd.f32 %v394, %v641
        %v700 = vadd.f32 %v395, %v643
        %v701 = vadd.f32 %v396, %v647
        %v702 = vadd.f32 %v397, %v649
        %v703 = vadd.f32 %v398, %v651
        %v704 = vadd.f32 %v399, %v653
        %v705 = vadd.f32 %v400, %v657
        %v706 = vadd.f32 %v401, %v659
        %v707 = vadd.f32 %v402, %v661
        %v708 = vadd.f32 %v403, %v663
        %v709 = vadd.f32 %v404, %v667
        %v710 = vadd.f32 %v405, %v669
        %v711 = vadd.f32 %v406, %v671
        %v712 = vadd.f32 %v407, %v673
        %v713 = vadd.f32 %v408, %v677
        %v714 = vadd.f32 %v409, %v679
        %v715 = vadd.f32 %v410, %v681
        %v716 = vadd.f32 %v411, %v683
        %717 = vst [vmem:[#allocation2] sm:$0xff] %v685
        %718 = vst [vmem:[#allocation2 + $0x8] sm:$0xff] %v686
        %719 = vst [vmem:[#allocation2 + $0x10] sm:$0xff] %v687
        %720 = vst [vmem:[#allocation2 + $0x18] sm:$0xff] %v688
        %721 = vst [vmem:[#allocation2 + $0x20] sm:$0xff] %v689
        %722 = vst [vmem:[#allocation2 + $0x28] sm:$0xff] %v690
        %723 = vst [vmem:[#allocation2 + $0x30] sm:$0xff] %v691
        %724 = vst [vmem:[#allocation2 + $0x38] sm:$0xff] %v692
        %725 = vst [vmem:[#allocation2 + $0x40] sm:$0xff] %v693
        %726 = vst [vmem:[#allocation2 + $0x48] sm:$0xff] %v694
        %727 = vst [vmem:[#allocation2 + $0x50] sm:$0xff] %v695
        %728 = vst [vmem:[#allocation2 + $0x58] sm:$0xff] %v696
        %729 = vst [vmem:[#allocation2 + $0x60] sm:$0xff] %v697
        %730 = vst [vmem:[#allocation2 + $0x68] sm:$0xff] %v698
        %731 = vst [vmem:[#allocation2 + $0x70] sm:$0xff] %v699
        %732 = vst [vmem:[#allocation2 + $0x78] sm:$0xff] %v700
        %733 = vst [vmem:[#allocation2 + $0x80] sm:$0xff] %v701
        %734 = vst [vmem:[#allocation2 + $0x88] sm:$0xff] %v702
        %735 = vst [vmem:[#allocation2 + $0x90] sm:$0xff] %v703
        %736 = vst [vmem:[#allocation2 + $0x98] sm:$0xff] %v704
        %737 = vst [vmem:[#allocation2 + $0xa0] sm:$0xff] %v705
        %738 = vst [vmem:[#allocation2 + $0xa8] sm:$0xff] %v706
        %739 = vst [vmem:[#allocation2 + $0xb0] sm:$0xff] %v707
        %740 = vst [vmem:[#allocation2 + $0xb8] sm:$0xff] %v708
        %741 = vst [vmem:[#allocation2 + $0xc0] sm:$0xff] %v709
        %742 = vst [vmem:[#allocation2 + $0xc8] sm:$0xff] %v710
        %743 = vst [vmem:[#allocation2 + $0xd0] sm:$0xff] %v711
        %744 = vst [vmem:[#allocation2 + $0xd8] sm:$0xff] %v712
        %745 = vst [vmem:[#allocation2 + $0xe0] sm:$0xff] %v713
        %746 = vst [vmem:[#allocation2 + $0xe8] sm:$0xff] %v714
        %747 = vst [vmem:[#allocation2 + $0xf0] sm:$0xff] %v715
        %748 = vst [vmem:[#allocation2 + $0xf8] sm:$0xff] %v716
        // Predicated region
        $region75: #{rnn_model_forward.5} parent=65 // pred_check
          %p749 = pneg %p344
        $region76: #{rnn_model_forward.5} parent=65 // pred_check_branch
          %751 = sbr.rel (%p749) target = $region78
        $region77: #{rnn_model_forward.5} parent=65 // pred_region
          %v752 = vld [vmem:[#allocation2] sm:$0xff]
          %v753 = vld [vmem:[#allocation2 + $0x8] sm:$0xff]
          %v754 = vld [vmem:[#allocation2 + $0x10] sm:$0xff]
          %v755 = vld [vmem:[#allocation2 + $0x18] sm:$0xff]
          %v756 = vld [vmem:[#allocation2 + $0x20] sm:$0xff]
          %v757 = vld [vmem:[#allocation2 + $0x28] sm:$0xff]
          %v758 = vld [vmem:[#allocation2 + $0x30] sm:$0xff]
          %v759 = vld [vmem:[#allocation2 + $0x38] sm:$0xff]
          %v760 = vld [vmem:[#allocation2 + $0x40] sm:$0xff]
          %v761 = vld [vmem:[#allocation2 + $0x48] sm:$0xff]
          %v762 = vld [vmem:[#allocation2 + $0x50] sm:$0xff]
          %v763 = vld [vmem:[#allocation2 + $0x58] sm:$0xff]
          %v764 = vld [vmem:[#allocation2 + $0x60] sm:$0xff]
          %v765 = vld [vmem:[#allocation2 + $0x68] sm:$0xff]
          %v766 = vld [vmem:[#allocation2 + $0x70] sm:$0xff]
          %v767 = vld [vmem:[#allocation2 + $0x78] sm:$0xff]
          %v768 = vld [vmem:[#allocation2 + $0x80] sm:$0xff]
          %v769 = vld [vmem:[#allocation2 + $0x88] sm:$0xff]
          %v770 = vld [vmem:[#allocation2 + $0x90] sm:$0xff]
          %v771 = vld [vmem:[#allocation2 + $0x98] sm:$0xff]
          %v772 = vld [vmem:[#allocation2 + $0xa0] sm:$0xff]
          %v773 = vld [vmem:[#allocation2 + $0xa8] sm:$0xff]
          %v774 = vld [vmem:[#allocation2 + $0xb0] sm:$0xff]
          %v775 = vld [vmem:[#allocation2 + $0xb8] sm:$0xff]
          %v776 = vld [vmem:[#allocation2 + $0xc0] sm:$0xff]
          %v777 = vld [vmem:[#allocation2 + $0xc8] sm:$0xff]
          %v778 = vld [vmem:[#allocation2 + $0xd0] sm:$0xff]
          %v779 = vld [vmem:[#allocation2 + $0xd8] sm:$0xff]
          %v780 = vld [vmem:[#allocation2 + $0xe0] sm:$0xff]
          %v781 = vld [vmem:[#allocation2 + $0xe8] sm:$0xff]
          %v782 = vld [vmem:[#allocation2 + $0xf0] sm:$0xff]
          %v783 = vld [vmem:[#allocation2 + $0xf8] sm:$0xff]
          %v784 = vld [vmem:[%s339] sm:$0x3]
          %v786 = vlaneseq
          %v787 = vshrl.u32 %v786, 7
          %v788 = vsub.s32 0, %v787
          %v789 = vrot.slane %v784, %v788
          %v790 = vlaneseq
          %v791 = vshrl.u32 %v790, 7
          %v792 = vsub.s32 1, %v791
          %v793 = vrot.slane %v784, %v792
          %v796 = vadd.f32 %v752, %v789
          %v797 = vadd.f32 %v753, %v793
          %v798 = vadd.f32 %v754, %v789
          %v799 = vadd.f32 %v755, %v793
          %v800 = vadd.f32 %v756, %v789
          %v801 = vadd.f32 %v757, %v793
          %v802 = vadd.f32 %v758, %v789
          %v803 = vadd.f32 %v759, %v793
          %v804 = vadd.f32 %v760, %v789
          %v805 = vadd.f32 %v761, %v793
          %v806 = vadd.f32 %v762, %v789
          %v807 = vadd.f32 %v763, %v793
          %v808 = vadd.f32 %v764, %v789
          %v809 = vadd.f32 %v765, %v793
          %v810 = vadd.f32 %v766, %v789
          %v811 = vadd.f32 %v767, %v793
          %v812 = vadd.f32 %v768, %v789
          %v813 = vadd.f32 %v769, %v793
          %v814 = vadd.f32 %v770, %v789
          %v815 = vadd.f32 %v771, %v793
          %v816 = vadd.f32 %v772, %v789
          %v817 = vadd.f32 %v773, %v793
          %v818 = vadd.f32 %v774, %v789
          %v819 = vadd.f32 %v775, %v793
          %v820 = vadd.f32 %v776, %v789
          %v821 = vadd.f32 %v777, %v793
          %v822 = vadd.f32 %v778, %v789
          %v823 = vadd.f32 %v779, %v793
          %v824 = vadd.f32 %v780, %v789
          %v825 = vadd.f32 %v781, %v793
          %v826 = vadd.f32 %v782, %v789
          %v827 = vadd.f32 %v783, %v793
          %v828 = vpack.c.bf16 %v798, %v796
          %v829 = vpack.c.bf16 %v799, %v797
          %v830 = vpack.c.bf16 %v802, %v800
          %v831 = vpack.c.bf16 %v803, %v801
          %v832 = vpack.c.bf16 %v806, %v804
          %v833 = vpack.c.bf16 %v807, %v805
          %v834 = vpack.c.bf16 %v810, %v808
          %v835 = vpack.c.bf16 %v811, %v809
          %v836 = vpack.c.bf16 %v814, %v812
          %v837 = vpack.c.bf16 %v815, %v813
          %v838 = vpack.c.bf16 %v818, %v816
          %v839 = vpack.c.bf16 %v819, %v817
          %v840 = vpack.c.bf16 %v822, %v820
          %v841 = vpack.c.bf16 %v823, %v821
          %v842 = vpack.c.bf16 %v826, %v824
          %v843 = vpack.c.bf16 %v827, %v825
          %v860 = vunpack.c.l.b16 %v828
          %v861 = vunpack.c.l.b16 %v829
          %v862 = vunpack.c.h.b16 %v828
          %v863 = vunpack.c.h.b16 %v829
          %v864 = vunpack.c.l.b16 %v830
          %v865 = vunpack.c.l.b16 %v831
          %v866 = vunpack.c.h.b16 %v830
          %v867 = vunpack.c.h.b16 %v831
          %v868 = vunpack.c.l.b16 %v832
          %v869 = vunpack.c.l.b16 %v833
          %v870 = vunpack.c.h.b16 %v832
          %v871 = vunpack.c.h.b16 %v833
          %v872 = vunpack.c.l.b16 %v834
          %v873 = vunpack.c.l.b16 %v835
          %v874 = vunpack.c.h.b16 %v834
          %v875 = vunpack.c.h.b16 %v835
          %v876 = vunpack.c.l.b16 %v836
          %v877 = vunpack.c.l.b16 %v837
          %v878 = vunpack.c.h.b16 %v836
          %v879 = vunpack.c.h.b16 %v837
          %v880 = vunpack.c.l.b16 %v838
          %v881 = vunpack.c.l.b16 %v839
          %v882 = vunpack.c.h.b16 %v838
          %v883 = vunpack.c.h.b16 %v839
          %v884 = vunpack.c.l.b16 %v840
          %v885 = vunpack.c.l.b16 %v841
          %v886 = vunpack.c.h.b16 %v840
          %v887 = vunpack.c.h.b16 %v841
          %v888 = vunpack.c.l.b16 %v842
          %v889 = vunpack.c.l.b16 %v843
          %v890 = vunpack.c.h.b16 %v842
          %v891 = vunpack.c.h.b16 %v843
          %v892 = vpack.c.b16 %v861, %v860
          %v893 = vpack.c.b16 %v863, %v862
          %v894 = vpack.c.b16 %v865, %v864
          %v895 = vpack.c.b16 %v867, %v866
          %v896 = vpack.c.b16 %v869, %v868
          %v897 = vpack.c.b16 %v871, %v870
          %v898 = vpack.c.b16 %v873, %v872
          %v899 = vpack.c.b16 %v875, %v874
          %v900 = vpack.c.b16 %v877, %v876
          %v901 = vpack.c.b16 %v879, %v878
          %v902 = vpack.c.b16 %v881, %v880
          %v903 = vpack.c.b16 %v883, %v882
          %v904 = vpack.c.b16 %v885, %v884
          %v905 = vpack.c.b16 %v887, %v886
          %v906 = vpack.c.b16 %v889, %v888
          %v907 = vpack.c.b16 %v891, %v890
          %924 = vst [vmem:[%s324] sm:$0xff] %v892
          %925 = vst [vmem:[%s324 + $0x8] sm:$0xff] %v893
          %926 = vst [vmem:[%s324 + $0x10] sm:$0xff] %v894
          %927 = vst [vmem:[%s324 + $0x18] sm:$0xff] %v895
          %928 = vst [vmem:[%s324 + $0x20] sm:$0xff] %v896
          %929 = vst [vmem:[%s324 + $0x28] sm:$0xff] %v897
          %930 = vst [vmem:[%s324 + $0x30] sm:$0xff] %v898
          %931 = vst [vmem:[%s324 + $0x38] sm:$0xff] %v899
          %932 = vst [vmem:[%s324 + $0x40] sm:$0xff] %v900
          %933 = vst [vmem:[%s324 + $0x48] sm:$0xff] %v901
          %934 = vst [vmem:[%s324 + $0x50] sm:$0xff] %v902
          %935 = vst [vmem:[%s324 + $0x58] sm:$0xff] %v903
          %936 = vst [vmem:[%s324 + $0x60] sm:$0xff] %v904
          %937 = vst [vmem:[%s324 + $0x68] sm:$0xff] %v905
          %938 = vst [vmem:[%s324 + $0x70] sm:$0xff] %v906
          %939 = vst [vmem:[%s324 + $0x78] sm:$0xff] %v907
        $region78: #{rnn_model_forward.5} parent=65 // pred_fallthru
          _
        %s940 = sand.u32 %s125, 1
        %s941 = sand.u32 %s125, 1
        %s942 = smul.addr %s941, 128
        %s943 = scalar_lea.vmem [#allocation4], %s942
        // Predicated region
        $region79: #{rnn_model_forward.5} parent=65 // pred_check
          %p944 = pneg %p135
        $region80: #{rnn_model_forward.5} parent=65 // pred_check_branch
          %946 = sbr.rel (%p944) target = $region82
        $region81: #{rnn_model_forward.5} parent=65 // pred_region
          %s947 = smul.u32 16, %s19
          %s948 = smul.u32 2, %s20
          %s949 = smul.addr %s947, 4
          %s950 = sadd.s32 %s948, %s949
          %s951 = smul.addr %s950, 4
          %s952 = scalar_lea.vmem %s3, %s951
          // Predicated region
          $region83: #{rnn_model_forward.5} parent=81 // pred_check
            _
          $region84: #{rnn_model_forward.5} parent=81 // pred_check_branch
            %954 = sbr.rel (0) target = $region86
          $region85: #{rnn_model_forward.5} parent=81 // pred_region
            // Predicated region
            $region87: #{rnn_model_forward.5} parent=85 // pred_check
              _
            $region88: #{rnn_model_forward.5} parent=85 // pred_check_branch
              %956 = sbr.rel (0) target = $region90
            $region89: #{rnn_model_forward.5} parent=85 // pred_region
              // Predicated region
              $region102: #{rnn_model_forward.5} parent=89 // pred_check
                _
              $region103: #{rnn_model_forward.5} parent=89 // pred_check_branch
                %1002 = sbr.rel (0) target = $region105
              $region104: #{rnn_model_forward.5} parent=89 // pred_region
                loop: start=0, step=1, limit=1
                $region106: #{rnn_model_forward.5} parent=104 // loop_pre_header
                  _
                $region107: #{rnn_model_forward.5} parent=104 // loop_header
                  %s1004 = sphi 0, %s1008
                  %p1005 = scmp.ge.s32.totalorder %s1004, 1
                  %s1009 = sphi %s943, %s943
                  %s1010 = sphi %s952, %s952
                $region108: #{rnn_model_forward.5} parent=104 // loop_header_branch
                  %1007 = sbr.rel (%p1005) target = $region112
                $region109: #{rnn_model_forward.5} parent=104 // loop_body
                  %v1011 = vld [vmem:[%s1009] sm:$0xff]
                  %1012 = vst [vmem:[%s1010] sm:$0xff] %v1011
                  %v1013 = vld [vmem:[%s1009 + $0x8] sm:$0xff]
                  %1014 = vst [vmem:[%s1010 + $0x10] sm:$0xff] %v1013
                  %v1015 = vld [vmem:[%s1009 + $0x10] sm:$0xff]
                  %1016 = vst [vmem:[%s1010 + $0x20] sm:$0xff] %v1015
                  %v1017 = vld [vmem:[%s1009 + $0x18] sm:$0xff]
                  %1018 = vst [vmem:[%s1010 + $0x30] sm:$0xff] %v1017
                  %v1019 = vld [vmem:[%s1009 + $0x20] sm:$0xff]
                  %1020 = vst [vmem:[%s1010 + $0x40] sm:$0xff] %v1019
                  %v1021 = vld [vmem:[%s1009 + $0x28] sm:$0xff]
                  %1022 = vst [vmem:[%s1010 + $0x50] sm:$0xff] %v1021
                  %v1023 = vld [vmem:[%s1009 + $0x30] sm:$0xff]
                  %1024 = vst [vmem:[%s1010 + $0x60] sm:$0xff] %v1023
                  %v1025 = vld [vmem:[%s1009 + $0x38] sm:$0xff]
                  %1026 = vst [vmem:[%s1010 + $0x70] sm:$0xff] %v1025
                  %v1027 = vld [vmem:[%s1009 + $0x40] sm:$0xff]
                  %1028 = vst [vmem:[%s1010 + $0x80] sm:$0xff] %v1027
                  %v1029 = vld [vmem:[%s1009 + $0x48] sm:$0xff]
                  %1030 = vst [vmem:[%s1010 + $0x90] sm:$0xff] %v1029
                  %v1031 = vld [vmem:[%s1009 + $0x50] sm:$0xff]
                  %1032 = vst [vmem:[%s1010 + $0xa0] sm:$0xff] %v1031
                  %v1033 = vld [vmem:[%s1009 + $0x58] sm:$0xff]
                  %1034 = vst [vmem:[%s1010 + $0xb0] sm:$0xff] %v1033
                  %v1035 = vld [vmem:[%s1009 + $0x60] sm:$0xff]
                  %1036 = vst [vmem:[%s1010 + $0xc0] sm:$0xff] %v1035
                  %v1037 = vld [vmem:[%s1009 + $0x68] sm:$0xff]
                  %1038 = vst [vmem:[%s1010 + $0xd0] sm:$0xff] %v1037
                  %v1039 = vld [vmem:[%s1009 + $0x70] sm:$0xff]
                  %1040 = vst [vmem:[%s1010 + $0xe0] sm:$0xff] %v1039
                  %v1041 = vld [vmem:[%s1009 + $0x78] sm:$0xff]
                  %1042 = vst [vmem:[%s1010 + $0xf0] sm:$0xff] %v1041
                $region110: #{rnn_model_forward.5} parent=104 // loop_footer
                  %s1008 = sadd.s32 1, %s1004
                $region111: #{rnn_model_forward.5} parent=104 // loop_footer_branch
                  %1003 = sbr.rel target = $region107
                $region112: #{rnn_model_forward.5} parent=104 // loop_exit
                  _
              $region105: #{rnn_model_forward.5} parent=89 // pred_fallthru
                _
              // Predicated region
              $region113: #{rnn_model_forward.5} parent=89 // pred_check
                _
              $region114: #{rnn_model_forward.5} parent=89 // pred_check_branch
                %1044 = sbr.rel target = $region116
              $region115: #{rnn_model_forward.5} parent=89 // pred_region
                _
              $region116: #{rnn_model_forward.5} parent=89 // pred_fallthru
                _
            $region90: #{rnn_model_forward.5} parent=85 // pred_fallthru
              _
            // Predicated region
            $region91: #{rnn_model_forward.5} parent=85 // pred_check
              _
            $region92: #{rnn_model_forward.5} parent=85 // pred_check_branch
              %958 = sbr.rel target = $region94
            $region93: #{rnn_model_forward.5} parent=85 // pred_region
              %s960 = ssub.s32 256, 1
              loop: start=0, step=1, limit=1
              $region95: #{rnn_model_forward.5} parent=93 // loop_pre_header
                _
              $region96: #{rnn_model_forward.5} parent=93 // loop_header
                %s962 = sphi 0, %s966
                %p963 = scmp.ge.s32.totalorder %s962, 1
                %s967 = sphi %s943, %s943
                %s968 = sphi %s952, %s952
              $region97: #{rnn_model_forward.5} parent=93 // loop_header_branch
                %965 = sbr.rel (%p963) target = $region101
              $region98: #{rnn_model_forward.5} parent=93 // loop_body
                %v969 = vld [vmem:[%s967] sm:%s960]
                %970 = vst [vmem:[%s968] sm:%s960] %v969
                %v971 = vld [vmem:[%s967 + $0x8] sm:%s960]
                %972 = vst [vmem:[%s968 + $0x10] sm:%s960] %v971
                %v973 = vld [vmem:[%s967 + $0x10] sm:%s960]
                %974 = vst [vmem:[%s968 + $0x20] sm:%s960] %v973
                %v975 = vld [vmem:[%s967 + $0x18] sm:%s960]
                %976 = vst [vmem:[%s968 + $0x30] sm:%s960] %v975
                %v977 = vld [vmem:[%s967 + $0x20] sm:%s960]
                %978 = vst [vmem:[%s968 + $0x40] sm:%s960] %v977
                %v979 = vld [vmem:[%s967 + $0x28] sm:%s960]
                %980 = vst [vmem:[%s968 + $0x50] sm:%s960] %v979
                %v981 = vld [vmem:[%s967 + $0x30] sm:%s960]
                %982 = vst [vmem:[%s968 + $0x60] sm:%s960] %v981
                %v983 = vld [vmem:[%s967 + $0x38] sm:%s960]
                %984 = vst [vmem:[%s968 + $0x70] sm:%s960] %v983
                %v985 = vld [vmem:[%s967 + $0x40] sm:%s960]
                %986 = vst [vmem:[%s968 + $0x80] sm:%s960] %v985
                %v987 = vld [vmem:[%s967 + $0x48] sm:%s960]
                %988 = vst [vmem:[%s968 + $0x90] sm:%s960] %v987
                %v989 = vld [vmem:[%s967 + $0x50] sm:%s960]
                %990 = vst [vmem:[%s968 + $0xa0] sm:%s960] %v989
                %v991 = vld [vmem:[%s967 + $0x58] sm:%s960]
                %992 = vst [vmem:[%s968 + $0xb0] sm:%s960] %v991
                %v993 = vld [vmem:[%s967 + $0x60] sm:%s960]
                %994 = vst [vmem:[%s968 + $0xc0] sm:%s960] %v993
                %v995 = vld [vmem:[%s967 + $0x68] sm:%s960]
                %996 = vst [vmem:[%s968 + $0xd0] sm:%s960] %v995
                %v997 = vld [vmem:[%s967 + $0x70] sm:%s960]
                %998 = vst [vmem:[%s968 + $0xe0] sm:%s960] %v997
                %v999 = vld [vmem:[%s967 + $0x78] sm:%s960]
                %1000 = vst [vmem:[%s968 + $0xf0] sm:%s960] %v999
              $region99: #{rnn_model_forward.5} parent=93 // loop_footer
                %s966 = sadd.s32 1, %s962
              $region100: #{rnn_model_forward.5} parent=93 // loop_footer_branch
                %961 = sbr.rel target = $region96
              $region101: #{rnn_model_forward.5} parent=93 // loop_exit
                _
            $region94: #{rnn_model_forward.5} parent=85 // pred_fallthru
              _
          $region86: #{rnn_model_forward.5} parent=81 // pred_fallthru
            _
          %1045 = vnop
        $region82: #{rnn_model_forward.5} parent=65 // pred_fallthru
          _
      $region66: #{rnn_model_forward.5} parent=5 // pred_fallthru
        _
      %p1046 = scmp.le.s32.totalorder 2, %s9
      // Predicated region
      $region117: #{rnn_model_forward.5} parent=5 // pred_check
        %p1047 = pneg %p1046
      $region118: #{rnn_model_forward.5} parent=5 // pred_check_branch
        %1049 = sbr.rel (%p1047) target = $region120
      $region119: #{rnn_model_forward.5} parent=5 // pred_region
        %s1050 = ssub.s32 %s9, 2
        // Predicated region
        $region121: #{rnn_model_forward.5} parent=119 // pred_check
          %p1051 = pneg %p141
        $region122: #{rnn_model_forward.5} parent=119 // pred_check_branch
          %1053 = sbr.rel (%p1051) target = $region124
        $region123: #{rnn_model_forward.5} parent=119 // pred_region
          %s1054 = sand.u32 %s126, 1
          %s1055 = sand.u32 %s126, 1
          %s1056 = smul.addr %s1055, 128
          %s1057 = scalar_lea.vmem [#allocation4], %s1056
        $region124: #{rnn_model_forward.5} parent=119 // pred_fallthru
          _
      $region120: #{rnn_model_forward.5} parent=5 // pred_fallthru
        _
    $region6: #{rnn_model_forward.5} parent=1 // loop_footer
      %s13 = sadd.s32 1, %s9
    $region7: #{rnn_model_forward.5} parent=1 // loop_footer_branch
      %8 = sbr.rel target = $region3
    $region8: #{rnn_model_forward.5} parent=1 // loop_exit
      _

// kernel: rnn_model_forward.9
$region0: #{rnn_model_forward.9}
  #allocation0 [shape = 'u32[]', space=smem, size = 0x4, offset = 0x4, fixed_abs, tag = 'smem constant byte address 0x4 - core index']
  #allocation1 [shape = 'u32[144,128]{1,0:T(1,128)}', space=vmem, size = 0x12000, scoped, tag = 'internal scratch']
  #allocation2 [shape = 'f32[128,256]{1,0:T(8,128)}', space=vmem, size = 0x20000, scoped, tag = 'scratch operand']
  %s0 = inlined_call_operand.vmem [shape: bf16[128,128], index: 0, kind: input, shape index: {}]
  %s1 = inlined_call_operand.vmem [shape: bf16[128,256], index: 1, kind: input, shape index: {}]
  %s2 = inlined_call_operand.vmem [shape: f32[1,256], index: 2, kind: input, shape index: {}]
  %s3 = inlined_call_operand.hbm [shape: f32[128,256], index: 3, kind: output, shape index: {}]
  %s4 = sld [smem:[#allocation0]]
  $region30: #{rnn_model_forward.9} parent=0
    _
  %s6 = ssub.s32 1, %s4
  %s7 = scalar_select 0, %s6, %s4
  $region1: #{rnn_model_forward.9} parent=0
    #allocation3 [shape = 'u8[131072]{0}', space=vmem, size = 0x20000, scoped, tag = 'output window, operand 0, single buffered']
    #allocation4 [shape = 's32[1]{0}', space=sflag, size = 0x4, scoped, tag = 'scoped memory for rnn_model_forward.9']
    %8 = vsyncpa [#allocation4], 0
    // Predicated region
    $region2: #{rnn_model_forward.9} parent=1 // pred_check
      _
    $region3: #{rnn_model_forward.9} parent=1 // pred_check_branch
      %10 = sbr.rel (0) target = $region5
    $region4: #{rnn_model_forward.9} parent=1 // pred_region
      _
    $region5: #{rnn_model_forward.9} parent=1 // pred_fallthru
      _
    // Predicated region
    $region6: #{rnn_model_forward.9} parent=1 // pred_check
      _
    $region7: #{rnn_model_forward.9} parent=1 // pred_check_branch
      %12 = sbr.rel (0) target = $region9
    $region8: #{rnn_model_forward.9} parent=1 // pred_region
      _
    $region9: #{rnn_model_forward.9} parent=1 // pred_fallthru
      _
    // Predicated region
    $region10: #{rnn_model_forward.9} parent=1 // pred_check
      _
    $region11: #{rnn_model_forward.9} parent=1 // pred_check_branch
      %14 = sbr.rel (0) target = $region13
    $region12: #{rnn_model_forward.9} parent=1 // pred_region
      _
    $region13: #{rnn_model_forward.9} parent=1 // pred_fallthru
      _
    %p16 = scmp.eq.s32.totalorder 0, 0
    // Predicated region
    $region14: #{rnn_model_forward.9} parent=1 // pred_check
      %p17 = pneg %p16
    $region15: #{rnn_model_forward.9} parent=1 // pred_check_branch
      %19 = sbr.rel (%p17) target = $region17
    $region16: #{rnn_model_forward.9} parent=1 // pred_region
      %20 = vst [vmem:[#allocation2] sm:$0xff] 0.0
      %21 = vst [vmem:[#allocation2 + $0x8] sm:$0xff] 0.0
      %22 = vst [vmem:[#allocation2 + $0x10] sm:$0xff] 0.0
      %23 = vst [vmem:[#allocation2 + $0x18] sm:$0xff] 0.0
      %24 = vst [vmem:[#allocation2 + $0x20] sm:$0xff] 0.0
      %25 = vst [vmem:[#allocation2 + $0x28] sm:$0xff] 0.0
      %26 = vst [vmem:[#allocation2 + $0x30] sm:$0xff] 0.0
      %27 = vst [vmem:[#allocation2 + $0x38] sm:$0xff] 0.0
      %28 = vst [vmem:[#allocation2 + $0x40] sm:$0xff] 0.0
      %29 = vst [vmem:[#allocation2 + $0x48] sm:$0xff] 0.0
      %30 = vst [vmem:[#allocation2 + $0x50] sm:$0xff] 0.0
      %31 = vst [vmem:[#allocation2 + $0x58] sm:$0xff] 0.0
      %32 = vst [vmem:[#allocation2 + $0x60] sm:$0xff] 0.0
      %33 = vst [vmem:[#allocation2 + $0x68] sm:$0xff] 0.0
      %34 = vst [vmem:[#allocation2 + $0x70] sm:$0xff] 0.0
      %35 = vst [vmem:[#allocation2 + $0x78] sm:$0xff] 0.0
      %36 = vst [vmem:[#allocation2 + $0x80] sm:$0xff] 0.0
      %37 = vst [vmem:[#allocation2 + $0x88] sm:$0xff] 0.0
      %38 = vst [vmem:[#allocation2 + $0x90] sm:$0xff] 0.0
      %39 = vst [vmem:[#allocation2 + $0x98] sm:$0xff] 0.0
      %40 = vst [vmem:[#allocation2 + $0xa0] sm:$0xff] 0.0
      %41 = vst [vmem:[#allocation2 + $0xa8] sm:$0xff] 0.0
      %42 = vst [vmem:[#allocation2 + $0xb0] sm:$0xff] 0.0
      %43 = vst [vmem:[#allocation2 + $0xb8] sm:$0xff] 0.0
      %44 = vst [vmem:[#allocation2 + $0xc0] sm:$0xff] 0.0
      %45 = vst [vmem:[#allocation2 + $0xc8] sm:$0xff] 0.0
      %46 = vst [vmem:[#allocation2 + $0xd0] sm:$0xff] 0.0
      %47 = vst [vmem:[#allocation2 + $0xd8] sm:$0xff] 0.0
      %48 = vst [vmem:[#allocation2 + $0xe0] sm:$0xff] 0.0
      %49 = vst [vmem:[#allocation2 + $0xe8] sm:$0xff] 0.0
      %50 = vst [vmem:[#allocation2 + $0xf0] sm:$0xff] 0.0
      %51 = vst [vmem:[#allocation2 + $0xf8] sm:$0xff] 0.0
    $region17: #{rnn_model_forward.9} parent=1 // pred_fallthru
      _
    %v52 = vld [vmem:[#allocation2] sm:$0xff]
    %v53 = vld [vmem:[#allocation2 + $0x8] sm:$0xff]
    %v54 = vld [vmem:[#allocation2 + $0x10] sm:$0xff]
    %v55 = vld [vmem:[#allocation2 + $0x18] sm:$0xff]
    %v56 = vld [vmem:[#allocation2 + $0x20] sm:$0xff]
    %v57 = vld [vmem:[#allocation2 + $0x28] sm:$0xff]
    %v58 = vld [vmem:[#allocation2 + $0x30] sm:$0xff]
    %v59 = vld [vmem:[#allocation2 + $0x38] sm:$0xff]
    %v60 = vld [vmem:[#allocation2 + $0x40] sm:$0xff]
    %v61 = vld [vmem:[#allocation2 + $0x48] sm:$0xff]
    %v62 = vld [vmem:[#allocation2 + $0x50] sm:$0xff]
    %v63 = vld [vmem:[#allocation2 + $0x58] sm:$0xff]
    %v64 = vld [vmem:[#allocation2 + $0x60] sm:$0xff]
    %v65 = vld [vmem:[#allocation2 + $0x68] sm:$0xff]
    %v66 = vld [vmem:[#allocation2 + $0x70] sm:$0xff]
    %v67 = vld [vmem:[#allocation2 + $0x78] sm:$0xff]
    %v68 = vld [vmem:[#allocation2 + $0x80] sm:$0xff]
    %v69 = vld [vmem:[#allocation2 + $0x88] sm:$0xff]
    %v70 = vld [vmem:[#allocation2 + $0x90] sm:$0xff]
    %v71 = vld [vmem:[#allocation2 + $0x98] sm:$0xff]
    %v72 = vld [vmem:[#allocation2 + $0xa0] sm:$0xff]
    %v73 = vld [vmem:[#allocation2 + $0xa8] sm:$0xff]
    %v74 = vld [vmem:[#allocation2 + $0xb0] sm:$0xff]
    %v75 = vld [vmem:[#allocation2 + $0xb8] sm:$0xff]
    %v76 = vld [vmem:[#allocation2 + $0xc0] sm:$0xff]
    %v77 = vld [vmem:[#allocation2 + $0xc8] sm:$0xff]
    %v78 = vld [vmem:[#allocation2 + $0xd0] sm:$0xff]
    %v79 = vld [vmem:[#allocation2 + $0xd8] sm:$0xff]
    %v80 = vld [vmem:[#allocation2 + $0xe0] sm:$0xff]
    %v81 = vld [vmem:[#allocation2 + $0xe8] sm:$0xff]
    %v82 = vld [vmem:[#allocation2 + $0xf0] sm:$0xff]
    %v83 = vld [vmem:[#allocation2 + $0xf8] sm:$0xff]
    %v84 = vld [vmem:[%s0] sm:$0xf]
    %v85 = vld [vmem:[%s0 + $0x4] sm:$0xf]
    %v86 = vld [vmem:[%s0 + $0x8] sm:$0xf]
    %v87 = vld [vmem:[%s0 + $0xc] sm:$0xf]
    %v88 = vld [vmem:[%s0 + $0x10] sm:$0xf]
    %v89 = vld [vmem:[%s0 + $0x14] sm:$0xf]
    %v90 = vld [vmem:[%s0 + $0x18] sm:$0xf]
    %v91 = vld [vmem:[%s0 + $0x1c] sm:$0xf]
    %v92 = vld [vmem:[%s0 + $0x20] sm:$0xf]
    %v93 = vld [vmem:[%s0 + $0x24] sm:$0xf]
    %v94 = vld [vmem:[%s0 + $0x28] sm:$0xf]
    %v95 = vld [vmem:[%s0 + $0x2c] sm:$0xf]
    %v96 = vld [vmem:[%s0 + $0x30] sm:$0xf]
    %v97 = vld [vmem:[%s0 + $0x34] sm:$0xf]
    %v98 = vld [vmem:[%s0 + $0x38] sm:$0xf]
    %v99 = vld [vmem:[%s0 + $0x3c] sm:$0xf]
    %v100 = vld [vmem:[%s1] sm:$0xff]
    %v101 = vld [vmem:[%s1 + $0x8] sm:$0xff]
    %v102 = vld [vmem:[%s1 + $0x10] sm:$0xff]
    %v103 = vld [vmem:[%s1 + $0x18] sm:$0xff]
    %v104 = vld [vmem:[%s1 + $0x20] sm:$0xff]
    %v105 = vld [vmem:[%s1 + $0x28] sm:$0xff]
    %v106 = vld [vmem:[%s1 + $0x30] sm:$0xff]
    %v107 = vld [vmem:[%s1 + $0x38] sm:$0xff]
    %v108 = vld [vmem:[%s1 + $0x40] sm:$0xff]
    %v109 = vld [vmem:[%s1 + $0x48] sm:$0xff]
    %v110 = vld [vmem:[%s1 + $0x50] sm:$0xff]
    %v111 = vld [vmem:[%s1 + $0x58] sm:$0xff]
    %v112 = vld [vmem:[%s1 + $0x60] sm:$0xff]
    %v113 = vld [vmem:[%s1 + $0x68] sm:$0xff]
    %v114 = vld [vmem:[%s1 + $0x70] sm:$0xff]
    %v115 = vld [vmem:[%s1 + $0x78] sm:$0xff]
    %v132 = vunpack.c.l.b16 %v84
    %v133 = vunpack.c.l.b16 %v85
    %v134 = vunpack.c.l.b16 %v86
    %v135 = vunpack.c.l.b16 %v87
    %v136 = vunpack.c.l.b16 %v88
    %v137 = vunpack.c.l.b16 %v89
    %v138 = vunpack.c.l.b16 %v90
    %v139 = vunpack.c.l.b16 %v91
    %v140 = vunpack.c.l.b16 %v92
    %v141 = vunpack.c.l.b16 %v93
    %v142 = vunpack.c.l.b16 %v94
    %v143 = vunpack.c.l.b16 %v95
    %v144 = vunpack.c.l.b16 %v96
    %v145 = vunpack.c.l.b16 %v97
    %v146 = vunpack.c.l.b16 %v98
    %v147 = vunpack.c.l.b16 %v99
    %v148 = vpack.c.b16 %v133, %v132
    %v149 = vpack.c.b16 %v135, %v134
    %v150 = vpack.c.b16 %v137, %v136
    %v151 = vpack.c.b16 %v139, %v138
    %v152 = vpack.c.b16 %v141, %v140
    %v153 = vpack.c.b16 %v143, %v142
    %v154 = vpack.c.b16 %v145, %v144
    %v155 = vpack.c.b16 %v147, %v146
    %v180 = vunpack.c.l.b16 %v100
    %v181 = vunpack.c.h.b16 %v100
    %v182 = vunpack.c.l.b16 %v101
    %v183 = vunpack.c.h.b16 %v101
    %v184 = vunpack.c.l.b16 %v102
    %v185 = vunpack.c.h.b16 %v102
    %v186 = vunpack.c.l.b16 %v103
    %v187 = vunpack.c.h.b16 %v103
    %v188 = vunpack.c.l.b16 %v104
    %v189 = vunpack.c.h.b16 %v104
    %v190 = vunpack.c.l.b16 %v105
    %v191 = vunpack.c.h.b16 %v105
    %v192 = vunpack.c.l.b16 %v106
    %v193 = vunpack.c.h.b16 %v106
    %v194 = vunpack.c.l.b16 %v107
    %v195 = vunpack.c.h.b16 %v107
    %v196 = vunpack.c.l.b16 %v108
    %v197 = vunpack.c.h.b16 %v108
    %v198 = vunpack.c.l.b16 %v109
    %v199 = vunpack.c.h.b16 %v109
    %v200 = vunpack.c.l.b16 %v110
    %v201 = vunpack.c.h.b16 %v110
    %v202 = vunpack.c.l.b16 %v111
    %v203 = vunpack.c.h.b16 %v111
    %v204 = vunpack.c.l.b16 %v112
    %v205 = vunpack.c.h.b16 %v112
    %v206 = vunpack.c.l.b16 %v113
    %v207 = vunpack.c.h.b16 %v113
    %v208 = vunpack.c.l.b16 %v114
    %v209 = vunpack.c.h.b16 %v114
    %v210 = vunpack.c.l.b16 %v115
    %v211 = vunpack.c.h.b16 %v115
    %v212 = vpack.c.b16 %v182, %v180
    %v213 = vpack.c.b16 %v183, %v181
    %v214 = vpack.c.b16 %v186, %v184
    %v215 = vpack.c.b16 %v187, %v185
    %v216 = vpack.c.b16 %v190, %v188
    %v217 = vpack.c.b16 %v191, %v189
    %v218 = vpack.c.b16 %v194, %v192
    %v219 = vpack.c.b16 %v195, %v193
    %v220 = vpack.c.b16 %v198, %v196
    %v221 = vpack.c.b16 %v199, %v197
    %v222 = vpack.c.b16 %v202, %v200
    %v223 = vpack.c.b16 %v203, %v201
    %v224 = vpack.c.b16 %v206, %v204
    %v225 = vpack.c.b16 %v207, %v205
    %v226 = vpack.c.b16 %v210, %v208
    %v227 = vpack.c.b16 %v211, %v209
    %244 = vmatprep.subr.bf16.mxu0 %v227
    %245 = vmatpush1.bf16.msra.mxu0 %v226
    %246 = vmatprep.subr.bf16.mxu0 %v225
    %247 = vmatpush1.bf16.msra.mxu0 %v224
    %248 = vmatprep.subr.bf16.mxu0 %v223
    %249 = vmatpush1.bf16.msra.mxu0 %v222
    %250 = vmatprep.subr.bf16.mxu0 %v221
    %251 = vmatpush1.bf16.msra.mxu0 %v220
    %252 = vmatprep.subr.bf16.mxu0 %v219
    %253 = vmatpush1.bf16.msra.mxu0 %v218
    %254 = vmatprep.subr.bf16.mxu0 %v217
    %255 = vmatpush1.bf16.msra.mxu0 %v216
    %256 = vmatprep.subr.bf16.mxu0 %v215
    %257 = vmatpush1.bf16.msra.mxu0 %v214
    %258 = vmatprep.subr.bf16.mxu0 %v213
    %259 = vmatpush1.bf16.msra.mxu0 %v212
    %260 = vmatprep.subr.bf16.mxu0 0
    %261 = vmatpush2.bf16.msra.mxu0 0
    %262 = vmatprep.subr.bf16.mxu0 0
    %263 = vmatpush2.bf16.msra.mxu0 0
    %264 = vmatprep.subr.bf16.mxu0 0
    %265 = vmatpush2.bf16.msra.mxu0 0
    %266 = vmatprep.subr.bf16.mxu0 0
    %267 = vmatpush2.bf16.msra.mxu0 0
    %268 = vmatprep.subr.bf16.mxu0 0
    %269 = vmatpush2.bf16.msra.mxu0 0
    %270 = vmatprep.subr.bf16.mxu0 0
    %271 = vmatpush2.bf16.msra.mxu0 0
    %272 = vmatprep.subr.bf16.mxu0 0
    %273 = vmatpush2.bf16.msra.mxu0 0
    %274 = vmatprep.subr.bf16.mxu0 0
    %275 = vmatpush2.bf16.msra.mxu0 0
    %276 = vmatprep.mubr.bf16.mxu0 0
    %277 = vmatmul.mubr.bf16.gmra.mxu0 %v148
    %v278 = vpop.f32.mrf.mxu0
    %v279 = vadd.f32 0.0, %v278
    %v280 = vpop.f32.mrf.mxu0
    %v281 = vadd.f32 0.0, %v280
    %v282 = vpop.f32.mrf.mxu0
    %v283 = vadd.f32 0.0, %v282
    %v284 = vpop.f32.mrf.mxu0
    %v285 = vadd.f32 0.0, %v284
    %286 = vmatprep.mubr.bf16.mxu0 0
    %287 = vmatmul.mubr.bf16.gmra.mxu0 %v149
    %v288 = vpop.f32.mrf.mxu0
    %v289 = vadd.f32 0.0, %v288
    %v290 = vpop.f32.mrf.mxu0
    %v291 = vadd.f32 0.0, %v290
    %v292 = vpop.f32.mrf.mxu0
    %v293 = vadd.f32 0.0, %v292
    %v294 = vpop.f32.mrf.mxu0
    %v295 = vadd.f32 0.0, %v294
    %296 = vmatprep.mubr.bf16.mxu0 0
    %297 = vmatmul.mubr.bf16.gmra.mxu0 %v150
    %v298 = vpop.f32.mrf.mxu0
    %v299 = vadd.f32 0.0, %v298
    %v300 = vpop.f32.mrf.mxu0
    %v301 = vadd.f32 0.0, %v300
    %v302 = vpop.f32.mrf.mxu0
    %v303 = vadd.f32 0.0, %v302
    %v304 = vpop.f32.mrf.mxu0
    %v305 = vadd.f32 0.0, %v304
    %306 = vmatprep.mubr.bf16.mxu0 0
    %307 = vmatmul.mubr.bf16.gmra.mxu0 %v151
    %v308 = vpop.f32.mrf.mxu0
    %v309 = vadd.f32 0.0, %v308
    %v310 = vpop.f32.mrf.mxu0
    %v311 = vadd.f32 0.0, %v310
    %v312 = vpop.f32.mrf.mxu0
    %v313 = vadd.f32 0.0, %v312
    %v314 = vpop.f32.mrf.mxu0
    %v315 = vadd.f32 0.0, %v314
    %316 = vmatprep.mubr.bf16.mxu0 0
    %317 = vmatmul.mubr.bf16.gmra.mxu0 %v152
    %v318 = vpop.f32.mrf.mxu0
    %v319 = vadd.f32 0.0, %v318
    %v320 = vpop.f32.mrf.mxu0
    %v321 = vadd.f32 0.0, %v320
    %v322 = vpop.f32.mrf.mxu0
    %v323 = vadd.f32 0.0, %v322
    %v324 = vpop.f32.mrf.mxu0
    %v325 = vadd.f32 0.0, %v324
    %326 = vmatprep.mubr.bf16.mxu0 0
    %327 = vmatmul.mubr.bf16.gmra.mxu0 %v153
    %v328 = vpop.f32.mrf.mxu0
    %v329 = vadd.f32 0.0, %v328
    %v330 = vpop.f32.mrf.mxu0
    %v331 = vadd.f32 0.0, %v330
    %v332 = vpop.f32.mrf.mxu0
    %v333 = vadd.f32 0.0, %v332
    %v334 = vpop.f32.mrf.mxu0
    %v335 = vadd.f32 0.0, %v334
    %336 = vmatprep.mubr.bf16.mxu0 0
    %337 = vmatmul.mubr.bf16.gmra.mxu0 %v154
    %v338 = vpop.f32.mrf.mxu0
    %v339 = vadd.f32 0.0, %v338
    %v340 = vpop.f32.mrf.mxu0
    %v341 = vadd.f32 0.0, %v340
    %v342 = vpop.f32.mrf.mxu0
    %v343 = vadd.f32 0.0, %v342
    %v344 = vpop.f32.mrf.mxu0
    %v345 = vadd.f32 0.0, %v344
    %346 = vmatprep.mubr.bf16.mxu0 0
    %347 = vmatmul.mubr.bf16.gmra.mxu0 %v155
    %v348 = vpop.f32.mrf.mxu0
    %v349 = vadd.f32 0.0, %v348
    %v350 = vpop.f32.mrf.mxu0
    %v351 = vadd.f32 0.0, %v350
    %v352 = vpop.f32.mrf.mxu0
    %v353 = vadd.f32 0.0, %v352
    %v354 = vpop.f32.mrf.mxu0
    %v355 = vadd.f32 0.0, %v354
    %356 = vdwg.mxu0
    %v357 = vadd.f32 %v52, %v279
    %v358 = vadd.f32 %v53, %v281
    %v359 = vadd.f32 %v54, %v283
    %v360 = vadd.f32 %v55, %v285
    %v361 = vadd.f32 %v56, %v289
    %v362 = vadd.f32 %v57, %v291
    %v363 = vadd.f32 %v58, %v293
    %v364 = vadd.f32 %v59, %v295
    %v365 = vadd.f32 %v60, %v299
    %v366 = vadd.f32 %v61, %v301
    %v367 = vadd.f32 %v62, %v303
    %v368 = vadd.f32 %v63, %v305
    %v369 = vadd.f32 %v64, %v309
    %v370 = vadd.f32 %v65, %v311
    %v371 = vadd.f32 %v66, %v313
    %v372 = vadd.f32 %v67, %v315
    %v373 = vadd.f32 %v68, %v319
    %v374 = vadd.f32 %v69, %v321
    %v375 = vadd.f32 %v70, %v323
    %v376 = vadd.f32 %v71, %v325
    %v377 = vadd.f32 %v72, %v329
    %v378 = vadd.f32 %v73, %v331
    %v379 = vadd.f32 %v74, %v333
    %v380 = vadd.f32 %v75, %v335
    %v381 = vadd.f32 %v76, %v339
    %v382 = vadd.f32 %v77, %v341
    %v383 = vadd.f32 %v78, %v343
    %v384 = vadd.f32 %v79, %v345
    %v385 = vadd.f32 %v80, %v349
    %v386 = vadd.f32 %v81, %v351
    %v387 = vadd.f32 %v82, %v353
    %v388 = vadd.f32 %v83, %v355
    %389 = vst [vmem:[#allocation2] sm:$0xff] %v357
    %390 = vst [vmem:[#allocation2 + $0x8] sm:$0xff] %v358
    %391 = vst [vmem:[#allocation2 + $0x10] sm:$0xff] %v359
    %392 = vst [vmem:[#allocation2 + $0x18] sm:$0xff] %v360
    %393 = vst [vmem:[#allocation2 + $0x20] sm:$0xff] %v361
    %394 = vst [vmem:[#allocation2 + $0x28] sm:$0xff] %v362
    %395 = vst [vmem:[#allocation2 + $0x30] sm:$0xff] %v363
    %396 = vst [vmem:[#allocation2 + $0x38] sm:$0xff] %v364
    %397 = vst [vmem:[#allocation2 + $0x40] sm:$0xff] %v365
    %398 = vst [vmem:[#allocation2 + $0x48] sm:$0xff] %v366
    %399 = vst [vmem:[#allocation2 + $0x50] sm:$0xff] %v367
    %400 = vst [vmem:[#allocation2 + $0x58] sm:$0xff] %v368
    %401 = vst [vmem:[#allocation2 + $0x60] sm:$0xff] %v369
    %402 = vst [vmem:[#allocation2 + $0x68] sm:$0xff] %v370
    %403 = vst [vmem:[#allocation2 + $0x70] sm:$0xff] %v371
    %404 = vst [vmem:[#allocation2 + $0x78] sm:$0xff] %v372
    %405 = vst [vmem:[#allocation2 + $0x80] sm:$0xff] %v373
    %406 = vst [vmem:[#allocation2 + $0x88] sm:$0xff] %v374
    %407 = vst [vmem:[#allocation2 + $0x90] sm:$0xff] %v375
    %408 = vst [vmem:[#allocation2 + $0x98] sm:$0xff] %v376
    %409 = vst [vmem:[#allocation2 + $0xa0] sm:$0xff] %v377
    %410 = vst [vmem:[#allocation2 + $0xa8] sm:$0xff] %v378
    %411 = vst [vmem:[#allocation2 + $0xb0] sm:$0xff] %v379
    %412 = vst [vmem:[#allocation2 + $0xb8] sm:$0xff] %v380
    %413 = vst [vmem:[#allocation2 + $0xc0] sm:$0xff] %v381
    %414 = vst [vmem:[#allocation2 + $0xc8] sm:$0xff] %v382
    %415 = vst [vmem:[#allocation2 + $0xd0] sm:$0xff] %v383
    %416 = vst [vmem:[#allocation2 + $0xd8] sm:$0xff] %v384
    %417 = vst [vmem:[#allocation2 + $0xe0] sm:$0xff] %v385
    %418 = vst [vmem:[#allocation2 + $0xe8] sm:$0xff] %v386
    %419 = vst [vmem:[#allocation2 + $0xf0] sm:$0xff] %v387
    %420 = vst [vmem:[#allocation2 + $0xf8] sm:$0xff] %v388
    // Predicated region
    $region18: #{rnn_model_forward.9} parent=1 // pred_check
      %p421 = pneg %p16
    $region19: #{rnn_model_forward.9} parent=1 // pred_check_branch
      %423 = sbr.rel (%p421) target = $region21
    $region20: #{rnn_model_forward.9} parent=1 // pred_region
      %v424 = vld [vmem:[#allocation2] sm:$0xff]
      %v425 = vld [vmem:[#allocation2 + $0x8] sm:$0xff]
      %v426 = vld [vmem:[#allocation2 + $0x10] sm:$0xff]
      %v427 = vld [vmem:[#allocation2 + $0x18] sm:$0xff]
      %v428 = vld [vmem:[#allocation2 + $0x20] sm:$0xff]
      %v429 = vld [vmem:[#allocation2 + $0x28] sm:$0xff]
      %v430 = vld [vmem:[#allocation2 + $0x30] sm:$0xff]
      %v431 = vld [vmem:[#allocation2 + $0x38] sm:$0xff]
      %v432 = vld [vmem:[#allocation2 + $0x40] sm:$0xff]
      %v433 = vld [vmem:[#allocation2 + $0x48] sm:$0xff]
      %v434 = vld [vmem:[#allocation2 + $0x50] sm:$0xff]
      %v435 = vld [vmem:[#allocation2 + $0x58] sm:$0xff]
      %v436 = vld [vmem:[#allocation2 + $0x60] sm:$0xff]
      %v437 = vld [vmem:[#allocation2 + $0x68] sm:$0xff]
      %v438 = vld [vmem:[#allocation2 + $0x70] sm:$0xff]
      %v439 = vld [vmem:[#allocation2 + $0x78] sm:$0xff]
      %v440 = vld [vmem:[#allocation2 + $0x80] sm:$0xff]
      %v441 = vld [vmem:[#allocation2 + $0x88] sm:$0xff]
      %v442 = vld [vmem:[#allocation2 + $0x90] sm:$0xff]
      %v443 = vld [vmem:[#allocation2 + $0x98] sm:$0xff]
      %v444 = vld [vmem:[#allocation2 + $0xa0] sm:$0xff]
      %v445 = vld [vmem:[#allocation2 + $0xa8] sm:$0xff]
      %v446 = vld [vmem:[#allocation2 + $0xb0] sm:$0xff]
      %v447 = vld [vmem:[#allocation2 + $0xb8] sm:$0xff]
      %v448 = vld [vmem:[#allocation2 + $0xc0] sm:$0xff]
      %v449 = vld [vmem:[#allocation2 + $0xc8] sm:$0xff]
      %v450 = vld [vmem:[#allocation2 + $0xd0] sm:$0xff]
      %v451 = vld [vmem:[#allocation2 + $0xd8] sm:$0xff]
      %v452 = vld [vmem:[#allocation2 + $0xe0] sm:$0xff]
      %v453 = vld [vmem:[#allocation2 + $0xe8] sm:$0xff]
      %v454 = vld [vmem:[#allocation2 + $0xf0] sm:$0xff]
      %v455 = vld [vmem:[#allocation2 + $0xf8] sm:$0xff]
      %v456 = vld [vmem:[%s2] sm:$0x3]
      %v458 = vlaneseq
      %v459 = vshrl.u32 %v458, 7
      %v460 = vsub.s32 0, %v459
      %v461 = vrot.slane %v456, %v460
      %v462 = vlaneseq
      %v463 = vshrl.u32 %v462, 7
      %v464 = vsub.s32 1, %v463
      %v465 = vrot.slane %v456, %v464
      %v468 = vadd.f32 %v424, %v461
      %v469 = vadd.f32 %v425, %v465
      %v470 = vadd.f32 %v426, %v461
      %v471 = vadd.f32 %v427, %v465
      %v472 = vadd.f32 %v428, %v461
      %v473 = vadd.f32 %v429, %v465
      %v474 = vadd.f32 %v430, %v461
      %v475 = vadd.f32 %v431, %v465
      %v476 = vadd.f32 %v432, %v461
      %v477 = vadd.f32 %v433, %v465
      %v478 = vadd.f32 %v434, %v461
      %v479 = vadd.f32 %v435, %v465
      %v480 = vadd.f32 %v436, %v461
      %v481 = vadd.f32 %v437, %v465
      %v482 = vadd.f32 %v438, %v461
      %v483 = vadd.f32 %v439, %v465
      %v484 = vadd.f32 %v440, %v461
      %v485 = vadd.f32 %v441, %v465
      %v486 = vadd.f32 %v442, %v461
      %v487 = vadd.f32 %v443, %v465
      %v488 = vadd.f32 %v444, %v461
      %v489 = vadd.f32 %v445, %v465
      %v490 = vadd.f32 %v446, %v461
      %v491 = vadd.f32 %v447, %v465
      %v492 = vadd.f32 %v448, %v461
      %v493 = vadd.f32 %v449, %v465
      %v494 = vadd.f32 %v450, %v461
      %v495 = vadd.f32 %v451, %v465
      %v496 = vadd.f32 %v452, %v461
      %v497 = vadd.f32 %v453, %v465
      %v498 = vadd.f32 %v454, %v461
      %v499 = vadd.f32 %v455, %v465
      %500 = vst [vmem:[#allocation3] sm:$0xff] %v468
      %501 = vst [vmem:[#allocation3 + $0x8] sm:$0xff] %v469
      %502 = vst [vmem:[#allocation3 + $0x10] sm:$0xff] %v470
      %503 = vst [vmem:[#allocation3 + $0x18] sm:$0xff] %v471
      %504 = vst [vmem:[#allocation3 + $0x20] sm:$0xff] %v472
      %505 = vst [vmem:[#allocation3 + $0x28] sm:$0xff] %v473
      %506 = vst [vmem:[#allocation3 + $0x30] sm:$0xff] %v474
      %507 = vst [vmem:[#allocation3 + $0x38] sm:$0xff] %v475
      %508 = vst [vmem:[#allocation3 + $0x40] sm:$0xff] %v476
      %509 = vst [vmem:[#allocation3 + $0x48] sm:$0xff] %v477
      %510 = vst [vmem:[#allocation3 + $0x50] sm:$0xff] %v478
      %511 = vst [vmem:[#allocation3 + $0x58] sm:$0xff] %v479
      %512 = vst [vmem:[#allocation3 + $0x60] sm:$0xff] %v480
      %513 = vst [vmem:[#allocation3 + $0x68] sm:$0xff] %v481
      %514 = vst [vmem:[#allocation3 + $0x70] sm:$0xff] %v482
      %515 = vst [vmem:[#allocation3 + $0x78] sm:$0xff] %v483
      %516 = vst [vmem:[#allocation3 + $0x80] sm:$0xff] %v484
      %517 = vst [vmem:[#allocation3 + $0x88] sm:$0xff] %v485
      %518 = vst [vmem:[#allocation3 + $0x90] sm:$0xff] %v486
      %519 = vst [vmem:[#allocation3 + $0x98] sm:$0xff] %v487
      %520 = vst [vmem:[#allocation3 + $0xa0] sm:$0xff] %v488
      %521 = vst [vmem:[#allocation3 + $0xa8] sm:$0xff] %v489
      %522 = vst [vmem:[#allocation3 + $0xb0] sm:$0xff] %v490
      %523 = vst [vmem:[#allocation3 + $0xb8] sm:$0xff] %v491
      %524 = vst [vmem:[#allocation3 + $0xc0] sm:$0xff] %v492
      %525 = vst [vmem:[#allocation3 + $0xc8] sm:$0xff] %v493
      %526 = vst [vmem:[#allocation3 + $0xd0] sm:$0xff] %v494
      %527 = vst [vmem:[#allocation3 + $0xd8] sm:$0xff] %v495
      %528 = vst [vmem:[#allocation3 + $0xe0] sm:$0xff] %v496
      %529 = vst [vmem:[#allocation3 + $0xe8] sm:$0xff] %v497
      %530 = vst [vmem:[#allocation3 + $0xf0] sm:$0xff] %v498
      %531 = vst [vmem:[#allocation3 + $0xf8] sm:$0xff] %v499
    $region21: #{rnn_model_forward.9} parent=1 // pred_fallthru
      _
    // Predicated region
    $region22: #{rnn_model_forward.9} parent=1 // pred_check
      _
    $region23: #{rnn_model_forward.9} parent=1 // pred_check_branch
      %533 = sbr.rel (0) target = $region25
    $region24: #{rnn_model_forward.9} parent=1 // pred_region
      %s535 = ssub.s32 4096, 4096
      %536 = vsyncadd [#allocation4], %s535
      %s537 = sshll.u32 [#allocation3], 4
      %s538 = int_to_ptr.vmem [resolvable:$true] %s537
      %543 = dma.vmem_to_hbm [thread:$0]  %s538, 4096, %s3, [#allocation4], 256, 256, 16
    $region25: #{rnn_model_forward.9} parent=1 // pred_fallthru
      _
    // Predicated region
    $region26: #{rnn_model_forward.9} parent=1 // pred_check
      _
    $region27: #{rnn_model_forward.9} parent=1 // pred_check_branch
      %545 = sbr.rel (0) target = $region29
    $region28: #{rnn_model_forward.9} parent=1 // pred_region
      %546 = dma.done [#allocation4], 4096
    $region29: #{rnn_model_forward.9} parent=1 // pred_fallthru
      _
    %547 = vsyncpa [#allocation4], 1

// kernel: rnn_model_forward.6
$region0: #{rnn_model_forward.6}
  #allocation0 [shape = 'u32[]', space=smem, size = 0x4, offset = 0x4, fixed_abs, tag = 'smem constant byte address 0x4 - core index']
  #allocation1 [shape = 'u32[144,128]{1,0:T(1,128)}', space=vmem, size = 0x12000, scoped, tag = 'internal scratch']
  #allocation2 [shape = 'f32[8,128]{1,0:T(8,128)}', space=vmem, size = 0x1000, scoped, tag = 'scratch operand']
  #allocation3 [shape = 'f32[8,128]{1,0:T(8,128)}', space=vmem, size = 0x1000, scoped, tag = 'scratch operand']
  %s0 = inlined_call_operand.vmem [shape: bf16[16,8,512], index: 0, kind: input, shape index: {}]
  %s1 = inlined_call_operand.vmem [shape: bf16[128,512], index: 1, kind: input, shape index: {}]
  %s2 = inlined_call_operand.vmem [shape: f32[8,128], index: 2, kind: input, shape index: {}]
  %s3 = inlined_call_operand.vmem [shape: f32[8,128], index: 3, kind: input, shape index: {}]
  %s4 = inlined_call_operand.vmem [shape: bf16[16,8,128], index: 4, kind: output, shape index: {0}]
  %s5 = inlined_call_operand.vmem [shape: f32[8,128], index: 5, kind: output, shape index: {1}]
  %s6 = inlined_call_operand.vmem [shape: f32[8,128], index: 6, kind: output, shape index: {2}]
  %7 = xla_tuple %s4, %s5, %s6
  %s8 = sld [smem:[#allocation0]]
  $region50: #{rnn_model_forward.6} parent=0
    _
  %s10 = ssub.s32 1, %s8
  %s11 = scalar_select 0, %s10, %s8
  // Predicated region
  $region2: #{rnn_model_forward.6} parent=0 // pred_check
    _
  $region3: #{rnn_model_forward.6} parent=0 // pred_check_branch
    %13 = sbr.rel (0) target = $region5
  $region4: #{rnn_model_forward.6} parent=0 // pred_region
    _
  $region5: #{rnn_model_forward.6} parent=0 // pred_fallthru
    _
  // Predicated region
  $region6: #{rnn_model_forward.6} parent=0 // pred_check
    _
  $region7: #{rnn_model_forward.6} parent=0 // pred_check_branch
    %15 = sbr.rel (0) target = $region9
  $region8: #{rnn_model_forward.6} parent=0 // pred_region
    _
  $region9: #{rnn_model_forward.6} parent=0 // pred_fallthru
    _
  // Predicated region
  $region10: #{rnn_model_forward.6} parent=0 // pred_check
    _
  $region11: #{rnn_model_forward.6} parent=0 // pred_check_branch
    %17 = sbr.rel (0) target = $region13
  $region12: #{rnn_model_forward.6} parent=0 // pred_region
    _
  $region13: #{rnn_model_forward.6} parent=0 // pred_fallthru
    _
  // Predicated region
  $region14: #{rnn_model_forward.6} parent=0 // pred_check
    _
  $region15: #{rnn_model_forward.6} parent=0 // pred_check_branch
    %19 = sbr.rel (0) target = $region17
  $region16: #{rnn_model_forward.6} parent=0 // pred_region
    _
  $region17: #{rnn_model_forward.6} parent=0 // pred_fallthru
    _
  %p21 = scmp.eq.s32.totalorder 0, 0
  // Predicated region
  $region18: #{rnn_model_forward.6} parent=0 // pred_check
    %p22 = pneg %p21
  $region19: #{rnn_model_forward.6} parent=0 // pred_check_branch
    %24 = sbr.rel (%p22) target = $region21
  $region20: #{rnn_model_forward.6} parent=0 // pred_region
    %v25 = vld [vmem:[%s2] sm:$0xff]
    %26 = vst [vmem:[#allocation2] sm:$0xff] %v25
    %v27 = vld [vmem:[%s3] sm:$0xff]
    %28 = vst [vmem:[#allocation3] sm:$0xff] %v27
  $region21: #{rnn_model_forward.6} parent=0 // pred_fallthru
    _
  %v29 = vld [vmem:[#allocation2] sm:$0xff]
  %v30 = vld [vmem:[#allocation3] sm:$0xff]
  %v31 = vld [vmem:[%s0] sm:$0xff]
  %v32 = vld [vmem:[%s0 + $0x8] sm:$0xff]
  %v33 = vunpack.c.l.bf16 %v31
  %v34 = vunpack.c.h.bf16 %v31
  %v35 = vunpack.c.l.bf16 %v32
  %v36 = vunpack.c.h.bf16 %v32
  %v37 = vpack.c.bf16 %v29, %v29
  %v38 = vld [vmem:[%s1] sm:$0xff]
  %v39 = vld [vmem:[%s1 + $0x8] sm:$0xff]
  %v40 = vld [vmem:[%s1 + $0x10] sm:$0xff]
  %v41 = vld [vmem:[%s1 + $0x18] sm:$0xff]
  %v42 = vld [vmem:[%s1 + $0x20] sm:$0xff]
  %v43 = vld [vmem:[%s1 + $0x28] sm:$0xff]
  %v44 = vld [vmem:[%s1 + $0x30] sm:$0xff]
  %v45 = vld [vmem:[%s1 + $0x38] sm:$0xff]
  %v46 = vld [vmem:[%s1 + $0x40] sm:$0xff]
  %v47 = vld [vmem:[%s1 + $0x48] sm:$0xff]
  %v48 = vld [vmem:[%s1 + $0x50] sm:$0xff]
  %v49 = vld [vmem:[%s1 + $0x58] sm:$0xff]
  %v50 = vld [vmem:[%s1 + $0x60] sm:$0xff]
  %v51 = vld [vmem:[%s1 + $0x68] sm:$0xff]
  %v52 = vld [vmem:[%s1 + $0x70] sm:$0xff]
  %v53 = vld [vmem:[%s1 + $0x78] sm:$0xff]
  %v54 = vld [vmem:[%s1 + $0x80] sm:$0xff]
  %v55 = vld [vmem:[%s1 + $0x88] sm:$0xff]
  %v56 = vld [vmem:[%s1 + $0x90] sm:$0xff]
  %v57 = vld [vmem:[%s1 + $0x98] sm:$0xff]
  %v58 = vld [vmem:[%s1 + $0xa0] sm:$0xff]
  %v59 = vld [vmem:[%s1 + $0xa8] sm:$0xff]
  %v60 = vld [vmem:[%s1 + $0xb0] sm:$0xff]
  %v61 = vld [vmem:[%s1 + $0xb8] sm:$0xff]
  %v62 = vld [vmem:[%s1 + $0xc0] sm:$0xff]
  %v63 = vld [vmem:[%s1 + $0xc8] sm:$0xff]
  %v64 = vld [vmem:[%s1 + $0xd0] sm:$0xff]
  %v65 = vld [vmem:[%s1 + $0xd8] sm:$0xff]
  %v66 = vld [vmem:[%s1 + $0xe0] sm:$0xff]
  %v67 = vld [vmem:[%s1 + $0xe8] sm:$0xff]
  %v68 = vld [vmem:[%s1 + $0xf0] sm:$0xff]
  %v69 = vld [vmem:[%s1 + $0xf8] sm:$0xff]
  %v102 = vunpack.c.l.b16 %v38
  %v103 = vunpack.c.h.b16 %v38
  %v104 = vunpack.c.l.b16 %v39
  %v105 = vunpack.c.h.b16 %v39
  %v106 = vunpack.c.l.b16 %v40
  %v107 = vunpack.c.h.b16 %v40
  %v108 = vunpack.c.l.b16 %v41
  %v109 = vunpack.c.h.b16 %v41
  %v110 = vunpack.c.l.b16 %v42
  %v111 = vunpack.c.h.b16 %v42
  %v112 = vunpack.c.l.b16 %v43
  %v113 = vunpack.c.h.b16 %v43
  %v114 = vunpack.c.l.b16 %v44
  %v115 = vunpack.c.h.b16 %v44
  %v116 = vunpack.c.l.b16 %v45
  %v117 = vunpack.c.h.b16 %v45
  %v118 = vunpack.c.l.b16 %v46
  %v119 = vunpack.c.h.b16 %v46
  %v120 = vunpack.c.l.b16 %v47
  %v121 = vunpack.c.h.b16 %v47
  %v122 = vunpack.c.l.b16 %v48
  %v123 = vunpack.c.h.b16 %v48
  %v124 = vunpack.c.l.b16 %v49
  %v125 = vunpack.c.h.b16 %v49
  %v126 = vunpack.c.l.b16 %v50
  %v127 = vunpack.c.h.b16 %v50
  %v128 = vunpack.c.l.b16 %v51
  %v129 = vunpack.c.h.b16 %v51
  %v130 = vunpack.c.l.b16 %v52
  %v131 = vunpack.c.h.b16 %v52
  %v132 = vunpack.c.l.b16 %v53
  %v133 = vunpack.c.h.b16 %v53
  %v134 = vunpack.c.l.b16 %v54
  %v135 = vunpack.c.h.b16 %v54
  %v136 = vunpack.c.l.b16 %v55
  %v137 = vunpack.c.h.b16 %v55
  %v138 = vunpack.c.l.b16 %v56
  %v139 = vunpack.c.h.b16 %v56
  %v140 = vunpack.c.l.b16 %v57
  %v141 = vunpack.c.h.b16 %v57
  %v142 = vunpack.c.l.b16 %v58
  %v143 = vunpack.c.h.b16 %v58
  %v144 = vunpack.c.l.b16 %v59
  %v145 = vunpack.c.h.b16 %v59
  %v146 = vunpack.c.l.b16 %v60
  %v147 = vunpack.c.h.b16 %v60
  %v148 = vunpack.c.l.b16 %v61
  %v149 = vunpack.c.h.b16 %v61
  %v150 = vunpack.c.l.b16 %v62
  %v151 = vunpack.c.h.b16 %v62
  %v152 = vunpack.c.l.b16 %v63
  %v153 = vunpack.c.h.b16 %v63
  %v154 = vunpack.c.l.b16 %v64
  %v155 = vunpack.c.h.b16 %v64
  %v156 = vunpack.c.l.b16 %v65
  %v157 = vunpack.c.h.b16 %v65
  %v158 = vunpack.c.l.b16 %v66
  %v159 = vunpack.c.h.b16 %v66
  %v160 = vunpack.c.l.b16 %v67
  %v161 = vunpack.c.h.b16 %v67
  %v162 = vunpack.c.l.b16 %v68
  %v163 = vunpack.c.h.b16 %v68
  %v164 = vunpack.c.l.b16 %v69
  %v165 = vunpack.c.h.b16 %v69
  %v166 = vpack.c.b16 %v106, %v102
  %v167 = vpack.c.b16 %v107, %v103
  %v168 = vpack.c.b16 %v108, %v104
  %v169 = vpack.c.b16 %v109, %v105
  %v170 = vpack.c.b16 %v114, %v110
  %v171 = vpack.c.b16 %v115, %v111
  %v172 = vpack.c.b16 %v116, %v112
  %v173 = vpack.c.b16 %v117, %v113
  %v174 = vpack.c.b16 %v122, %v118
  %v175 = vpack.c.b16 %v123, %v119
  %v176 = vpack.c.b16 %v124, %v120
  %v177 = vpack.c.b16 %v125, %v121
  %v178 = vpack.c.b16 %v130, %v126
  %v179 = vpack.c.b16 %v131, %v127
  %v180 = vpack.c.b16 %v132, %v128
  %v181 = vpack.c.b16 %v133, %v129
  %v182 = vpack.c.b16 %v138, %v134
  %v183 = vpack.c.b16 %v139, %v135
  %v184 = vpack.c.b16 %v140, %v136
  %v185 = vpack.c.b16 %v141, %v137
  %v186 = vpack.c.b16 %v146, %v142
  %v187 = vpack.c.b16 %v147, %v143
  %v188 = vpack.c.b16 %v148, %v144
  %v189 = vpack.c.b16 %v149, %v145
  %v190 = vpack.c.b16 %v154, %v150
  %v191 = vpack.c.b16 %v155, %v151
  %v192 = vpack.c.b16 %v156, %v152
  %v193 = vpack.c.b16 %v157, %v153
  %v194 = vpack.c.b16 %v162, %v158
  %v195 = vpack.c.b16 %v163, %v159
  %v196 = vpack.c.b16 %v164, %v160
  %v197 = vpack.c.b16 %v165, %v161
  %230 = vmatprep.subr.bf16.mxu0 %v195
  %231 = vmatpush1.bf16.msra.mxu0 %v194
  %232 = vmatprep.subr.bf16.mxu0 %v191
  %233 = vmatpush1.bf16.msra.mxu0 %v190
  %234 = vmatprep.subr.bf16.mxu0 %v187
  %235 = vmatpush1.bf16.msra.mxu0 %v186
  %236 = vmatprep.subr.bf16.mxu0 %v183
  %237 = vmatpush1.bf16.msra.mxu0 %v182
  %238 = vmatprep.subr.bf16.mxu0 %v179
  %239 = vmatpush1.bf16.msra.mxu0 %v178
  %240 = vmatprep.subr.bf16.mxu0 %v175
  %241 = vmatpush1.bf16.msra.mxu0 %v174
  %242 = vmatprep.subr.bf16.mxu0 %v171
  %243 = vmatpush1.bf16.msra.mxu0 %v170
  %244 = vmatprep.subr.bf16.mxu0 %v167
  %245 = vmatpush1.bf16.msra.mxu0 %v166
  %246 = vmatprep.subr.bf16.mxu0 0
  %247 = vmatpush2.bf16.msra.mxu0 0
  %248 = vmatprep.subr.bf16.mxu0 0
  %249 = vmatpush2.bf16.msra.mxu0 0
  %250 = vmatprep.subr.bf16.mxu0 0
  %251 = vmatpush2.bf16.msra.mxu0 0
  %252 = vmatprep.subr.bf16.mxu0 0
  %253 = vmatpush2.bf16.msra.mxu0 0
  %254 = vmatprep.subr.bf16.mxu0 0
  %255 = vmatpush2.bf16.msra.mxu0 0
  %256 = vmatprep.subr.bf16.mxu0 0
  %257 = vmatpush2.bf16.msra.mxu0 0
  %258 = vmatprep.subr.bf16.mxu0 0
  %259 = vmatpush2.bf16.msra.mxu0 0
  %260 = vmatprep.subr.bf16.mxu0 0
  %261 = vmatpush2.bf16.msra.mxu0 0
  %262 = vmatprep.mubr.bf16.mxu0 0
  %263 = vmatmul.mubr.bf16.gmra.mxu0 %v37
  %v264 = vpop.f32.mrf.mxu0
  %v265 = vadd.f32 0.0, %v264
  %v266 = vpop.f32.mrf.mxu0
  %v267 = vadd.f32 0.0, %v266
  %v268 = vpop.f32.mrf.mxu0
  %v269 = vpop.f32.mrf.mxu0
  %270 = vdwg.mxu0
  %271 = vmatprep.subr.bf16.mxu0 %v197
  %272 = vmatpush1.bf16.msra.mxu0 %v196
  %273 = vmatprep.subr.bf16.mxu0 %v193
  %274 = vmatpush1.bf16.msra.mxu0 %v192
  %275 = vmatprep.subr.bf16.mxu0 %v189
  %276 = vmatpush1.bf16.msra.mxu0 %v188
  %277 = vmatprep.subr.bf16.mxu0 %v185
  %278 = vmatpush1.bf16.msra.mxu0 %v184
  %279 = vmatprep.subr.bf16.mxu0 %v181
  %280 = vmatpush1.bf16.msra.mxu0 %v180
  %281 = vmatprep.subr.bf16.mxu0 %v177
  %282 = vmatpush1.bf16.msra.mxu0 %v176
  %283 = vmatprep.subr.bf16.mxu0 %v173
  %284 = vmatpush1.bf16.msra.mxu0 %v172
  %285 = vmatprep.subr.bf16.mxu0 %v169
  %286 = vmatpush1.bf16.msra.mxu0 %v168
  %287 = vmatprep.subr.bf16.mxu0 0
  %288 = vmatpush2.bf16.msra.mxu0 0
  %289 = vmatprep.subr.bf16.mxu0 0
  %290 = vmatpush2.bf16.msra.mxu0 0
  %291 = vmatprep.subr.bf16.mxu0 0
  %292 = vmatpush2.bf16.msra.mxu0 0
  %293 = vmatprep.subr.bf16.mxu0 0
  %294 = vmatpush2.bf16.msra.mxu0 0
  %295 = vmatprep.subr.bf16.mxu0 0
  %296 = vmatpush2.bf16.msra.mxu0 0
  %297 = vmatprep.subr.bf16.mxu0 0
  %298 = vmatpush2.bf16.msra.mxu0 0
  %299 = vmatprep.subr.bf16.mxu0 0
  %300 = vmatpush2.bf16.msra.mxu0 0
  %301 = vmatprep.subr.bf16.mxu0 0
  %302 = vmatpush2.bf16.msra.mxu0 0
  %303 = vmatprep.mubr.bf16.mxu0 0
  %304 = vmatmul.mubr.bf16.gmra.mxu0 %v37
  %v305 = vpop.f32.mrf.mxu0
  %v306 = vadd.f32 0.0, %v305
  %v307 = vpop.f32.mrf.mxu0
  %v308 = vadd.f32 0.0, %v307
  %v309 = vpop.f32.mrf.mxu0
  %v310 = vpop.f32.mrf.mxu0
  %311 = vdwg.mxu0
  %v312 = vadd.f32 %v33, %v265
  %v313 = vadd.f32 %v34, %v267
  %v314 = vadd.f32 %v35, %v306
  %v315 = vadd.f32 %v36, %v308
  %v316 = vxor.u32 %v312, 2147483648
  %v317 = vmul.f32 %v316, 1.442695
  %v318 = vpow.pop %v317
  %v319 = vadd.f32 %v318, 1.0
  %v320 = vrcp.pop %v319
  %v321 = vmul.f32 1.0, %v320
  %v322 = vxor.u32 %v313, 2147483648
  %v323 = vmul.f32 %v322, 1.442695
  %v324 = vpow.pop %v323
  %v325 = vadd.f32 %v324, 1.0
  %v326 = vrcp.pop %v325
  %v327 = vmul.f32 1.0, %v326
  %v328 = vtanh.pop %v314
  %v329 = vxor.u32 %v315, 2147483648
  %v330 = vmul.f32 %v329, 1.442695
  %v331 = vpow.pop %v330
  %v332 = vadd.f32 %v331, 1.0
  %v333 = vrcp.pop %v332
  %v334 = vmul.f32 1.0, %v333
  %v335 = vmul.f32 %v327, %v30
  %v336 = vmul.f32 %v321, %v328
  %v337 = vadd.f32 %v335, %v336
  %v338 = vtanh.pop %v337
  %v339 = vmul.f32 %v334, %v338
  %340 = vst [vmem:[#allocation3] sm:$0xff] %v337
  %341 = vst [vmem:[#allocation2] sm:$0xff] %v339
  %v342 = vpack.c.bf16 %v339, %v339
  %343 = vst [vmem:[%s4] sm:$0xf] %v342
  %v344 = vld [vmem:[#allocation2] sm:$0xff]
  %v345 = vld [vmem:[#allocation3] sm:$0xff]
  %s346 = scalar_lea.vmem %s0, 16
  %v347 = vld [vmem:[%s346] sm:$0xff]
  %v348 = vld [vmem:[%s346 + $0x8] sm:$0xff]
  %v349 = vunpack.c.l.bf16 %v347
  %v350 = vunpack.c.h.bf16 %v347
  %v351 = vunpack.c.l.bf16 %v348
  %v352 = vunpack.c.h.bf16 %v348
  %v353 = vpack.c.bf16 %v344, %v344
  %v354 = vld [vmem:[%s1] sm:$0xff]
  %v355 = vld [vmem:[%s1 + $0x8] sm:$0xff]
  %v356 = vld [vmem:[%s1 + $0x10] sm:$0xff]
  %v357 = vld [vmem:[%s1 + $0x18] sm:$0xff]
  %v358 = vld [vmem:[%s1 + $0x20] sm:$0xff]
  %v359 = vld [vmem:[%s1 + $0x28] sm:$0xff]
  %v360 = vld [vmem:[%s1 + $0x30] sm:$0xff]
  %v361 = vld [vmem:[%s1 + $0x38] sm:$0xff]
  %v362 = vld [vmem:[%s1 + $0x40] sm:$0xff]
  %v363 = vld [vmem:[%s1 + $0x48] sm:$0xff]
  %v364 = vld [vmem:[%s1 + $0x50] sm:$0xff]
  %v365 = vld [vmem:[%s1 + $0x58] sm:$0xff]
  %v366 = vld [vmem:[%s1 + $0x60] sm:$0xff]
  %v367 = vld [vmem:[%s1 + $0x68] sm:$0xff]
  %v368 = vld [vmem:[%s1 + $0x70] sm:$0xff]
  %v369 = vld [vmem:[%s1 + $0x78] sm:$0xff]
  %v370 = vld [vmem:[%s1 + $0x80] sm:$0xff]
  %v371 = vld [vmem:[%s1 + $0x88] sm:$0xff]
  %v372 = vld [vmem:[%s1 + $0x90] sm:$0xff]
  %v373 = vld [vmem:[%s1 + $0x98] sm:$0xff]
  %v374 = vld [vmem:[%s1 + $0xa0] sm:$0xff]
  %v375 = vld [vmem:[%s1 + $0xa8] sm:$0xff]
  %v376 = vld [vmem:[%s1 + $0xb0] sm:$0xff]
  %v377 = vld [vmem:[%s1 + $0xb8] sm:$0xff]
  %v378 = vld [vmem:[%s1 + $0xc0] sm:$0xff]
  %v379 = vld [vmem:[%s1 + $0xc8] sm:$0xff]
  %v380 = vld [vmem:[%s1 + $0xd0] sm:$0xff]
  %v381 = vld [vmem:[%s1 + $0xd8] sm:$0xff]
  %v382 = vld [vmem:[%s1 + $0xe0] sm:$0xff]
  %v383 = vld [vmem:[%s1 + $0xe8] sm:$0xff]
  %v384 = vld [vmem:[%s1 + $0xf0] sm:$0xff]
  %v385 = vld [vmem:[%s1 + $0xf8] sm:$0xff]
  %v418 = vunpack.c.l.b16 %v354
  %v419 = vunpack.c.h.b16 %v354
  %v420 = vunpack.c.l.b16 %v355
  %v421 = vunpack.c.h.b16 %v355
  %v422 = vunpack.c.l.b16 %v356
  %v423 = vunpack.c.h.b16 %v356
  %v424 = vunpack.c.l.b16 %v357
  %v425 = vunpack.c.h.b16 %v357
  %v426 = vunpack.c.l.b16 %v358
  %v427 = vunpack.c.h.b16 %v358
  %v428 = vunpack.c.l.b16 %v359
  %v429 = vunpack.c.h.b16 %v359
  %v430 = vunpack.c.l.b16 %v360
  %v431 = vunpack.c.h.b16 %v360
  %v432 = vunpack.c.l.b16 %v361
  %v433 = vunpack.c.h.b16 %v361
  %v434 = vunpack.c.l.b16 %v362
  %v435 = vunpack.c.h.b16 %v362
  %v436 = vunpack.c.l.b16 %v363
  %v437 = vunpack.c.h.b16 %v363
  %v438 = vunpack.c.l.b16 %v364
  %v439 = vunpack.c.h.b16 %v364
  %v440 = vunpack.c.l.b16 %v365
  %v441 = vunpack.c.h.b16 %v365
  %v442 = vunpack.c.l.b16 %v366
  %v443 = vunpack.c.h.b16 %v366
  %v444 = vunpack.c.l.b16 %v367
  %v445 = vunpack.c.h.b16 %v367
  %v446 = vunpack.c.l.b16 %v368
  %v447 = vunpack.c.h.b16 %v368
  %v448 = vunpack.c.l.b16 %v369
  %v449 = vunpack.c.h.b16 %v369
  %v450 = vunpack.c.l.b16 %v370
  %v451 = vunpack.c.h.b16 %v370
  %v452 = vunpack.c.l.b16 %v371
  %v453 = vunpack.c.h.b16 %v371
  %v454 = vunpack.c.l.b16 %v372
  %v455 = vunpack.c.h.b16 %v372
  %v456 = vunpack.c.l.b16 %v373
  %v457 = vunpack.c.h.b16 %v373
  %v458 = vunpack.c.l.b16 %v374
  %v459 = vunpack.c.h.b16 %v374
  %v460 = vunpack.c.l.b16 %v375
  %v461 = vunpack.c.h.b16 %v375
  %v462 = vunpack.c.l.b16 %v376
  %v463 = vunpack.c.h.b16 %v376
  %v464 = vunpack.c.l.b16 %v377
  %v465 = vunpack.c.h.b16 %v377
  %v466 = vunpack.c.l.b16 %v378
  %v467 = vunpack.c.h.b16 %v378
  %v468 = vunpack.c.l.b16 %v379
  %v469 = vunpack.c.h.b16 %v379
  %v470 = vunpack.c.l.b16 %v380
  %v471 = vunpack.c.h.b16 %v380
  %v472 = vunpack.c.l.b16 %v381
  %v473 = vunpack.c.h.b16 %v381
  %v474 = vunpack.c.l.b16 %v382
  %v475 = vunpack.c.h.b16 %v382
  %v476 = vunpack.c.l.b16 %v383
  %v477 = vunpack.c.h.b16 %v383
  %v478 = vunpack.c.l.b16 %v384
  %v479 = vunpack.c.h.b16 %v384
  %v480 = vunpack.c.l.b16 %v385
  %v481 = vunpack.c.h.b16 %v385
  %v482 = vpack.c.b16 %v422, %v418
  %v483 = vpack.c.b16 %v423, %v419
  %v484 = vpack.c.b16 %v424, %v420
  %v485 = vpack.c.b16 %v425, %v421
  %v486 = vpack.c.b16 %v430, %v426
  %v487 = vpack.c.b16 %v431, %v427
  %v488 = vpack.c.b16 %v432, %v428
  %v489 = vpack.c.b16 %v433, %v429
  %v490 = vpack.c.b16 %v438, %v434
  %v491 = vpack.c.b16 %v439, %v435
  %v492 = vpack.c.b16 %v440, %v436
  %v493 = vpack.c.b16 %v441, %v437
  %v494 = vpack.c.b16 %v446, %v442
  %v495 = vpack.c.b16 %v447, %v443
  %v496 = vpack.c.b16 %v448, %v444
  %v497 = vpack.c.b16 %v449, %v445
  %v498 = vpack.c.b16 %v454, %v450
  %v499 = vpack.c.b16 %v455, %v451
  %v500 = vpack.c.b16 %v456, %v452
  %v501 = vpack.c.b16 %v457, %v453
  %v502 = vpack.c.b16 %v462, %v458
  %v503 = vpack.c.b16 %v463, %v459
  %v504 = vpack.c.b16 %v464, %v460
  %v505 = vpack.c.b16 %v465, %v461
  %v506 = vpack.c.b16 %v470, %v466
  %v507 = vpack.c.b16 %v471, %v467
  %v508 = vpack.c.b16 %v472, %v468
  %v509 = vpack.c.b16 %v473, %v469
  %v510 = vpack.c.b16 %v478, %v474
  %v511 = vpack.c.b16 %v479, %v475
  %v512 = vpack.c.b16 %v480, %v476
  %v513 = vpack.c.b16 %v481, %v477
  %546 = vmatprep.subr.bf16.mxu0 %v511
  %547 = vmatpush1.bf16.msra.mxu0 %v510
  %548 = vmatprep.subr.bf16.mxu0 %v507
  %549 = vmatpush1.bf16.msra.mxu0 %v506
  %550 = vmatprep.subr.bf16.mxu0 %v503
  %551 = vmatpush1.bf16.msra.mxu0 %v502
  %552 = vmatprep.subr.bf16.mxu0 %v499
  %553 = vmatpush1.bf16.msra.mxu0 %v498
  %554 = vmatprep.subr.bf16.mxu0 %v495
  %555 = vmatpush1.bf16.msra.mxu0 %v494
  %556 = vmatprep.subr.bf16.mxu0 %v491
  %557 = vmatpush1.bf16.msra.mxu0 %v490
  %558 = vmatprep.subr.bf16.mxu0 %v487
  %559 = vmatpush1.bf16.msra.mxu0 %v486
  %560 = vmatprep.subr.bf16.mxu0 %v483
  %561 = vmatpush1.bf16.msra.mxu0 %v482
  %562 = vmatprep.subr.bf16.mxu0 0
  %563 = vmatpush2.bf16.msra.mxu0 0
  %564 = vmatprep.subr.bf16.mxu0 0
  %565 = vmatpush2.bf16.msra.mxu0 0
  %566 = vmatprep.subr.bf16.mxu0 0
  %567 = vmatpush2.bf16.msra.mxu0 0
  %568 = vmatprep.subr.bf16.mxu0 0
  %569 = vmatpush2.bf16.msra.mxu0 0
  %570 = vmatprep.subr.bf16.mxu0 0
  %571 = vmatpush2.bf16.msra.mxu0 0
  %572 = vmatprep.subr.bf16.mxu0 0
  %573 = vmatpush2.bf16.msra.mxu0 0
  %574 = vmatprep.subr.bf16.mxu0 0
  %575 = vmatpush2.bf16.msra.mxu0 0
  %576 = vmatprep.subr.bf16.mxu0 0
  %577 = vmatpush2.bf16.msra.mxu0 0
  %578 = vmatprep.mubr.bf16.mxu0 0
  %579 = vmatmul.mubr.bf16.gmra.mxu0 %v353
  %v580 = vpop.f32.mrf.mxu0
  %v581 = vadd.f32 0.0, %v580
  %v582 = vpop.f32.mrf.mxu0
  %v583 = vadd.f32 0.0, %v582
  %v584 = vpop.f32.mrf.mxu0
  %v585 = vpop.f32.mrf.mxu0
  %586 = vdwg.mxu0
  %587 = vmatprep.subr.bf16.mxu0 %v513
  %588 = vmatpush1.bf16.msra.mxu0 %v512
  %589 = vmatprep.subr.bf16.mxu0 %v509
  %590 = vmatpush1.bf16.msra.mxu0 %v508
  %591 = vmatprep.subr.bf16.mxu0 %v505
  %592 = vmatpush1.bf16.msra.mxu0 %v504
  %593 = vmatprep.subr.bf16.mxu0 %v501
  %594 = vmatpush1.bf16.msra.mxu0 %v500
  %595 = vmatprep.subr.bf16.mxu0 %v497
  %596 = vmatpush1.bf16.msra.mxu0 %v496
  %597 = vmatprep.subr.bf16.mxu0 %v493
  %598 = vmatpush1.bf16.msra.mxu0 %v492
  %599 = vmatprep.subr.bf16.mxu0 %v489
  %600 = vmatpush1.bf16.msra.mxu0 %v488
  %601 = vmatprep.subr.bf16.mxu0 %v485
  %602 = vmatpush1.bf16.msra.mxu0 %v484
  %603 = vmatprep.subr.bf16.mxu0 0
  %604 = vmatpush2.bf16.msra.mxu0 0
  %605 = vmatprep.subr.bf16.mxu0 0
  %606 = vmatpush2.bf16.msra.mxu0 0
  %607 = vmatprep.subr.bf16.mxu0 0
  %608 = vmatpush2.bf16.msra.mxu0 0
  %609 = vmatprep.subr.bf16.mxu0 0
  %610 = vmatpush2.bf16.msra.mxu0 0
  %611 = vmatprep.subr.bf16.mxu0 0
  %612 = vmatpush2.bf16.msra.mxu0 0
  %613 = vmatprep.subr.bf16.mxu0 0
  %614 = vmatpush2.bf16.msra.mxu0 0
  %615 = vmatprep.subr.bf16.mxu0 0
  %616 = vmatpush2.bf16.msra.mxu0 0
  %617 = vmatprep.subr.bf16.mxu0 0
  %618 = vmatpush2.bf16.msra.mxu0 0
  %619 = vmatprep.mubr.bf16.mxu0 0
  %620 = vmatmul.mubr.bf16.gmra.mxu0 %v353
  %v621 = vpop.f32.mrf.mxu0
  %v622 = vadd.f32 0.0, %v621
  %v623 = vpop.f32.mrf.mxu0
  %v624 = vadd.f32 0.0, %v623
  %v625 = vpop.f32.mrf.mxu0
  %v626 = vpop.f32.mrf.mxu0
  %627 = vdwg.mxu0
  %v628 = vadd.f32 %v349, %v581
  %v629 = vadd.f32 %v350, %v583
  %v630 = vadd.f32 %v351, %v622
  %v631 = vadd.f32 %v352, %v624
  %v632 = vxor.u32 %v628, 2147483648
  %v633 = vmul.f32 %v632, 1.442695
  %v634 = vpow.pop %v633
  %v635 = vadd.f32 %v634, 1.0
  %v636 = vrcp.pop %v635
  %v637 = vmul.f32 1.0, %v636
  %v638 = vxor.u32 %v629, 2147483648
  %v639 = vmul.f32 %v638, 1.442695
  %v640 = vpow.pop %v639
  %v641 = vadd.f32 %v640, 1.0
  %v642 = vrcp.pop %v641
  %v643 = vmul.f32 1.0, %v642
  %v644 = vtanh.pop %v630
  %v645 = vxor.u32 %v631, 2147483648
  %v646 = vmul.f32 %v645, 1.442695
  %v647 = vpow.pop %v646
  %v648 = vadd.f32 %v647, 1.0
  %v649 = vrcp.pop %v648
  %v650 = vmul.f32 1.0, %v649
  %v651 = vmul.f32 %v643, %v345
  %v652 = vmul.f32 %v637, %v644
  %v653 = vadd.f32 %v651, %v652
  %v654 = vtanh.pop %v653
  %v655 = vmul.f32 %v650, %v654
  %656 = vst [vmem:[#allocation3] sm:$0xff] %v653
  %657 = vst [vmem:[#allocation2] sm:$0xff] %v655
  %v658 = vpack.c.bf16 %v655, %v655
  %s659 = scalar_lea.vmem %s4, 4
  %660 = vst [vmem:[%s659] sm:$0xf] %v658
  %v661 = vld [vmem:[#allocation2] sm:$0xff]
  %v662 = vld [vmem:[#allocation3] sm:$0xff]
  %s663 = scalar_lea.vmem %s0, 32
  %v664 = vld [vmem:[%s663] sm:$0xff]
  %v665 = vld [vmem:[%s663 + $0x8] sm:$0xff]
  %v666 = vunpack.c.l.bf16 %v664
  %v667 = vunpack.c.h.bf16 %v664
  %v668 = vunpack.c.l.bf16 %v665
  %v669 = vunpack.c.h.bf16 %v665
  %v670 = vpack.c.bf16 %v661, %v661
  %v671 = vld [vmem:[%s1] sm:$0xff]
  %v672 = vld [vmem:[%s1 + $0x8] sm:$0xff]
  %v673 = vld [vmem:[%s1 + $0x10] sm:$0xff]
  %v674 = vld [vmem:[%s1 + $0x18] sm:$0xff]
  %v675 = vld [vmem:[%s1 + $0x20] sm:$0xff]
  %v676 = vld [vmem:[%s1 + $0x28] sm:$0xff]
  %v677 = vld [vmem:[%s1 + $0x30] sm:$0xff]
  %v678 = vld [vmem:[%s1 + $0x38] sm:$0xff]
  %v679 = vld [vmem:[%s1 + $0x40] sm:$0xff]
  %v680 = vld [vmem:[%s1 + $0x48] sm:$0xff]
  %v681 = vld [vmem:[%s1 + $0x50] sm:$0xff]
  %v682 = vld [vmem:[%s1 + $0x58] sm:$0xff]
  %v683 = vld [vmem:[%s1 + $0x60] sm:$0xff]
  %v684 = vld [vmem:[%s1 + $0x68] sm:$0xff]
  %v685 = vld [vmem:[%s1 + $0x70] sm:$0xff]
  %v686 = vld [vmem:[%s1 + $0x78] sm:$0xff]
  %v687 = vld [vmem:[%s1 + $0x80] sm:$0xff]
  %v688 = vld [vmem:[%s1 + $0x88] sm:$0xff]
  %v689 = vld [vmem:[%s1 + $0x90] sm:$0xff]
  %v690 = vld [vmem:[%s1 + $0x98] sm:$0xff]
  %v691 = vld [vmem:[%s1 + $0xa0] sm:$0xff]
  %v692 = vld [vmem:[%s1 + $0xa8] sm:$0xff]
  %v693 = vld [vmem:[%s1 + $0xb0] sm:$0xff]
  %v694 = vld [vmem:[%s1 + $0xb8] sm:$0xff]
  %v695 = vld [vmem:[%s1 + $0xc0] sm:$0xff]
  %v696 = vld [vmem:[%s1 + $0xc8] sm:$0xff]
  %v697 = vld [vmem:[%s1 + $0xd0] sm:$0xff]
  %v698 = vld [vmem:[%s1 + $0xd8] sm:$0xff]
  %v699 = vld [vmem:[%s1 + $0xe0] sm:$0xff]
  %v700 = vld [vmem:[%s1 + $0xe8] sm:$0xff]
  %v701 = vld [vmem:[%s1 + $0xf0] sm:$0xff]
  %v702 = vld [vmem:[%s1 + $0xf8] sm:$0xff]
  %v735 = vunpack.c.l.b16 %v671
  %v736 = vunpack.c.h.b16 %v671
  %v737 = vunpack.c.l.b16 %v672
  %v738 = vunpack.c.h.b16 %v672
  %v739 = vunpack.c.l.b16 %v673
  %v740 = vunpack.c.h.b16 %v673
  %v741 = vunpack.c.l.b16 %v674
  %v742 = vunpack.c.h.b16 %v674
  %v743 = vunpack.c.l.b16 %v675
  %v744 = vunpack.c.h.b16 %v675
  %v745 = vunpack.c.l.b16 %v676
  %v746 = vunpack.c.h.b16 %v676
  %v747 = vunpack.c.l.b16 %v677
  %v748 = vunpack.c.h.b16 %v677
  %v749 = vunpack.c.l.b16 %v678
  %v750 = vunpack.c.h.b16 %v678
  %v751 = vunpack.c.l.b16 %v679
  %v752 = vunpack.c.h.b16 %v679
  %v753 = vunpack.c.l.b16 %v680
  %v754 = vunpack.c.h.b16 %v680
  %v755 = vunpack.c.l.b16 %v681
  %v756 = vunpack.c.h.b16 %v681
  %v757 = vunpack.c.l.b16 %v682
  %v758 = vunpack.c.h.b16 %v682
  %v759 = vunpack.c.l.b16 %v683
  %v760 = vunpack.c.h.b16 %v683
  %v761 = vunpack.c.l.b16 %v684
  %v762 = vunpack.c.h.b16 %v684
  %v763 = vunpack.c.l.b16 %v685
  %v764 = vunpack.c.h.b16 %v685
  %v765 = vunpack.c.l.b16 %v686
  %v766 = vunpack.c.h.b16 %v686
  %v767 = vunpack.c.l.b16 %v687
  %v768 = vunpack.c.h.b16 %v687
  %v769 = vunpack.c.l.b16 %v688
  %v770 = vunpack.c.h.b16 %v688
  %v771 = vunpack.c.l.b16 %v689
  %v772 = vunpack.c.h.b16 %v689
  %v773 = vunpack.c.l.b16 %v690
  %v774 = vunpack.c.h.b16 %v690
  %v775 = vunpack.c.l.b16 %v691
  %v776 = vunpack.c.h.b16 %v691
  %v777 = vunpack.c.l.b16 %v692
  %v778 = vunpack.c.h.b16 %v692
  %v779 = vunpack.c.l.b16 %v693
  %v780 = vunpack.c.h.b16 %v693
  %v781 = vunpack.c.l.b16 %v694
  %v782 = vunpack.c.h.b16 %v694
  %v783 = vunpack.c.l.b16 %v695
  %v784 = vunpack.c.h.b16 %v695
  %v785 = vunpack.c.l.b16 %v696
  %v786 = vunpack.c.h.b16 %v696
  %v787 = vunpack.c.l.b16 %v697
  %v788 = vunpack.c.h.b16 %v697
  %v789 = vunpack.c.l.b16 %v698
  %v790 = vunpack.c.h.b16 %v698
  %v791 = vunpack.c.l.b16 %v699
  %v792 = vunpack.c.h.b16 %v699
  %v793 = vunpack.c.l.b16 %v700
  %v794 = vunpack.c.h.b16 %v700
  %v795 = vunpack.c.l.b16 %v701
  %v796 = vunpack.c.h.b16 %v701
  %v797 = vunpack.c.l.b16 %v702
  %v798 = vunpack.c.h.b16 %v702
  %v799 = vpack.c.b16 %v739, %v735
  %v800 = vpack.c.b16 %v740, %v736
  %v801 = vpack.c.b16 %v741, %v737
  %v802 = vpack.c.b16 %v742, %v738
  %v803 = vpack.c.b16 %v747, %v743
  %v804 = vpack.c.b16 %v748, %v744
  %v805 = vpack.c.b16 %v749, %v745
  %v806 = vpack.c.b16 %v750, %v746
  %v807 = vpack.c.b16 %v755, %v751
  %v808 = vpack.c.b16 %v756, %v752
  %v809 = vpack.c.b16 %v757, %v753
  %v810 = vpack.c.b16 %v758, %v754
  %v811 = vpack.c.b16 %v763, %v759
  %v812 = vpack.c.b16 %v764, %v760
  %v813 = vpack.c.b16 %v765, %v761
  %v814 = vpack.c.b16 %v766, %v762
  %v815 = vpack.c.b16 %v771, %v767
  %v816 = vpack.c.b16 %v772, %v768
  %v817 = vpack.c.b16 %v773, %v769
  %v818 = vpack.c.b16 %v774, %v770
  %v819 = vpack.c.b16 %v779, %v775
  %v820 = vpack.c.b16 %v780, %v776
  %v821 = vpack.c.b16 %v781, %v777
  %v822 = vpack.c.b16 %v782, %v778
  %v823 = vpack.c.b16 %v787, %v783
  %v824 = vpack.c.b16 %v788, %v784
  %v825 = vpack.c.b16 %v789, %v785
  %v826 = vpack.c.b16 %v790, %v786
  %v827 = vpack.c.b16 %v795, %v791
  %v828 = vpack.c.b16 %v796, %v792
  %v829 = vpack.c.b16 %v797, %v793
  %v830 = vpack.c.b16 %v798, %v794
  %863 = vmatprep.subr.bf16.mxu0 %v828
  %864 = vmatpush1.bf16.msra.mxu0 %v827
  %865 = vmatprep.subr.bf16.mxu0 %v824
  %866 = vmatpush1.bf16.msra.mxu0 %v823
  %867 = vmatprep.subr.bf16.mxu0 %v820
  %868 = vmatpush1.bf16.msra.mxu0 %v819
  %869 = vmatprep.subr.bf16.mxu0 %v816
  %870 = vmatpush1.bf16.msra.mxu0 %v815
  %871 = vmatprep.subr.bf16.mxu0 %v812
  %872 = vmatpush1.bf16.msra.mxu0 %v811
  %873 = vmatprep.subr.bf16.mxu0 %v808
  %874 = vmatpush1.bf16.msra.mxu0 %v807
  %875 = vmatprep.subr.bf16.mxu0 %v804
  %876 = vmatpush1.bf16.msra.mxu0 %v803
  %877 = vmatprep.subr.bf16.mxu0 %v800
  %878 = vmatpush1.bf16.msra.mxu0 %v799
  %879 = vmatprep.subr.bf16.mxu0 0
  %880 = vmatpush2.bf16.msra.mxu0 0
  %881 = vmatprep.subr.bf16.mxu0 0
  %882 = vmatpush2.bf16.msra.mxu0 0
  %883 = vmatprep.subr.bf16.mxu0 0
  %884 = vmatpush2.bf16.msra.mxu0 0
  %885 = vmatprep.subr.bf16.mxu0 0
  %886 = vmatpush2.bf16.msra.mxu0 0
  %887 = vmatprep.subr.bf16.mxu0 0
  %888 = vmatpush2.bf16.msra.mxu0 0
  %889 = vmatprep.subr.bf16.mxu0 0
  %890 = vmatpush2.bf16.msra.mxu0 0
  %891 = vmatprep.subr.bf16.mxu0 0
  %892 = vmatpush2.bf16.msra.mxu0 0
  %893 = vmatprep.subr.bf16.mxu0 0
  %894 = vmatpush2.bf16.msra.mxu0 0
  %895 = vmatprep.mubr.bf16.mxu0 0
  %896 = vmatmul.mubr.bf16.gmra.mxu0 %v670
  %v897 = vpop.f32.mrf.mxu0
  %v898 = vadd.f32 0.0, %v897
  %v899 = vpop.f32.mrf.mxu0
  %v900 = vadd.f32 0.0, %v899
  %v901 = vpop.f32.mrf.mxu0
  %v902 = vpop.f32.mrf.mxu0
  %903 = vdwg.mxu0
  %904 = vmatprep.subr.bf16.mxu0 %v830
  %905 = vmatpush1.bf16.msra.mxu0 %v829
  %906 = vmatprep.subr.bf16.mxu0 %v826
  %907 = vmatpush1.bf16.msra.mxu0 %v825
  %908 = vmatprep.subr.bf16.mxu0 %v822
  %909 = vmatpush1.bf16.msra.mxu0 %v821
  %910 = vmatprep.subr.bf16.mxu0 %v818
  %911 = vmatpush1.bf16.msra.mxu0 %v817
  %912 = vmatprep.subr.bf16.mxu0 %v814
  %913 = vmatpush1.bf16.msra.mxu0 %v813
  %914 = vmatprep.subr.bf16.mxu0 %v810
  %915 = vmatpush1.bf16.msra.mxu0 %v809
  %916 = vmatprep.subr.bf16.mxu0 %v806
  %917 = vmatpush1.bf16.msra.mxu0 %v805
  %918 = vmatprep.subr.bf16.mxu0 %v802
  %919 = vmatpush1.bf16.msra.mxu0 %v801
  %920 = vmatprep.subr.bf16.mxu0 0
  %921 = vmatpush2.bf16.msra.mxu0 0
  %922 = vmatprep.subr.bf16.mxu0 0
  %923 = vmatpush2.bf16.msra.mxu0 0
  %924 = vmatprep.subr.bf16.mxu0 0
  %925 = vmatpush2.bf16.msra.mxu0 0
  %926 = vmatprep.subr.bf16.mxu0 0
  %927 = vmatpush2.bf16.msra.mxu0 0
  %928 = vmatprep.subr.bf16.mxu0 0
  %929 = vmatpush2.bf16.msra.mxu0 0
  %930 = vmatprep.subr.bf16.mxu0 0
  %931 = vmatpush2.bf16.msra.mxu0 0
  %932 = vmatprep.subr.bf16.mxu0 0
  %933 = vmatpush2.bf16.msra.mxu0 0
  %934 = vmatprep.subr.bf16.mxu0 0
  %935 = vmatpush2.bf16.msra.mxu0 0
  %936 = vmatprep.mubr.bf16.mxu0 0
  %937 = vmatmul.mubr.bf16.gmra.mxu0 %v670
  %v938 = vpop.f32.mrf.mxu0
  %v939 = vadd.f32 0.0, %v938
  %v940 = vpop.f32.mrf.mxu0
  %v941 = vadd.f32 0.0, %v940
  %v942 = vpop.f32.mrf.mxu0
  %v943 = vpop.f32.mrf.mxu0
  %944 = vdwg.mxu0
  %v945 = vadd.f32 %v666, %v898
  %v946 = vadd.f32 %v667, %v900
  %v947 = vadd.f32 %v668, %v939
  %v948 = vadd.f32 %v669, %v941
  %v949 = vxor.u32 %v945, 2147483648
  %v950 = vmul.f32 %v949, 1.442695
  %v951 = vpow.pop %v950
  %v952 = vadd.f32 %v951, 1.0
  %v953 = vrcp.pop %v952
  %v954 = vmul.f32 1.0, %v953
  %v955 = vxor.u32 %v946, 2147483648
  %v956 = vmul.f32 %v955, 1.442695
  %v957 = vpow.pop %v956
  %v958 = vadd.f32 %v957, 1.0
  %v959 = vrcp.pop %v958
  %v960 = vmul.f32 1.0, %v959
  %v961 = vtanh.pop %v947
  %v962 = vxor.u32 %v948, 2147483648
  %v963 = vmul.f32 %v962, 1.442695
  %v964 = vpow.pop %v963
  %v965 = vadd.f32 %v964, 1.0
  %v966 = vrcp.pop %v965
  %v967 = vmul.f32 1.0, %v966
  %v968 = vmul.f32 %v960, %v662
  %v969 = vmul.f32 %v954, %v961
  %v970 = vadd.f32 %v968, %v969
  %v971 = vtanh.pop %v970
  %v972 = vmul.f32 %v967, %v971
  %973 = vst [vmem:[#allocation3] sm:$0xff] %v970
  %974 = vst [vmem:[#allocation2] sm:$0xff] %v972
  %v975 = vpack.c.bf16 %v972, %v972
  %s976 = scalar_lea.vmem %s4, 8
  %977 = vst [vmem:[%s976] sm:$0xf] %v975
  %v978 = vld [vmem:[#allocation2] sm:$0xff]
  %v979 = vld [vmem:[#allocation3] sm:$0xff]
  %s980 = scalar_lea.vmem %s0, 48
  %v981 = vld [vmem:[%s980] sm:$0xff]
  %v982 = vld [vmem:[%s980 + $0x8] sm:$0xff]
  %v983 = vunpack.c.l.bf16 %v981
  %v984 = vunpack.c.h.bf16 %v981
  %v985 = vunpack.c.l.bf16 %v982
  %v986 = vunpack.c.h.bf16 %v982
  %v987 = vpack.c.bf16 %v978, %v978
  %v988 = vld [vmem:[%s1] sm:$0xff]
  %v989 = vld [vmem:[%s1 + $0x8] sm:$0xff]
  %v990 = vld [vmem:[%s1 + $0x10] sm:$0xff]
  %v991 = vld [vmem:[%s1 + $0x18] sm:$0xff]
  %v992 = vld [vmem:[%s1 + $0x20] sm:$0xff]
  %v993 = vld [vmem:[%s1 + $0x28] sm:$0xff]
  %v994 = vld [vmem:[%s1 + $0x30] sm:$0xff]
  %v995 = vld [vmem:[%s1 + $0x38] sm:$0xff]
  %v996 = vld [vmem:[%s1 + $0x40] sm:$0xff]
  %v997 = vld [vmem:[%s1 + $0x48] sm:$0xff]
  %v998 = vld [vmem:[%s1 + $0x50] sm:$0xff]
  %v999 = vld [vmem:[%s1 + $0x58] sm:$0xff]
  %v1000 = vld [vmem:[%s1 + $0x60] sm:$0xff]
  %v1001 = vld [vmem:[%s1 + $0x68] sm:$0xff]
  %v1002 = vld [vmem:[%s1 + $0x70] sm:$0xff]
  %v1003 = vld [vmem:[%s1 + $0x78] sm:$0xff]
  %v1004 = vld [vmem:[%s1 + $0x80] sm:$0xff]
  %v1005 = vld [vmem:[%s1 + $0x88] sm:$0xff]
  %v1006 = vld [vmem:[%s1 + $0x90] sm:$0xff]
  %v1007 = vld [vmem:[%s1 + $0x98] sm:$0xff]
  %v1008 = vld [vmem:[%s1 + $0xa0] sm:$0xff]
  %v1009 = vld [vmem:[%s1 + $0xa8] sm:$0xff]
  %v1010 = vld [vmem:[%s1 + $0xb0] sm:$0xff]
  %v1011 = vld [vmem:[%s1 + $0xb8] sm:$0xff]
  %v1012 = vld [vmem:[%s1 + $0xc0] sm:$0xff]
  %v1013 = vld [vmem:[%s1 + $0xc8] sm:$0xff]
  %v1014 = vld [vmem:[%s1 + $0xd0] sm:$0xff]
  %v1015 = vld [vmem:[%s1 + $0xd8] sm:$0xff]
  %v1016 = vld [vmem:[%s1 + $0xe0] sm:$0xff]
  %v1017 = vld [vmem:[%s1 + $0xe8] sm:$0xff]
  %v1018 = vld [vmem:[%s1 + $0xf0] sm:$0xff]
  %v1019 = vld [vmem:[%s1 + $0xf8] sm:$0xff]
  %v1052 = vunpack.c.l.b16 %v988
  %v1053 = vunpack.c.h.b16 %v988
  %v1054 = vunpack.c.l.b16 %v989
  %v1055 = vunpack.c.h.b16 %v989
  %v1056 = vunpack.c.l.b16 %v990
  %v1057 = vunpack.c.h.b16 %v990
  %v1058 = vunpack.c.l.b16 %v991
  %v1059 = vunpack.c.h.b16 %v991
  %v1060 = vunpack.c.l.b16 %v992
  %v1061 = vunpack.c.h.b16 %v992
  %v1062 = vunpack.c.l.b16 %v993
  %v1063 = vunpack.c.h.b16 %v993
  %v1064 = vunpack.c.l.b16 %v994
  %v1065 = vunpack.c.h.b16 %v994
  %v1066 = vunpack.c.l.b16 %v995
  %v1067 = vunpack.c.h.b16 %v995
  %v1068 = vunpack.c.l.b16 %v996
  %v1069 = vunpack.c.h.b16 %v996
  %v1070 = vunpack.c.l.b16 %v997
  %v1071 = vunpack.c.h.b16 %v997
  %v1072 = vunpack.c.l.b16 %v998
  %v1073 = vunpack.c.h.b16 %v998
  %v1074 = vunpack.c.l.b16 %v999
  %v1075 = vunpack.c.h.b16 %v999
  %v1076 = vunpack.c.l.b16 %v1000
  %v1077 = vunpack.c.h.b16 %v1000
  %v1078 = vunpack.c.l.b16 %v1001
  %v1079 = vunpack.c.h.b16 %v1001
  %v1080 = vunpack.c.l.b16 %v1002
  %v1081 = vunpack.c.h.b16 %v1002
  %v1082 = vunpack.c.l.b16 %v1003
  %v1083 = vunpack.c.h.b16 %v1003
  %v1084 = vunpack.c.l.b16 %v1004
  %v1085 = vunpack.c.h.b16 %v1004
  %v1086 = vunpack.c.l.b16 %v1005
  %v1087 = vunpack.c.h.b16 %v1005
  %v1088 = vunpack.c.l.b16 %v1006
  %v1089 = vunpack.c.h.b16 %v1006
  %v1090 = vunpack.c.l.b16 %v1007
  %v1091 = vunpack.c.h.b16 %v1007
  %v1092 = vunpack.c.l.b16 %v1008
  %v1093 = vunpack.c.h.b16 %v1008
  %v1094 = vunpack.c.l.b16 %v1009
  %v1095 = vunpack.c.h.b16 %v1009
  %v1096 = vunpack.c.l.b16 %v1010
  %v1097 = vunpack.c.h.b16 %v1010
  %v1098 = vunpack.c.l.b16 %v1011
  %v1099 = vunpack.c.h.b16 %v1011
  %v1100 = vunpack.c.l.b16 %v1012
  %v1101 = vunpack.c.h.b16 %v1012
  %v1102 = vunpack.c.l.b16 %v1013
  %v1103 = vunpack.c.h.b16 %v1013
  %v1104 = vunpack.c.l.b16 %v1014
  %v1105 = vunpack.c.h.b16 %v1014
  %v1106 = vunpack.c.l.b16 %v1015
  %v1107 = vunpack.c.h.b16 %v1015
  %v1108 = vunpack.c.l.b16 %v1016
  %v1109 = vunpack.c.h.b16 %v1016
  %v1110 = vunpack.c.l.b16 %v1017
  %v1111 = vunpack.c.h.b16 %v1017
  %v1112 = vunpack.c.l.b16 %v1018
  %v1113 = vunpack.c.h.b16 %v1018
  %v1114 = vunpack.c.l.b16 %v1019
  %v1115 = vunpack.c.h.b16 %v1019
  %v1116 = vpack.c.b16 %v1056, %v1052
  %v1117 = vpack.c.b16 %v1057, %v1053
  %v1118 = vpack.c.b16 %v1058, %v1054
  %v1119 = vpack.c.b16 %v1059, %v1055
  %v1120 = vpack.c.b16 %v1064, %v1060
  %v1121 = vpack.c.b16 %v1065, %v1061
  %v1122 = vpack.c.b16 %v1066, %v1062
  %v1123 = vpack.c.b16 %v1067, %v1063
  %v1124 = vpack.c.b16 %v1072, %v1068
  %v1125 = vpack.c.b16 %v1073, %v1069
  %v1126 = vpack.c.b16 %v1074, %v1070
  %v1127 = vpack.c.b16 %v1075, %v1071
  %v1128 = vpack.c.b16 %v1080, %v1076
  %v1129 = vpack.c.b16 %v1081, %v1077
  %v1130 = vpack.c.b16 %v1082, %v1078
  %v1131 = vpack.c.b16 %v1083, %v1079
  %v1132 = vpack.c.b16 %v1088, %v1084
  %v1133 = vpack.c.b16 %v1089, %v1085
  %v1134 = vpack.c.b16 %v1090, %v1086
  %v1135 = vpack.c.b16 %v1091, %v1087
  %v1136 = vpack.c.b16 %v1096, %v1092
  %v1137 = vpack.c.b16 %v1097, %v1093
  %v1138 = vpack.c.b16 %v1098, %v1094
  %v1139 = vpack.c.b16 %v1099, %v1095
  %v1140 = vpack.c.b16 %v1104, %v1100
  %v1141 = vpack.c.b16 %v1105, %v1101
  %v1142 = vpack.c.b16 %v1106, %v1102
  %v1143 = vpack.c.b16 %v1107, %v1103
  %v1144 = vpack.c.b16 %v1112, %v1108
  %v1145 = vpack.c.b16 %v1113, %v1109
  %v1146 = vpack.c.b16 %v1114, %v1110
  %v1147 = vpack.c.b16 %v1115, %v1111
  %1180 = vmatprep.subr.bf16.mxu0 %v1145
  %1181 = vmatpush1.bf16.msra.mxu0 %v1144
  %1182 = vmatprep.subr.bf16.mxu0 %v1141
  %1183 = vmatpush1.bf16.msra.mxu0 %v1140
  %1184 = vmatprep.subr.bf16.mxu0 %v1137
  %1185 = vmatpush1.bf16.msra.mxu0 %v1136
  %1186 = vmatprep.subr.bf16.mxu0 %v1133
  %1187 = vmatpush1.bf16.msra.mxu0 %v1132
  %1188 = vmatprep.subr.bf16.mxu0 %v1129
  %1189 = vmatpush1.bf16.msra.mxu0 %v1128
  %1190 = vmatprep.subr.bf16.mxu0 %v1125
  %1191 = vmatpush1.bf16.msra.mxu0 %v1124
  %1192 = vmatprep.subr.bf16.mxu0 %v1121
  %1193 = vmatpush1.bf16.msra.mxu0 %v1120
  %1194 = vmatprep.subr.bf16.mxu0 %v1117
  %1195 = vmatpush1.bf16.msra.mxu0 %v1116
  %1196 = vmatprep.subr.bf16.mxu0 0
  %1197 = vmatpush2.bf16.msra.mxu0 0
  %1198 = vmatprep.subr.bf16.mxu0 0
  %1199 = vmatpush2.bf16.msra.mxu0 0
  %1200 = vmatprep.subr.bf16.mxu0 0
  %1201 = vmatpush2.bf16.msra.mxu0 0
  %1202 = vmatprep.subr.bf16.mxu0 0
  %1203 = vmatpush2.bf16.msra.mxu0 0
  %1204 = vmatprep.subr.bf16.mxu0 0
  %1205 = vmatpush2.bf16.msra.mxu0 0
  %1206 = vmatprep.subr.bf16.mxu0 0
  %1207 = vmatpush2.bf16.msra.mxu0 0
  %1208 = vmatprep.subr.bf16.mxu0 0
  %1209 = vmatpush2.bf16.msra.mxu0 0
  %1210 = vmatprep.subr.bf16.mxu0 0
  %1211 = vmatpush2.bf16.msra.mxu0 0
  %1212 = vmatprep.mubr.bf16.mxu0 0
  %1213 = vmatmul.mubr.bf16.gmra.mxu0 %v987
  %v1214 = vpop.f32.mrf.mxu0
  %v1215 = vadd.f32 0.0, %v1214
  %v1216 = vpop.f32.mrf.mxu0
  %v1217 = vadd.f32 0.0, %v1216
  %v1218 = vpop.f32.mrf.mxu0
  %v1219 = vpop.f32.mrf.mxu0
  %1220 = vdwg.mxu0
  %1221 = vmatprep.subr.bf16.mxu0 %v1147
  %1222 = vmatpush1.bf16.msra.mxu0 %v1146
  %1223 = vmatprep.subr.bf16.mxu0 %v1143
  %1224 = vmatpush1.bf16.msra.mxu0 %v1142
  %1225 = vmatprep.subr.bf16.mxu0 %v1139
  %1226 = vmatpush1.bf16.msra.mxu0 %v1138
  %1227 = vmatprep.subr.bf16.mxu0 %v1135
  %1228 = vmatpush1.bf16.msra.mxu0 %v1134
  %1229 = vmatprep.subr.bf16.mxu0 %v1131
  %1230 = vmatpush1.bf16.msra.mxu0 %v1130
  %1231 = vmatprep.subr.bf16.mxu0 %v1127
  %1232 = vmatpush1.bf16.msra.mxu0 %v1126
  %1233 = vmatprep.subr.bf16.mxu0 %v1123
  %1234 = vmatpush1.bf16.msra.mxu0 %v1122
  %1235 = vmatprep.subr.bf16.mxu0 %v1119
  %1236 = vmatpush1.bf16.msra.mxu0 %v1118
  %1237 = vmatprep.subr.bf16.mxu0 0
  %1238 = vmatpush2.bf16.msra.mxu0 0
  %1239 = vmatprep.subr.bf16.mxu0 0
  %1240 = vmatpush2.bf16.msra.mxu0 0
  %1241 = vmatprep.subr.bf16.mxu0 0
  %1242 = vmatpush2.bf16.msra.mxu0 0
  %1243 = vmatprep.subr.bf16.mxu0 0
  %1244 = vmatpush2.bf16.msra.mxu0 0
  %1245 = vmatprep.subr.bf16.mxu0 0
  %1246 = vmatpush2.bf16.msra.mxu0 0
  %1247 = vmatprep.subr.bf16.mxu0 0
  %1248 = vmatpush2.bf16.msra.mxu0 0
  %1249 = vmatprep.subr.bf16.mxu0 0
  %1250 = vmatpush2.bf16.msra.mxu0 0
  %1251 = vmatprep.subr.bf16.mxu0 0
  %1252 = vmatpush2.bf16.msra.mxu0 0
  %1253 = vmatprep.mubr.bf16.mxu0 0
  %1254 = vmatmul.mubr.bf16.gmra.mxu0 %v987
  %v1255 = vpop.f32.mrf.mxu0
  %v1256 = vadd.f32 0.0, %v1255
  %v1257 = vpop.f32.mrf.mxu0
  %v1258 = vadd.f32 0.0, %v1257
  %v1259 = vpop.f32.mrf.mxu0
  %v1260 = vpop.f32.mrf.mxu0
  %1261 = vdwg.mxu0
  %v1262 = vadd.f32 %v983, %v1215
  %v1263 = vadd.f32 %v984, %v1217
  %v1264 = vadd.f32 %v985, %v1256
  %v1265 = vadd.f32 %v986, %v1258
  %v1266 = vxor.u32 %v1262, 2147483648
  %v1267 = vmul.f32 %v1266, 1.442695
  %v1268 = vpow.pop %v1267
  %v1269 = vadd.f32 %v1268, 1.0
  %v1270 = vrcp.pop %v1269
  %v1271 = vmul.f32 1.0, %v1270
  %v1272 = vxor.u32 %v1263, 2147483648
  %v1273 = vmul.f32 %v1272, 1.442695
  %v1274 = vpow.pop %v1273
  %v1275 = vadd.f32 %v1274, 1.0
  %v1276 = vrcp.pop %v1275
  %v1277 = vmul.f32 1.0, %v1276
  %v1278 = vtanh.pop %v1264
  %v1279 = vxor.u32 %v1265, 2147483648
  %v1280 = vmul.f32 %v1279, 1.442695
  %v1281 = vpow.pop %v1280
  %v1282 = vadd.f32 %v1281, 1.0
  %v1283 = vrcp.pop %v1282
  %v1284 = vmul.f32 1.0, %v1283
  %v1285 = vmul.f32 %v1277, %v979
  %v1286 = vmul.f32 %v1271, %v1278
  %v1287 = vadd.f32 %v1285, %v1286
  %v1288 = vtanh.pop %v1287
  %v1289 = vmul.f32 %v1284, %v1288
  %1290 = vst [vmem:[#allocation3] sm:$0xff] %v1287
  %1291 = vst [vmem:[#allocation2] sm:$0xff] %v1289
  %v1292 = vpack.c.bf16 %v1289, %v1289
  %s1293 = scalar_lea.vmem %s4, 12
  %1294 = vst [vmem:[%s1293] sm:$0xf] %v1292
  %v1295 = vld [vmem:[#allocation2] sm:$0xff]
  %v1296 = vld [vmem:[#allocation3] sm:$0xff]
  %s1297 = scalar_lea.vmem %s0, 64
  %v1298 = vld [vmem:[%s1297] sm:$0xff]
  %v1299 = vld [vmem:[%s1297 + $0x8] sm:$0xff]
  %v1300 = vunpack.c.l.bf16 %v1298
  %v1301 = vunpack.c.h.bf16 %v1298
  %v1302 = vunpack.c.l.bf16 %v1299
  %v1303 = vunpack.c.h.bf16 %v1299
  %v1304 = vpack.c.bf16 %v1295, %v1295
  %v1305 = vld [vmem:[%s1] sm:$0xff]
  %v1306 = vld [vmem:[%s1 + $0x8] sm:$0xff]
  %v1307 = vld [vmem:[%s1 + $0x10] sm:$0xff]
  %v1308 = vld [vmem:[%s1 + $0x18] sm:$0xff]
  %v1309 = vld [vmem:[%s1 + $0x20] sm:$0xff]
  %v1310 = vld [vmem:[%s1 + $0x28] sm:$0xff]
  %v1311 = vld [vmem:[%s1 + $0x30] sm:$0xff]
  %v1312 = vld [vmem:[%s1 + $0x38] sm:$0xff]
  %v1313 = vld [vmem:[%s1 + $0x40] sm:$0xff]
  %v1314 = vld [vmem:[%s1 + $0x48] sm:$0xff]
  %v1315 = vld [vmem:[%s1 + $0x50] sm:$0xff]
  %v1316 = vld [vmem:[%s1 + $0x58] sm:$0xff]
  %v1317 = vld [vmem:[%s1 + $0x60] sm:$0xff]
  %v1318 = vld [vmem:[%s1 + $0x68] sm:$0xff]
  %v1319 = vld [vmem:[%s1 + $0x70] sm:$0xff]
  %v1320 = vld [vmem:[%s1 + $0x78] sm:$0xff]
  %v1321 = vld [vmem:[%s1 + $0x80] sm:$0xff]
  %v1322 = vld [vmem:[%s1 + $0x88] sm:$0xff]
  %v1323 = vld [vmem:[%s1 + $0x90] sm:$0xff]
  %v1324 = vld [vmem:[%s1 + $0x98] sm:$0xff]
  %v1325 = vld [vmem:[%s1 + $0xa0] sm:$0xff]
  %v1326 = vld [vmem:[%s1 + $0xa8] sm:$0xff]
  %v1327 = vld [vmem:[%s1 + $0xb0] sm:$0xff]
  %v1328 = vld [vmem:[%s1 + $0xb8] sm:$0xff]
  %v1329 = vld [vmem:[%s1 + $0xc0] sm:$0xff]
  %v1330 = vld [vmem:[%s1 + $0xc8] sm:$0xff]
  %v1331 = vld [vmem:[%s1 + $0xd0] sm:$0xff]
  %v1332 = vld [vmem:[%s1 + $0xd8] sm:$0xff]
  %v1333 = vld [vmem:[%s1 + $0xe0] sm:$0xff]
  %v1334 = vld [vmem:[%s1 + $0xe8] sm:$0xff]
  %v1335 = vld [vmem:[%s1 + $0xf0] sm:$0xff]
  %v1336 = vld [vmem:[%s1 + $0xf8] sm:$0xff]
  %v1369 = vunpack.c.l.b16 %v1305
  %v1370 = vunpack.c.h.b16 %v1305
  %v1371 = vunpack.c.l.b16 %v1306
  %v1372 = vunpack.c.h.b16 %v1306
  %v1373 = vunpack.c.l.b16 %v1307
  %v1374 = vunpack.c.h.b16 %v1307
  %v1375 = vunpack.c.l.b16 %v1308
  %v1376 = vunpack.c.h.b16 %v1308
  %v1377 = vunpack.c.l.b16 %v1309
  %v1378 = vunpack.c.h.b16 %v1309
  %v1379 = vunpack.c.l.b16 %v1310
  %v1380 = vunpack.c.h.b16 %v1310
  %v1381 = vunpack.c.l.b16 %v1311
  %v1382 = vunpack.c.h.b16 %v1311
  %v1383 = vunpack.c.l.b16 %v1312
  %v1384 = vunpack.c.h.b16 %v1312
  %v1385 = vunpack.c.l.b16 %v1313
  %v1386 = vunpack.c.h.b16 %v1313
  %v1387 = vunpack.c.l.b16 %v1314
  %v1388 = vunpack.c.h.b16 %v1314
  %v1389 = vunpack.c.l.b16 %v1315
  %v1390 = vunpack.c.h.b16 %v1315
  %v1391 = vunpack.c.l.b16 %v1316
  %v1392 = vunpack.c.h.b16 %v1316
  %v1393 = vunpack.c.l.b16 %v1317
  %v1394 = vunpack.c.h.b16 %v1317
  %v1395 = vunpack.c.l.b16 %v1318
  %v1396 = vunpack.c.h.b16 %v1318
  %v1397 = vunpack.c.l.b16 %v1319
  %v1398 = vunpack.c.h.b16 %v1319
  %v1399 = vunpack.c.l.b16 %v1320
  %v1400 = vunpack.c.h.b16 %v1320
  %v1401 = vunpack.c.l.b16 %v1321
  %v1402 = vunpack.c.h.b16 %v1321
  %v1403 = vunpack.c.l.b16 %v1322
  %v1404 = vunpack.c.h.b16 %v1322
  %v1405 = vunpack.c.l.b16 %v1323
  %v1406 = vunpack.c.h.b16 %v1323
  %v1407 = vunpack.c.l.b16 %v1324
  %v1408 = vunpack.c.h.b16 %v1324
  %v1409 = vunpack.c.l.b16 %v1325
  %v1410 = vunpack.c.h.b16 %v1325
  %v1411 = vunpack.c.l.b16 %v1326
  %v1412 = vunpack.c.h.b16 %v1326
  %v1413 = vunpack.c.l.b16 %v1327
  %v1414 = vunpack.c.h.b16 %v1327
  %v1415 = vunpack.c.l.b16 %v1328
  %v1416 = vunpack.c.h.b16 %v1328
  %v1417 = vunpack.c.l.b16 %v1329
  %v1418 = vunpack.c.h.b16 %v1329
  %v1419 = vunpack.c.l.b16 %v1330
  %v1420 = vunpack.c.h.b16 %v1330
  %v1421 = vunpack.c.l.b16 %v1331
  %v1422 = vunpack.c.h.b16 %v1331
  %v1423 = vunpack.c.l.b16 %v1332
  %v1424 = vunpack.c.h.b16 %v1332
  %v1425 = vunpack.c.l.b16 %v1333
  %v1426 = vunpack.c.h.b16 %v1333
  %v1427 = vunpack.c.l.b16 %v1334
  %v1428 = vunpack.c.h.b16 %v1334
  %v1429 = vunpack.c.l.b16 %v1335
  %v1430 = vunpack.c.h.b16 %v1335
  %v1431 = vunpack.c.l.b16 %v1336
  %v1432 = vunpack.c.h.b16 %v1336
  %v1433 = vpack.c.b16 %v1373, %v1369
  %v1434 = vpack.c.b16 %v1374, %v1370
  %v1435 = vpack.c.b16 %v1375, %v1371
  %v1436 = vpack.c.b16 %v1376, %v1372
  %v1437 = vpack.c.b16 %v1381, %v1377
  %v1438 = vpack.c.b16 %v1382, %v1378
  %v1439 = vpack.c.b16 %v1383, %v1379
  %v1440 = vpack.c.b16 %v1384, %v1380
  %v1441 = vpack.c.b16 %v1389, %v1385
  %v1442 = vpack.c.b16 %v1390, %v1386
  %v1443 = vpack.c.b16 %v1391, %v1387
  %v1444 = vpack.c.b16 %v1392, %v1388
  %v1445 = vpack.c.b16 %v1397, %v1393
  %v1446 = vpack.c.b16 %v1398, %v1394
  %v1447 = vpack.c.b16 %v1399, %v1395
  %v1448 = vpack.c.b16 %v1400, %v1396
  %v1449 = vpack.c.b16 %v1405, %v1401
  %v1450 = vpack.c.b16 %v1406, %v1402
  %v1451 = vpack.c.b16 %v1407, %v1403
  %v1452 = vpack.c.b16 %v1408, %v1404
  %v1453 = vpack.c.b16 %v1413, %v1409
  %v1454 = vpack.c.b16 %v1414, %v1410
  %v1455 = vpack.c.b16 %v1415, %v1411
  %v1456 = vpack.c.b16 %v1416, %v1412
  %v1457 = vpack.c.b16 %v1421, %v1417
  %v1458 = vpack.c.b16 %v1422, %v1418
  %v1459 = vpack.c.b16 %v1423, %v1419
  %v1460 = vpack.c.b16 %v1424, %v1420
  %v1461 = vpack.c.b16 %v1429, %v1425
  %v1462 = vpack.c.b16 %v1430, %v1426
  %v1463 = vpack.c.b16 %v1431, %v1427
  %v1464 = vpack.c.b16 %v1432, %v1428
  %1497 = vmatprep.subr.bf16.mxu0 %v1462
  %1498 = vmatpush1.bf16.msra.mxu0 %v1461
  %1499 = vmatprep.subr.bf16.mxu0 %v1458
  %1500 = vmatpush1.bf16.msra.mxu0 %v1457
  %1501 = vmatprep.subr.bf16.mxu0 %v1454
  %1502 = vmatpush1.bf16.msra.mxu0 %v1453
  %1503 = vmatprep.subr.bf16.mxu0 %v1450
  %1504 = vmatpush1.bf16.msra.mxu0 %v1449
  %1505 = vmatprep.subr.bf16.mxu0 %v1446
  %1506 = vmatpush1.bf16.msra.mxu0 %v1445
  %1507 = vmatprep.subr.bf16.mxu0 %v1442
  %1508 = vmatpush1.bf16.msra.mxu0 %v1441
  %1509 = vmatprep.subr.bf16.mxu0 %v1438
  %1510 = vmatpush1.bf16.msra.mxu0 %v1437
  %1511 = vmatprep.subr.bf16.mxu0 %v1434
  %1512 = vmatpush1.bf16.msra.mxu0 %v1433
  %1513 = vmatprep.subr.bf16.mxu0 0
  %1514 = vmatpush2.bf16.msra.mxu0 0
  %1515 = vmatprep.subr.bf16.mxu0 0
  %1516 = vmatpush2.bf16.msra.mxu0 0
  %1517 = vmatprep.subr.bf16.mxu0 0
  %1518 = vmatpush2.bf16.msra.mxu0 0
  %1519 = vmatprep.subr.bf16.mxu0 0
  %1520 = vmatpush2.bf16.msra.mxu0 0
  %1521 = vmatprep.subr.bf16.mxu0 0
  %1522 = vmatpush2.bf16.msra.mxu0 0
  %1523 = vmatprep.subr.bf16.mxu0 0
  %1524 = vmatpush2.bf16.msra.mxu0 0
  %1525 = vmatprep.subr.bf16.mxu0 0
  %1526 = vmatpush2.bf16.msra.mxu0 0
  %1527 = vmatprep.subr.bf16.mxu0 0
  %1528 = vmatpush2.bf16.msra.mxu0 0
  %1529 = vmatprep.mubr.bf16.mxu0 0
  %1530 = vmatmul.mubr.bf16.gmra.mxu0 %v1304
  %v1531 = vpop.f32.mrf.mxu0
  %v1532 = vadd.f32 0.0, %v1531
  %v1533 = vpop.f32.mrf.mxu0
  %v1534 = vadd.f32 0.0, %v1533
  %v1535 = vpop.f32.mrf.mxu0
  %v1536 = vpop.f32.mrf.mxu0
  %1537 = vdwg.mxu0
  %1538 = vmatprep.subr.bf16.mxu0 %v1464
  %1539 = vmatpush1.bf16.msra.mxu0 %v1463
  %1540 = vmatprep.subr.bf16.mxu0 %v1460
  %1541 = vmatpush1.bf16.msra.mxu0 %v1459
  %1542 = vmatprep.subr.bf16.mxu0 %v1456
  %1543 = vmatpush1.bf16.msra.mxu0 %v1455
  %1544 = vmatprep.subr.bf16.mxu0 %v1452
  %1545 = vmatpush1.bf16.msra.mxu0 %v1451
  %1546 = vmatprep.subr.bf16.mxu0 %v1448
  %1547 = vmatpush1.bf16.msra.mxu0 %v1447
  %1548 = vmatprep.subr.bf16.mxu0 %v1444
  %1549 = vmatpush1.bf16.msra.mxu0 %v1443
  %1550 = vmatprep.subr.bf16.mxu0 %v1440
  %1551 = vmatpush1.bf16.msra.mxu0 %v1439
  %1552 = vmatprep.subr.bf16.mxu0 %v1436
  %1553 = vmatpush1.bf16.msra.mxu0 %v1435
  %1554 = vmatprep.subr.bf16.mxu0 0
  %1555 = vmatpush2.bf16.msra.mxu0 0
  %1556 = vmatprep.subr.bf16.mxu0 0
  %1557 = vmatpush2.bf16.msra.mxu0 0
  %1558 = vmatprep.subr.bf16.mxu0 0
  %1559 = vmatpush2.bf16.msra.mxu0 0
  %1560 = vmatprep.subr.bf16.mxu0 0
  %1561 = vmatpush2.bf16.msra.mxu0 0
  %1562 = vmatprep.subr.bf16.mxu0 0
  %1563 = vmatpush2.bf16.msra.mxu0 0
  %1564 = vmatprep.subr.bf16.mxu0 0
  %1565 = vmatpush2.bf16.msra.mxu0 0
  %1566 = vmatprep.subr.bf16.mxu0 0
  %1567 = vmatpush2.bf16.msra.mxu0 0
  %1568 = vmatprep.subr.bf16.mxu0 0
  %1569 = vmatpush2.bf16.msra.mxu0 0
  %1570 = vmatprep.mubr.bf16.mxu0 0
  %1571 = vmatmul.mubr.bf16.gmra.mxu0 %v1304
  %v1572 = vpop.f32.mrf.mxu0
  %v1573 = vadd.f32 0.0, %v1572
  %v1574 = vpop.f32.mrf.mxu0
  %v1575 = vadd.f32 0.0, %v1574
  %v1576 = vpop.f32.mrf.mxu0
  %v1577 = vpop.f32.mrf.mxu0
  %1578 = vdwg.mxu0
  %v1579 = vadd.f32 %v1300, %v1532
  %v1580 = vadd.f32 %v1301, %v1534
  %v1581 = vadd.f32 %v1302, %v1573
  %v1582 = vadd.f32 %v1303, %v1575
  %v1583 = vxor.u32 %v1579, 2147483648
  %v1584 = vmul.f32 %v1583, 1.442695
  %v1585 = vpow.pop %v1584
  %v1586 = vadd.f32 %v1585, 1.0
  %v1587 = vrcp.pop %v1586
  %v1588 = vmul.f32 1.0, %v1587
  %v1589 = vxor.u32 %v1580, 2147483648
  %v1590 = vmul.f32 %v1589, 1.442695
  %v1591 = vpow.pop %v1590
  %v1592 = vadd.f32 %v1591, 1.0
  %v1593 = vrcp.pop %v1592
  %v1594 = vmul.f32 1.0, %v1593
  %v1595 = vtanh.pop %v1581
  %v1596 = vxor.u32 %v1582, 2147483648
  %v1597 = vmul.f32 %v1596, 1.442695
  %v1598 = vpow.pop %v1597
  %v1599 = vadd.f32 %v1598, 1.0
  %v1600 = vrcp.pop %v1599
  %v1601 = vmul.f32 1.0, %v1600
  %v1602 = vmul.f32 %v1594, %v1296
  %v1603 = vmul.f32 %v1588, %v1595
  %v1604 = vadd.f32 %v1602, %v1603
  %v1605 = vtanh.pop %v1604
  %v1606 = vmul.f32 %v1601, %v1605
  %1607 = vst [vmem:[#allocation3] sm:$0xff] %v1604
  %1608 = vst [vmem:[#allocation2] sm:$0xff] %v1606
  %v1609 = vpack.c.bf16 %v1606, %v1606
  %s1610 = scalar_lea.vmem %s4, 16
  %1611 = vst [vmem:[%s1610] sm:$0xf] %v1609
  %v1612 = vld [vmem:[#allocation2] sm:$0xff]
  %v1613 = vld [vmem:[#allocation3] sm:$0xff]
  %s1614 = scalar_lea.vmem %s0, 80
  %v1615 = vld [vmem:[%s1614] sm:$0xff]
  %v1616 = vld [vmem:[%s1614 + $0x8] sm:$0xff]
  %v1617 = vunpack.c.l.bf16 %v1615
  %v1618 = vunpack.c.h.bf16 %v1615
  %v1619 = vunpack.c.l.bf16 %v1616
  %v1620 = vunpack.c.h.bf16 %v1616
  %v1621 = vpack.c.bf16 %v1612, %v1612
  %v1622 = vld [vmem:[%s1] sm:$0xff]
  %v1623 = vld [vmem:[%s1 + $0x8] sm:$0xff]
  %v1624 = vld [vmem:[%s1 + $0x10] sm:$0xff]
  %v1625 = vld [vmem:[%s1 + $0x18] sm:$0xff]
  %v1626 = vld [vmem:[%s1 + $0x20] sm:$0xff]
  %v1627 = vld [vmem:[%s1 + $0x28] sm:$0xff]
  %v1628 = vld [vmem:[%s1 + $0x30] sm:$0xff]
  %v1629 = vld [vmem:[%s1 + $0x38] sm:$0xff]
  %v1630 = vld [vmem:[%s1 + $0x40] sm:$0xff]
  %v1631 = vld [vmem:[%s1 + $0x48] sm:$0xff]
  %v1632 = vld [vmem:[%s1 + $0x50] sm:$0xff]
  %v1633 = vld [vmem:[%s1 + $0x58] sm:$0xff]
  %v1634 = vld [vmem:[%s1 + $0x60] sm:$0xff]
  %v1635 = vld [vmem:[%s1 + $0x68] sm:$0xff]
  %v1636 = vld [vmem:[%s1 + $0x70] sm:$0xff]
  %v1637 = vld [vmem:[%s1 + $0x78] sm:$0xff]
  %v1638 = vld [vmem:[%s1 + $0x80] sm:$0xff]
  %v1639 = vld [vmem:[%s1 + $0x88] sm:$0xff]
  %v1640 = vld [vmem:[%s1 + $0x90] sm:$0xff]
  %v1641 = vld [vmem:[%s1 + $0x98] sm:$0xff]
  %v1642 = vld [vmem:[%s1 + $0xa0] sm:$0xff]
  %v1643 = vld [vmem:[%s1 + $0xa8] sm:$0xff]
  %v1644 = vld [vmem:[%s1 + $0xb0] sm:$0xff]
  %v1645 = vld [vmem:[%s1 + $0xb8] sm:$0xff]
  %v1646 = vld [vmem:[%s1 + $0xc0] sm:$0xff]
  %v1647 = vld [vmem:[%s1 + $0xc8] sm:$0xff]
  %v1648 = vld [vmem:[%s1 + $0xd0] sm:$0xff]
  %v1649 = vld [vmem:[%s1 + $0xd8] sm:$0xff]
  %v1650 = vld [vmem:[%s1 + $0xe0] sm:$0xff]
  %v1651 = vld [vmem:[%s1 + $0xe8] sm:$0xff]
  %v1652 = vld [vmem:[%s1 + $0xf0] sm:$0xff]
  %v1653 = vld [vmem:[%s1 + $0xf8] sm:$0xff]
  %v1686 = vunpack.c.l.b16 %v1622
  %v1687 = vunpack.c.h.b16 %v1622
  %v1688 = vunpack.c.l.b16 %v1623
  %v1689 = vunpack.c.h.b16 %v1623
  %v1690 = vunpack.c.l.b16 %v1624
  %v1691 = vunpack.c.h.b16 %v1624
  %v1692 = vunpack.c.l.b16 %v1625
  %v1693 = vunpack.c.h.b16 %v1625
  %v1694 = vunpack.c.l.b16 %v1626
  %v1695 = vunpack.c.h.b16 %v1626
  %v1696 = vunpack.c.l.b16 %v1627
  %v1697 = vunpack.c.h.b16 %v1627
  %v1698 = vunpack.c.l.b16 %v1628
  %v1699 = vunpack.c.h.b16 %v1628
  %v1700 = vunpack.c.l.b16 %v1629
  %v1701 = vunpack.c.h.b16 %v1629
  %v1702 = vunpack.c.l.b16 %v1630
  %v1703 = vunpack.c.h.b16 %v1630
  %v1704 = vunpack.c.l.b16 %v1631
  %v1705 = vunpack.c.h.b16 %v1631
  %v1706 = vunpack.c.l.b16 %v1632
  %v1707 = vunpack.c.h.b16 %v1632
  %v1708 = vunpack.c.l.b16 %v1633
  %v1709 = vunpack.c.h.b16 %v1633
  %v1710 = vunpack.c.l.b16 %v1634
  %v1711 = vunpack.c.h.b16 %v1634
  %v1712 = vunpack.c.l.b16 %v1635
  %v1713 = vunpack.c.h.b16 %v1635
  %v1714 = vunpack.c.l.b16 %v1636
  %v1715 = vunpack.c.h.b16 %v1636
  %v1716 = vunpack.c.l.b16 %v1637
  %v1717 = vunpack.c.h.b16 %v1637
  %v1718 = vunpack.c.l.b16 %v1638
  %v1719 = vunpack.c.h.b16 %v1638
  %v1720 = vunpack.c.l.b16 %v1639
  %v1721 = vunpack.c.h.b16 %v1639
  %v1722 = vunpack.c.l.b16 %v1640
  %v1723 = vunpack.c.h.b16 %v1640
  %v1724 = vunpack.c.l.b16 %v1641
  %v1725 = vunpack.c.h.b16 %v1641
  %v1726 = vunpack.c.l.b16 %v1642
  %v1727 = vunpack.c.h.b16 %v1642
  %v1728 = vunpack.c.l.b16 %v1643
  %v1729 = vunpack.c.h.b16 %v1643
  %v1730 = vunpack.c.l.b16 %v1644
  %v1731 = vunpack.c.h.b16 %v1644
  %v1732 = vunpack.c.l.b16 %v1645
  %v1733 = vunpack.c.h.b16 %v1645
  %v1734 = vunpack.c.l.b16 %v1646
  %v1735 = vunpack.c.h.b16 %v1646
  %v1736 = vunpack.c.l.b16 %v1647
  %v1737 = vunpack.c.h.b16 %v1647
  %v1738 = vunpack.c.l.b16 %v1648
  %v1739 = vunpack.c.h.b16 %v1648
  %v1740 = vunpack.c.l.b16 %v1649
  %v1741 = vunpack.c.h.b16 %v1649
  %v1742 = vunpack.c.l.b16 %v1650
  %v1743 = vunpack.c.h.b16 %v1650
  %v1744 = vunpack.c.l.b16 %v1651
  %v1745 = vunpack.c.h.b16 %v1651
  %v1746 = vunpack.c.l.b16 %v1652
  %v1747 = vunpack.c.h.b16 %v1652
  %v1748 = vunpack.c.l.b16 %v1653
  %v1749 = vunpack.c.h.b16 %v1653
  %v1750 = vpack.c.b16 %v1690, %v1686
  %v1751 = vpack.c.b16 %v1691, %v1687
  %v1752 = vpack.c.b16 %v1692, %v1688
  %v1753 = vpack.c.b16 %v1693, %v1689
  %v1754 = vpack.c.b16 %v1698, %v1694
  %v1755 = vpack.c.b16 %v1699, %v1695
  %v1756 = vpack.c.b16 %v1700, %v1696
  %v1757 = vpack.c.b16 %v1701, %v1697
  %v1758 = vpack.c.b16 %v1706, %v1702
  %v1759 = vpack.c.b16 %v1707, %v1703
  %v1760 = vpack.c.b16 %v1708, %v1704
  %v1761 = vpack.c.b16 %v1709, %v1705
  %v1762 = vpack.c.b16 %v1714, %v1710
  %v1763 = vpack.c.b16 %v1715, %v1711
  %v1764 = vpack.c.b16 %v1716, %v1712
  %v1765 = vpack.c.b16 %v1717, %v1713
  %v1766 = vpack.c.b16 %v1722, %v1718
  %v1767 = vpack.c.b16 %v1723, %v1719
  %v1768 = vpack.c.b16 %v1724, %v1720
  %v1769 = vpack.c.b16 %v1725, %v1721
  %v1770 = vpack.c.b16 %v1730, %v1726
  %v1771 = vpack.c.b16 %v1731, %v1727
  %v1772 = vpack.c.b16 %v1732, %v1728
  %v1773 = vpack.c.b16 %v1733, %v1729
  %v1774 = vpack.c.b16 %v1738, %v1734
  %v1775 = vpack.c.b16 %v1739, %v1735
  %v1776 = vpack.c.b16 %v1740, %v1736
  %v1777 = vpack.c.b16 %v1741, %v1737
  %v1778 = vpack.c.b16 %v1746, %v1742
  %v1779 = vpack.c.b16 %v1747, %v1743
  %v1780 = vpack.c.b16 %v1748, %v1744
  %v1781 = vpack.c.b16 %v1749, %v1745
  %1814 = vmatprep.subr.bf16.mxu0 %v1779
  %1815 = vmatpush1.bf16.msra.mxu0 %v1778
  %1816 = vmatprep.subr.bf16.mxu0 %v1775
  %1817 = vmatpush1.bf16.msra.mxu0 %v1774
  %1818 = vmatprep.subr.bf16.mxu0 %v1771
  %1819 = vmatpush1.bf16.msra.mxu0 %v1770
  %1820 = vmatprep.subr.bf16.mxu0 %v1767
  %1821 = vmatpush1.bf16.msra.mxu0 %v1766
  %1822 = vmatprep.subr.bf16.mxu0 %v1763
  %1823 = vmatpush1.bf16.msra.mxu0 %v1762
  %1824 = vmatprep.subr.bf16.mxu0 %v1759
  %1825 = vmatpush1.bf16.msra.mxu0 %v1758
  %1826 = vmatprep.subr.bf16.mxu0 %v1755
  %1827 = vmatpush1.bf16.msra.mxu0 %v1754
  %1828 = vmatprep.subr.bf16.mxu0 %v1751
  %1829 = vmatpush1.bf16.msra.mxu0 %v1750
  %1830 = vmatprep.subr.bf16.mxu0 0
  %1831 = vmatpush2.bf16.msra.mxu0 0
  %1832 = vmatprep.subr.bf16.mxu0 0
  %1833 = vmatpush2.bf16.msra.mxu0 0
  %1834 = vmatprep.subr.bf16.mxu0 0
  %1835 = vmatpush2.bf16.msra.mxu0 0
  %1836 = vmatprep.subr.bf16.mxu0 0
  %1837 = vmatpush2.bf16.msra.mxu0 0
  %1838 = vmatprep.subr.bf16.mxu0 0
  %1839 = vmatpush2.bf16.msra.mxu0 0
  %1840 = vmatprep.subr.bf16.mxu0 0
  %1841 = vmatpush2.bf16.msra.mxu0 0
  %1842 = vmatprep.subr.bf16.mxu0 0
  %1843 = vmatpush2.bf16.msra.mxu0 0
  %1844 = vmatprep.subr.bf16.mxu0 0
  %1845 = vmatpush2.bf16.msra.mxu0 0
  %1846 = vmatprep.mubr.bf16.mxu0 0
  %1847 = vmatmul.mubr.bf16.gmra.mxu0 %v1621
  %v1848 = vpop.f32.mrf.mxu0
  %v1849 = vadd.f32 0.0, %v1848
  %v1850 = vpop.f32.mrf.mxu0
  %v1851 = vadd.f32 0.0, %v1850
  %v1852 = vpop.f32.mrf.mxu0
  %v1853 = vpop.f32.mrf.mxu0
  %1854 = vdwg.mxu0
  %1855 = vmatprep.subr.bf16.mxu0 %v1781
  %1856 = vmatpush1.bf16.msra.mxu0 %v1780
  %1857 = vmatprep.subr.bf16.mxu0 %v1777
  %1858 = vmatpush1.bf16.msra.mxu0 %v1776
  %1859 = vmatprep.subr.bf16.mxu0 %v1773
  %1860 = vmatpush1.bf16.msra.mxu0 %v1772
  %1861 = vmatprep.subr.bf16.mxu0 %v1769
  %1862 = vmatpush1.bf16.msra.mxu0 %v1768
  %1863 = vmatprep.subr.bf16.mxu0 %v1765
  %1864 = vmatpush1.bf16.msra.mxu0 %v1764
  %1865 = vmatprep.subr.bf16.mxu0 %v1761
  %1866 = vmatpush1.bf16.msra.mxu0 %v1760
  %1867 = vmatprep.subr.bf16.mxu0 %v1757
  %1868 = vmatpush1.bf16.msra.mxu0 %v1756
  %1869 = vmatprep.subr.bf16.mxu0 %v1753
  %1870 = vmatpush1.bf16.msra.mxu0 %v1752
  %1871 = vmatprep.subr.bf16.mxu0 0
  %1872 = vmatpush2.bf16.msra.mxu0 0
  %1873 = vmatprep.subr.bf16.mxu0 0
  %1874 = vmatpush2.bf16.msra.mxu0 0
  %1875 = vmatprep.subr.bf16.mxu0 0
  %1876 = vmatpush2.bf16.msra.mxu0 0
  %1877 = vmatprep.subr.bf16.mxu0 0
  %1878 = vmatpush2.bf16.msra.mxu0 0
  %1879 = vmatprep.subr.bf16.mxu0 0
  %1880 = vmatpush2.bf16.msra.mxu0 0
  %1881 = vmatprep.subr.bf16.mxu0 0
  %1882 = vmatpush2.bf16.msra.mxu0 0
  %1883 = vmatprep.subr.bf16.mxu0 0
  %1884 = vmatpush2.bf16.msra.mxu0 0
  %1885 = vmatprep.subr.bf16.mxu0 0
  %1886 = vmatpush2.bf16.msra.mxu0 0
  %1887 = vmatprep.mubr.bf16.mxu0 0
  %1888 = vmatmul.mubr.bf16.gmra.mxu0 %v1621
  %v1889 = vpop.f32.mrf.mxu0
  %v1890 = vadd.f32 0.0, %v1889
  %v1891 = vpop.f32.mrf.mxu0
  %v1892 = vadd.f32 0.0, %v1891
  %v1893 = vpop.f32.mrf.mxu0
  %v1894 = vpop.f32.mrf.mxu0
  %1895 = vdwg.mxu0
  %v1896 = vadd.f32 %v1617, %v1849
  %v1897 = vadd.f32 %v1618, %v1851
  %v1898 = vadd.f32 %v1619, %v1890
  %v1899 = vadd.f32 %v1620, %v1892
  %v1900 = vxor.u32 %v1896, 2147483648
  %v1901 = vmul.f32 %v1900, 1.442695
  %v1902 = vpow.pop %v1901
  %v1903 = vadd.f32 %v1902, 1.0
  %v1904 = vrcp.pop %v1903
  %v1905 = vmul.f32 1.0, %v1904
  %v1906 = vxor.u32 %v1897, 2147483648
  %v1907 = vmul.f32 %v1906, 1.442695
  %v1908 = vpow.pop %v1907
  %v1909 = vadd.f32 %v1908, 1.0
  %v1910 = vrcp.pop %v1909
  %v1911 = vmul.f32 1.0, %v1910
  %v1912 = vtanh.pop %v1898
  %v1913 = vxor.u32 %v1899, 2147483648
  %v1914 = vmul.f32 %v1913, 1.442695
  %v1915 = vpow.pop %v1914
  %v1916 = vadd.f32 %v1915, 1.0
  %v1917 = vrcp.pop %v1916
  %v1918 = vmul.f32 1.0, %v1917
  %v1919 = vmul.f32 %v1911, %v1613
  %v1920 = vmul.f32 %v1905, %v1912
  %v1921 = vadd.f32 %v1919, %v1920
  %v1922 = vtanh.pop %v1921
  %v1923 = vmul.f32 %v1918, %v1922
  %1924 = vst [vmem:[#allocation3] sm:$0xff] %v1921
  %1925 = vst [vmem:[#allocation2] sm:$0xff] %v1923
  %v1926 = vpack.c.bf16 %v1923, %v1923
  %s1927 = scalar_lea.vmem %s4, 20
  %1928 = vst [vmem:[%s1927] sm:$0xf] %v1926
  %v1929 = vld [vmem:[#allocation2] sm:$0xff]
  %v1930 = vld [vmem:[#allocation3] sm:$0xff]
  %s1931 = scalar_lea.vmem %s0, 96
  %v1932 = vld [vmem:[%s1931] sm:$0xff]
  %v1933 = vld [vmem:[%s1931 + $0x8] sm:$0xff]
  %v1934 = vunpack.c.l.bf16 %v1932
  %v1935 = vunpack.c.h.bf16 %v1932
  %v1936 = vunpack.c.l.bf16 %v1933
  %v1937 = vunpack.c.h.bf16 %v1933
  %v1938 = vpack.c.bf16 %v1929, %v1929
  %v1939 = vld [vmem:[%s1] sm:$0xff]
  %v1940 = vld [vmem:[%s1 + $0x8] sm:$0xff]
  %v1941 = vld [vmem:[%s1 + $0x10] sm:$0xff]
  %v1942 = vld [vmem:[%s1 + $0x18] sm:$0xff]
  %v1943 = vld [vmem:[%s1 + $0x20] sm:$0xff]
  %v1944 = vld [vmem:[%s1 + $0x28] sm:$0xff]
  %v1945 = vld [vmem:[%s1 + $0x30] sm:$0xff]
  %v1946 = vld [vmem:[%s1 + $0x38] sm:$0xff]
  %v1947 = vld [vmem:[%s1 + $0x40] sm:$0xff]
  %v1948 = vld [vmem:[%s1 + $0x48] sm:$0xff]
  %v1949 = vld [vmem:[%s1 + $0x50] sm:$0xff]
  %v1950 = vld [vmem:[%s1 + $0x58] sm:$0xff]
  %v1951 = vld [vmem:[%s1 + $0x60] sm:$0xff]
  %v1952 = vld [vmem:[%s1 + $0x68] sm:$0xff]
  %v1953 = vld [vmem:[%s1 + $0x70] sm:$0xff]
  %v1954 = vld [vmem:[%s1 + $0x78] sm:$0xff]
  %v1955 = vld [vmem:[%s1 + $0x80] sm:$0xff]
  %v1956 = vld [vmem:[%s1 + $0x88] sm:$0xff]
  %v1957 = vld [vmem:[%s1 + $0x90] sm:$0xff]
  %v1958 = vld [vmem:[%s1 + $0x98] sm:$0xff]
  %v1959 = vld [vmem:[%s1 + $0xa0] sm:$0xff]
  %v1960 = vld [vmem:[%s1 + $0xa8] sm:$0xff]
  %v1961 = vld [vmem:[%s1 + $0xb0] sm:$0xff]
  %v1962 = vld [vmem:[%s1 + $0xb8] sm:$0xff]
  %v1963 = vld [vmem:[%s1 + $0xc0] sm:$0xff]
  %v1964 = vld [vmem:[%s1 + $0xc8] sm:$0xff]
  %v1965 = vld [vmem:[%s1 + $0xd0] sm:$0xff]
  %v1966 = vld [vmem:[%s1 + $0xd8] sm:$0xff]
  %v1967 = vld [vmem:[%s1 + $0xe0] sm:$0xff]
  %v1968 = vld [vmem:[%s1 + $0xe8] sm:$0xff]
  %v1969 = vld [vmem:[%s1 + $0xf0] sm:$0xff]
  %v1970 = vld [vmem:[%s1 + $0xf8] sm:$0xff]
  %v2003 = vunpack.c.l.b16 %v1939
  %v2004 = vunpack.c.h.b16 %v1939
  %v2005 = vunpack.c.l.b16 %v1940
  %v2006 = vunpack.c.h.b16 %v1940
  %v2007 = vunpack.c.l.b16 %v1941
  %v2008 = vunpack.c.h.b16 %v1941
  %v2009 = vunpack.c.l.b16 %v1942
  %v2010 = vunpack.c.h.b16 %v1942
  %v2011 = vunpack.c.l.b16 %v1943
  %v2012 = vunpack.c.h.b16 %v1943
  %v2013 = vunpack.c.l.b16 %v1944
  %v2014 = vunpack.c.h.b16 %v1944
  %v2015 = vunpack.c.l.b16 %v1945
  %v2016 = vunpack.c.h.b16 %v1945
  %v2017 = vunpack.c.l.b16 %v1946
  %v2018 = vunpack.c.h.b16 %v1946
  %v2019 = vunpack.c.l.b16 %v1947
  %v2020 = vunpack.c.h.b16 %v1947
  %v2021 = vunpack.c.l.b16 %v1948
  %v2022 = vunpack.c.h.b16 %v1948
  %v2023 = vunpack.c.l.b16 %v1949
  %v2024 = vunpack.c.h.b16 %v1949
  %v2025 = vunpack.c.l.b16 %v1950
  %v2026 = vunpack.c.h.b16 %v1950
  %v2027 = vunpack.c.l.b16 %v1951
  %v2028 = vunpack.c.h.b16 %v1951
  %v2029 = vunpack.c.l.b16 %v1952
  %v2030 = vunpack.c.h.b16 %v1952
  %v2031 = vunpack.c.l.b16 %v1953
  %v2032 = vunpack.c.h.b16 %v1953
  %v2033 = vunpack.c.l.b16 %v1954
  %v2034 = vunpack.c.h.b16 %v1954
  %v2035 = vunpack.c.l.b16 %v1955
  %v2036 = vunpack.c.h.b16 %v1955
  %v2037 = vunpack.c.l.b16 %v1956
  %v2038 = vunpack.c.h.b16 %v1956
  %v2039 = vunpack.c.l.b16 %v1957
  %v2040 = vunpack.c.h.b16 %v1957
  %v2041 = vunpack.c.l.b16 %v1958
  %v2042 = vunpack.c.h.b16 %v1958
  %v2043 = vunpack.c.l.b16 %v1959
  %v2044 = vunpack.c.h.b16 %v1959
  %v2045 = vunpack.c.l.b16 %v1960
  %v2046 = vunpack.c.h.b16 %v1960
  %v2047 = vunpack.c.l.b16 %v1961
  %v2048 = vunpack.c.h.b16 %v1961
  %v2049 = vunpack.c.l.b16 %v1962
  %v2050 = vunpack.c.h.b16 %v1962
  %v2051 = vunpack.c.l.b16 %v1963
  %v2052 = vunpack.c.h.b16 %v1963
  %v2053 = vunpack.c.l.b16 %v1964
  %v2054 = vunpack.c.h.b16 %v1964
  %v2055 = vunpack.c.l.b16 %v1965
  %v2056 = vunpack.c.h.b16 %v1965
  %v2057 = vunpack.c.l.b16 %v1966
  %v2058 = vunpack.c.h.b16 %v1966
  %v2059 = vunpack.c.l.b16 %v1967
  %v2060 = vunpack.c.h.b16 %v1967
  %v2061 = vunpack.c.l.b16 %v1968
  %v2062 = vunpack.c.h.b16 %v1968
  %v2063 = vunpack.c.l.b16 %v1969
  %v2064 = vunpack.c.h.b16 %v1969
  %v2065 = vunpack.c.l.b16 %v1970
  %v2066 = vunpack.c.h.b16 %v1970
  %v2067 = vpack.c.b16 %v2007, %v2003
  %v2068 = vpack.c.b16 %v2008, %v2004
  %v2069 = vpack.c.b16 %v2009, %v2005
  %v2070 = vpack.c.b16 %v2010, %v2006
  %v2071 = vpack.c.b16 %v2015, %v2011
  %v2072 = vpack.c.b16 %v2016, %v2012
  %v2073 = vpack.c.b16 %v2017, %v2013
  %v2074 = vpack.c.b16 %v2018, %v2014
  %v2075 = vpack.c.b16 %v2023, %v2019
  %v2076 = vpack.c.b16 %v2024, %v2020
  %v2077 = vpack.c.b16 %v2025, %v2021
  %v2078 = vpack.c.b16 %v2026, %v2022
  %v2079 = vpack.c.b16 %v2031, %v2027
  %v2080 = vpack.c.b16 %v2032, %v2028
  %v2081 = vpack.c.b16 %v2033, %v2029
  %v2082 = vpack.c.b16 %v2034, %v2030
  %v2083 = vpack.c.b16 %v2039, %v2035
  %v2084 = vpack.c.b16 %v2040, %v2036
  %v2085 = vpack.c.b16 %v2041, %v2037
  %v2086 = vpack.c.b16 %v2042, %v2038
  %v2087 = vpack.c.b16 %v2047, %v2043
  %v2088 = vpack.c.b16 %v2048, %v2044
  %v2089 = vpack.c.b16 %v2049, %v2045
  %v2090 = vpack.c.b16 %v2050, %v2046
  %v2091 = vpack.c.b16 %v2055, %v2051
  %v2092 = vpack.c.b16 %v2056, %v2052
  %v2093 = vpack.c.b16 %v2057, %v2053
  %v2094 = vpack.c.b16 %v2058, %v2054
  %v2095 = vpack.c.b16 %v2063, %v2059
  %v2096 = vpack.c.b16 %v2064, %v2060
  %v2097 = vpack.c.b16 %v2065, %v2061
  %v2098 = vpack.c.b16 %v2066, %v2062
  %2131 = vmatprep.subr.bf16.mxu0 %v2096
  %2132 = vmatpush1.bf16.msra.mxu0 %v2095
  %2133 = vmatprep.subr.bf16.mxu0 %v2092
  %2134 = vmatpush1.bf16.msra.mxu0 %v2091
  %2135 = vmatprep.subr.bf16.mxu0 %v2088
  %2136 = vmatpush1.bf16.msra.mxu0 %v2087
  %2137 = vmatprep.subr.bf16.mxu0 %v2084
  %2138 = vmatpush1.bf16.msra.mxu0 %v2083
  %2139 = vmatprep.subr.bf16.mxu0 %v2080
  %2140 = vmatpush1.bf16.msra.mxu0 %v2079
  %2141 = vmatprep.subr.bf16.mxu0 %v2076
  %2142 = vmatpush1.bf16.msra.mxu0 %v2075
  %2143 = vmatprep.subr.bf16.mxu0 %v2072
  %2144 = vmatpush1.bf16.msra.mxu0 %v2071
  %2145 = vmatprep.subr.bf16.mxu0 %v2068
  %2146 = vmatpush1.bf16.msra.mxu0 %v2067
  %2147 = vmatprep.subr.bf16.mxu0 0
  %2148 = vmatpush2.bf16.msra.mxu0 0
  %2149 = vmatprep.subr.bf16.mxu0 0
  %2150 = vmatpush2.bf16.msra.mxu0 0
  %2151 = vmatprep.subr.bf16.mxu0 0
  %2152 = vmatpush2.bf16.msra.mxu0 0
  %2153 = vmatprep.subr.bf16.mxu0 0
  %2154 = vmatpush2.bf16.msra.mxu0 0
  %2155 = vmatprep.subr.bf16.mxu0 0
  %2156 = vmatpush2.bf16.msra.mxu0 0
  %2157 = vmatprep.subr.bf16.mxu0 0
  %2158 = vmatpush2.bf16.msra.mxu0 0
  %2159 = vmatprep.subr.bf16.mxu0 0
  %2160 = vmatpush2.bf16.msra.mxu0 0
  %2161 = vmatprep.subr.bf16.mxu0 0
  %2162 = vmatpush2.bf16.msra.mxu0 0
  %2163 = vmatprep.mubr.bf16.mxu0 0
  %2164 = vmatmul.mubr.bf16.gmra.mxu0 %v1938
  %v2165 = vpop.f32.mrf.mxu0
  %v2166 = vadd.f32 0.0, %v2165
  %v2167 = vpop.f32.mrf.mxu0
  %v2168 = vadd.f32 0.0, %v2167
  %v2169 = vpop.f32.mrf.mxu0
  %v2170 = vpop.f32.mrf.mxu0
  %2171 = vdwg.mxu0
  %2172 = vmatprep.subr.bf16.mxu0 %v2098
  %2173 = vmatpush1.bf16.msra.mxu0 %v2097
  %2174 = vmatprep.subr.bf16.mxu0 %v2094
  %2175 = vmatpush1.bf16.msra.mxu0 %v2093
  %2176 = vmatprep.subr.bf16.mxu0 %v2090
  %2177 = vmatpush1.bf16.msra.mxu0 %v2089
  %2178 = vmatprep.subr.bf16.mxu0 %v2086
  %2179 = vmatpush1.bf16.msra.mxu0 %v2085
  %2180 = vmatprep.subr.bf16.mxu0 %v2082
  %2181 = vmatpush1.bf16.msra.mxu0 %v2081
  %2182 = vmatprep.subr.bf16.mxu0 %v2078
  %2183 = vmatpush1.bf16.msra.mxu0 %v2077
  %2184 = vmatprep.subr.bf16.mxu0 %v2074
  %2185 = vmatpush1.bf16.msra.mxu0 %v2073
  %2186 = vmatprep.subr.bf16.mxu0 %v2070
  %2187 = vmatpush1.bf16.msra.mxu0 %v2069
  %2188 = vmatprep.subr.bf16.mxu0 0
  %2189 = vmatpush2.bf16.msra.mxu0 0
  %2190 = vmatprep.subr.bf16.mxu0 0
  %2191 = vmatpush2.bf16.msra.mxu0 0
  %2192 = vmatprep.subr.bf16.mxu0 0
  %2193 = vmatpush2.bf16.msra.mxu0 0
  %2194 = vmatprep.subr.bf16.mxu0 0
  %2195 = vmatpush2.bf16.msra.mxu0 0
  %2196 = vmatprep.subr.bf16.mxu0 0
  %2197 = vmatpush2.bf16.msra.mxu0 0
  %2198 = vmatprep.subr.bf16.mxu0 0
  %2199 = vmatpush2.bf16.msra.mxu0 0
  %2200 = vmatprep.subr.bf16.mxu0 0
  %2201 = vmatpush2.bf16.msra.mxu0 0
  %2202 = vmatprep.subr.bf16.mxu0 0
  %2203 = vmatpush2.bf16.msra.mxu0 0
  %2204 = vmatprep.mubr.bf16.mxu0 0
  %2205 = vmatmul.mubr.bf16.gmra.mxu0 %v1938
  %v2206 = vpop.f32.mrf.mxu0
  %v2207 = vadd.f32 0.0, %v2206
  %v2208 = vpop.f32.mrf.mxu0
  %v2209 = vadd.f32 0.0, %v2208
  %v2210 = vpop.f32.mrf.mxu0
  %v2211 = vpop.f32.mrf.mxu0
  %2212 = vdwg.mxu0
  %v2213 = vadd.f32 %v1934, %v2166
  %v2214 = vadd.f32 %v1935, %v2168
  %v2215 = vadd.f32 %v1936, %v2207
  %v2216 = vadd.f32 %v1937, %v2209
  %v2217 = vxor.u32 %v2213, 2147483648
  %v2218 = vmul.f32 %v2217, 1.442695
  %v2219 = vpow.pop %v2218
  %v2220 = vadd.f32 %v2219, 1.0
  %v2221 = vrcp.pop %v2220
  %v2222 = vmul.f32 1.0, %v2221
  %v2223 = vxor.u32 %v2214, 2147483648
  %v2224 = vmul.f32 %v2223, 1.442695
  %v2225 = vpow.pop %v2224
  %v2226 = vadd.f32 %v2225, 1.0
  %v2227 = vrcp.pop %v2226
  %v2228 = vmul.f32 1.0, %v2227
  %v2229 = vtanh.pop %v2215
  %v2230 = vxor.u32 %v2216, 2147483648
  %v2231 = vmul.f32 %v2230, 1.442695
  %v2232 = vpow.pop %v2231
  %v2233 = vadd.f32 %v2232, 1.0
  %v2234 = vrcp.pop %v2233
  %v2235 = vmul.f32 1.0, %v2234
  %v2236 = vmul.f32 %v2228, %v1930
  %v2237 = vmul.f32 %v2222, %v2229
  %v2238 = vadd.f32 %v2236, %v2237
  %v2239 = vtanh.pop %v2238
  %v2240 = vmul.f32 %v2235, %v2239
  %2241 = vst [vmem:[#allocation3] sm:$0xff] %v2238
  %2242 = vst [vmem:[#allocation2] sm:$0xff] %v2240
  %v2243 = vpack.c.bf16 %v2240, %v2240
  %s2244 = scalar_lea.vmem %s4, 24
  %2245 = vst [vmem:[%s2244] sm:$0xf] %v2243
  %v2246 = vld [vmem:[#allocation2] sm:$0xff]
  %v2247 = vld [vmem:[#allocation3] sm:$0xff]
  %s2248 = scalar_lea.vmem %s0, 112
  %v2249 = vld [vmem:[%s2248] sm:$0xff]
  %v2250 = vld [vmem:[%s2248 + $0x8] sm:$0xff]
  %v2251 = vunpack.c.l.bf16 %v2249
  %v2252 = vunpack.c.h.bf16 %v2249
  %v2253 = vunpack.c.l.bf16 %v2250
  %v2254 = vunpack.c.h.bf16 %v2250
  %v2255 = vpack.c.bf16 %v2246, %v2246
  %v2256 = vld [vmem:[%s1] sm:$0xff]
  %v2257 = vld [vmem:[%s1 + $0x8] sm:$0xff]
  %v2258 = vld [vmem:[%s1 + $0x10] sm:$0xff]
  %v2259 = vld [vmem:[%s1 + $0x18] sm:$0xff]
  %v2260 = vld [vmem:[%s1 + $0x20] sm:$0xff]
  %v2261 = vld [vmem:[%s1 + $0x28] sm:$0xff]
  %v2262 = vld [vmem:[%s1 + $0x30] sm:$0xff]
  %v2263 = vld [vmem:[%s1 + $0x38] sm:$0xff]
  %v2264 = vld [vmem:[%s1 + $0x40] sm:$0xff]
  %v2265 = vld [vmem:[%s1 + $0x48] sm:$0xff]
  %v2266 = vld [vmem:[%s1 + $0x50] sm:$0xff]
  %v2267 = vld [vmem:[%s1 + $0x58] sm:$0xff]
  %v2268 = vld [vmem:[%s1 + $0x60] sm:$0xff]
  %v2269 = vld [vmem:[%s1 + $0x68] sm:$0xff]
  %v2270 = vld [vmem:[%s1 + $0x70] sm:$0xff]
  %v2271 = vld [vmem:[%s1 + $0x78] sm:$0xff]
  %v2272 = vld [vmem:[%s1 + $0x80] sm:$0xff]
  %v2273 = vld [vmem:[%s1 + $0x88] sm:$0xff]
  %v2274 = vld [vmem:[%s1 + $0x90] sm:$0xff]
  %v2275 = vld [vmem:[%s1 + $0x98] sm:$0xff]
  %v2276 = vld [vmem:[%s1 + $0xa0] sm:$0xff]
  %v2277 = vld [vmem:[%s1 + $0xa8] sm:$0xff]
  %v2278 = vld [vmem:[%s1 + $0xb0] sm:$0xff]
  %v2279 = vld [vmem:[%s1 + $0xb8] sm:$0xff]
  %v2280 = vld [vmem:[%s1 + $0xc0] sm:$0xff]
  %v2281 = vld [vmem:[%s1 + $0xc8] sm:$0xff]
  %v2282 = vld [vmem:[%s1 + $0xd0] sm:$0xff]
  %v2283 = vld [vmem:[%s1 + $0xd8] sm:$0xff]
  %v2284 = vld [vmem:[%s1 + $0xe0] sm:$0xff]
  %v2285 = vld [vmem:[%s1 + $0xe8] sm:$0xff]
  %v2286 = vld [vmem:[%s1 + $0xf0] sm:$0xff]
  %v2287 = vld [vmem:[%s1 + $0xf8] sm:$0xff]
  %v2320 = vunpack.c.l.b16 %v2256
  %v2321 = vunpack.c.h.b16 %v2256
  %v2322 = vunpack.c.l.b16 %v2257
  %v2323 = vunpack.c.h.b16 %v2257
  %v2324 = vunpack.c.l.b16 %v2258
  %v2325 = vunpack.c.h.b16 %v2258
  %v2326 = vunpack.c.l.b16 %v2259
  %v2327 = vunpack.c.h.b16 %v2259
  %v2328 = vunpack.c.l.b16 %v2260
  %v2329 = vunpack.c.h.b16 %v2260
  %v2330 = vunpack.c.l.b16 %v2261
  %v2331 = vunpack.c.h.b16 %v2261
  %v2332 = vunpack.c.l.b16 %v2262
  %v2333 = vunpack.c.h.b16 %v2262
  %v2334 = vunpack.c.l.b16 %v2263
  %v2335 = vunpack.c.h.b16 %v2263
  %v2336 = vunpack.c.l.b16 %v2264
  %v2337 = vunpack.c.h.b16 %v2264
  %v2338 = vunpack.c.l.b16 %v2265
  %v2339 = vunpack.c.h.b16 %v2265
  %v2340 = vunpack.c.l.b16 %v2266
  %v2341 = vunpack.c.h.b16 %v2266
  %v2342 = vunpack.c.l.b16 %v2267
  %v2343 = vunpack.c.h.b16 %v2267
  %v2344 = vunpack.c.l.b16 %v2268
  %v2345 = vunpack.c.h.b16 %v2268
  %v2346 = vunpack.c.l.b16 %v2269
  %v2347 = vunpack.c.h.b16 %v2269
  %v2348 = vunpack.c.l.b16 %v2270
  %v2349 = vunpack.c.h.b16 %v2270
  %v2350 = vunpack.c.l.b16 %v2271
  %v2351 = vunpack.c.h.b16 %v2271
  %v2352 = vunpack.c.l.b16 %v2272
  %v2353 = vunpack.c.h.b16 %v2272
  %v2354 = vunpack.c.l.b16 %v2273
  %v2355 = vunpack.c.h.b16 %v2273
  %v2356 = vunpack.c.l.b16 %v2274
  %v2357 = vunpack.c.h.b16 %v2274
  %v2358 = vunpack.c.l.b16 %v2275
  %v2359 = vunpack.c.h.b16 %v2275
  %v2360 = vunpack.c.l.b16 %v2276
  %v2361 = vunpack.c.h.b16 %v2276
  %v2362 = vunpack.c.l.b16 %v2277
  %v2363 = vunpack.c.h.b16 %v2277
  %v2364 = vunpack.c.l.b16 %v2278
  %v2365 = vunpack.c.h.b16 %v2278
  %v2366 = vunpack.c.l.b16 %v2279
  %v2367 = vunpack.c.h.b16 %v2279
  %v2368 = vunpack.c.l.b16 %v2280
  %v2369 = vunpack.c.h.b16 %v2280
  %v2370 = vunpack.c.l.b16 %v2281
  %v2371 = vunpack.c.h.b16 %v2281
  %v2372 = vunpack.c.l.b16 %v2282
  %v2373 = vunpack.c.h.b16 %v2282
  %v2374 = vunpack.c.l.b16 %v2283
  %v2375 = vunpack.c.h.b16 %v2283
  %v2376 = vunpack.c.l.b16 %v2284
  %v2377 = vunpack.c.h.b16 %v2284
  %v2378 = vunpack.c.l.b16 %v2285
  %v2379 = vunpack.c.h.b16 %v2285
  %v2380 = vunpack.c.l.b16 %v2286
  %v2381 = vunpack.c.h.b16 %v2286
  %v2382 = vunpack.c.l.b16 %v2287
  %v2383 = vunpack.c.h.b16 %v2287
  %v2384 = vpack.c.b16 %v2324, %v2320
  %v2385 = vpack.c.b16 %v2325, %v2321
  %v2386 = vpack.c.b16 %v2326, %v2322
  %v2387 = vpack.c.b16 %v2327, %v2323
  %v2388 = vpack.c.b16 %v2332, %v2328
  %v2389 = vpack.c.b16 %v2333, %v2329
  %v2390 = vpack.c.b16 %v2334, %v2330
  %v2391 = vpack.c.b16 %v2335, %v2331
  %v2392 = vpack.c.b16 %v2340, %v2336
  %v2393 = vpack.c.b16 %v2341, %v2337
  %v2394 = vpack.c.b16 %v2342, %v2338
  %v2395 = vpack.c.b16 %v2343, %v2339
  %v2396 = vpack.c.b16 %v2348, %v2344
  %v2397 = vpack.c.b16 %v2349, %v2345
  %v2398 = vpack.c.b16 %v2350, %v2346
  %v2399 = vpack.c.b16 %v2351, %v2347
  %v2400 = vpack.c.b16 %v2356, %v2352
  %v2401 = vpack.c.b16 %v2357, %v2353
  %v2402 = vpack.c.b16 %v2358, %v2354
  %v2403 = vpack.c.b16 %v2359, %v2355
  %v2404 = vpack.c.b16 %v2364, %v2360
  %v2405 = vpack.c.b16 %v2365, %v2361
  %v2406 = vpack.c.b16 %v2366, %v2362
  %v2407 = vpack.c.b16 %v2367, %v2363
  %v2408 = vpack.c.b16 %v2372, %v2368
  %v2409 = vpack.c.b16 %v2373, %v2369
  %v2410 = vpack.c.b16 %v2374, %v2370
  %v2411 = vpack.c.b16 %v2375, %v2371
  %v2412 = vpack.c.b16 %v2380, %v2376
  %v2413 = vpack.c.b16 %v2381, %v2377
  %v2414 = vpack.c.b16 %v2382, %v2378
  %v2415 = vpack.c.b16 %v2383, %v2379
  %2448 = vmatprep.subr.bf16.mxu0 %v2413
  %2449 = vmatpush1.bf16.msra.mxu0 %v2412
  %2450 = vmatprep.subr.bf16.mxu0 %v2409
  %2451 = vmatpush1.bf16.msra.mxu0 %v2408
  %2452 = vmatprep.subr.bf16.mxu0 %v2405
  %2453 = vmatpush1.bf16.msra.mxu0 %v2404
  %2454 = vmatprep.subr.bf16.mxu0 %v2401
  %2455 = vmatpush1.bf16.msra.mxu0 %v2400
  %2456 = vmatprep.subr.bf16.mxu0 %v2397
  %2457 = vmatpush1.bf16.msra.mxu0 %v2396
  %2458 = vmatprep.subr.bf16.mxu0 %v2393
  %2459 = vmatpush1.bf16.msra.mxu0 %v2392
  %2460 = vmatprep.subr.bf16.mxu0 %v2389
  %2461 = vmatpush1.bf16.msra.mxu0 %v2388
  %2462 = vmatprep.subr.bf16.mxu0 %v2385
  %2463 = vmatpush1.bf16.msra.mxu0 %v2384
  %2464 = vmatprep.subr.bf16.mxu0 0
  %2465 = vmatpush2.bf16.msra.mxu0 0
  %2466 = vmatprep.subr.bf16.mxu0 0
  %2467 = vmatpush2.bf16.msra.mxu0 0
  %2468 = vmatprep.subr.bf16.mxu0 0
  %2469 = vmatpush2.bf16.msra.mxu0 0
  %2470 = vmatprep.subr.bf16.mxu0 0
  %2471 = vmatpush2.bf16.msra.mxu0 0
  %2472 = vmatprep.subr.bf16.mxu0 0
  %2473 = vmatpush2.bf16.msra.mxu0 0
  %2474 = vmatprep.subr.bf16.mxu0 0
  %2475 = vmatpush2.bf16.msra.mxu0 0
  %2476 = vmatprep.subr.bf16.mxu0 0
  %2477 = vmatpush2.bf16.msra.mxu0 0
  %2478 = vmatprep.subr.bf16.mxu0 0
  %2479 = vmatpush2.bf16.msra.mxu0 0
  %2480 = vmatprep.mubr.bf16.mxu0 0
  %2481 = vmatmul.mubr.bf16.gmra.mxu0 %v2255
  %v2482 = vpop.f32.mrf.mxu0
  %v2483 = vadd.f32 0.0, %v2482
  %v2484 = vpop.f32.mrf.mxu0
  %v2485 = vadd.f32 0.0, %v2484
  %v2486 = vpop.f32.mrf.mxu0
  %v2487 = vpop.f32.mrf.mxu0
  %2488 = vdwg.mxu0
  %2489 = vmatprep.subr.bf16.mxu0 %v2415
  %2490 = vmatpush1.bf16.msra.mxu0 %v2414
  %2491 = vmatprep.subr.bf16.mxu0 %v2411
  %2492 = vmatpush1.bf16.msra.mxu0 %v2410
  %2493 = vmatprep.subr.bf16.mxu0 %v2407
  %2494 = vmatpush1.bf16.msra.mxu0 %v2406
  %2495 = vmatprep.subr.bf16.mxu0 %v2403
  %2496 = vmatpush1.bf16.msra.mxu0 %v2402
  %2497 = vmatprep.subr.bf16.mxu0 %v2399
  %2498 = vmatpush1.bf16.msra.mxu0 %v2398
  %2499 = vmatprep.subr.bf16.mxu0 %v2395
  %2500 = vmatpush1.bf16.msra.mxu0 %v2394
  %2501 = vmatprep.subr.bf16.mxu0 %v2391
  %2502 = vmatpush1.bf16.msra.mxu0 %v2390
  %2503 = vmatprep.subr.bf16.mxu0 %v2387
  %2504 = vmatpush1.bf16.msra.mxu0 %v2386
  %2505 = vmatprep.subr.bf16.mxu0 0
  %2506 = vmatpush2.bf16.msra.mxu0 0
  %2507 = vmatprep.subr.bf16.mxu0 0
  %2508 = vmatpush2.bf16.msra.mxu0 0
  %2509 = vmatprep.subr.bf16.mxu0 0
  %2510 = vmatpush2.bf16.msra.mxu0 0
  %2511 = vmatprep.subr.bf16.mxu0 0
  %2512 = vmatpush2.bf16.msra.mxu0 0
  %2513 = vmatprep.subr.bf16.mxu0 0
  %2514 = vmatpush2.bf16.msra.mxu0 0
  %2515 = vmatprep.subr.bf16.mxu0 0
  %2516 = vmatpush2.bf16.msra.mxu0 0
  %2517 = vmatprep.subr.bf16.mxu0 0
  %2518 = vmatpush2.bf16.msra.mxu0 0
  %2519 = vmatprep.subr.bf16.mxu0 0
  %2520 = vmatpush2.bf16.msra.mxu0 0
  %2521 = vmatprep.mubr.bf16.mxu0 0
  %2522 = vmatmul.mubr.bf16.gmra.mxu0 %v2255
  %v2523 = vpop.f32.mrf.mxu0
  %v2524 = vadd.f32 0.0, %v2523
  %v2525 = vpop.f32.mrf.mxu0
  %v2526 = vadd.f32 0.0, %v2525
  %v2527 = vpop.f32.mrf.mxu0
  %v2528 = vpop.f32.mrf.mxu0
  %2529 = vdwg.mxu0
  %v2530 = vadd.f32 %v2251, %v2483
  %v2531 = vadd.f32 %v2252, %v2485
  %v2532 = vadd.f32 %v2253, %v2524
  %v2533 = vadd.f32 %v2254, %v2526
  %v2534 = vxor.u32 %v2530, 2147483648
  %v2535 = vmul.f32 %v2534, 1.442695
  %v2536 = vpow.pop %v2535
  %v2537 = vadd.f32 %v2536, 1.0
  %v2538 = vrcp.pop %v2537
  %v2539 = vmul.f32 1.0, %v2538
  %v2540 = vxor.u32 %v2531, 2147483648
  %v2541 = vmul.f32 %v2540, 1.442695
  %v2542 = vpow.pop %v2541
  %v2543 = vadd.f32 %v2542, 1.0
  %v2544 = vrcp.pop %v2543
  %v2545 = vmul.f32 1.0, %v2544
  %v2546 = vtanh.pop %v2532
  %v2547 = vxor.u32 %v2533, 2147483648
  %v2548 = vmul.f32 %v2547, 1.442695
  %v2549 = vpow.pop %v2548
  %v2550 = vadd.f32 %v2549, 1.0
  %v2551 = vrcp.pop %v2550
  %v2552 = vmul.f32 1.0, %v2551
  %v2553 = vmul.f32 %v2545, %v2247
  %v2554 = vmul.f32 %v2539, %v2546
  %v2555 = vadd.f32 %v2553, %v2554
  %v2556 = vtanh.pop %v2555
  %v2557 = vmul.f32 %v2552, %v2556
  %2558 = vst [vmem:[#allocation3] sm:$0xff] %v2555
  %2559 = vst [vmem:[#allocation2] sm:$0xff] %v2557
  %v2560 = vpack.c.bf16 %v2557, %v2557
  %s2561 = scalar_lea.vmem %s4, 28
  %2562 = vst [vmem:[%s2561] sm:$0xf] %v2560
  %v2563 = vld [vmem:[#allocation2] sm:$0xff]
  %v2564 = vld [vmem:[#allocation3] sm:$0xff]
  %s2565 = scalar_lea.vmem %s0, 128
  %v2566 = vld [vmem:[%s2565] sm:$0xff]
  %v2567 = vld [vmem:[%s2565 + $0x8] sm:$0xff]
  %v2568 = vunpack.c.l.bf16 %v2566
  %v2569 = vunpack.c.h.bf16 %v2566
  %v2570 = vunpack.c.l.bf16 %v2567
  %v2571 = vunpack.c.h.bf16 %v2567
  %v2572 = vpack.c.bf16 %v2563, %v2563
  %v2573 = vld [vmem:[%s1] sm:$0xff]
  %v2574 = vld [vmem:[%s1 + $0x8] sm:$0xff]
  %v2575 = vld [vmem:[%s1 + $0x10] sm:$0xff]
  %v2576 = vld [vmem:[%s1 + $0x18] sm:$0xff]
  %v2577 = vld [vmem:[%s1 + $0x20] sm:$0xff]
  %v2578 = vld [vmem:[%s1 + $0x28] sm:$0xff]
  %v2579 = vld [vmem:[%s1 + $0x30] sm:$0xff]
  %v2580 = vld [vmem:[%s1 + $0x38] sm:$0xff]
  %v2581 = vld [vmem:[%s1 + $0x40] sm:$0xff]
  %v2582 = vld [vmem:[%s1 + $0x48] sm:$0xff]
  %v2583 = vld [vmem:[%s1 + $0x50] sm:$0xff]
  %v2584 = vld [vmem:[%s1 + $0x58] sm:$0xff]
  %v2585 = vld [vmem:[%s1 + $0x60] sm:$0xff]
  %v2586 = vld [vmem:[%s1 + $0x68] sm:$0xff]
  %v2587 = vld [vmem:[%s1 + $0x70] sm:$0xff]
  %v2588 = vld [vmem:[%s1 + $0x78] sm:$0xff]
  %v2589 = vld [vmem:[%s1 + $0x80] sm:$0xff]
  %v2590 = vld [vmem:[%s1 + $0x88] sm:$0xff]
  %v2591 = vld [vmem:[%s1 + $0x90] sm:$0xff]
  %v2592 = vld [vmem:[%s1 + $0x98] sm:$0xff]
  %v2593 = vld [vmem:[%s1 + $0xa0] sm:$0xff]
  %v2594 = vld [vmem:[%s1 + $0xa8] sm:$0xff]
  %v2595 = vld [vmem:[%s1 + $0xb0] sm:$0xff]
  %v2596 = vld [vmem:[%s1 + $0xb8] sm:$0xff]
  %v2597 = vld [vmem:[%s1 + $0xc0] sm:$0xff]
  %v2598 = vld [vmem:[%s1 + $0xc8] sm:$0xff]
  %v2599 = vld [vmem:[%s1 + $0xd0] sm:$0xff]
  %v2600 = vld [vmem:[%s1 + $0xd8] sm:$0xff]
  %v2601 = vld [vmem:[%s1 + $0xe0] sm:$0xff]
  %v2602 = vld [vmem:[%s1 + $0xe8] sm:$0xff]
  %v2603 = vld [vmem:[%s1 + $0xf0] sm:$0xff]
  %v2604 = vld [vmem:[%s1 + $0xf8] sm:$0xff]
  %v2637 = vunpack.c.l.b16 %v2573
  %v2638 = vunpack.c.h.b16 %v2573
  %v2639 = vunpack.c.l.b16 %v2574
  %v2640 = vunpack.c.h.b16 %v2574
  %v2641 = vunpack.c.l.b16 %v2575
  %v2642 = vunpack.c.h.b16 %v2575
  %v2643 = vunpack.c.l.b16 %v2576
  %v2644 = vunpack.c.h.b16 %v2576
  %v2645 = vunpack.c.l.b16 %v2577
  %v2646 = vunpack.c.h.b16 %v2577
  %v2647 = vunpack.c.l.b16 %v2578
  %v2648 = vunpack.c.h.b16 %v2578
  %v2649 = vunpack.c.l.b16 %v2579
  %v2650 = vunpack.c.h.b16 %v2579
  %v2651 = vunpack.c.l.b16 %v2580
  %v2652 = vunpack.c.h.b16 %v2580
  %v2653 = vunpack.c.l.b16 %v2581
  %v2654 = vunpack.c.h.b16 %v2581
  %v2655 = vunpack.c.l.b16 %v2582
  %v2656 = vunpack.c.h.b16 %v2582
  %v2657 = vunpack.c.l.b16 %v2583
  %v2658 = vunpack.c.h.b16 %v2583
  %v2659 = vunpack.c.l.b16 %v2584
  %v2660 = vunpack.c.h.b16 %v2584
  %v2661 = vunpack.c.l.b16 %v2585
  %v2662 = vunpack.c.h.b16 %v2585
  %v2663 = vunpack.c.l.b16 %v2586
  %v2664 = vunpack.c.h.b16 %v2586
  %v2665 = vunpack.c.l.b16 %v2587
  %v2666 = vunpack.c.h.b16 %v2587
  %v2667 = vunpack.c.l.b16 %v2588
  %v2668 = vunpack.c.h.b16 %v2588
  %v2669 = vunpack.c.l.b16 %v2589
  %v2670 = vunpack.c.h.b16 %v2589
  %v2671 = vunpack.c.l.b16 %v2590
  %v2672 = vunpack.c.h.b16 %v2590
  %v2673 = vunpack.c.l.b16 %v2591
  %v2674 = vunpack.c.h.b16 %v2591
  %v2675 = vunpack.c.l.b16 %v2592
  %v2676 = vunpack.c.h.b16 %v2592
  %v2677 = vunpack.c.l.b16 %v2593
  %v2678 = vunpack.c.h.b16 %v2593
  %v2679 = vunpack.c.l.b16 %v2594
  %v2680 = vunpack.c.h.b16 %v2594
  %v2681 = vunpack.c.l.b16 %v2595
  %v2682 = vunpack.c.h.b16 %v2595
  %v2683 = vunpack.c.l.b16 %v2596
  %v2684 = vunpack.c.h.b16 %v2596
  %v2685 = vunpack.c.l.b16 %v2597
  %v2686 = vunpack.c.h.b16 %v2597
  %v2687 = vunpack.c.l.b16 %v2598
  %v2688 = vunpack.c.h.b16 %v2598
  %v2689 = vunpack.c.l.b16 %v2599
  %v2690 = vunpack.c.h.b16 %v2599
  %v2691 = vunpack.c.l.b16 %v2600
  %v2692 = vunpack.c.h.b16 %v2600
  %v2693 = vunpack.c.l.b16 %v2601
  %v2694 = vunpack.c.h.b16 %v2601
  %v2695 = vunpack.c.l.b16 %v2602
  %v2696 = vunpack.c.h.b16 %v2602
  %v2697 = vunpack.c.l.b16 %v2603
  %v2698 = vunpack.c.h.b16 %v2603
  %v2699 = vunpack.c.l.b16 %v2604
  %v2700 = vunpack.c.h.b16 %v2604
  %v2701 = vpack.c.b16 %v2641, %v2637
  %v2702 = vpack.c.b16 %v2642, %v2638
  %v2703 = vpack.c.b16 %v2643, %v2639
  %v2704 = vpack.c.b16 %v2644, %v2640
  %v2705 = vpack.c.b16 %v2649, %v2645
  %v2706 = vpack.c.b16 %v2650, %v2646
  %v2707 = vpack.c.b16 %v2651, %v2647
  %v2708 = vpack.c.b16 %v2652, %v2648
  %v2709 = vpack.c.b16 %v2657, %v2653
  %v2710 = vpack.c.b16 %v2658, %v2654
  %v2711 = vpack.c.b16 %v2659, %v2655
  %v2712 = vpack.c.b16 %v2660, %v2656
  %v2713 = vpack.c.b16 %v2665, %v2661
  %v2714 = vpack.c.b16 %v2666, %v2662
  %v2715 = vpack.c.b16 %v2667, %v2663
  %v2716 = vpack.c.b16 %v2668, %v2664
  %v2717 = vpack.c.b16 %v2673, %v2669
  %v2718 = vpack.c.b16 %v2674, %v2670
  %v2719 = vpack.c.b16 %v2675, %v2671
  %v2720 = vpack.c.b16 %v2676, %v2672
  %v2721 = vpack.c.b16 %v2681, %v2677
  %v2722 = vpack.c.b16 %v2682, %v2678
  %v2723 = vpack.c.b16 %v2683, %v2679
  %v2724 = vpack.c.b16 %v2684, %v2680
  %v2725 = vpack.c.b16 %v2689, %v2685
  %v2726 = vpack.c.b16 %v2690, %v2686
  %v2727 = vpack.c.b16 %v2691, %v2687
  %v2728 = vpack.c.b16 %v2692, %v2688
  %v2729 = vpack.c.b16 %v2697, %v2693
  %v2730 = vpack.c.b16 %v2698, %v2694
  %v2731 = vpack.c.b16 %v2699, %v2695
  %v2732 = vpack.c.b16 %v2700, %v2696
  %2765 = vmatprep.subr.bf16.mxu0 %v2730
  %2766 = vmatpush1.bf16.msra.mxu0 %v2729
  %2767 = vmatprep.subr.bf16.mxu0 %v2726
  %2768 = vmatpush1.bf16.msra.mxu0 %v2725
  %2769 = vmatprep.subr.bf16.mxu0 %v2722
  %2770 = vmatpush1.bf16.msra.mxu0 %v2721
  %2771 = vmatprep.subr.bf16.mxu0 %v2718
  %2772 = vmatpush1.bf16.msra.mxu0 %v2717
  %2773 = vmatprep.subr.bf16.mxu0 %v2714
  %2774 = vmatpush1.bf16.msra.mxu0 %v2713
  %2775 = vmatprep.subr.bf16.mxu0 %v2710
  %2776 = vmatpush1.bf16.msra.mxu0 %v2709
  %2777 = vmatprep.subr.bf16.mxu0 %v2706
  %2778 = vmatpush1.bf16.msra.mxu0 %v2705
  %2779 = vmatprep.subr.bf16.mxu0 %v2702
  %2780 = vmatpush1.bf16.msra.mxu0 %v2701
  %2781 = vmatprep.subr.bf16.mxu0 0
  %2782 = vmatpush2.bf16.msra.mxu0 0
  %2783 = vmatprep.subr.bf16.mxu0 0
  %2784 = vmatpush2.bf16.msra.mxu0 0
  %2785 = vmatprep.subr.bf16.mxu0 0
  %2786 = vmatpush2.bf16.msra.mxu0 0
  %2787 = vmatprep.subr.bf16.mxu0 0
  %2788 = vmatpush2.bf16.msra.mxu0 0
  %2789 = vmatprep.subr.bf16.mxu0 0
  %2790 = vmatpush2.bf16.msra.mxu0 0
  %2791 = vmatprep.subr.bf16.mxu0 0
  %2792 = vmatpush2.bf16.msra.mxu0 0
  %2793 = vmatprep.subr.bf16.mxu0 0
  %2794 = vmatpush2.bf16.msra.mxu0 0
  %2795 = vmatprep.subr.bf16.mxu0 0
  %2796 = vmatpush2.bf16.msra.mxu0 0
  %2797 = vmatprep.mubr.bf16.mxu0 0
  %2798 = vmatmul.mubr.bf16.gmra.mxu0 %v2572
  %v2799 = vpop.f32.mrf.mxu0
  %v2800 = vadd.f32 0.0, %v2799
  %v2801 = vpop.f32.mrf.mxu0
  %v2802 = vadd.f32 0.0, %v2801
  %v2803 = vpop.f32.mrf.mxu0
  %v2804 = vpop.f32.mrf.mxu0
  %2805 = vdwg.mxu0
  %2806 = vmatprep.subr.bf16.mxu0 %v2732
  %2807 = vmatpush1.bf16.msra.mxu0 %v2731
  %2808 = vmatprep.subr.bf16.mxu0 %v2728
  %2809 = vmatpush1.bf16.msra.mxu0 %v2727
  %2810 = vmatprep.subr.bf16.mxu0 %v2724
  %2811 = vmatpush1.bf16.msra.mxu0 %v2723
  %2812 = vmatprep.subr.bf16.mxu0 %v2720
  %2813 = vmatpush1.bf16.msra.mxu0 %v2719
  %2814 = vmatprep.subr.bf16.mxu0 %v2716
  %2815 = vmatpush1.bf16.msra.mxu0 %v2715
  %2816 = vmatprep.subr.bf16.mxu0 %v2712
  %2817 = vmatpush1.bf16.msra.mxu0 %v2711
  %2818 = vmatprep.subr.bf16.mxu0 %v2708
  %2819 = vmatpush1.bf16.msra.mxu0 %v2707
  %2820 = vmatprep.subr.bf16.mxu0 %v2704
  %2821 = vmatpush1.bf16.msra.mxu0 %v2703
  %2822 = vmatprep.subr.bf16.mxu0 0
  %2823 = vmatpush2.bf16.msra.mxu0 0
  %2824 = vmatprep.subr.bf16.mxu0 0
  %2825 = vmatpush2.bf16.msra.mxu0 0
  %2826 = vmatprep.subr.bf16.mxu0 0
  %2827 = vmatpush2.bf16.msra.mxu0 0
  %2828 = vmatprep.subr.bf16.mxu0 0
  %2829 = vmatpush2.bf16.msra.mxu0 0
  %2830 = vmatprep.subr.bf16.mxu0 0
  %2831 = vmatpush2.bf16.msra.mxu0 0
  %2832 = vmatprep.subr.bf16.mxu0 0
  %2833 = vmatpush2.bf16.msra.mxu0 0
  %2834 = vmatprep.subr.bf16.mxu0 0
  %2835 = vmatpush2.bf16.msra.mxu0 0
  %2836 = vmatprep.subr.bf16.mxu0 0
  %2837 = vmatpush2.bf16.msra.mxu0 0
  %2838 = vmatprep.mubr.bf16.mxu0 0
  %2839 = vmatmul.mubr.bf16.gmra.mxu0 %v2572
  %v2840 = vpop.f32.mrf.mxu0
  %v2841 = vadd.f32 0.0, %v2840
  %v2842 = vpop.f32.mrf.mxu0
  %v2843 = vadd.f32 0.0, %v2842
  %v2844 = vpop.f32.mrf.mxu0
  %v2845 = vpop.f32.mrf.mxu0
  %2846 = vdwg.mxu0
  %v2847 = vadd.f32 %v2568, %v2800
  %v2848 = vadd.f32 %v2569, %v2802
  %v2849 = vadd.f32 %v2570, %v2841
  %v2850 = vadd.f32 %v2571, %v2843
  %v2851 = vxor.u32 %v2847, 2147483648
  %v2852 = vmul.f32 %v2851, 1.442695
  %v2853 = vpow.pop %v2852
  %v2854 = vadd.f32 %v2853, 1.0
  %v2855 = vrcp.pop %v2854
  %v2856 = vmul.f32 1.0, %v2855
  %v2857 = vxor.u32 %v2848, 2147483648
  %v2858 = vmul.f32 %v2857, 1.442695
  %v2859 = vpow.pop %v2858
  %v2860 = vadd.f32 %v2859, 1.0
  %v2861 = vrcp.pop %v2860
  %v2862 = vmul.f32 1.0, %v2861
  %v2863 = vtanh.pop %v2849
  %v2864 = vxor.u32 %v2850, 2147483648
  %v2865 = vmul.f32 %v2864, 1.442695
  %v2866 = vpow.pop %v2865
  %v2867 = vadd.f32 %v2866, 1.0
  %v2868 = vrcp.pop %v2867
  %v2869 = vmul.f32 1.0, %v2868
  %v2870 = vmul.f32 %v2862, %v2564
  %v2871 = vmul.f32 %v2856, %v2863
  %v2872 = vadd.f32 %v2870, %v2871
  %v2873 = vtanh.pop %v2872
  %v2874 = vmul.f32 %v2869, %v2873
  %2875 = vst [vmem:[#allocation3] sm:$0xff] %v2872
  %2876 = vst [vmem:[#allocation2] sm:$0xff] %v2874
  %v2877 = vpack.c.bf16 %v2874, %v2874
  %s2878 = scalar_lea.vmem %s4, 32
  %2879 = vst [vmem:[%s2878] sm:$0xf] %v2877
  %v2880 = vld [vmem:[#allocation2] sm:$0xff]
  %v2881 = vld [vmem:[#allocation3] sm:$0xff]
  %s2882 = scalar_lea.vmem %s0, 144
  %v2883 = vld [vmem:[%s2882] sm:$0xff]
  %v2884 = vld [vmem:[%s2882 + $0x8] sm:$0xff]
  %v2885 = vunpack.c.l.bf16 %v2883
  %v2886 = vunpack.c.h.bf16 %v2883
  %v2887 = vunpack.c.l.bf16 %v2884
  %v2888 = vunpack.c.h.bf16 %v2884
  %v2889 = vpack.c.bf16 %v2880, %v2880
  %v2890 = vld [vmem:[%s1] sm:$0xff]
  %v2891 = vld [vmem:[%s1 + $0x8] sm:$0xff]
  %v2892 = vld [vmem:[%s1 + $0x10] sm:$0xff]
  %v2893 = vld [vmem:[%s1 + $0x18] sm:$0xff]
  %v2894 = vld [vmem:[%s1 + $0x20] sm:$0xff]
  %v2895 = vld [vmem:[%s1 + $0x28] sm:$0xff]
  %v2896 = vld [vmem:[%s1 + $0x30] sm:$0xff]
  %v2897 = vld [vmem:[%s1 + $0x38] sm:$0xff]
  %v2898 = vld [vmem:[%s1 + $0x40] sm:$0xff]
  %v2899 = vld [vmem:[%s1 + $0x48] sm:$0xff]
  %v2900 = vld [vmem:[%s1 + $0x50] sm:$0xff]
  %v2901 = vld [vmem:[%s1 + $0x58] sm:$0xff]
  %v2902 = vld [vmem:[%s1 + $0x60] sm:$0xff]
  %v2903 = vld [vmem:[%s1 + $0x68] sm:$0xff]
  %v2904 = vld [vmem:[%s1 + $0x70] sm:$0xff]
  %v2905 = vld [vmem:[%s1 + $0x78] sm:$0xff]
  %v2906 = vld [vmem:[%s1 + $0x80] sm:$0xff]
  %v2907 = vld [vmem:[%s1 + $0x88] sm:$0xff]
  %v2908 = vld [vmem:[%s1 + $0x90] sm:$0xff]
  %v2909 = vld [vmem:[%s1 + $0x98] sm:$0xff]
  %v2910 = vld [vmem:[%s1 + $0xa0] sm:$0xff]
  %v2911 = vld [vmem:[%s1 + $0xa8] sm:$0xff]
  %v2912 = vld [vmem:[%s1 + $0xb0] sm:$0xff]
  %v2913 = vld [vmem:[%s1 + $0xb8] sm:$0xff]
  %v2914 = vld [vmem:[%s1 + $0xc0] sm:$0xff]
  %v2915 = vld [vmem:[%s1 + $0xc8] sm:$0xff]
  %v2916 = vld [vmem:[%s1 + $0xd0] sm:$0xff]
  %v2917 = vld [vmem:[%s1 + $0xd8] sm:$0xff]
  %v2918 = vld [vmem:[%s1 + $0xe0] sm:$0xff]
  %v2919 = vld [vmem:[%s1 + $0xe8] sm:$0xff]
  %v2920 = vld [vmem:[%s1 + $0xf0] sm:$0xff]
  %v2921 = vld [vmem:[%s1 + $0xf8] sm:$0xff]
  %v2954 = vunpack.c.l.b16 %v2890
  %v2955 = vunpack.c.h.b16 %v2890
  %v2956 = vunpack.c.l.b16 %v2891
  %v2957 = vunpack.c.h.b16 %v2891
  %v2958 = vunpack.c.l.b16 %v2892
  %v2959 = vunpack.c.h.b16 %v2892
  %v2960 = vunpack.c.l.b16 %v2893
  %v2961 = vunpack.c.h.b16 %v2893
  %v2962 = vunpack.c.l.b16 %v2894
  %v2963 = vunpack.c.h.b16 %v2894
  %v2964 = vunpack.c.l.b16 %v2895
  %v2965 = vunpack.c.h.b16 %v2895
  %v2966 = vunpack.c.l.b16 %v2896
  %v2967 = vunpack.c.h.b16 %v2896
  %v2968 = vunpack.c.l.b16 %v2897
  %v2969 = vunpack.c.h.b16 %v2897
  %v2970 = vunpack.c.l.b16 %v2898
  %v2971 = vunpack.c.h.b16 %v2898
  %v2972 = vunpack.c.l.b16 %v2899
  %v2973 = vunpack.c.h.b16 %v2899
  %v2974 = vunpack.c.l.b16 %v2900
  %v2975 = vunpack.c.h.b16 %v2900
  %v2976 = vunpack.c.l.b16 %v2901
  %v2977 = vunpack.c.h.b16 %v2901
  %v2978 = vunpack.c.l.b16 %v2902
  %v2979 = vunpack.c.h.b16 %v2902
  %v2980 = vunpack.c.l.b16 %v2903
  %v2981 = vunpack.c.h.b16 %v2903
  %v2982 = vunpack.c.l.b16 %v2904
  %v2983 = vunpack.c.h.b16 %v2904
  %v2984 = vunpack.c.l.b16 %v2905
  %v2985 = vunpack.c.h.b16 %v2905
  %v2986 = vunpack.c.l.b16 %v2906
  %v2987 = vunpack.c.h.b16 %v2906
  %v2988 = vunpack.c.l.b16 %v2907
  %v2989 = vunpack.c.h.b16 %v2907
  %v2990 = vunpack.c.l.b16 %v2908
  %v2991 = vunpack.c.h.b16 %v2908
  %v2992 = vunpack.c.l.b16 %v2909
  %v2993 = vunpack.c.h.b16 %v2909
  %v2994 = vunpack.c.l.b16 %v2910
  %v2995 = vunpack.c.h.b16 %v2910
  %v2996 = vunpack.c.l.b16 %v2911
  %v2997 = vunpack.c.h.b16 %v2911
  %v2998 = vunpack.c.l.b16 %v2912
  %v2999 = vunpack.c.h.b16 %v2912
  %v3000 = vunpack.c.l.b16 %v2913
  %v3001 = vunpack.c.h.b16 %v2913
  %v3002 = vunpack.c.l.b16 %v2914
  %v3003 = vunpack.c.h.b16 %v2914
  %v3004 = vunpack.c.l.b16 %v2915
  %v3005 = vunpack.c.h.b16 %v2915
  %v3006 = vunpack.c.l.b16 %v2916
  %v3007 = vunpack.c.h.b16 %v2916
  %v3008 = vunpack.c.l.b16 %v2917
  %v3009 = vunpack.c.h.b16 %v2917
  %v3010 = vunpack.c.l.b16 %v2918
  %v3011 = vunpack.c.h.b16 %v2918
  %v3012 = vunpack.c.l.b16 %v2919
  %v3013 = vunpack.c.h.b16 %v2919
  %v3014 = vunpack.c.l.b16 %v2920
  %v3015 = vunpack.c.h.b16 %v2920
  %v3016 = vunpack.c.l.b16 %v2921
  %v3017 = vunpack.c.h.b16 %v2921
  %v3018 = vpack.c.b16 %v2958, %v2954
  %v3019 = vpack.c.b16 %v2959, %v2955
  %v3020 = vpack.c.b16 %v2960, %v2956
  %v3021 = vpack.c.b16 %v2961, %v2957
  %v3022 = vpack.c.b16 %v2966, %v2962
  %v3023 = vpack.c.b16 %v2967, %v2963
  %v3024 = vpack.c.b16 %v2968, %v2964
  %v3025 = vpack.c.b16 %v2969, %v2965
  %v3026 = vpack.c.b16 %v2974, %v2970
  %v3027 = vpack.c.b16 %v2975, %v2971
  %v3028 = vpack.c.b16 %v2976, %v2972
  %v3029 = vpack.c.b16 %v2977, %v2973
  %v3030 = vpack.c.b16 %v2982, %v2978
  %v3031 = vpack.c.b16 %v2983, %v2979
  %v3032 = vpack.c.b16 %v2984, %v2980
  %v3033 = vpack.c.b16 %v2985, %v2981
  %v3034 = vpack.c.b16 %v2990, %v2986
  %v3035 = vpack.c.b16 %v2991, %v2987
  %v3036 = vpack.c.b16 %v2992, %v2988
  %v3037 = vpack.c.b16 %v2993, %v2989
  %v3038 = vpack.c.b16 %v2998, %v2994
  %v3039 = vpack.c.b16 %v2999, %v2995
  %v3040 = vpack.c.b16 %v3000, %v2996
  %v3041 = vpack.c.b16 %v3001, %v2997
  %v3042 = vpack.c.b16 %v3006, %v3002
  %v3043 = vpack.c.b16 %v3007, %v3003
  %v3044 = vpack.c.b16 %v3008, %v3004
  %v3045 = vpack.c.b16 %v3009, %v3005
  %v3046 = vpack.c.b16 %v3014, %v3010
  %v3047 = vpack.c.b16 %v3015, %v3011
  %v3048 = vpack.c.b16 %v3016, %v3012
  %v3049 = vpack.c.b16 %v3017, %v3013
  %3082 = vmatprep.subr.bf16.mxu0 %v3047
  %3083 = vmatpush1.bf16.msra.mxu0 %v3046
  %3084 = vmatprep.subr.bf16.mxu0 %v3043
  %3085 = vmatpush1.bf16.msra.mxu0 %v3042
  %3086 = vmatprep.subr.bf16.mxu0 %v3039
  %3087 = vmatpush1.bf16.msra.mxu0 %v3038
  %3088 = vmatprep.subr.bf16.mxu0 %v3035
  %3089 = vmatpush1.bf16.msra.mxu0 %v3034
  %3090 = vmatprep.subr.bf16.mxu0 %v3031
  %3091 = vmatpush1.bf16.msra.mxu0 %v3030
  %3092 = vmatprep.subr.bf16.mxu0 %v3027
  %3093 = vmatpush1.bf16.msra.mxu0 %v3026
  %3094 = vmatprep.subr.bf16.mxu0 %v3023
  %3095 = vmatpush1.bf16.msra.mxu0 %v3022
  %3096 = vmatprep.subr.bf16.mxu0 %v3019
  %3097 = vmatpush1.bf16.msra.mxu0 %v3018
  %3098 = vmatprep.subr.bf16.mxu0 0
  %3099 = vmatpush2.bf16.msra.mxu0 0
  %3100 = vmatprep.subr.bf16.mxu0 0
  %3101 = vmatpush2.bf16.msra.mxu0 0
  %3102 = vmatprep.subr.bf16.mxu0 0
  %3103 = vmatpush2.bf16.msra.mxu0 0
  %3104 = vmatprep.subr.bf16.mxu0 0
  %3105 = vmatpush2.bf16.msra.mxu0 0
  %3106 = vmatprep.subr.bf16.mxu0 0
  %3107 = vmatpush2.bf16.msra.mxu0 0
  %3108 = vmatprep.subr.bf16.mxu0 0
  %3109 = vmatpush2.bf16.msra.mxu0 0
  %3110 = vmatprep.subr.bf16.mxu0 0
  %3111 = vmatpush2.bf16.msra.mxu0 0
  %3112 = vmatprep.subr.bf16.mxu0 0
  %3113 = vmatpush2.bf16.msra.mxu0 0
  %3114 = vmatprep.mubr.bf16.mxu0 0
  %3115 = vmatmul.mubr.bf16.gmra.mxu0 %v2889
  %v3116 = vpop.f32.mrf.mxu0
  %v3117 = vadd.f32 0.0, %v3116
  %v3118 = vpop.f32.mrf.mxu0
  %v3119 = vadd.f32 0.0, %v3118
  %v3120 = vpop.f32.mrf.mxu0
  %v3121 = vpop.f32.mrf.mxu0
  %3122 = vdwg.mxu0
  %3123 = vmatprep.subr.bf16.mxu0 %v3049
  %3124 = vmatpush1.bf16.msra.mxu0 %v3048
  %3125 = vmatprep.subr.bf16.mxu0 %v3045
  %3126 = vmatpush1.bf16.msra.mxu0 %v3044
  %3127 = vmatprep.subr.bf16.mxu0 %v3041
  %3128 = vmatpush1.bf16.msra.mxu0 %v3040
  %3129 = vmatprep.subr.bf16.mxu0 %v3037
  %3130 = vmatpush1.bf16.msra.mxu0 %v3036
  %3131 = vmatprep.subr.bf16.mxu0 %v3033
  %3132 = vmatpush1.bf16.msra.mxu0 %v3032
  %3133 = vmatprep.subr.bf16.mxu0 %v3029
  %3134 = vmatpush1.bf16.msra.mxu0 %v3028
  %3135 = vmatprep.subr.bf16.mxu0 %v3025
  %3136 = vmatpush1.bf16.msra.mxu0 %v3024
  %3137 = vmatprep.subr.bf16.mxu0 %v3021
  %3138 = vmatpush1.bf16.msra.mxu0 %v3020
  %3139 = vmatprep.subr.bf16.mxu0 0
  %3140 = vmatpush2.bf16.msra.mxu0 0
  %3141 = vmatprep.subr.bf16.mxu0 0
  %3142 = vmatpush2.bf16.msra.mxu0 0
  %3143 = vmatprep.subr.bf16.mxu0 0
  %3144 = vmatpush2.bf16.msra.mxu0 0
  %3145 = vmatprep.subr.bf16.mxu0 0
  %3146 = vmatpush2.bf16.msra.mxu0 0
  %3147 = vmatprep.subr.bf16.mxu0 0
  %3148 = vmatpush2.bf16.msra.mxu0 0
  %3149 = vmatprep.subr.bf16.mxu0 0
  %3150 = vmatpush2.bf16.msra.mxu0 0
  %3151 = vmatprep.subr.bf16.mxu0 0
  %3152 = vmatpush2.bf16.msra.mxu0 0
  %3153 = vmatprep.subr.bf16.mxu0 0
  %3154 = vmatpush2.bf16.msra.mxu0 0
  %3155 = vmatprep.mubr.bf16.mxu0 0
  %3156 = vmatmul.mubr.bf16.gmra.mxu0 %v2889
  %v3157 = vpop.f32.mrf.mxu0
  %v3158 = vadd.f32 0.0, %v3157
  %v3159 = vpop.f32.mrf.mxu0
  %v3160 = vadd.f32 0.0, %v3159
  %v3161 = vpop.f32.mrf.mxu0
  %v3162 = vpop.f32.mrf.mxu0
  %3163 = vdwg.mxu0
  %v3164 = vadd.f32 %v2885, %v3117
  %v3165 = vadd.f32 %v2886, %v3119
  %v3166 = vadd.f32 %v2887, %v3158
  %v3167 = vadd.f32 %v2888, %v3160
  %v3168 = vxor.u32 %v3164, 2147483648
  %v3169 = vmul.f32 %v3168, 1.442695
  %v3170 = vpow.pop %v3169
  %v3171 = vadd.f32 %v3170, 1.0
  %v3172 = vrcp.pop %v3171
  %v3173 = vmul.f32 1.0, %v3172
  %v3174 = vxor.u32 %v3165, 2147483648
  %v3175 = vmul.f32 %v3174, 1.442695
  %v3176 = vpow.pop %v3175
  %v3177 = vadd.f32 %v3176, 1.0
  %v3178 = vrcp.pop %v3177
  %v3179 = vmul.f32 1.0, %v3178
  %v3180 = vtanh.pop %v3166
  %v3181 = vxor.u32 %v3167, 2147483648
  %v3182 = vmul.f32 %v3181, 1.442695
  %v3183 = vpow.pop %v3182
  %v3184 = vadd.f32 %v3183, 1.0
  %v3185 = vrcp.pop %v3184
  %v3186 = vmul.f32 1.0, %v3185
  %v3187 = vmul.f32 %v3179, %v2881
  %v3188 = vmul.f32 %v3173, %v3180
  %v3189 = vadd.f32 %v3187, %v3188
  %v3190 = vtanh.pop %v3189
  %v3191 = vmul.f32 %v3186, %v3190
  %3192 = vst [vmem:[#allocation3] sm:$0xff] %v3189
  %3193 = vst [vmem:[#allocation2] sm:$0xff] %v3191
  %v3194 = vpack.c.bf16 %v3191, %v3191
  %s3195 = scalar_lea.vmem %s4, 36
  %3196 = vst [vmem:[%s3195] sm:$0xf] %v3194
  %v3197 = vld [vmem:[#allocation2] sm:$0xff]
  %v3198 = vld [vmem:[#allocation3] sm:$0xff]
  %s3199 = scalar_lea.vmem %s0, 160
  %v3200 = vld [vmem:[%s3199] sm:$0xff]
  %v3201 = vld [vmem:[%s3199 + $0x8] sm:$0xff]
  %v3202 = vunpack.c.l.bf16 %v3200
  %v3203 = vunpack.c.h.bf16 %v3200
  %v3204 = vunpack.c.l.bf16 %v3201
  %v3205 = vunpack.c.h.bf16 %v3201
  %v3206 = vpack.c.bf16 %v3197, %v3197
  %v3207 = vld [vmem:[%s1] sm:$0xff]
  %v3208 = vld [vmem:[%s1 + $0x8] sm:$0xff]
  %v3209 = vld [vmem:[%s1 + $0x10] sm:$0xff]
  %v3210 = vld [vmem:[%s1 + $0x18] sm:$0xff]
  %v3211 = vld [vmem:[%s1 + $0x20] sm:$0xff]
  %v3212 = vld [vmem:[%s1 + $0x28] sm:$0xff]
  %v3213 = vld [vmem:[%s1 + $0x30] sm:$0xff]
  %v3214 = vld [vmem:[%s1 + $0x38] sm:$0xff]
  %v3215 = vld [vmem:[%s1 + $0x40] sm:$0xff]
  %v3216 = vld [vmem:[%s1 + $0x48] sm:$0xff]
  %v3217 = vld [vmem:[%s1 + $0x50] sm:$0xff]
  %v3218 = vld [vmem:[%s1 + $0x58] sm:$0xff]
  %v3219 = vld [vmem:[%s1 + $0x60] sm:$0xff]
  %v3220 = vld [vmem:[%s1 + $0x68] sm:$0xff]
  %v3221 = vld [vmem:[%s1 + $0x70] sm:$0xff]
  %v3222 = vld [vmem:[%s1 + $0x78] sm:$0xff]
  %v3223 = vld [vmem:[%s1 + $0x80] sm:$0xff]
  %v3224 = vld [vmem:[%s1 + $0x88] sm:$0xff]
  %v3225 = vld [vmem:[%s1 + $0x90] sm:$0xff]
  %v3226 = vld [vmem:[%s1 + $0x98] sm:$0xff]
  %v3227 = vld [vmem:[%s1 + $0xa0] sm:$0xff]
  %v3228 = vld [vmem:[%s1 + $0xa8] sm:$0xff]
  %v3229 = vld [vmem:[%s1 + $0xb0] sm:$0xff]
  %v3230 = vld [vmem:[%s1 + $0xb8] sm:$0xff]
  %v3231 = vld [vmem:[%s1 + $0xc0] sm:$0xff]
  %v3232 = vld [vmem:[%s1 + $0xc8] sm:$0xff]
  %v3233 = vld [vmem:[%s1 + $0xd0] sm:$0xff]
  %v3234 = vld [vmem:[%s1 + $0xd8] sm:$0xff]
  %v3235 = vld [vmem:[%s1 + $0xe0] sm:$0xff]
  %v3236 = vld [vmem:[%s1 + $0xe8] sm:$0xff]
  %v3237 = vld [vmem:[%s1 + $0xf0] sm:$0xff]
  %v3238 = vld [vmem:[%s1 + $0xf8] sm:$0xff]
  %v3271 = vunpack.c.l.b16 %v3207
  %v3272 = vunpack.c.h.b16 %v3207
  %v3273 = vunpack.c.l.b16 %v3208
  %v3274 = vunpack.c.h.b16 %v3208
  %v3275 = vunpack.c.l.b16 %v3209
  %v3276 = vunpack.c.h.b16 %v3209
  %v3277 = vunpack.c.l.b16 %v3210
  %v3278 = vunpack.c.h.b16 %v3210
  %v3279 = vunpack.c.l.b16 %v3211
  %v3280 = vunpack.c.h.b16 %v3211
  %v3281 = vunpack.c.l.b16 %v3212
  %v3282 = vunpack.c.h.b16 %v3212
  %v3283 = vunpack.c.l.b16 %v3213
  %v3284 = vunpack.c.h.b16 %v3213
  %v3285 = vunpack.c.l.b16 %v3214
  %v3286 = vunpack.c.h.b16 %v3214
  %v3287 = vunpack.c.l.b16 %v3215
  %v3288 = vunpack.c.h.b16 %v3215
  %v3289 = vunpack.c.l.b16 %v3216
  %v3290 = vunpack.c.h.b16 %v3216
  %v3291 = vunpack.c.l.b16 %v3217
  %v3292 = vunpack.c.h.b16 %v3217
  %v3293 = vunpack.c.l.b16 %v3218
  %v3294 = vunpack.c.h.b16 %v3218
  %v3295 = vunpack.c.l.b16 %v3219
  %v3296 = vunpack.c.h.b16 %v3219
  %v3297 = vunpack.c.l.b16 %v3220
  %v3298 = vunpack.c.h.b16 %v3220
  %v3299 = vunpack.c.l.b16 %v3221
  %v3300 = vunpack.c.h.b16 %v3221
  %v3301 = vunpack.c.l.b16 %v3222
  %v3302 = vunpack.c.h.b16 %v3222
  %v3303 = vunpack.c.l.b16 %v3223
  %v3304 = vunpack.c.h.b16 %v3223
  %v3305 = vunpack.c.l.b16 %v3224
  %v3306 = vunpack.c.h.b16 %v3224
  %v3307 = vunpack.c.l.b16 %v3225
  %v3308 = vunpack.c.h.b16 %v3225
  %v3309 = vunpack.c.l.b16 %v3226
  %v3310 = vunpack.c.h.b16 %v3226
  %v3311 = vunpack.c.l.b16 %v3227
  %v3312 = vunpack.c.h.b16 %v3227
  %v3313 = vunpack.c.l.b16 %v3228
  %v3314 = vunpack.c.h.b16 %v3228
  %v3315 = vunpack.c.l.b16 %v3229
  %v3316 = vunpack.c.h.b16 %v3229
  %v3317 = vunpack.c.l.b16 %v3230
  %v3318 = vunpack.c.h.b16 %v3230
  %v3319 = vunpack.c.l.b16 %v3231
  %v3320 = vunpack.c.h.b16 %v3231
  %v3321 = vunpack.c.l.b16 %v3232
  %v3322 = vunpack.c.h.b16 %v3232
  %v3323 = vunpack.c.l.b16 %v3233
  %v3324 = vunpack.c.h.b16 %v3233
  %v3325 = vunpack.c.l.b16 %v3234
  %v3326 = vunpack.c.h.b16 %v3234
  %v3327 = vunpack.c.l.b16 %v3235
  %v3328 = vunpack.c.h.b16 %v3235
  %v3329 = vunpack.c.l.b16 %v3236
  %v3330 = vunpack.c.h.b16 %v3236
  %v3331 = vunpack.c.l.b16 %v3237
  %v3332 = vunpack.c.h.b16 %v3237
  %v3333 = vunpack.c.l.b16 %v3238
  %v3334 = vunpack.c.h.b16 %v3238
  %v3335 = vpack.c.b16 %v3275, %v3271
  %v3336 = vpack.c.b16 %v3276, %v3272
  %v3337 = vpack.c.b16 %v3277, %v3273
  %v3338 = vpack.c.b16 %v3278, %v3274
  %v3339 = vpack.c.b16 %v3283, %v3279
  %v3340 = vpack.c.b16 %v3284, %v3280
  %v3341 = vpack.c.b16 %v3285, %v3281
  %v3342 = vpack.c.b16 %v3286, %v3282
  %v3343 = vpack.c.b16 %v3291, %v3287
  %v3344 = vpack.c.b16 %v3292, %v3288
  %v3345 = vpack.c.b16 %v3293, %v3289
  %v3346 = vpack.c.b16 %v3294, %v3290
  %v3347 = vpack.c.b16 %v3299, %v3295
  %v3348 = vpack.c.b16 %v3300, %v3296
  %v3349 = vpack.c.b16 %v3301, %v3297
  %v3350 = vpack.c.b16 %v3302, %v3298
  %v3351 = vpack.c.b16 %v3307, %v3303
  %v3352 = vpack.c.b16 %v3308, %v3304
  %v3353 = vpack.c.b16 %v3309, %v3305
  %v3354 = vpack.c.b16 %v3310, %v3306
  %v3355 = vpack.c.b16 %v3315, %v3311
  %v3356 = vpack.c.b16 %v3316, %v3312
  %v3357 = vpack.c.b16 %v3317, %v3313
  %v3358 = vpack.c.b16 %v3318, %v3314
  %v3359 = vpack.c.b16 %v3323, %v3319
  %v3360 = vpack.c.b16 %v3324, %v3320
  %v3361 = vpack.c.b16 %v3325, %v3321
  %v3362 = vpack.c.b16 %v3326, %v3322
  %v3363 = vpack.c.b16 %v3331, %v3327
  %v3364 = vpack.c.b16 %v3332, %v3328
  %v3365 = vpack.c.b16 %v3333, %v3329
  %v3366 = vpack.c.b16 %v3334, %v3330
  %3399 = vmatprep.subr.bf16.mxu0 %v3364
  %3400 = vmatpush1.bf16.msra.mxu0 %v3363
  %3401 = vmatprep.subr.bf16.mxu0 %v3360
  %3402 = vmatpush1.bf16.msra.mxu0 %v3359
  %3403 = vmatprep.subr.bf16.mxu0 %v3356
  %3404 = vmatpush1.bf16.msra.mxu0 %v3355
  %3405 = vmatprep.subr.bf16.mxu0 %v3352
  %3406 = vmatpush1.bf16.msra.mxu0 %v3351
  %3407 = vmatprep.subr.bf16.mxu0 %v3348
  %3408 = vmatpush1.bf16.msra.mxu0 %v3347
  %3409 = vmatprep.subr.bf16.mxu0 %v3344
  %3410 = vmatpush1.bf16.msra.mxu0 %v3343
  %3411 = vmatprep.subr.bf16.mxu0 %v3340
  %3412 = vmatpush1.bf16.msra.mxu0 %v3339
  %3413 = vmatprep.subr.bf16.mxu0 %v3336
  %3414 = vmatpush1.bf16.msra.mxu0 %v3335
  %3415 = vmatprep.subr.bf16.mxu0 0
  %3416 = vmatpush2.bf16.msra.mxu0 0
  %3417 = vmatprep.subr.bf16.mxu0 0
  %3418 = vmatpush2.bf16.msra.mxu0 0
  %3419 = vmatprep.subr.bf16.mxu0 0
  %3420 = vmatpush2.bf16.msra.mxu0 0
  %3421 = vmatprep.subr.bf16.mxu0 0
  %3422 = vmatpush2.bf16.msra.mxu0 0
  %3423 = vmatprep.subr.bf16.mxu0 0
  %3424 = vmatpush2.bf16.msra.mxu0 0
  %3425 = vmatprep.subr.bf16.mxu0 0
  %3426 = vmatpush2.bf16.msra.mxu0 0
  %3427 = vmatprep.subr.bf16.mxu0 0
  %3428 = vmatpush2.bf16.msra.mxu0 0
  %3429 = vmatprep.subr.bf16.mxu0 0
  %3430 = vmatpush2.bf16.msra.mxu0 0
  %3431 = vmatprep.mubr.bf16.mxu0 0
  %3432 = vmatmul.mubr.bf16.gmra.mxu0 %v3206
  %v3433 = vpop.f32.mrf.mxu0
  %v3434 = vadd.f32 0.0, %v3433
  %v3435 = vpop.f32.mrf.mxu0
  %v3436 = vadd.f32 0.0, %v3435
  %v3437 = vpop.f32.mrf.mxu0
  %v3438 = vpop.f32.mrf.mxu0
  %3439 = vdwg.mxu0
  %3440 = vmatprep.subr.bf16.mxu0 %v3366
  %3441 = vmatpush1.bf16.msra.mxu0 %v3365
  %3442 = vmatprep.subr.bf16.mxu0 %v3362
  %3443 = vmatpush1.bf16.msra.mxu0 %v3361
  %3444 = vmatprep.subr.bf16.mxu0 %v3358
  %3445 = vmatpush1.bf16.msra.mxu0 %v3357
  %3446 = vmatprep.subr.bf16.mxu0 %v3354
  %3447 = vmatpush1.bf16.msra.mxu0 %v3353
  %3448 = vmatprep.subr.bf16.mxu0 %v3350
  %3449 = vmatpush1.bf16.msra.mxu0 %v3349
  %3450 = vmatprep.subr.bf16.mxu0 %v3346
  %3451 = vmatpush1.bf16.msra.mxu0 %v3345
  %3452 = vmatprep.subr.bf16.mxu0 %v3342
  %3453 = vmatpush1.bf16.msra.mxu0 %v3341
  %3454 = vmatprep.subr.bf16.mxu0 %v3338
  %3455 = vmatpush1.bf16.msra.mxu0 %v3337
  %3456 = vmatprep.subr.bf16.mxu0 0
  %3457 = vmatpush2.bf16.msra.mxu0 0
  %3458 = vmatprep.subr.bf16.mxu0 0
  %3459 = vmatpush2.bf16.msra.mxu0 0
  %3460 = vmatprep.subr.bf16.mxu0 0
  %3461 = vmatpush2.bf16.msra.mxu0 0
  %3462 = vmatprep.subr.bf16.mxu0 0
  %3463 = vmatpush2.bf16.msra.mxu0 0
  %3464 = vmatprep.subr.bf16.mxu0 0
  %3465 = vmatpush2.bf16.msra.mxu0 0
  %3466 = vmatprep.subr.bf16.mxu0 0
  %3467 = vmatpush2.bf16.msra.mxu0 0
  %3468 = vmatprep.subr.bf16.mxu0 0
  %3469 = vmatpush2.bf16.msra.mxu0 0
  %3470 = vmatprep.subr.bf16.mxu0 0
  %3471 = vmatpush2.bf16.msra.mxu0 0
  %3472 = vmatprep.mubr.bf16.mxu0 0
  %3473 = vmatmul.mubr.bf16.gmra.mxu0 %v3206
  %v3474 = vpop.f32.mrf.mxu0
  %v3475 = vadd.f32 0.0, %v3474
  %v3476 = vpop.f32.mrf.mxu0
  %v3477 = vadd.f32 0.0, %v3476
  %v3478 = vpop.f32.mrf.mxu0
  %v3479 = vpop.f32.mrf.mxu0
  %3480 = vdwg.mxu0
  %v3481 = vadd.f32 %v3202, %v3434
  %v3482 = vadd.f32 %v3203, %v3436
  %v3483 = vadd.f32 %v3204, %v3475
  %v3484 = vadd.f32 %v3205, %v3477
  %v3485 = vxor.u32 %v3481, 2147483648
  %v3486 = vmul.f32 %v3485, 1.442695
  %v3487 = vpow.pop %v3486
  %v3488 = vadd.f32 %v3487, 1.0
  %v3489 = vrcp.pop %v3488
  %v3490 = vmul.f32 1.0, %v3489
  %v3491 = vxor.u32 %v3482, 2147483648
  %v3492 = vmul.f32 %v3491, 1.442695
  %v3493 = vpow.pop %v3492
  %v3494 = vadd.f32 %v3493, 1.0
  %v3495 = vrcp.pop %v3494
  %v3496 = vmul.f32 1.0, %v3495
  %v3497 = vtanh.pop %v3483
  %v3498 = vxor.u32 %v3484, 2147483648
  %v3499 = vmul.f32 %v3498, 1.442695
  %v3500 = vpow.pop %v3499
  %v3501 = vadd.f32 %v3500, 1.0
  %v3502 = vrcp.pop %v3501
  %v3503 = vmul.f32 1.0, %v3502
  %v3504 = vmul.f32 %v3496, %v3198
  %v3505 = vmul.f32 %v3490, %v3497
  %v3506 = vadd.f32 %v3504, %v3505
  %v3507 = vtanh.pop %v3506
  %v3508 = vmul.f32 %v3503, %v3507
  %3509 = vst [vmem:[#allocation3] sm:$0xff] %v3506
  %3510 = vst [vmem:[#allocation2] sm:$0xff] %v3508
  %v3511 = vpack.c.bf16 %v3508, %v3508
  %s3512 = scalar_lea.vmem %s4, 40
  %3513 = vst [vmem:[%s3512] sm:$0xf] %v3511
  %v3514 = vld [vmem:[#allocation2] sm:$0xff]
  %v3515 = vld [vmem:[#allocation3] sm:$0xff]
  %s3516 = scalar_lea.vmem %s0, 176
  %v3517 = vld [vmem:[%s3516] sm:$0xff]
  %v3518 = vld [vmem:[%s3516 + $0x8] sm:$0xff]
  %v3519 = vunpack.c.l.bf16 %v3517
  %v3520 = vunpack.c.h.bf16 %v3517
  %v3521 = vunpack.c.l.bf16 %v3518
  %v3522 = vunpack.c.h.bf16 %v3518
  %v3523 = vpack.c.bf16 %v3514, %v3514
  %v3524 = vld [vmem:[%s1] sm:$0xff]
  %v3525 = vld [vmem:[%s1 + $0x8] sm:$0xff]
  %v3526 = vld [vmem:[%s1 + $0x10] sm:$0xff]
  %v3527 = vld [vmem:[%s1 + $0x18] sm:$0xff]
  %v3528 = vld [vmem:[%s1 + $0x20] sm:$0xff]
  %v3529 = vld [vmem:[%s1 + $0x28] sm:$0xff]
  %v3530 = vld [vmem:[%s1 + $0x30] sm:$0xff]
  %v3531 = vld [vmem:[%s1 + $0x38] sm:$0xff]
  %v3532 = vld [vmem:[%s1 + $0x40] sm:$0xff]
  %v3533 = vld [vmem:[%s1 + $0x48] sm:$0xff]
  %v3534 = vld [vmem:[%s1 + $0x50] sm:$0xff]
  %v3535 = vld [vmem:[%s1 + $0x58] sm:$0xff]
  %v3536 = vld [vmem:[%s1 + $0x60] sm:$0xff]
  %v3537 = vld [vmem:[%s1 + $0x68] sm:$0xff]
  %v3538 = vld [vmem:[%s1 + $0x70] sm:$0xff]
  %v3539 = vld [vmem:[%s1 + $0x78] sm:$0xff]
  %v3540 = vld [vmem:[%s1 + $0x80] sm:$0xff]
  %v3541 = vld [vmem:[%s1 + $0x88] sm:$0xff]
  %v3542 = vld [vmem:[%s1 + $0x90] sm:$0xff]
  %v3543 = vld [vmem:[%s1 + $0x98] sm:$0xff]
  %v3544 = vld [vmem:[%s1 + $0xa0] sm:$0xff]
  %v3545 = vld [vmem:[%s1 + $0xa8] sm:$0xff]
  %v3546 = vld [vmem:[%s1 + $0xb0] sm:$0xff]
  %v3547 = vld [vmem:[%s1 + $0xb8] sm:$0xff]
  %v3548 = vld [vmem:[%s1 + $0xc0] sm:$0xff]
  %v3549 = vld [vmem:[%s1 + $0xc8] sm:$0xff]
  %v3550 = vld [vmem:[%s1 + $0xd0] sm:$0xff]
  %v3551 = vld [vmem:[%s1 + $0xd8] sm:$0xff]
  %v3552 = vld [vmem:[%s1 + $0xe0] sm:$0xff]
  %v3553 = vld [vmem:[%s1 + $0xe8] sm:$0xff]
  %v3554 = vld [vmem:[%s1 + $0xf0] sm:$0xff]
  %v3555 = vld [vmem:[%s1 + $0xf8] sm:$0xff]
  %v3588 = vunpack.c.l.b16 %v3524
  %v3589 = vunpack.c.h.b16 %v3524
  %v3590 = vunpack.c.l.b16 %v3525
  %v3591 = vunpack.c.h.b16 %v3525
  %v3592 = vunpack.c.l.b16 %v3526
  %v3593 = vunpack.c.h.b16 %v3526
  %v3594 = vunpack.c.l.b16 %v3527
  %v3595 = vunpack.c.h.b16 %v3527
  %v3596 = vunpack.c.l.b16 %v3528
  %v3597 = vunpack.c.h.b16 %v3528
  %v3598 = vunpack.c.l.b16 %v3529
  %v3599 = vunpack.c.h.b16 %v3529
  %v3600 = vunpack.c.l.b16 %v3530
  %v3601 = vunpack.c.h.b16 %v3530
  %v3602 = vunpack.c.l.b16 %v3531
  %v3603 = vunpack.c.h.b16 %v3531
  %v3604 = vunpack.c.l.b16 %v3532
  %v3605 = vunpack.c.h.b16 %v3532
  %v3606 = vunpack.c.l.b16 %v3533
  %v3607 = vunpack.c.h.b16 %v3533
  %v3608 = vunpack.c.l.b16 %v3534
  %v3609 = vunpack.c.h.b16 %v3534
  %v3610 = vunpack.c.l.b16 %v3535
  %v3611 = vunpack.c.h.b16 %v3535
  %v3612 = vunpack.c.l.b16 %v3536
  %v3613 = vunpack.c.h.b16 %v3536
  %v3614 = vunpack.c.l.b16 %v3537
  %v3615 = vunpack.c.h.b16 %v3537
  %v3616 = vunpack.c.l.b16 %v3538
  %v3617 = vunpack.c.h.b16 %v3538
  %v3618 = vunpack.c.l.b16 %v3539
  %v3619 = vunpack.c.h.b16 %v3539
  %v3620 = vunpack.c.l.b16 %v3540
  %v3621 = vunpack.c.h.b16 %v3540
  %v3622 = vunpack.c.l.b16 %v3541
  %v3623 = vunpack.c.h.b16 %v3541
  %v3624 = vunpack.c.l.b16 %v3542
  %v3625 = vunpack.c.h.b16 %v3542
  %v3626 = vunpack.c.l.b16 %v3543
  %v3627 = vunpack.c.h.b16 %v3543
  %v3628 = vunpack.c.l.b16 %v3544
  %v3629 = vunpack.c.h.b16 %v3544
  %v3630 = vunpack.c.l.b16 %v3545
  %v3631 = vunpack.c.h.b16 %v3545
  %v3632 = vunpack.c.l.b16 %v3546
  %v3633 = vunpack.c.h.b16 %v3546
  %v3634 = vunpack.c.l.b16 %v3547
  %v3635 = vunpack.c.h.b16 %v3547
  %v3636 = vunpack.c.l.b16 %v3548
  %v3637 = vunpack.c.h.b16 %v3548
  %v3638 = vunpack.c.l.b16 %v3549
  %v3639 = vunpack.c.h.b16 %v3549
  %v3640 = vunpack.c.l.b16 %v3550
  %v3641 = vunpack.c.h.b16 %v3550
  %v3642 = vunpack.c.l.b16 %v3551
  %v3643 = vunpack.c.h.b16 %v3551
  %v3644 = vunpack.c.l.b16 %v3552
  %v3645 = vunpack.c.h.b16 %v3552
  %v3646 = vunpack.c.l.b16 %v3553
  %v3647 = vunpack.c.h.b16 %v3553
  %v3648 = vunpack.c.l.b16 %v3554
  %v3649 = vunpack.c.h.b16 %v3554
  %v3650 = vunpack.c.l.b16 %v3555
  %v3651 = vunpack.c.h.b16 %v3555
  %v3652 = vpack.c.b16 %v3592, %v3588
  %v3653 = vpack.c.b16 %v3593, %v3589
  %v3654 = vpack.c.b16 %v3594, %v3590
  %v3655 = vpack.c.b16 %v3595, %v3591
  %v3656 = vpack.c.b16 %v3600, %v3596
  %v3657 = vpack.c.b16 %v3601, %v3597
  %v3658 = vpack.c.b16 %v3602, %v3598
  %v3659 = vpack.c.b16 %v3603, %v3599
  %v3660 = vpack.c.b16 %v3608, %v3604
  %v3661 = vpack.c.b16 %v3609, %v3605
  %v3662 = vpack.c.b16 %v3610, %v3606
  %v3663 = vpack.c.b16 %v3611, %v3607
  %v3664 = vpack.c.b16 %v3616, %v3612
  %v3665 = vpack.c.b16 %v3617, %v3613
  %v3666 = vpack.c.b16 %v3618, %v3614
  %v3667 = vpack.c.b16 %v3619, %v3615
  %v3668 = vpack.c.b16 %v3624, %v3620
  %v3669 = vpack.c.b16 %v3625, %v3621
  %v3670 = vpack.c.b16 %v3626, %v3622
  %v3671 = vpack.c.b16 %v3627, %v3623
  %v3672 = vpack.c.b16 %v3632, %v3628
  %v3673 = vpack.c.b16 %v3633, %v3629
  %v3674 = vpack.c.b16 %v3634, %v3630
  %v3675 = vpack.c.b16 %v3635, %v3631
  %v3676 = vpack.c.b16 %v3640, %v3636
  %v3677 = vpack.c.b16 %v3641, %v3637
  %v3678 = vpack.c.b16 %v3642, %v3638
  %v3679 = vpack.c.b16 %v3643, %v3639
  %v3680 = vpack.c.b16 %v3648, %v3644
  %v3681 = vpack.c.b16 %v3649, %v3645
  %v3682 = vpack.c.b16 %v3650, %v3646
  %v3683 = vpack.c.b16 %v3651, %v3647
  %3716 = vmatprep.subr.bf16.mxu0 %v3681
  %3717 = vmatpush1.bf16.msra.mxu0 %v3680
  %3718 = vmatprep.subr.bf16.mxu0 %v3677
  %3719 = vmatpush1.bf16.msra.mxu0 %v3676
  %3720 = vmatprep.subr.bf16.mxu0 %v3673
  %3721 = vmatpush1.bf16.msra.mxu0 %v3672
  %3722 = vmatprep.subr.bf16.mxu0 %v3669
  %3723 = vmatpush1.bf16.msra.mxu0 %v3668
  %3724 = vmatprep.subr.bf16.mxu0 %v3665
  %3725 = vmatpush1.bf16.msra.mxu0 %v3664
  %3726 = vmatprep.subr.bf16.mxu0 %v3661
  %3727 = vmatpush1.bf16.msra.mxu0 %v3660
  %3728 = vmatprep.subr.bf16.mxu0 %v3657
  %3729 = vmatpush1.bf16.msra.mxu0 %v3656
  %3730 = vmatprep.subr.bf16.mxu0 %v3653
  %3731 = vmatpush1.bf16.msra.mxu0 %v3652
  %3732 = vmatprep.subr.bf16.mxu0 0
  %3733 = vmatpush2.bf16.msra.mxu0 0
  %3734 = vmatprep.subr.bf16.mxu0 0
  %3735 = vmatpush2.bf16.msra.mxu0 0
  %3736 = vmatprep.subr.bf16.mxu0 0
  %3737 = vmatpush2.bf16.msra.mxu0 0
  %3738 = vmatprep.subr.bf16.mxu0 0
  %3739 = vmatpush2.bf16.msra.mxu0 0
  %3740 = vmatprep.subr.bf16.mxu0 0
  %3741 = vmatpush2.bf16.msra.mxu0 0
  %3742 = vmatprep.subr.bf16.mxu0 0
  %3743 = vmatpush2.bf16.msra.mxu0 0
  %3744 = vmatprep.subr.bf16.mxu0 0
  %3745 = vmatpush2.bf16.msra.mxu0 0
  %3746 = vmatprep.subr.bf16.mxu0 0
  %3747 = vmatpush2.bf16.msra.mxu0 0
  %3748 = vmatprep.mubr.bf16.mxu0 0
  %3749 = vmatmul.mubr.bf16.gmra.mxu0 %v3523
  %v3750 = vpop.f32.mrf.mxu0
  %v3751 = vadd.f32 0.0, %v3750
  %v3752 = vpop.f32.mrf.mxu0
  %v3753 = vadd.f32 0.0, %v3752
  %v3754 = vpop.f32.mrf.mxu0
  %v3755 = vpop.f32.mrf.mxu0
  %3756 = vdwg.mxu0
  %3757 = vmatprep.subr.bf16.mxu0 %v3683
  %3758 = vmatpush1.bf16.msra.mxu0 %v3682
  %3759 = vmatprep.subr.bf16.mxu0 %v3679
  %3760 = vmatpush1.bf16.msra.mxu0 %v3678
  %3761 = vmatprep.subr.bf16.mxu0 %v3675
  %3762 = vmatpush1.bf16.msra.mxu0 %v3674
  %3763 = vmatprep.subr.bf16.mxu0 %v3671
  %3764 = vmatpush1.bf16.msra.mxu0 %v3670
  %3765 = vmatprep.subr.bf16.mxu0 %v3667
  %3766 = vmatpush1.bf16.msra.mxu0 %v3666
  %3767 = vmatprep.subr.bf16.mxu0 %v3663
  %3768 = vmatpush1.bf16.msra.mxu0 %v3662
  %3769 = vmatprep.subr.bf16.mxu0 %v3659
  %3770 = vmatpush1.bf16.msra.mxu0 %v3658
  %3771 = vmatprep.subr.bf16.mxu0 %v3655
  %3772 = vmatpush1.bf16.msra.mxu0 %v3654
  %3773 = vmatprep.subr.bf16.mxu0 0
  %3774 = vmatpush2.bf16.msra.mxu0 0
  %3775 = vmatprep.subr.bf16.mxu0 0
  %3776 = vmatpush2.bf16.msra.mxu0 0
  %3777 = vmatprep.subr.bf16.mxu0 0
  %3778 = vmatpush2.bf16.msra.mxu0 0
  %3779 = vmatprep.subr.bf16.mxu0 0
  %3780 = vmatpush2.bf16.msra.mxu0 0
  %3781 = vmatprep.subr.bf16.mxu0 0
  %3782 = vmatpush2.bf16.msra.mxu0 0
  %3783 = vmatprep.subr.bf16.mxu0 0
  %3784 = vmatpush2.bf16.msra.mxu0 0
  %3785 = vmatprep.subr.bf16.mxu0 0
  %3786 = vmatpush2.bf16.msra.mxu0 0
  %3787 = vmatprep.subr.bf16.mxu0 0
  %3788 = vmatpush2.bf16.msra.mxu0 0
  %3789 = vmatprep.mubr.bf16.mxu0 0
  %3790 = vmatmul.mubr.bf16.gmra.mxu0 %v3523
  %v3791 = vpop.f32.mrf.mxu0
  %v3792 = vadd.f32 0.0, %v3791
  %v3793 = vpop.f32.mrf.mxu0
  %v3794 = vadd.f32 0.0, %v3793
  %v3795 = vpop.f32.mrf.mxu0
  %v3796 = vpop.f32.mrf.mxu0
  %3797 = vdwg.mxu0
  %v3798 = vadd.f32 %v3519, %v3751
  %v3799 = vadd.f32 %v3520, %v3753
  %v3800 = vadd.f32 %v3521, %v3792
  %v3801 = vadd.f32 %v3522, %v3794
  %v3802 = vxor.u32 %v3798, 2147483648
  %v3803 = vmul.f32 %v3802, 1.442695
  %v3804 = vpow.pop %v3803
  %v3805 = vadd.f32 %v3804, 1.0
  %v3806 = vrcp.pop %v3805
  %v3807 = vmul.f32 1.0, %v3806
  %v3808 = vxor.u32 %v3799, 2147483648
  %v3809 = vmul.f32 %v3808, 1.442695
  %v3810 = vpow.pop %v3809
  %v3811 = vadd.f32 %v3810, 1.0
  %v3812 = vrcp.pop %v3811
  %v3813 = vmul.f32 1.0, %v3812
  %v3814 = vtanh.pop %v3800
  %v3815 = vxor.u32 %v3801, 2147483648
  %v3816 = vmul.f32 %v3815, 1.442695
  %v3817 = vpow.pop %v3816
  %v3818 = vadd.f32 %v3817, 1.0
  %v3819 = vrcp.pop %v3818
  %v3820 = vmul.f32 1.0, %v3819
  %v3821 = vmul.f32 %v3813, %v3515
  %v3822 = vmul.f32 %v3807, %v3814
  %v3823 = vadd.f32 %v3821, %v3822
  %v3824 = vtanh.pop %v3823
  %v3825 = vmul.f32 %v3820, %v3824
  %3826 = vst [vmem:[#allocation3] sm:$0xff] %v3823
  %3827 = vst [vmem:[#allocation2] sm:$0xff] %v3825
  %v3828 = vpack.c.bf16 %v3825, %v3825
  %s3829 = scalar_lea.vmem %s4, 44
  %3830 = vst [vmem:[%s3829] sm:$0xf] %v3828
  %v3831 = vld [vmem:[#allocation2] sm:$0xff]
  %v3832 = vld [vmem:[#allocation3] sm:$0xff]
  %s3833 = scalar_lea.vmem %s0, 192
  %v3834 = vld [vmem:[%s3833] sm:$0xff]
  %v3835 = vld [vmem:[%s3833 + $0x8] sm:$0xff]
  %v3836 = vunpack.c.l.bf16 %v3834
  %v3837 = vunpack.c.h.bf16 %v3834
  %v3838 = vunpack.c.l.bf16 %v3835
  %v3839 = vunpack.c.h.bf16 %v3835
  %v3840 = vpack.c.bf16 %v3831, %v3831
  %v3841 = vld [vmem:[%s1] sm:$0xff]
  %v3842 = vld [vmem:[%s1 + $0x8] sm:$0xff]
  %v3843 = vld [vmem:[%s1 + $0x10] sm:$0xff]
  %v3844 = vld [vmem:[%s1 + $0x18] sm:$0xff]
  %v3845 = vld [vmem:[%s1 + $0x20] sm:$0xff]
  %v3846 = vld [vmem:[%s1 + $0x28] sm:$0xff]
  %v3847 = vld [vmem:[%s1 + $0x30] sm:$0xff]
  %v3848 = vld [vmem:[%s1 + $0x38] sm:$0xff]
  %v3849 = vld [vmem:[%s1 + $0x40] sm:$0xff]
  %v3850 = vld [vmem:[%s1 + $0x48] sm:$0xff]
  %v3851 = vld [vmem:[%s1 + $0x50] sm:$0xff]
  %v3852 = vld [vmem:[%s1 + $0x58] sm:$0xff]
  %v3853 = vld [vmem:[%s1 + $0x60] sm:$0xff]
  %v3854 = vld [vmem:[%s1 + $0x68] sm:$0xff]
  %v3855 = vld [vmem:[%s1 + $0x70] sm:$0xff]
  %v3856 = vld [vmem:[%s1 + $0x78] sm:$0xff]
  %v3857 = vld [vmem:[%s1 + $0x80] sm:$0xff]
  %v3858 = vld [vmem:[%s1 + $0x88] sm:$0xff]
  %v3859 = vld [vmem:[%s1 + $0x90] sm:$0xff]
  %v3860 = vld [vmem:[%s1 + $0x98] sm:$0xff]
  %v3861 = vld [vmem:[%s1 + $0xa0] sm:$0xff]
  %v3862 = vld [vmem:[%s1 + $0xa8] sm:$0xff]
  %v3863 = vld [vmem:[%s1 + $0xb0] sm:$0xff]
  %v3864 = vld [vmem:[%s1 + $0xb8] sm:$0xff]
  %v3865 = vld [vmem:[%s1 + $0xc0] sm:$0xff]
  %v3866 = vld [vmem:[%s1 + $0xc8] sm:$0xff]
  %v3867 = vld [vmem:[%s1 + $0xd0] sm:$0xff]
  %v3868 = vld [vmem:[%s1 + $0xd8] sm:$0xff]
  %v3869 = vld [vmem:[%s1 + $0xe0] sm:$0xff]
  %v3870 = vld [vmem:[%s1 + $0xe8] sm:$0xff]
  %v3871 = vld [vmem:[%s1 + $0xf0] sm:$0xff]
  %v3872 = vld [vmem:[%s1 + $0xf8] sm:$0xff]
  %v3905 = vunpack.c.l.b16 %v3841
  %v3906 = vunpack.c.h.b16 %v3841
  %v3907 = vunpack.c.l.b16 %v3842
  %v3908 = vunpack.c.h.b16 %v3842
  %v3909 = vunpack.c.l.b16 %v3843
  %v3910 = vunpack.c.h.b16 %v3843
  %v3911 = vunpack.c.l.b16 %v3844
  %v3912 = vunpack.c.h.b16 %v3844
  %v3913 = vunpack.c.l.b16 %v3845
  %v3914 = vunpack.c.h.b16 %v3845
  %v3915 = vunpack.c.l.b16 %v3846
  %v3916 = vunpack.c.h.b16 %v3846
  %v3917 = vunpack.c.l.b16 %v3847
  %v3918 = vunpack.c.h.b16 %v3847
  %v3919 = vunpack.c.l.b16 %v3848
  %v3920 = vunpack.c.h.b16 %v3848
  %v3921 = vunpack.c.l.b16 %v3849
  %v3922 = vunpack.c.h.b16 %v3849
  %v3923 = vunpack.c.l.b16 %v3850
  %v3924 = vunpack.c.h.b16 %v3850
  %v3925 = vunpack.c.l.b16 %v3851
  %v3926 = vunpack.c.h.b16 %v3851
  %v3927 = vunpack.c.l.b16 %v3852
  %v3928 = vunpack.c.h.b16 %v3852
  %v3929 = vunpack.c.l.b16 %v3853
  %v3930 = vunpack.c.h.b16 %v3853
  %v3931 = vunpack.c.l.b16 %v3854
  %v3932 = vunpack.c.h.b16 %v3854
  %v3933 = vunpack.c.l.b16 %v3855
  %v3934 = vunpack.c.h.b16 %v3855
  %v3935 = vunpack.c.l.b16 %v3856
  %v3936 = vunpack.c.h.b16 %v3856
  %v3937 = vunpack.c.l.b16 %v3857
  %v3938 = vunpack.c.h.b16 %v3857
  %v3939 = vunpack.c.l.b16 %v3858
  %v3940 = vunpack.c.h.b16 %v3858
  %v3941 = vunpack.c.l.b16 %v3859
  %v3942 = vunpack.c.h.b16 %v3859
  %v3943 = vunpack.c.l.b16 %v3860
  %v3944 = vunpack.c.h.b16 %v3860
  %v3945 = vunpack.c.l.b16 %v3861
  %v3946 = vunpack.c.h.b16 %v3861
  %v3947 = vunpack.c.l.b16 %v3862
  %v3948 = vunpack.c.h.b16 %v3862
  %v3949 = vunpack.c.l.b16 %v3863
  %v3950 = vunpack.c.h.b16 %v3863
  %v3951 = vunpack.c.l.b16 %v3864
  %v3952 = vunpack.c.h.b16 %v3864
  %v3953 = vunpack.c.l.b16 %v3865
  %v3954 = vunpack.c.h.b16 %v3865
  %v3955 = vunpack.c.l.b16 %v3866
  %v3956 = vunpack.c.h.b16 %v3866
  %v3957 = vunpack.c.l.b16 %v3867
  %v3958 = vunpack.c.h.b16 %v3867
  %v3959 = vunpack.c.l.b16 %v3868
  %v3960 = vunpack.c.h.b16 %v3868
  %v3961 = vunpack.c.l.b16 %v3869
  %v3962 = vunpack.c.h.b16 %v3869
  %v3963 = vunpack.c.l.b16 %v3870
  %v3964 = vunpack.c.h.b16 %v3870
  %v3965 = vunpack.c.l.b16 %v3871
  %v3966 = vunpack.c.h.b16 %v3871
  %v3967 = vunpack.c.l.b16 %v3872
  %v3968 = vunpack.c.h.b16 %v3872
  %v3969 = vpack.c.b16 %v3909, %v3905
  %v3970 = vpack.c.b16 %v3910, %v3906
  %v3971 = vpack.c.b16 %v3911, %v3907
  %v3972 = vpack.c.b16 %v3912, %v3908
  %v3973 = vpack.c.b16 %v3917, %v3913
  %v3974 = vpack.c.b16 %v3918, %v3914
  %v3975 = vpack.c.b16 %v3919, %v3915
  %v3976 = vpack.c.b16 %v3920, %v3916
  %v3977 = vpack.c.b16 %v3925, %v3921
  %v3978 = vpack.c.b16 %v3926, %v3922
  %v3979 = vpack.c.b16 %v3927, %v3923
  %v3980 = vpack.c.b16 %v3928, %v3924
  %v3981 = vpack.c.b16 %v3933, %v3929
  %v3982 = vpack.c.b16 %v3934, %v3930
  %v3983 = vpack.c.b16 %v3935, %v3931
  %v3984 = vpack.c.b16 %v3936, %v3932
  %v3985 = vpack.c.b16 %v3941, %v3937
  %v3986 = vpack.c.b16 %v3942, %v3938
  %v3987 = vpack.c.b16 %v3943, %v3939
  %v3988 = vpack.c.b16 %v3944, %v3940
  %v3989 = vpack.c.b16 %v3949, %v3945
  %v3990 = vpack.c.b16 %v3950, %v3946
  %v3991 = vpack.c.b16 %v3951, %v3947
  %v3992 = vpack.c.b16 %v3952, %v3948
  %v3993 = vpack.c.b16 %v3957, %v3953
  %v3994 = vpack.c.b16 %v3958, %v3954
  %v3995 = vpack.c.b16 %v3959, %v3955
  %v3996 = vpack.c.b16 %v3960, %v3956
  %v3997 = vpack.c.b16 %v3965, %v3961
  %v3998 = vpack.c.b16 %v3966, %v3962
  %v3999 = vpack.c.b16 %v3967, %v3963
  %v4000 = vpack.c.b16 %v3968, %v3964
  %4033 = vmatprep.subr.bf16.mxu0 %v3998
  %4034 = vmatpush1.bf16.msra.mxu0 %v3997
  %4035 = vmatprep.subr.bf16.mxu0 %v3994
  %4036 = vmatpush1.bf16.msra.mxu0 %v3993
  %4037 = vmatprep.subr.bf16.mxu0 %v3990
  %4038 = vmatpush1.bf16.msra.mxu0 %v3989
  %4039 = vmatprep.subr.bf16.mxu0 %v3986
  %4040 = vmatpush1.bf16.msra.mxu0 %v3985
  %4041 = vmatprep.subr.bf16.mxu0 %v3982
  %4042 = vmatpush1.bf16.msra.mxu0 %v3981
  %4043 = vmatprep.subr.bf16.mxu0 %v3978
  %4044 = vmatpush1.bf16.msra.mxu0 %v3977
  %4045 = vmatprep.subr.bf16.mxu0 %v3974
  %4046 = vmatpush1.bf16.msra.mxu0 %v3973
  %4047 = vmatprep.subr.bf16.mxu0 %v3970
  %4048 = vmatpush1.bf16.msra.mxu0 %v3969
  %4049 = vmatprep.subr.bf16.mxu0 0
  %4050 = vmatpush2.bf16.msra.mxu0 0
  %4051 = vmatprep.subr.bf16.mxu0 0
  %4052 = vmatpush2.bf16.msra.mxu0 0
  %4053 = vmatprep.subr.bf16.mxu0 0
  %4054 = vmatpush2.bf16.msra.mxu0 0
  %4055 = vmatprep.subr.bf16.mxu0 0
  %4056 = vmatpush2.bf16.msra.mxu0 0
  %4057 = vmatprep.subr.bf16.mxu0 0
  %4058 = vmatpush2.bf16.msra.mxu0 0
  %4059 = vmatprep.subr.bf16.mxu0 0
  %4060 = vmatpush2.bf16.msra.mxu0 0
  %4061 = vmatprep.subr.bf16.mxu0 0
  %4062 = vmatpush2.bf16.msra.mxu0 0
  %4063 = vmatprep.subr.bf16.mxu0 0
  %4064 = vmatpush2.bf16.msra.mxu0 0
  %4065 = vmatprep.mubr.bf16.mxu0 0
  %4066 = vmatmul.mubr.bf16.gmra.mxu0 %v3840
  %v4067 = vpop.f32.mrf.mxu0
  %v4068 = vadd.f32 0.0, %v4067
  %v4069 = vpop.f32.mrf.mxu0
  %v4070 = vadd.f32 0.0, %v4069
  %v4071 = vpop.f32.mrf.mxu0
  %v4072 = vpop.f32.mrf.mxu0
  %4073 = vdwg.mxu0
  %4074 = vmatprep.subr.bf16.mxu0 %v4000
  %4075 = vmatpush1.bf16.msra.mxu0 %v3999
  %4076 = vmatprep.subr.bf16.mxu0 %v3996
  %4077 = vmatpush1.bf16.msra.mxu0 %v3995
  %4078 = vmatprep.subr.bf16.mxu0 %v3992
  %4079 = vmatpush1.bf16.msra.mxu0 %v3991
  %4080 = vmatprep.subr.bf16.mxu0 %v3988
  %4081 = vmatpush1.bf16.msra.mxu0 %v3987
  %4082 = vmatprep.subr.bf16.mxu0 %v3984
  %4083 = vmatpush1.bf16.msra.mxu0 %v3983
  %4084 = vmatprep.subr.bf16.mxu0 %v3980
  %4085 = vmatpush1.bf16.msra.mxu0 %v3979
  %4086 = vmatprep.subr.bf16.mxu0 %v3976
  %4087 = vmatpush1.bf16.msra.mxu0 %v3975
  %4088 = vmatprep.subr.bf16.mxu0 %v3972
  %4089 = vmatpush1.bf16.msra.mxu0 %v3971
  %4090 = vmatprep.subr.bf16.mxu0 0
  %4091 = vmatpush2.bf16.msra.mxu0 0
  %4092 = vmatprep.subr.bf16.mxu0 0
  %4093 = vmatpush2.bf16.msra.mxu0 0
  %4094 = vmatprep.subr.bf16.mxu0 0
  %4095 = vmatpush2.bf16.msra.mxu0 0
  %4096 = vmatprep.subr.bf16.mxu0 0
  %4097 = vmatpush2.bf16.msra.mxu0 0
  %4098 = vmatprep.subr.bf16.mxu0 0
  %4099 = vmatpush2.bf16.msra.mxu0 0
  %4100 = vmatprep.subr.bf16.mxu0 0
  %4101 = vmatpush2.bf16.msra.mxu0 0
  %4102 = vmatprep.subr.bf16.mxu0 0
  %4103 = vmatpush2.bf16.msra.mxu0 0
  %4104 = vmatprep.subr.bf16.mxu0 0
  %4105 = vmatpush2.bf16.msra.mxu0 0
  %4106 = vmatprep.mubr.bf16.mxu0 0
  %4107 = vmatmul.mubr.bf16.gmra.mxu0 %v3840
  %v4108 = vpop.f32.mrf.mxu0
  %v4109 = vadd.f32 0.0, %v4108
  %v4110 = vpop.f32.mrf.mxu0
  %v4111 = vadd.f32 0.0, %v4110
  %v4112 = vpop.f32.mrf.mxu0
  %v4113 = vpop.f32.mrf.mxu0
  %4114 = vdwg.mxu0
  %v4115 = vadd.f32 %v3836, %v4068
  %v4116 = vadd.f32 %v3837, %v4070
  %v4117 = vadd.f32 %v3838, %v4109
  %v4118 = vadd.f32 %v3839, %v4111
  %v4119 = vxor.u32 %v4115, 2147483648
  %v4120 = vmul.f32 %v4119, 1.442695
  %v4121 = vpow.pop %v4120
  %v4122 = vadd.f32 %v4121, 1.0
  %v4123 = vrcp.pop %v4122
  %v4124 = vmul.f32 1.0, %v4123
  %v4125 = vxor.u32 %v4116, 2147483648
  %v4126 = vmul.f32 %v4125, 1.442695
  %v4127 = vpow.pop %v4126
  %v4128 = vadd.f32 %v4127, 1.0
  %v4129 = vrcp.pop %v4128
  %v4130 = vmul.f32 1.0, %v4129
  %v4131 = vtanh.pop %v4117
  %v4132 = vxor.u32 %v4118, 2147483648
  %v4133 = vmul.f32 %v4132, 1.442695
  %v4134 = vpow.pop %v4133
  %v4135 = vadd.f32 %v4134, 1.0
  %v4136 = vrcp.pop %v4135
  %v4137 = vmul.f32 1.0, %v4136
  %v4138 = vmul.f32 %v4130, %v3832
  %v4139 = vmul.f32 %v4124, %v4131
  %v4140 = vadd.f32 %v4138, %v4139
  %v4141 = vtanh.pop %v4140
  %v4142 = vmul.f32 %v4137, %v4141
  %4143 = vst [vmem:[#allocation3] sm:$0xff] %v4140
  %4144 = vst [vmem:[#allocation2] sm:$0xff] %v4142
  %v4145 = vpack.c.bf16 %v4142, %v4142
  %s4146 = scalar_lea.vmem %s4, 48
  %4147 = vst [vmem:[%s4146] sm:$0xf] %v4145
  %v4148 = vld [vmem:[#allocation2] sm:$0xff]
  %v4149 = vld [vmem:[#allocation3] sm:$0xff]
  %s4150 = scalar_lea.vmem %s0, 208
  %v4151 = vld [vmem:[%s4150] sm:$0xff]
  %v4152 = vld [vmem:[%s4150 + $0x8] sm:$0xff]
  %v4153 = vunpack.c.l.bf16 %v4151
  %v4154 = vunpack.c.h.bf16 %v4151
  %v4155 = vunpack.c.l.bf16 %v4152
  %v4156 = vunpack.c.h.bf16 %v4152
  %v4157 = vpack.c.bf16 %v4148, %v4148
  %v4158 = vld [vmem:[%s1] sm:$0xff]
  %v4159 = vld [vmem:[%s1 + $0x8] sm:$0xff]
  %v4160 = vld [vmem:[%s1 + $0x10] sm:$0xff]
  %v4161 = vld [vmem:[%s1 + $0x18] sm:$0xff]
  %v4162 = vld [vmem:[%s1 + $0x20] sm:$0xff]
  %v4163 = vld [vmem:[%s1 + $0x28] sm:$0xff]
  %v4164 = vld [vmem:[%s1 + $0x30] sm:$0xff]
  %v4165 = vld [vmem:[%s1 + $0x38] sm:$0xff]
  %v4166 = vld [vmem:[%s1 + $0x40] sm:$0xff]
  %v4167 = vld [vmem:[%s1 + $0x48] sm:$0xff]
  %v4168 = vld [vmem:[%s1 + $0x50] sm:$0xff]
  %v4169 = vld [vmem:[%s1 + $0x58] sm:$0xff]
  %v4170 = vld [vmem:[%s1 + $0x60] sm:$0xff]
  %v4171 = vld [vmem:[%s1 + $0x68] sm:$0xff]
  %v4172 = vld [vmem:[%s1 + $0x70] sm:$0xff]
  %v4173 = vld [vmem:[%s1 + $0x78] sm:$0xff]
  %v4174 = vld [vmem:[%s1 + $0x80] sm:$0xff]
  %v4175 = vld [vmem:[%s1 + $0x88] sm:$0xff]
  %v4176 = vld [vmem:[%s1 + $0x90] sm:$0xff]
  %v4177 = vld [vmem:[%s1 + $0x98] sm:$0xff]
  %v4178 = vld [vmem:[%s1 + $0xa0] sm:$0xff]
  %v4179 = vld [vmem:[%s1 + $0xa8] sm:$0xff]
  %v4180 = vld [vmem:[%s1 + $0xb0] sm:$0xff]
  %v4181 = vld [vmem:[%s1 + $0xb8] sm:$0xff]
  %v4182 = vld [vmem:[%s1 + $0xc0] sm:$0xff]
  %v4183 = vld [vmem:[%s1 + $0xc8] sm:$0xff]
  %v4184 = vld [vmem:[%s1 + $0xd0] sm:$0xff]
  %v4185 = vld [vmem:[%s1 + $0xd8] sm:$0xff]
  %v4186 = vld [vmem:[%s1 + $0xe0] sm:$0xff]
  %v4187 = vld [vmem:[%s1 + $0xe8] sm:$0xff]
  %v4188 = vld [vmem:[%s1 + $0xf0] sm:$0xff]
  %v4189 = vld [vmem:[%s1 + $0xf8] sm:$0xff]
  %v4222 = vunpack.c.l.b16 %v4158
  %v4223 = vunpack.c.h.b16 %v4158
  %v4224 = vunpack.c.l.b16 %v4159
  %v4225 = vunpack.c.h.b16 %v4159
  %v4226 = vunpack.c.l.b16 %v4160
  %v4227 = vunpack.c.h.b16 %v4160
  %v4228 = vunpack.c.l.b16 %v4161
  %v4229 = vunpack.c.h.b16 %v4161
  %v4230 = vunpack.c.l.b16 %v4162
  %v4231 = vunpack.c.h.b16 %v4162
  %v4232 = vunpack.c.l.b16 %v4163
  %v4233 = vunpack.c.h.b16 %v4163
  %v4234 = vunpack.c.l.b16 %v4164
  %v4235 = vunpack.c.h.b16 %v4164
  %v4236 = vunpack.c.l.b16 %v4165
  %v4237 = vunpack.c.h.b16 %v4165
  %v4238 = vunpack.c.l.b16 %v4166
  %v4239 = vunpack.c.h.b16 %v4166
  %v4240 = vunpack.c.l.b16 %v4167
  %v4241 = vunpack.c.h.b16 %v4167
  %v4242 = vunpack.c.l.b16 %v4168
  %v4243 = vunpack.c.h.b16 %v4168
  %v4244 = vunpack.c.l.b16 %v4169
  %v4245 = vunpack.c.h.b16 %v4169
  %v4246 = vunpack.c.l.b16 %v4170
  %v4247 = vunpack.c.h.b16 %v4170
  %v4248 = vunpack.c.l.b16 %v4171
  %v4249 = vunpack.c.h.b16 %v4171
  %v4250 = vunpack.c.l.b16 %v4172
  %v4251 = vunpack.c.h.b16 %v4172
  %v4252 = vunpack.c.l.b16 %v4173
  %v4253 = vunpack.c.h.b16 %v4173
  %v4254 = vunpack.c.l.b16 %v4174
  %v4255 = vunpack.c.h.b16 %v4174
  %v4256 = vunpack.c.l.b16 %v4175
  %v4257 = vunpack.c.h.b16 %v4175
  %v4258 = vunpack.c.l.b16 %v4176
  %v4259 = vunpack.c.h.b16 %v4176
  %v4260 = vunpack.c.l.b16 %v4177
  %v4261 = vunpack.c.h.b16 %v4177
  %v4262 = vunpack.c.l.b16 %v4178
  %v4263 = vunpack.c.h.b16 %v4178
  %v4264 = vunpack.c.l.b16 %v4179
  %v4265 = vunpack.c.h.b16 %v4179
  %v4266 = vunpack.c.l.b16 %v4180
  %v4267 = vunpack.c.h.b16 %v4180
  %v4268 = vunpack.c.l.b16 %v4181
  %v4269 = vunpack.c.h.b16 %v4181
  %v4270 = vunpack.c.l.b16 %v4182
  %v4271 = vunpack.c.h.b16 %v4182
  %v4272 = vunpack.c.l.b16 %v4183
  %v4273 = vunpack.c.h.b16 %v4183
  %v4274 = vunpack.c.l.b16 %v4184
  %v4275 = vunpack.c.h.b16 %v4184
  %v4276 = vunpack.c.l.b16 %v4185
  %v4277 = vunpack.c.h.b16 %v4185
  %v4278 = vunpack.c.l.b16 %v4186
  %v4279 = vunpack.c.h.b16 %v4186
  %v4280 = vunpack.c.l.b16 %v4187
  %v4281 = vunpack.c.h.b16 %v4187
  %v4282 = vunpack.c.l.b16 %v4188
  %v4283 = vunpack.c.h.b16 %v4188
  %v4284 = vunpack.c.l.b16 %v4189
  %v4285 = vunpack.c.h.b16 %v4189
  %v4286 = vpack.c.b16 %v4226, %v4222
  %v4287 = vpack.c.b16 %v4227, %v4223
  %v4288 = vpack.c.b16 %v4228, %v4224
  %v4289 = vpack.c.b16 %v4229, %v4225
  %v4290 = vpack.c.b16 %v4234, %v4230
  %v4291 = vpack.c.b16 %v4235, %v4231
  %v4292 = vpack.c.b16 %v4236, %v4232
  %v4293 = vpack.c.b16 %v4237, %v4233
  %v4294 = vpack.c.b16 %v4242, %v4238
  %v4295 = vpack.c.b16 %v4243, %v4239
  %v4296 = vpack.c.b16 %v4244, %v4240
  %v4297 = vpack.c.b16 %v4245, %v4241
  %v4298 = vpack.c.b16 %v4250, %v4246
  %v4299 = vpack.c.b16 %v4251, %v4247
  %v4300 = vpack.c.b16 %v4252, %v4248
  %v4301 = vpack.c.b16 %v4253, %v4249
  %v4302 = vpack.c.b16 %v4258, %v4254
  %v4303 = vpack.c.b16 %v4259, %v4255
  %v4304 = vpack.c.b16 %v4260, %v4256
  %v4305 = vpack.c.b16 %v4261, %v4257
  %v4306 = vpack.c.b16 %v4266, %v4262
  %v4307 = vpack.c.b16 %v4267, %v4263
  %v4308 = vpack.c.b16 %v4268, %v4264
  %v4309 = vpack.c.b16 %v4269, %v4265
  %v4310 = vpack.c.b16 %v4274, %v4270
  %v4311 = vpack.c.b16 %v4275, %v4271
  %v4312 = vpack.c.b16 %v4276, %v4272
  %v4313 = vpack.c.b16 %v4277, %v4273
  %v4314 = vpack.c.b16 %v4282, %v4278
  %v4315 = vpack.c.b16 %v4283, %v4279
  %v4316 = vpack.c.b16 %v4284, %v4280
  %v4317 = vpack.c.b16 %v4285, %v4281
  %4350 = vmatprep.subr.bf16.mxu0 %v4315
  %4351 = vmatpush1.bf16.msra.mxu0 %v4314
  %4352 = vmatprep.subr.bf16.mxu0 %v4311
  %4353 = vmatpush1.bf16.msra.mxu0 %v4310
  %4354 = vmatprep.subr.bf16.mxu0 %v4307
  %4355 = vmatpush1.bf16.msra.mxu0 %v4306
  %4356 = vmatprep.subr.bf16.mxu0 %v4303
  %4357 = vmatpush1.bf16.msra.mxu0 %v4302
  %4358 = vmatprep.subr.bf16.mxu0 %v4299
  %4359 = vmatpush1.bf16.msra.mxu0 %v4298
  %4360 = vmatprep.subr.bf16.mxu0 %v4295
  %4361 = vmatpush1.bf16.msra.mxu0 %v4294
  %4362 = vmatprep.subr.bf16.mxu0 %v4291
  %4363 = vmatpush1.bf16.msra.mxu0 %v4290
  %4364 = vmatprep.subr.bf16.mxu0 %v4287
  %4365 = vmatpush1.bf16.msra.mxu0 %v4286
  %4366 = vmatprep.subr.bf16.mxu0 0
  %4367 = vmatpush2.bf16.msra.mxu0 0
  %4368 = vmatprep.subr.bf16.mxu0 0
  %4369 = vmatpush2.bf16.msra.mxu0 0
  %4370 = vmatprep.subr.bf16.mxu0 0
  %4371 = vmatpush2.bf16.msra.mxu0 0
  %4372 = vmatprep.subr.bf16.mxu0 0
  %4373 = vmatpush2.bf16.msra.mxu0 0
  %4374 = vmatprep.subr.bf16.mxu0 0
  %4375 = vmatpush2.bf16.msra.mxu0 0
  %4376 = vmatprep.subr.bf16.mxu0 0
  %4377 = vmatpush2.bf16.msra.mxu0 0
  %4378 = vmatprep.subr.bf16.mxu0 0
  %4379 = vmatpush2.bf16.msra.mxu0 0
  %4380 = vmatprep.subr.bf16.mxu0 0
  %4381 = vmatpush2.bf16.msra.mxu0 0
  %4382 = vmatprep.mubr.bf16.mxu0 0
  %4383 = vmatmul.mubr.bf16.gmra.mxu0 %v4157
  %v4384 = vpop.f32.mrf.mxu0
  %v4385 = vadd.f32 0.0, %v4384
  %v4386 = vpop.f32.mrf.mxu0
  %v4387 = vadd.f32 0.0, %v4386
  %v4388 = vpop.f32.mrf.mxu0
  %v4389 = vpop.f32.mrf.mxu0
  %4390 = vdwg.mxu0
  %4391 = vmatprep.subr.bf16.mxu0 %v4317
  %4392 = vmatpush1.bf16.msra.mxu0 %v4316
  %4393 = vmatprep.subr.bf16.mxu0 %v4313
  %4394 = vmatpush1.bf16.msra.mxu0 %v4312
  %4395 = vmatprep.subr.bf16.mxu0 %v4309
  %4396 = vmatpush1.bf16.msra.mxu0 %v4308
  %4397 = vmatprep.subr.bf16.mxu0 %v4305
  %4398 = vmatpush1.bf16.msra.mxu0 %v4304
  %4399 = vmatprep.subr.bf16.mxu0 %v4301
  %4400 = vmatpush1.bf16.msra.mxu0 %v4300
  %4401 = vmatprep.subr.bf16.mxu0 %v4297
  %4402 = vmatpush1.bf16.msra.mxu0 %v4296
  %4403 = vmatprep.subr.bf16.mxu0 %v4293
  %4404 = vmatpush1.bf16.msra.mxu0 %v4292
  %4405 = vmatprep.subr.bf16.mxu0 %v4289
  %4406 = vmatpush1.bf16.msra.mxu0 %v4288
  %4407 = vmatprep.subr.bf16.mxu0 0
  %4408 = vmatpush2.bf16.msra.mxu0 0
  %4409 = vmatprep.subr.bf16.mxu0 0
  %4410 = vmatpush2.bf16.msra.mxu0 0
  %4411 = vmatprep.subr.bf16.mxu0 0
  %4412 = vmatpush2.bf16.msra.mxu0 0
  %4413 = vmatprep.subr.bf16.mxu0 0
  %4414 = vmatpush2.bf16.msra.mxu0 0
  %4415 = vmatprep.subr.bf16.mxu0 0
  %4416 = vmatpush2.bf16.msra.mxu0 0
  %4417 = vmatprep.subr.bf16.mxu0 0
  %4418 = vmatpush2.bf16.msra.mxu0 0
  %4419 = vmatprep.subr.bf16.mxu0 0
  %4420 = vmatpush2.bf16.msra.mxu0 0
  %4421 = vmatprep.subr.bf16.mxu0 0
  %4422 = vmatpush2.bf16.msra.mxu0 0
  %4423 = vmatprep.mubr.bf16.mxu0 0
  %4424 = vmatmul.mubr.bf16.gmra.mxu0 %v4157
  %v4425 = vpop.f32.mrf.mxu0
  %v4426 = vadd.f32 0.0, %v4425
  %v4427 = vpop.f32.mrf.mxu0
  %v4428 = vadd.f32 0.0, %v4427
  %v4429 = vpop.f32.mrf.mxu0
  %v4430 = vpop.f32.mrf.mxu0
  %4431 = vdwg.mxu0
  %v4432 = vadd.f32 %v4153, %v4385
  %v4433 = vadd.f32 %v4154, %v4387
  %v4434 = vadd.f32 %v4155, %v4426
  %v4435 = vadd.f32 %v4156, %v4428
  %v4436 = vxor.u32 %v4432, 2147483648
  %v4437 = vmul.f32 %v4436, 1.442695
  %v4438 = vpow.pop %v4437
  %v4439 = vadd.f32 %v4438, 1.0
  %v4440 = vrcp.pop %v4439
  %v4441 = vmul.f32 1.0, %v4440
  %v4442 = vxor.u32 %v4433, 2147483648
  %v4443 = vmul.f32 %v4442, 1.442695
  %v4444 = vpow.pop %v4443
  %v4445 = vadd.f32 %v4444, 1.0
  %v4446 = vrcp.pop %v4445
  %v4447 = vmul.f32 1.0, %v4446
  %v4448 = vtanh.pop %v4434
  %v4449 = vxor.u32 %v4435, 2147483648
  %v4450 = vmul.f32 %v4449, 1.442695
  %v4451 = vpow.pop %v4450
  %v4452 = vadd.f32 %v4451, 1.0
  %v4453 = vrcp.pop %v4452
  %v4454 = vmul.f32 1.0, %v4453
  %v4455 = vmul.f32 %v4447, %v4149
  %v4456 = vmul.f32 %v4441, %v4448
  %v4457 = vadd.f32 %v4455, %v4456
  %v4458 = vtanh.pop %v4457
  %v4459 = vmul.f32 %v4454, %v4458
  %4460 = vst [vmem:[#allocation3] sm:$0xff] %v4457
  %4461 = vst [vmem:[#allocation2] sm:$0xff] %v4459
  %v4462 = vpack.c.bf16 %v4459, %v4459
  %s4463 = scalar_lea.vmem %s4, 52
  %4464 = vst [vmem:[%s4463] sm:$0xf] %v4462
  %v4465 = vld [vmem:[#allocation2] sm:$0xff]
  %v4466 = vld [vmem:[#allocation3] sm:$0xff]
  %s4467 = scalar_lea.vmem %s0, 224
  %v4468 = vld [vmem:[%s4467] sm:$0xff]
  %v4469 = vld [vmem:[%s4467 + $0x8] sm:$0xff]
  %v4470 = vunpack.c.l.bf16 %v4468
  %v4471 = vunpack.c.h.bf16 %v4468
  %v4472 = vunpack.c.l.bf16 %v4469
  %v4473 = vunpack.c.h.bf16 %v4469
  %v4474 = vpack.c.bf16 %v4465, %v4465
  %v4475 = vld [vmem:[%s1] sm:$0xff]
  %v4476 = vld [vmem:[%s1 + $0x8] sm:$0xff]
  %v4477 = vld [vmem:[%s1 + $0x10] sm:$0xff]
  %v4478 = vld [vmem:[%s1 + $0x18] sm:$0xff]
  %v4479 = vld [vmem:[%s1 + $0x20] sm:$0xff]
  %v4480 = vld [vmem:[%s1 + $0x28] sm:$0xff]
  %v4481 = vld [vmem:[%s1 + $0x30] sm:$0xff]
  %v4482 = vld [vmem:[%s1 + $0x38] sm:$0xff]
  %v4483 = vld [vmem:[%s1 + $0x40] sm:$0xff]
  %v4484 = vld [vmem:[%s1 + $0x48] sm:$0xff]
  %v4485 = vld [vmem:[%s1 + $0x50] sm:$0xff]
  %v4486 = vld [vmem:[%s1 + $0x58] sm:$0xff]
  %v4487 = vld [vmem:[%s1 + $0x60] sm:$0xff]
  %v4488 = vld [vmem:[%s1 + $0x68] sm:$0xff]
  %v4489 = vld [vmem:[%s1 + $0x70] sm:$0xff]
  %v4490 = vld [vmem:[%s1 + $0x78] sm:$0xff]
  %v4491 = vld [vmem:[%s1 + $0x80] sm:$0xff]
  %v4492 = vld [vmem:[%s1 + $0x88] sm:$0xff]
  %v4493 = vld [vmem:[%s1 + $0x90] sm:$0xff]
  %v4494 = vld [vmem:[%s1 + $0x98] sm:$0xff]
  %v4495 = vld [vmem:[%s1 + $0xa0] sm:$0xff]
  %v4496 = vld [vmem:[%s1 + $0xa8] sm:$0xff]
  %v4497 = vld [vmem:[%s1 + $0xb0] sm:$0xff]
  %v4498 = vld [vmem:[%s1 + $0xb8] sm:$0xff]
  %v4499 = vld [vmem:[%s1 + $0xc0] sm:$0xff]
  %v4500 = vld [vmem:[%s1 + $0xc8] sm:$0xff]
  %v4501 = vld [vmem:[%s1 + $0xd0] sm:$0xff]
  %v4502 = vld [vmem:[%s1 + $0xd8] sm:$0xff]
  %v4503 = vld [vmem:[%s1 + $0xe0] sm:$0xff]
  %v4504 = vld [vmem:[%s1 + $0xe8] sm:$0xff]
  %v4505 = vld [vmem:[%s1 + $0xf0] sm:$0xff]
  %v4506 = vld [vmem:[%s1 + $0xf8] sm:$0xff]
  %v4539 = vunpack.c.l.b16 %v4475
  %v4540 = vunpack.c.h.b16 %v4475
  %v4541 = vunpack.c.l.b16 %v4476
  %v4542 = vunpack.c.h.b16 %v4476
  %v4543 = vunpack.c.l.b16 %v4477
  %v4544 = vunpack.c.h.b16 %v4477
  %v4545 = vunpack.c.l.b16 %v4478
  %v4546 = vunpack.c.h.b16 %v4478
  %v4547 = vunpack.c.l.b16 %v4479
  %v4548 = vunpack.c.h.b16 %v4479
  %v4549 = vunpack.c.l.b16 %v4480
  %v4550 = vunpack.c.h.b16 %v4480
  %v4551 = vunpack.c.l.b16 %v4481
  %v4552 = vunpack.c.h.b16 %v4481
  %v4553 = vunpack.c.l.b16 %v4482
  %v4554 = vunpack.c.h.b16 %v4482
  %v4555 = vunpack.c.l.b16 %v4483
  %v4556 = vunpack.c.h.b16 %v4483
  %v4557 = vunpack.c.l.b16 %v4484
  %v4558 = vunpack.c.h.b16 %v4484
  %v4559 = vunpack.c.l.b16 %v4485
  %v4560 = vunpack.c.h.b16 %v4485
  %v4561 = vunpack.c.l.b16 %v4486
  %v4562 = vunpack.c.h.b16 %v4486
  %v4563 = vunpack.c.l.b16 %v4487
  %v4564 = vunpack.c.h.b16 %v4487
  %v4565 = vunpack.c.l.b16 %v4488
  %v4566 = vunpack.c.h.b16 %v4488
  %v4567 = vunpack.c.l.b16 %v4489
  %v4568 = vunpack.c.h.b16 %v4489
  %v4569 = vunpack.c.l.b16 %v4490
  %v4570 = vunpack.c.h.b16 %v4490
  %v4571 = vunpack.c.l.b16 %v4491
  %v4572 = vunpack.c.h.b16 %v4491
  %v4573 = vunpack.c.l.b16 %v4492
  %v4574 = vunpack.c.h.b16 %v4492
  %v4575 = vunpack.c.l.b16 %v4493
  %v4576 = vunpack.c.h.b16 %v4493
  %v4577 = vunpack.c.l.b16 %v4494
  %v4578 = vunpack.c.h.b16 %v4494
  %v4579 = vunpack.c.l.b16 %v4495
  %v4580 = vunpack.c.h.b16 %v4495
  %v4581 = vunpack.c.l.b16 %v4496
  %v4582 = vunpack.c.h.b16 %v4496
  %v4583 = vunpack.c.l.b16 %v4497
  %v4584 = vunpack.c.h.b16 %v4497
  %v4585 = vunpack.c.l.b16 %v4498
  %v4586 = vunpack.c.h.b16 %v4498
  %v4587 = vunpack.c.l.b16 %v4499
  %v4588 = vunpack.c.h.b16 %v4499
  %v4589 = vunpack.c.l.b16 %v4500
  %v4590 = vunpack.c.h.b16 %v4500
  %v4591 = vunpack.c.l.b16 %v4501
  %v4592 = vunpack.c.h.b16 %v4501
  %v4593 = vunpack.c.l.b16 %v4502
  %v4594 = vunpack.c.h.b16 %v4502
  %v4595 = vunpack.c.l.b16 %v4503
  %v4596 = vunpack.c.h.b16 %v4503
  %v4597 = vunpack.c.l.b16 %v4504
  %v4598 = vunpack.c.h.b16 %v4504
  %v4599 = vunpack.c.l.b16 %v4505
  %v4600 = vunpack.c.h.b16 %v4505
  %v4601 = vunpack.c.l.b16 %v4506
  %v4602 = vunpack.c.h.b16 %v4506
  %v4603 = vpack.c.b16 %v4543, %v4539
  %v4604 = vpack.c.b16 %v4544, %v4540
  %v4605 = vpack.c.b16 %v4545, %v4541
  %v4606 = vpack.c.b16 %v4546, %v4542
  %v4607 = vpack.c.b16 %v4551, %v4547
  %v4608 = vpack.c.b16 %v4552, %v4548
  %v4609 = vpack.c.b16 %v4553, %v4549
  %v4610 = vpack.c.b16 %v4554, %v4550
  %v4611 = vpack.c.b16 %v4559, %v4555
  %v4612 = vpack.c.b16 %v4560, %v4556
  %v4613 = vpack.c.b16 %v4561, %v4557
  %v4614 = vpack.c.b16 %v4562, %v4558
  %v4615 = vpack.c.b16 %v4567, %v4563
  %v4616 = vpack.c.b16 %v4568, %v4564
  %v4617 = vpack.c.b16 %v4569, %v4565
  %v4618 = vpack.c.b16 %v4570, %v4566
  %v4619 = vpack.c.b16 %v4575, %v4571
  %v4620 = vpack.c.b16 %v4576, %v4572
  %v4621 = vpack.c.b16 %v4577, %v4573
  %v4622 = vpack.c.b16 %v4578, %v4574
  %v4623 = vpack.c.b16 %v4583, %v4579
  %v4624 = vpack.c.b16 %v4584, %v4580
  %v4625 = vpack.c.b16 %v4585, %v4581
  %v4626 = vpack.c.b16 %v4586, %v4582
  %v4627 = vpack.c.b16 %v4591, %v4587
  %v4628 = vpack.c.b16 %v4592, %v4588
  %v4629 = vpack.c.b16 %v4593, %v4589
  %v4630 = vpack.c.b16 %v4594, %v4590
  %v4631 = vpack.c.b16 %v4599, %v4595
  %v4632 = vpack.c.b16 %v4600, %v4596
  %v4633 = vpack.c.b16 %v4601, %v4597
  %v4634 = vpack.c.b16 %v4602, %v4598
  %4667 = vmatprep.subr.bf16.mxu0 %v4632
  %4668 = vmatpush1.bf16.msra.mxu0 %v4631
  %4669 = vmatprep.subr.bf16.mxu0 %v4628
  %4670 = vmatpush1.bf16.msra.mxu0 %v4627
  %4671 = vmatprep.subr.bf16.mxu0 %v4624
  %4672 = vmatpush1.bf16.msra.mxu0 %v4623
  %4673 = vmatprep.subr.bf16.mxu0 %v4620
  %4674 = vmatpush1.bf16.msra.mxu0 %v4619
  %4675 = vmatprep.subr.bf16.mxu0 %v4616
  %4676 = vmatpush1.bf16.msra.mxu0 %v4615
  %4677 = vmatprep.subr.bf16.mxu0 %v4612
  %4678 = vmatpush1.bf16.msra.mxu0 %v4611
  %4679 = vmatprep.subr.bf16.mxu0 %v4608
  %4680 = vmatpush1.bf16.msra.mxu0 %v4607
  %4681 = vmatprep.subr.bf16.mxu0 %v4604
  %4682 = vmatpush1.bf16.msra.mxu0 %v4603
  %4683 = vmatprep.subr.bf16.mxu0 0
  %4684 = vmatpush2.bf16.msra.mxu0 0
  %4685 = vmatprep.subr.bf16.mxu0 0
  %4686 = vmatpush2.bf16.msra.mxu0 0
  %4687 = vmatprep.subr.bf16.mxu0 0
  %4688 = vmatpush2.bf16.msra.mxu0 0
  %4689 = vmatprep.subr.bf16.mxu0 0
  %4690 = vmatpush2.bf16.msra.mxu0 0
  %4691 = vmatprep.subr.bf16.mxu0 0
  %4692 = vmatpush2.bf16.msra.mxu0 0
  %4693 = vmatprep.subr.bf16.mxu0 0
  %4694 = vmatpush2.bf16.msra.mxu0 0
  %4695 = vmatprep.subr.bf16.mxu0 0
  %4696 = vmatpush2.bf16.msra.mxu0 0
  %4697 = vmatprep.subr.bf16.mxu0 0
  %4698 = vmatpush2.bf16.msra.mxu0 0
  %4699 = vmatprep.mubr.bf16.mxu0 0
  %4700 = vmatmul.mubr.bf16.gmra.mxu0 %v4474
  %v4701 = vpop.f32.mrf.mxu0
  %v4702 = vadd.f32 0.0, %v4701
  %v4703 = vpop.f32.mrf.mxu0
  %v4704 = vadd.f32 0.0, %v4703
  %v4705 = vpop.f32.mrf.mxu0
  %v4706 = vpop.f32.mrf.mxu0
  %4707 = vdwg.mxu0
  %4708 = vmatprep.subr.bf16.mxu0 %v4634
  %4709 = vmatpush1.bf16.msra.mxu0 %v4633
  %4710 = vmatprep.subr.bf16.mxu0 %v4630
  %4711 = vmatpush1.bf16.msra.mxu0 %v4629
  %4712 = vmatprep.subr.bf16.mxu0 %v4626
  %4713 = vmatpush1.bf16.msra.mxu0 %v4625
  %4714 = vmatprep.subr.bf16.mxu0 %v4622
  %4715 = vmatpush1.bf16.msra.mxu0 %v4621
  %4716 = vmatprep.subr.bf16.mxu0 %v4618
  %4717 = vmatpush1.bf16.msra.mxu0 %v4617
  %4718 = vmatprep.subr.bf16.mxu0 %v4614
  %4719 = vmatpush1.bf16.msra.mxu0 %v4613
  %4720 = vmatprep.subr.bf16.mxu0 %v4610
  %4721 = vmatpush1.bf16.msra.mxu0 %v4609
  %4722 = vmatprep.subr.bf16.mxu0 %v4606
  %4723 = vmatpush1.bf16.msra.mxu0 %v4605
  %4724 = vmatprep.subr.bf16.mxu0 0
  %4725 = vmatpush2.bf16.msra.mxu0 0
  %4726 = vmatprep.subr.bf16.mxu0 0
  %4727 = vmatpush2.bf16.msra.mxu0 0
  %4728 = vmatprep.subr.bf16.mxu0 0
  %4729 = vmatpush2.bf16.msra.mxu0 0
  %4730 = vmatprep.subr.bf16.mxu0 0
  %4731 = vmatpush2.bf16.msra.mxu0 0
  %4732 = vmatprep.subr.bf16.mxu0 0
  %4733 = vmatpush2.bf16.msra.mxu0 0
  %4734 = vmatprep.subr.bf16.mxu0 0
  %4735 = vmatpush2.bf16.msra.mxu0 0
  %4736 = vmatprep.subr.bf16.mxu0 0
  %4737 = vmatpush2.bf16.msra.mxu0 0
  %4738 = vmatprep.subr.bf16.mxu0 0
  %4739 = vmatpush2.bf16.msra.mxu0 0
  %4740 = vmatprep.mubr.bf16.mxu0 0
  %4741 = vmatmul.mubr.bf16.gmra.mxu0 %v4474
  %v4742 = vpop.f32.mrf.mxu0
  %v4743 = vadd.f32 0.0, %v4742
  %v4744 = vpop.f32.mrf.mxu0
  %v4745 = vadd.f32 0.0, %v4744
  %v4746 = vpop.f32.mrf.mxu0
  %v4747 = vpop.f32.mrf.mxu0
  %4748 = vdwg.mxu0
  %v4749 = vadd.f32 %v4470, %v4702
  %v4750 = vadd.f32 %v4471, %v4704
  %v4751 = vadd.f32 %v4472, %v4743
  %v4752 = vadd.f32 %v4473, %v4745
  %v4753 = vxor.u32 %v4749, 2147483648
  %v4754 = vmul.f32 %v4753, 1.442695
  %v4755 = vpow.pop %v4754
  %v4756 = vadd.f32 %v4755, 1.0
  %v4757 = vrcp.pop %v4756
  %v4758 = vmul.f32 1.0, %v4757
  %v4759 = vxor.u32 %v4750, 2147483648
  %v4760 = vmul.f32 %v4759, 1.442695
  %v4761 = vpow.pop %v4760
  %v4762 = vadd.f32 %v4761, 1.0
  %v4763 = vrcp.pop %v4762
  %v4764 = vmul.f32 1.0, %v4763
  %v4765 = vtanh.pop %v4751
  %v4766 = vxor.u32 %v4752, 2147483648
  %v4767 = vmul.f32 %v4766, 1.442695
  %v4768 = vpow.pop %v4767
  %v4769 = vadd.f32 %v4768, 1.0
  %v4770 = vrcp.pop %v4769
  %v4771 = vmul.f32 1.0, %v4770
  %v4772 = vmul.f32 %v4764, %v4466
  %v4773 = vmul.f32 %v4758, %v4765
  %v4774 = vadd.f32 %v4772, %v4773
  %v4775 = vtanh.pop %v4774
  %v4776 = vmul.f32 %v4771, %v4775
  %4777 = vst [vmem:[#allocation3] sm:$0xff] %v4774
  %4778 = vst [vmem:[#allocation2] sm:$0xff] %v4776
  %v4779 = vpack.c.bf16 %v4776, %v4776
  %s4780 = scalar_lea.vmem %s4, 56
  %4781 = vst [vmem:[%s4780] sm:$0xf] %v4779
  %v4782 = vld [vmem:[#allocation2] sm:$0xff]
  %v4783 = vld [vmem:[#allocation3] sm:$0xff]
  %s4784 = scalar_lea.vmem %s0, 240
  %v4785 = vld [vmem:[%s4784] sm:$0xff]
  %v4786 = vld [vmem:[%s4784 + $0x8] sm:$0xff]
  %v4787 = vunpack.c.l.bf16 %v4785
  %v4788 = vunpack.c.h.bf16 %v4785
  %v4789 = vunpack.c.l.bf16 %v4786
  %v4790 = vunpack.c.h.bf16 %v4786
  %v4791 = vpack.c.bf16 %v4782, %v4782
  %v4792 = vld [vmem:[%s1] sm:$0xff]
  %v4793 = vld [vmem:[%s1 + $0x8] sm:$0xff]
  %v4794 = vld [vmem:[%s1 + $0x10] sm:$0xff]
  %v4795 = vld [vmem:[%s1 + $0x18] sm:$0xff]
  %v4796 = vld [vmem:[%s1 + $0x20] sm:$0xff]
  %v4797 = vld [vmem:[%s1 + $0x28] sm:$0xff]
  %v4798 = vld [vmem:[%s1 + $0x30] sm:$0xff]
  %v4799 = vld [vmem:[%s1 + $0x38] sm:$0xff]
  %v4800 = vld [vmem:[%s1 + $0x40] sm:$0xff]
  %v4801 = vld [vmem:[%s1 + $0x48] sm:$0xff]
  %v4802 = vld [vmem:[%s1 + $0x50] sm:$0xff]
  %v4803 = vld [vmem:[%s1 + $0x58] sm:$0xff]
  %v4804 = vld [vmem:[%s1 + $0x60] sm:$0xff]
  %v4805 = vld [vmem:[%s1 + $0x68] sm:$0xff]
  %v4806 = vld [vmem:[%s1 + $0x70] sm:$0xff]
  %v4807 = vld [vmem:[%s1 + $0x78] sm:$0xff]
  %v4808 = vld [vmem:[%s1 + $0x80] sm:$0xff]
  %v4809 = vld [vmem:[%s1 + $0x88] sm:$0xff]
  %v4810 = vld [vmem:[%s1 + $0x90] sm:$0xff]
  %v4811 = vld [vmem:[%s1 + $0x98] sm:$0xff]
  %v4812 = vld [vmem:[%s1 + $0xa0] sm:$0xff]
  %v4813 = vld [vmem:[%s1 + $0xa8] sm:$0xff]
  %v4814 = vld [vmem:[%s1 + $0xb0] sm:$0xff]
  %v4815 = vld [vmem:[%s1 + $0xb8] sm:$0xff]
  %v4816 = vld [vmem:[%s1 + $0xc0] sm:$0xff]
  %v4817 = vld [vmem:[%s1 + $0xc8] sm:$0xff]
  %v4818 = vld [vmem:[%s1 + $0xd0] sm:$0xff]
  %v4819 = vld [vmem:[%s1 + $0xd8] sm:$0xff]
  %v4820 = vld [vmem:[%s1 + $0xe0] sm:$0xff]
  %v4821 = vld [vmem:[%s1 + $0xe8] sm:$0xff]
  %v4822 = vld [vmem:[%s1 + $0xf0] sm:$0xff]
  %v4823 = vld [vmem:[%s1 + $0xf8] sm:$0xff]
  %v4856 = vunpack.c.l.b16 %v4792
  %v4857 = vunpack.c.h.b16 %v4792
  %v4858 = vunpack.c.l.b16 %v4793
  %v4859 = vunpack.c.h.b16 %v4793
  %v4860 = vunpack.c.l.b16 %v4794
  %v4861 = vunpack.c.h.b16 %v4794
  %v4862 = vunpack.c.l.b16 %v4795
  %v4863 = vunpack.c.h.b16 %v4795
  %v4864 = vunpack.c.l.b16 %v4796
  %v4865 = vunpack.c.h.b16 %v4796
  %v4866 = vunpack.c.l.b16 %v4797
  %v4867 = vunpack.c.h.b16 %v4797
  %v4868 = vunpack.c.l.b16 %v4798
  %v4869 = vunpack.c.h.b16 %v4798
  %v4870 = vunpack.c.l.b16 %v4799
  %v4871 = vunpack.c.h.b16 %v4799
  %v4872 = vunpack.c.l.b16 %v4800
  %v4873 = vunpack.c.h.b16 %v4800
  %v4874 = vunpack.c.l.b16 %v4801
  %v4875 = vunpack.c.h.b16 %v4801
  %v4876 = vunpack.c.l.b16 %v4802
  %v4877 = vunpack.c.h.b16 %v4802
  %v4878 = vunpack.c.l.b16 %v4803
  %v4879 = vunpack.c.h.b16 %v4803
  %v4880 = vunpack.c.l.b16 %v4804
  %v4881 = vunpack.c.h.b16 %v4804
  %v4882 = vunpack.c.l.b16 %v4805
  %v4883 = vunpack.c.h.b16 %v4805
  %v4884 = vunpack.c.l.b16 %v4806
  %v4885 = vunpack.c.h.b16 %v4806
  %v4886 = vunpack.c.l.b16 %v4807
  %v4887 = vunpack.c.h.b16 %v4807
  %v4888 = vunpack.c.l.b16 %v4808
  %v4889 = vunpack.c.h.b16 %v4808
  %v4890 = vunpack.c.l.b16 %v4809
  %v4891 = vunpack.c.h.b16 %v4809
  %v4892 = vunpack.c.l.b16 %v4810
  %v4893 = vunpack.c.h.b16 %v4810
  %v4894 = vunpack.c.l.b16 %v4811
  %v4895 = vunpack.c.h.b16 %v4811
  %v4896 = vunpack.c.l.b16 %v4812
  %v4897 = vunpack.c.h.b16 %v4812
  %v4898 = vunpack.c.l.b16 %v4813
  %v4899 = vunpack.c.h.b16 %v4813
  %v4900 = vunpack.c.l.b16 %v4814
  %v4901 = vunpack.c.h.b16 %v4814
  %v4902 = vunpack.c.l.b16 %v4815
  %v4903 = vunpack.c.h.b16 %v4815
  %v4904 = vunpack.c.l.b16 %v4816
  %v4905 = vunpack.c.h.b16 %v4816
  %v4906 = vunpack.c.l.b16 %v4817
  %v4907 = vunpack.c.h.b16 %v4817
  %v4908 = vunpack.c.l.b16 %v4818
  %v4909 = vunpack.c.h.b16 %v4818
  %v4910 = vunpack.c.l.b16 %v4819
  %v4911 = vunpack.c.h.b16 %v4819
  %v4912 = vunpack.c.l.b16 %v4820
  %v4913 = vunpack.c.h.b16 %v4820
  %v4914 = vunpack.c.l.b16 %v4821
  %v4915 = vunpack.c.h.b16 %v4821
  %v4916 = vunpack.c.l.b16 %v4822
  %v4917 = vunpack.c.h.b16 %v4822
  %v4918 = vunpack.c.l.b16 %v4823
  %v4919 = vunpack.c.h.b16 %v4823
  %v4920 = vpack.c.b16 %v4860, %v4856
  %v4921 = vpack.c.b16 %v4861, %v4857
  %v4922 = vpack.c.b16 %v4862, %v4858
  %v4923 = vpack.c.b16 %v4863, %v4859
  %v4924 = vpack.c.b16 %v4868, %v4864
  %v4925 = vpack.c.b16 %v4869, %v4865
  %v4926 = vpack.c.b16 %v4870, %v4866
  %v4927 = vpack.c.b16 %v4871, %v4867
  %v4928 = vpack.c.b16 %v4876, %v4872
  %v4929 = vpack.c.b16 %v4877, %v4873
  %v4930 = vpack.c.b16 %v4878, %v4874
  %v4931 = vpack.c.b16 %v4879, %v4875
  %v4932 = vpack.c.b16 %v4884, %v4880
  %v4933 = vpack.c.b16 %v4885, %v4881
  %v4934 = vpack.c.b16 %v4886, %v4882
  %v4935 = vpack.c.b16 %v4887, %v4883
  %v4936 = vpack.c.b16 %v4892, %v4888
  %v4937 = vpack.c.b16 %v4893, %v4889
  %v4938 = vpack.c.b16 %v4894, %v4890
  %v4939 = vpack.c.b16 %v4895, %v4891
  %v4940 = vpack.c.b16 %v4900, %v4896
  %v4941 = vpack.c.b16 %v4901, %v4897
  %v4942 = vpack.c.b16 %v4902, %v4898
  %v4943 = vpack.c.b16 %v4903, %v4899
  %v4944 = vpack.c.b16 %v4908, %v4904
  %v4945 = vpack.c.b16 %v4909, %v4905
  %v4946 = vpack.c.b16 %v4910, %v4906
  %v4947 = vpack.c.b16 %v4911, %v4907
  %v4948 = vpack.c.b16 %v4916, %v4912
  %v4949 = vpack.c.b16 %v4917, %v4913
  %v4950 = vpack.c.b16 %v4918, %v4914
  %v4951 = vpack.c.b16 %v4919, %v4915
  %4984 = vmatprep.subr.bf16.mxu0 %v4949
  %4985 = vmatpush1.bf16.msra.mxu0 %v4948
  %4986 = vmatprep.subr.bf16.mxu0 %v4945
  %4987 = vmatpush1.bf16.msra.mxu0 %v4944
  %4988 = vmatprep.subr.bf16.mxu0 %v4941
  %4989 = vmatpush1.bf16.msra.mxu0 %v4940
  %4990 = vmatprep.subr.bf16.mxu0 %v4937
  %4991 = vmatpush1.bf16.msra.mxu0 %v4936
  %4992 = vmatprep.subr.bf16.mxu0 %v4933
  %4993 = vmatpush1.bf16.msra.mxu0 %v4932
  %4994 = vmatprep.subr.bf16.mxu0 %v4929
  %4995 = vmatpush1.bf16.msra.mxu0 %v4928
  %4996 = vmatprep.subr.bf16.mxu0 %v4925
  %4997 = vmatpush1.bf16.msra.mxu0 %v4924
  %4998 = vmatprep.subr.bf16.mxu0 %v4921
  %4999 = vmatpush1.bf16.msra.mxu0 %v4920
  %5000 = vmatprep.subr.bf16.mxu0 0
  %5001 = vmatpush2.bf16.msra.mxu0 0
  %5002 = vmatprep.subr.bf16.mxu0 0
  %5003 = vmatpush2.bf16.msra.mxu0 0
  %5004 = vmatprep.subr.bf16.mxu0 0
  %5005 = vmatpush2.bf16.msra.mxu0 0
  %5006 = vmatprep.subr.bf16.mxu0 0
  %5007 = vmatpush2.bf16.msra.mxu0 0
  %5008 = vmatprep.subr.bf16.mxu0 0
  %5009 = vmatpush2.bf16.msra.mxu0 0
  %5010 = vmatprep.subr.bf16.mxu0 0
  %5011 = vmatpush2.bf16.msra.mxu0 0
  %5012 = vmatprep.subr.bf16.mxu0 0
  %5013 = vmatpush2.bf16.msra.mxu0 0
  %5014 = vmatprep.subr.bf16.mxu0 0
  %5015 = vmatpush2.bf16.msra.mxu0 0
  %5016 = vmatprep.mubr.bf16.mxu0 0
  %5017 = vmatmul.mubr.bf16.gmra.mxu0 %v4791
  %v5018 = vpop.f32.mrf.mxu0
  %v5019 = vadd.f32 0.0, %v5018
  %v5020 = vpop.f32.mrf.mxu0
  %v5021 = vadd.f32 0.0, %v5020
  %v5022 = vpop.f32.mrf.mxu0
  %v5023 = vpop.f32.mrf.mxu0
  %5024 = vdwg.mxu0
  %5025 = vmatprep.subr.bf16.mxu0 %v4951
  %5026 = vmatpush1.bf16.msra.mxu0 %v4950
  %5027 = vmatprep.subr.bf16.mxu0 %v4947
  %5028 = vmatpush1.bf16.msra.mxu0 %v4946
  %5029 = vmatprep.subr.bf16.mxu0 %v4943
  %5030 = vmatpush1.bf16.msra.mxu0 %v4942
  %5031 = vmatprep.subr.bf16.mxu0 %v4939
  %5032 = vmatpush1.bf16.msra.mxu0 %v4938
  %5033 = vmatprep.subr.bf16.mxu0 %v4935
  %5034 = vmatpush1.bf16.msra.mxu0 %v4934
  %5035 = vmatprep.subr.bf16.mxu0 %v4931
  %5036 = vmatpush1.bf16.msra.mxu0 %v4930
  %5037 = vmatprep.subr.bf16.mxu0 %v4927
  %5038 = vmatpush1.bf16.msra.mxu0 %v4926
  %5039 = vmatprep.subr.bf16.mxu0 %v4923
  %5040 = vmatpush1.bf16.msra.mxu0 %v4922
  %5041 = vmatprep.subr.bf16.mxu0 0
  %5042 = vmatpush2.bf16.msra.mxu0 0
  %5043 = vmatprep.subr.bf16.mxu0 0
  %5044 = vmatpush2.bf16.msra.mxu0 0
  %5045 = vmatprep.subr.bf16.mxu0 0
  %5046 = vmatpush2.bf16.msra.mxu0 0
  %5047 = vmatprep.subr.bf16.mxu0 0
  %5048 = vmatpush2.bf16.msra.mxu0 0
  %5049 = vmatprep.subr.bf16.mxu0 0
  %5050 = vmatpush2.bf16.msra.mxu0 0
  %5051 = vmatprep.subr.bf16.mxu0 0
  %5052 = vmatpush2.bf16.msra.mxu0 0
  %5053 = vmatprep.subr.bf16.mxu0 0
  %5054 = vmatpush2.bf16.msra.mxu0 0
  %5055 = vmatprep.subr.bf16.mxu0 0
  %5056 = vmatpush2.bf16.msra.mxu0 0
  %5057 = vmatprep.mubr.bf16.mxu0 0
  %5058 = vmatmul.mubr.bf16.gmra.mxu0 %v4791
  %v5059 = vpop.f32.mrf.mxu0
  %v5060 = vadd.f32 0.0, %v5059
  %v5061 = vpop.f32.mrf.mxu0
  %v5062 = vadd.f32 0.0, %v5061
  %v5063 = vpop.f32.mrf.mxu0
  %v5064 = vpop.f32.mrf.mxu0
  %5065 = vdwg.mxu0
  %v5066 = vadd.f32 %v4787, %v5019
  %v5067 = vadd.f32 %v4788, %v5021
  %v5068 = vadd.f32 %v4789, %v5060
  %v5069 = vadd.f32 %v4790, %v5062
  %v5070 = vxor.u32 %v5066, 2147483648
  %v5071 = vmul.f32 %v5070, 1.442695
  %v5072 = vpow.pop %v5071
  %v5073 = vadd.f32 %v5072, 1.0
  %v5074 = vrcp.pop %v5073
  %v5075 = vmul.f32 1.0, %v5074
  %v5076 = vxor.u32 %v5067, 2147483648
  %v5077 = vmul.f32 %v5076, 1.442695
  %v5078 = vpow.pop %v5077
  %v5079 = vadd.f32 %v5078, 1.0
  %v5080 = vrcp.pop %v5079
  %v5081 = vmul.f32 1.0, %v5080
  %v5082 = vtanh.pop %v5068
  %v5083 = vxor.u32 %v5069, 2147483648
  %v5084 = vmul.f32 %v5083, 1.442695
  %v5085 = vpow.pop %v5084
  %v5086 = vadd.f32 %v5085, 1.0
  %v5087 = vrcp.pop %v5086
  %v5088 = vmul.f32 1.0, %v5087
  %v5089 = vmul.f32 %v5081, %v4783
  %v5090 = vmul.f32 %v5075, %v5082
  %v5091 = vadd.f32 %v5089, %v5090
  %v5092 = vtanh.pop %v5091
  %v5093 = vmul.f32 %v5088, %v5092
  %5094 = vst [vmem:[#allocation3] sm:$0xff] %v5091
  %5095 = vst [vmem:[#allocation2] sm:$0xff] %v5093
  %v5096 = vpack.c.bf16 %v5093, %v5093
  %s5097 = scalar_lea.vmem %s4, 60
  %5098 = vst [vmem:[%s5097] sm:$0xf] %v5096
  // Predicated region
  $region22: #{rnn_model_forward.6} parent=0 // pred_check
    %p5099 = pneg %p21
  $region23: #{rnn_model_forward.6} parent=0 // pred_check_branch
    %5101 = sbr.rel (%p5099) target = $region25
  $region24: #{rnn_model_forward.6} parent=0 // pred_region
    %v5102 = vld [vmem:[#allocation2] sm:$0xff]
    %5103 = vst [vmem:[%s5] sm:$0xff] %v5102
    %v5104 = vld [vmem:[#allocation3] sm:$0xff]
    %5105 = vst [vmem:[%s6] sm:$0xff] %v5104
  $region25: #{rnn_model_forward.6} parent=0 // pred_fallthru
    _
  // Predicated region
  $region26: #{rnn_model_forward.6} parent=0 // pred_check
    _
  $region27: #{rnn_model_forward.6} parent=0 // pred_check_branch
    %5107 = sbr.rel (0) target = $region29
  $region28: #{rnn_model_forward.6} parent=0 // pred_region
    _
  $region29: #{rnn_model_forward.6} parent=0 // pred_fallthru
    _
  // Predicated region
  $region30: #{rnn_model_forward.6} parent=0 // pred_check
    _
  $region31: #{rnn_model_forward.6} parent=0 // pred_check_branch
    %5109 = sbr.rel (0) target = $region33
  $region32: #{rnn_model_forward.6} parent=0 // pred_region
    _
  $region33: #{rnn_model_forward.6} parent=0 // pred_fallthru
    _
  // Predicated region
  $region34: #{rnn_model_forward.6} parent=0 // pred_check
    _
  $region35: #{rnn_model_forward.6} parent=0 // pred_check_branch
    %5111 = sbr.rel (0) target = $region37
  $region36: #{rnn_model_forward.6} parent=0 // pred_region
    _
  $region37: #{rnn_model_forward.6} parent=0 // pred_fallthru
    _
  // Predicated region
  $region38: #{rnn_model_forward.6} parent=0 // pred_check
    _
  $region39: #{rnn_model_forward.6} parent=0 // pred_check_branch
    %5113 = sbr.rel (0) target = $region41
  $region40: #{rnn_model_forward.6} parent=0 // pred_region
    _
  $region41: #{rnn_model_forward.6} parent=0 // pred_fallthru
    _
  // Predicated region
  $region42: #{rnn_model_forward.6} parent=0 // pred_check
    _
  $region43: #{rnn_model_forward.6} parent=0 // pred_check_branch
    %5115 = sbr.rel (0) target = $region45
  $region44: #{rnn_model_forward.6} parent=0 // pred_region
    _
  $region45: #{rnn_model_forward.6} parent=0 // pred_fallthru
    _
  // Predicated region
  $region46: #{rnn_model_forward.6} parent=0 // pred_check
    _
  $region47: #{rnn_model_forward.6} parent=0 // pred_check_branch
    %5117 = sbr.rel (0) target = $region49
  $region48: #{rnn_model_forward.6} parent=0 // pred_region
    _
  $region49: #{rnn_model_forward.6} parent=0 // pred_fallthru
    _

</llo_original>
